<compile_context>
chip_gen: v7x
topology: tpu7x:2x2x1
jax: 0.10.0
libtpu: 0.0.40
codegen_flags: <defaults>
</compile_context>

<pallas_src>
import functools

import jax
import jax.numpy as jnp
from jax.experimental import pallas as pl
from jax.experimental.pallas import tpu as pltpu

# ----------------------- synthetic small config -----------------------------
VOCAB = 32
HIDDEN = 32
N_HEADS = 4
HEAD_DIM = HIDDEN // N_HEADS
INTERMEDIATE = 64
ENCODER_D = 16          # cfg.encoder_d_model (kdim = vdim of cross-attention)
LN_EPS = 1e-5
PAD_ID = 1
NEG_INF = float(jnp.finfo(jnp.float32).min)

HP = 128                # padded lane width for every feature dimension
TARGET_ROWS = 256       # matmul-M rows targeted per grid step

# --------------------------- packed-slab layouts -----------------------------
# widths are in units of HP(=128) columns
W_LAYOUT = [
    ("l0_attn_qkv", 3), ("l0_attn_o", 1),
    ("l0_ffn_fc1", 1), ("l0_ffn_fc2", 1),
    ("ad_attn_qkv", 3), ("ad_attn_o", 1),
    ("ad_ffn_fc1", 1), ("ad_ffn_fc2", 1),
    ("ad_x_q", 1), ("ad_x_kv", 2), ("ad_x_o", 1),
    ("ad_xffn_fc1", 1), ("ad_xffn_fc2", 1),
    ("lm_dense", 1), ("lm_dec", 1),
]
B_LAYOUT = [
    ("l0_attn_ln_g", 1), ("l0_attn_ln_b", 1), ("l0_attn_qkv_b", 3), ("l0_attn_o_b", 1),
    ("l0_ffn_ln_g", 1), ("l0_ffn_ln_b", 1), ("l0_ffn_fc1_b", 1), ("l0_ffn_fc2_b", 1),
    ("ad_attn_ln_g", 1), ("ad_attn_ln_b", 1), ("ad_attn_qkv_b", 3), ("ad_attn_o_b", 1),
    ("ad_ffn_ln_g", 1), ("ad_ffn_ln_b", 1), ("ad_ffn_fc1_b", 1), ("ad_ffn_fc2_b", 1),
    ("ad_x_ln_g", 1), ("ad_x_ln_b", 1), ("ad_x_q_b", 1), ("ad_x_kv_b", 2), ("ad_x_o_b", 1),
    ("ad_xffn_ln_g", 1), ("ad_xffn_ln_b", 1), ("ad_xffn_fc1_b", 1), ("ad_xffn_fc2_b", 1),
    ("final_ln_g", 1), ("final_ln_b", 1),
    ("lm_dense_b", 1), ("lm_ln_g", 1), ("lm_ln_b", 1), ("lm_dec_b", 1),
]


def _layout_offsets(layout):
    offs, c = {}, 0
    for name, width in layout:
        offs[name] = (c * HP, width * HP)   # (start col, width) in elements
        c += width
    return offs, c * HP


# --------------------------- fused Pallas kernel -----------------------------
def _fused_forward_kernel(x_ref, feats_ref, sbias_ref, xbias_ref, hidm_ref,
                          kms_ref, kmx_ref, segs_ref, segx_ref,
                          w_ref, b_ref, out_ref, *, w_off, b_off):
    """One grid step == one block of whole sequences; all VMEM/vreg resident."""
    x0 = x_ref[...]              # (M, HP)    f32, lanes >= HIDDEN are zero
    feats = feats_ref[...]       # (KSE, HP)  f32, lanes >= ENCODER_D are zero
    sbias = sbias_ref[...]       # (M, NH*KS)   additive self-attn bias (block diag + pad)
    xbias = xbias_ref[...]       # (M, NH*KSE)  additive cross-attn bias
    hid_mask = hidm_ref[...]     # (1, HP)      1.0 for lanes < HIDDEN
    km_self = kms_ref[...]       # (NH*KS, HP)  head-block lane mask for keys/values
    km_cross = kmx_ref[...]      # (NH*KSE, HP)
    seg_self = segs_ref[...]     # (NH*KS, NH*KS)  same-head indicator matrix
    seg_cross = segx_ref[...]    # (NH*KSE, NH*KSE)

    inv_h = 1.0 / HIDDEN
    scale = 1.0 / float(HEAD_DIM) ** 0.5

    def wmat(name):              # static slice of the bf16 weight slab (free)
        off, n = w_off[name]
        return w_ref[:, off:off + n]

    def brow(name):              # static slice of the f32 bias slab (free)
        off, n = b_off[name]
        return b_ref[:, off:off + n]

    def mxu(a, name):            # bf16 MXU operands, f32 accumulation
        return jnp.dot(a.astype(jnp.bfloat16), wmat(name),
                       preferred_element_type=jnp.float32)

    def layer_norm(x, pfx):
        # padded lanes of x are exactly zero -> sum over 128 == sum over HIDDEN
        mu = jnp.sum(x, axis=-1, keepdims=True) * inv_h
        xc = x - mu
        var = jnp.sum(xc * xc * hid_mask, axis=-1, keepdims=True) * inv_h
        # gamma/beta are zero in padded lanes -> padding stays exactly zero
        return (xc * jax.lax.rsqrt(var + LN_EPS) * brow(pfx + "_ln_g")
                + brow(pfx + "_ln_b"))

    def gelu(y):                 # exact (erf) GELU, as in ESM
        return 0.5 * y * (1.0 + jax.lax.erf(y * (1.0 / 2.0 ** 0.5)))

    def mha(q, k, v, bias, kmask, seg):
        # All heads in ONE QK^T and ONE PV matmul: stack keys/values
        # head-block-wise (row block h = k/v masked to head h's lanes).
        k_heads = jnp.concatenate([k] * N_HEADS, axis=0) * kmask   # (NH*KS, HP)
        v_heads = jnp.concatenate([v] * N_HEADS, axis=0) * kmask   # (NH*KS, HP)
        s = jax.lax.dot_general(q * scale, k_heads,
                                (((1,), (1,)), ((), ())),
                                preferred_element_type=jnp.float32) + bias
        m = jnp.max(s, axis=-1, keepdims=True)         # global row max (exact)
        e = jnp.exp(s - m)
        denom = jnp.dot(e, seg, preferred_element_type=jnp.float32)  # per-head sums
        p = e * pl.reciprocal(denom, approx=True)
        return jnp.dot(p, v_heads, preferred_element_type=jnp.float32)  # (M, HP)

    def self_attn(x, pfx):
        x_ln = layer_norm(x, pfx)
        qkv = mxu(x_ln, pfx + "_qkv") + brow(pfx + "_qkv_b")        # (M, 3*HP)
        ctx = mha(qkv[:, :HP], qkv[:, HP:2 * HP], qkv[:, 2 * HP:],
                  sbias, km_self, seg_self)
        return mxu(ctx, pfx + "_o") + brow(pfx + "_o_b") + x

    def cross_attn(x, pfx):
        x_ln = layer_norm(x, pfx)
        q = mxu(x_ln, pfx + "_q") + brow(pfx + "_q_b")
        kv = mxu(feats, pfx + "_kv") + brow(pfx + "_kv_b")          # (KSE, 2*HP)
        ctx = mha(q, kv[:, :HP], kv[:, HP:], xbias, km_cross, seg_cross)
        return mxu(ctx, pfx + "_o") + brow(pfx + "_o_b") + x

    def ffn(x, pfx):
        x_ln = layer_norm(x, pfx)
        inter = gelu(mxu(x_ln, pfx + "_fc1") + brow(pfx + "_fc1_b"))
        return mxu(inter, pfx + "_fc2") + brow(pfx + "_fc2_b") + x

    # ---- frozen ESM layer ---------------------------------------------------
    h = self_attn(x0, "l0_attn")
    h = ffn(h, "l0_ffn")

    # ---- AdapterLayer (eval: cross-attention branch always taken) ------------
    attn_out = self_attn(h, "ad_attn")
    layer_out = ffn(attn_out, "ad_ffn")
    cross_out = cross_attn(layer_out, "ad_x")
    h = ffn(cross_out, "ad_xffn") + layer_out

    # ---- emb_layer_norm_after + LM head --------------------------------------
    h = layer_norm(h, "final")
    hh = gelu(mxu(h, "lm_dense") + brow("lm_dense_b"))
    hh = layer_norm(hh, "lm")
    out_ref[...] = (mxu(hh, "lm_dec") + brow("lm_dec_b")).astype(out_ref.dtype)


# ----------------------- weight / bias slab packing --------------------------
def _pack_params(params):
    w_off, w_cols = _layout_offsets(W_LAYOUT)
    b_off, b_cols = _layout_offsets(B_LAYOUT)
    w_slab = jnp.zeros((HP, w_cols), jnp.bfloat16)
    b_slab = jnp.zeros((1, b_cols), jnp.float32)

    def put_w(name, mat, shift=0):
        nonlocal w_slab
        c0 = w_off[name][0] + shift
        w_slab = w_slab.at[:mat.shape[0], c0:c0 + mat.shape[1]].set(
            mat.astype(jnp.bfloat16))

    def put_b(name, vec, shift=0):
        nonlocal b_slab
        c0 = b_off[name][0] + shift
        b_slab = b_slab.at[0, c0:c0 + vec.shape[0]].set(vec.astype(jnp.float32))

    def pack_self_attn(pfx, p):
        put_b(pfx + "_ln_g", p["ln_g"]); put_b(pfx + "_ln_b", p["ln_b"])
        put_w(pfx + "_qkv", p["q_w"], 0)
        put_w(pfx + "_qkv", p["k_w"], HP)
        put_w(pfx + "_qkv", p["v_w"], 2 * HP)
        put_b(pfx + "_qkv_b", p["q_b"], 0)
        put_b(pfx + "_qkv_b", p["k_b"], HP)
        put_b(pfx + "_qkv_b", p["v_b"], 2 * HP)
        put_w(pfx + "_o", p["o_w"]); put_b(pfx + "_o_b", p["o_b"])

    def pack_cross_attn(pfx, p):
        put_b(pfx + "_ln_g", p["ln_g"]); put_b(pfx + "_ln_b", p["ln_b"])
        put_w(pfx + "_q", p["q_w"]); put_b(pfx + "_q_b", p["q_b"])
        put_w(pfx + "_kv", p["k_w"], 0); put_w(pfx + "_kv", p["v_w"], HP)
        put_b(pfx + "_kv_b", p["k_b"], 0); put_b(pfx + "_kv_b", p["v_b"], HP)
        put_w(pfx + "_o", p["o_w"]); put_b(pfx + "_o_b", p["o_b"])

    def pack_ffn(pfx, p):
        put_b(pfx + "_ln_g", p["ln_g"]); put_b(pfx + "_ln_b", p["ln_b"])
        put_w(pfx + "_fc1", p["fc1_w"]); put_b(pfx + "_fc1_b", p["fc1_b"])
        put_w(pfx + "_fc2", p["fc2_w"]); put_b(pfx + "_fc2_b", p["fc2_b"])

    pack_self_attn("l0_attn", params["layer0"]["attention"])
    pack_ffn("l0_ffn", params["layer0"]["ffn"])
    ad = params["adapter"]
    pack_self_attn("ad_attn", ad["attention"])
    pack_ffn("ad_ffn", ad["ffn"])
    pack_cross_attn("ad_x", ad["adapter_crossattention"])
    pack_ffn("ad_xffn", ad["adapter_ffn"])
    put_b("final_ln_g", params["final_ln_g"]); put_b("final_ln_b", params["final_ln_b"])
    lm = params["lm_head"]
    put_w("lm_dense", lm["dense_w"]); put_b("lm_dense_b", lm["dense_b"])
    put_b("lm_ln_g", lm["ln_g"]); put_b("lm_ln_b", lm["ln_b"])
    put_w("lm_dec", lm["dec_w"]); put_b("lm_dec_b", lm["dec_b"])
    return w_slab, b_slab, w_off, b_off


# ---------------------- host-side bias / mask constants ----------------------
def _attention_bias(key_valid, nb, s_q, s_k, nh):
    """Block-diagonal (per-sequence) + key-padding additive bias, head-tiled.

    key_valid: (B, s_k) bool/0-1.  Returns (B*s_q, nh*nb*s_k) f32.
    """
    bsz = key_valid.shape[0]
    nblk = bsz // nb
    m = nb * s_q
    ks = nb * s_k
    same = (jnp.arange(m)[:, None] // s_q
            == jnp.arange(ks)[None, :] // s_k).astype(jnp.float32)       # (m, ks)
    kv = key_valid.astype(jnp.float32).reshape(nblk, 1, ks)
    allowed = same[None] * kv                                            # (nblk, m, ks)
    bias = (1.0 - allowed) * NEG_INF
    bias = jnp.tile(bias, (1, 1, nh))                                    # head-major cols
    return bias.reshape(nblk * m, nh * ks)


def _head_key_mask(ks):
    head = jnp.arange(N_HEADS * ks)[:, None] // ks
    lane = jnp.arange(HP)[None, :]
    return jnp.logical_and(lane >= head * HEAD_DIM,
                           lane < (head + 1) * HEAD_DIM).astype(jnp.float32)


def _seg_matrix(ks):
    head = jnp.arange(N_HEADS * ks) // ks
    return (head[:, None] == head[None, :]).astype(jnp.float32)


def _hidden_lane_mask():
    return (jnp.arange(HP)[None, :] < HIDDEN).astype(jnp.float32)


# ----------------------------- forward wrapper -------------------------------
def dplm_adapter_forward(params, batch, encoder_out):
    """DPLMWithConditionalAdatper.forward (eval mode), single fused kernel."""
    input_ids = batch["prev_tokens"]                        # (B, S) int32
    feats = encoder_out["feats"]                            # (B, S_enc, ENCODER_D)
    if "encoder_attention_mask" in encoder_out:
        enc_mask = encoder_out["encoder_attention_mask"]
    else:
        enc_mask = input_ids != PAD_ID

    B, S = input_ids.shape
    S_enc = feats.shape[1]

    # sequences per grid step: batch rows into matmul-M (target ~256 rows),
    # but keep >= 2 "parallel" grid steps when B allows (two v7x TensorCores).
    nb = max(1, min(B, TARGET_ROWS // max(S, 1)))
    if B >= 2 and B // nb < 2:
        nb = B // 2
    while B % nb:
        nb -= 1
    nblk = B // nb
    m = nb * S
    ks = nb * S
    kse = nb * S_enc

    # activations padded to 128 lanes with zeros, flattened to rows
    h0 = jnp.pad(params["embedding"][input_ids],
                 ((0, 0), (0, 0), (0, HP - HIDDEN))).reshape(B * S, HP)
    feats_p = jnp.pad(feats,
                      ((0, 0), (0, 0), (0, HP - feats.shape[-1]))).reshape(B * S_enc, HP)

    sbias = _attention_bias(input_ids != PAD_ID, nb, S, S, N_HEADS)      # (B*S, NH*ks)
    xbias = _attention_bias(enc_mask, nb, S, S_enc, N_HEADS)             # (B*S, NH*kse)

    hidm = _hidden_lane_mask()
    km_s, km_x = _head_key_mask(ks), _head_key_mask(kse)
    seg_s, seg_x = _seg_matrix(ks), _seg_matrix(kse)

    w_slab, b_slab, w_off, b_off = _pack_params(params)
    kernel = functools.partial(_fused_forward_kernel, w_off=w_off, b_off=b_off)

    def build_call(single_buffer_consts):
        def cspec(shape):
            idx = lambda g: (0,) * len(shape)
            if single_buffer_consts:
                return pl.BlockSpec(shape, idx, pipeline_mode=pl.Buffered(1))
            return pl.BlockSpec(shape, idx)

        in_specs = [
            pl.BlockSpec((m, HP), lambda g: (g, 0)),                 # activations
            pl.BlockSpec((kse, HP), lambda g: (g, 0)),               # encoder feats
            pl.BlockSpec((m, N_HEADS * ks), lambda g: (g, 0)),       # self bias
            pl.BlockSpec((m, N_HEADS * kse), lambda g: (g, 0)),      # cross bias
            cspec((1, HP)),                                          # hidden lane mask
            cspec((N_HEADS * ks, HP)),                               # self head/key mask
            cspec((N_HEADS * kse, HP)),                              # cross head/key mask
            cspec((N_HEADS * ks, N_HEADS * ks)),                     # self seg matrix
            cspec((N_HEADS * kse, N_HEADS * kse)),                   # cross seg matrix
            cspec(w_slab.shape),                                     # weight slab (bf16)
            cspec(b_slab.shape),                                     # bias slab (f32)
        ]
        return pl.pallas_call(
            kernel,
            grid=(nblk,),
            in_specs=in_specs,
            out_specs=pl.BlockSpec((m, HP), lambda g: (g, 0)),
            out_shape=jax.ShapeDtypeStruct((B * S, HP), jnp.bfloat16),
            compiler_params=pltpu.CompilerParams(
                dimension_semantics=("parallel",)),
        )

    args = (h0, feats_p, sbias, xbias, hidm, km_s, km_x, seg_s, seg_x,
            w_slab, b_slab)
    try:
        out = build_call(True)(*args)     # single-buffered constant inputs
    except Exception:
        out = build_call(False)(*args)    # fallback if Buffered(1) unsupported

    logits = out.astype(jnp.float32).reshape(B, S, HP)[:, :, :VOCAB]
    return {"logits": logits}


# ------------------------- pure-JAX reference (f32) --------------------------
def _ref_layernorm(x, g_, b_):
    mu = jnp.mean(x, axis=-1, keepdims=True)
    xc = x - mu
    var = jnp.mean(xc * xc, axis=-1, keepdims=True)
    return xc * jax.lax.rsqrt(var + LN_EPS) * g_ + b_


def _ref_gelu(x):
    return 0.5 * x * (1.0 + jax.lax.erf(x * (1.0 / 2.0 ** 0.5)))


def _ref_attention(p, x, bias, kv=None):
    x_ln = _ref_layernorm(x, p["ln_g"], p["ln_b"])
    kv_in = x_ln if kv is None else kv
    q = x_ln @ p["q_w"] + p["q_b"]
    k = kv_in @ p["k_w"] + p["k_b"]
    v = kv_in @ p["v_w"] + p["v_b"]
    B_, Sq, _ = q.shape
    Sk = k.shape[1]
    qh = q.reshape(B_, Sq, N_HEADS, HEAD_DIM).transpose(0, 2, 1, 3)
    kh = k.reshape(B_, Sk, N_HEADS, HEAD_DIM).transpose(0, 2, 1, 3)
    vh = v.reshape(B_, Sk, N_HEADS, HEAD_DIM).transpose(0, 2, 1, 3)
    s = jnp.einsum("bhqd,bhkd->bhqk", qh * (HEAD_DIM ** -0.5), kh) + bias[:, None, :, :]
    pr = jax.nn.softmax(s, axis=-1)
    ctx = jnp.einsum("bhqk,bhkd->bhqd", pr, vh).transpose(0, 2, 1, 3).reshape(B_, Sq, -1)
    return ctx @ p["o_w"] + p["o_b"] + x


def _ref_ffn(p, x):
    x_ln = _ref_layernorm(x, p["ln_g"], p["ln_b"])
    inter = _ref_gelu(x_ln @ p["fc1_w"] + p["fc1_b"])
    return inter @ p["fc2_w"] + p["fc2_b"] + x


def reference_forward(params, batch, encoder_out):
    input_ids = batch["prev_tokens"]
    feats = encoder_out["feats"]
    enc_mask = encoder_out.get("encoder_attention_mask", input_ids != PAD_ID)
    B_, S_ = input_ids.shape
    self_bias = ((1.0 - (input_ids != PAD_ID).astype(jnp.float32)) * NEG_INF
                 ).reshape(B_, 1, S_)
    enc_bias = ((1.0 - enc_mask.astype(jnp.float32)) * NEG_INF
                ).reshape(B_, 1, feats.shape[1])

    h = params["embedding"][input_ids]
    h = _ref_ffn(params["layer0"]["ffn"],
                 _ref_attention(params["layer0"]["attention"], h, self_bias))
    ad = params["adapter"]
    attn_out = _ref_attention(ad["attention"], h, self_bias)
    layer_out = _ref_ffn(ad["ffn"], attn_out)
    cross_out = _ref_attention(ad["adapter_crossattention"], layer_out, enc_bias,
                               kv=feats)
    h = _ref_ffn(ad["adapter_ffn"], cross_out) + layer_out
    h = _ref_layernorm(h, params["final_ln_g"], params["final_ln_b"])
    lm = params["lm_head"]
    hh = _ref_gelu(h @ lm["dense_w"] + lm["dense_b"])
    hh = _ref_layernorm(hh, lm["ln_g"], lm["ln_b"])
    return hh @ lm["dec_w"] + lm["dec_b"]


# ------------------------------ parameter init -------------------------------
def _dense(key, din, dout):
    kw, kb = jax.random.split(key)
    w = 0.02 * jax.random.normal(kw, (din, dout), jnp.float32)
    b = 0.02 * jax.random.normal(kb, (dout,), jnp.float32)
    return w, b


def _ln_params(key):
    kg, kb = jax.random.split(key)
    return (1.0 + 0.05 * jax.random.normal(kg, (HIDDEN,), jnp.float32),
            0.05 * jax.random.normal(kb, (HIDDEN,), jnp.float32))


def _init_attn(key, kvdim):
    ks = jax.random.split(key, 5)
    qw, qb = _dense(ks[0], HIDDEN, HIDDEN)
    kw, kb = _dense(ks[1], kvdim, HIDDEN)
    vw, vb = _dense(ks[2], kvdim, HIDDEN)
    ow, ob = _dense(ks[3], HIDDEN, HIDDEN)
    g, b = _ln_params(ks[4])
    return dict(ln_g=g, ln_b=b, q_w=qw, q_b=qb, k_w=kw, k_b=kb,
                v_w=vw, v_b=vb, o_w=ow, o_b=ob)


def _init_ffn(key):
    k1, k2, k3 = jax.random.split(key, 3)
    w1, b1 = _dense(k1, HIDDEN, INTERMEDIATE)
    w2, b2 = _dense(k2, INTERMEDIATE, HIDDEN)
    g, b = _ln_params(k3)
    return dict(ln_g=g, ln_b=b, fc1_w=w1, fc1_b=b1, fc2_w=w2, fc2_b=b2)


def init_params(key):
    ks = jax.random.split(key, 10)
    fin_g, fin_b = _ln_params(ks[8])
    params = {
        "embedding": 0.02 * jax.random.normal(ks[0], (VOCAB, HIDDEN), jnp.float32),
        "layer0": {"attention": _init_attn(ks[1], HIDDEN), "ffn": _init_ffn(ks[2])},
        "adapter": {
            "attention": _init_attn(ks[3], HIDDEN),
            "ffn": _init_ffn(ks[4]),
            "adapter_crossattention": _init_attn(ks[5], ENCODER_D),  # kdim=vdim=encoder_d_model
            "adapter_ffn": _init_ffn(ks[6]),
        },
        "final_ln_g": fin_g,
        "final_ln_b": fin_b,
    }
    kh1, kh2, kh3 = jax.random.split(ks[7], 3)
    dw, db = _dense(kh1, HIDDEN, HIDDEN)
    decw, decb = _dense(kh2, HIDDEN, VOCAB)
    lg, lb = _ln_params(kh3)
    params["lm_head"] = dict(dense_w=dw, dense_b=db, ln_g=lg, ln_b=lb,
                             dec_w=decw, dec_b=decb)
    return params


# ----------------------------------- main ------------------------------------
if __name__ == "__main__":
    key = jax.random.PRNGKey(0)
    kp, kt, kf = jax.random.split(key, 3)
    params = init_params(kp)

    B, S = 2, 8
    input_ids = jax.random.randint(kt, (B, S), 0, VOCAB, dtype=jnp.int32)
    input_ids = input_ids.at[1, -2:].set(PAD_ID)                      # exercise padding mask
    feats = jax.random.normal(kf, (B, S, ENCODER_D), jnp.float32)     # encoder_out['feats']
    enc_mask = input_ids != PAD_ID

    batch = {"prev_tokens": input_ids}
    encoder_out = {"feats": feats, "encoder_attention_mask": enc_mask}

    out = dplm_adapter_forward(params, batch, encoder_out)
    logits = jax.block_until_ready(out["logits"])

    assert logits.shape == (B, S, VOCAB), logits.shape
    assert bool(jnp.all(jnp.isfinite(logits)))

    ref = reference_forward(params, batch, encoder_out)
    max_err = float(jnp.max(jnp.abs(logits - ref)))
    assert max_err < 5e-2, f"max abs error vs reference: {max_err}"
    print("KERNEL_OK")
</pallas_src>

<mosaic_0001>
module attributes {stable_mosaic.version = 11 : i64} {
  func.func @_fused_forward_kernel(%arg0: i32, %arg1: memref<8x128xf32, #tpu.memory_space<vmem>>, %arg2: memref<8x128xf32, #tpu.memory_space<vmem>>, %arg3: memref<8x32xf32, #tpu.memory_space<vmem>>, %arg4: memref<8x32xf32, #tpu.memory_space<vmem>>, %arg5: memref<1x128xf32, #tpu.memory_space<vmem>>, %arg6: memref<32x128xf32, #tpu.memory_space<vmem>>, %arg7: memref<32x128xf32, #tpu.memory_space<vmem>>, %arg8: memref<32x32xf32, #tpu.memory_space<vmem>>, %arg9: memref<32x32xf32, #tpu.memory_space<vmem>>, %arg10: memref<128x2560xbf16, #tpu.memory_space<vmem>>, %arg11: memref<1x4608xf32, #tpu.memory_space<vmem>>, %arg12: memref<8x128xbf16, #tpu.memory_space<vmem>>) attributes {dimension_semantics = [#tpu.dimension_semantics<parallel>], iteration_bounds = array<i64: 2>, scalar_prefetch = 0 : i64, scratch_operands = 0 : i64, tpu.core_type = #tpu.core_type<tc>, window_params = [{transform_indices = @transform_0, window_bounds = array<i64: 8, 128>}, {transform_indices = @transform_1, window_bounds = array<i64: 8, 128>}, {transform_indices = @transform_2, window_bounds = array<i64: 8, 32>}, {transform_indices = @transform_3, window_bounds = array<i64: 8, 32>}, {pipeline_mode = #tpu.pipeline_mode<synchronous>, transform_indices = @transform_4, window_bounds = array<i64: 1, 128>}, {pipeline_mode = #tpu.pipeline_mode<synchronous>, transform_indices = @transform_5, window_bounds = array<i64: 32, 128>}, {pipeline_mode = #tpu.pipeline_mode<synchronous>, transform_indices = @transform_6, window_bounds = array<i64: 32, 128>}, {pipeline_mode = #tpu.pipeline_mode<synchronous>, transform_indices = @transform_7, window_bounds = array<i64: 32, 32>}, {pipeline_mode = #tpu.pipeline_mode<synchronous>, transform_indices = @transform_8, window_bounds = array<i64: 32, 32>}, {pipeline_mode = #tpu.pipeline_mode<synchronous>, transform_indices = @transform_9, window_bounds = array<i64: 128, 2560>}, {pipeline_mode = #tpu.pipeline_mode<synchronous>, transform_indices = @transform_10, window_bounds = array<i64: 1, 4608>}, {transform_indices = @transform_11, window_bounds = array<i64: 8, 128>}]} {
    %c0 = arith.constant 0 : index
    %c0_0 = arith.constant 0 : index
    %0 = vector.load %arg1[%c0, %c0_0] : memref<8x128xf32, #tpu.memory_space<vmem>>, vector<8x128xf32>
    %c0_1 = arith.constant 0 : index
    %c0_2 = arith.constant 0 : index
    %1 = vector.load %arg2[%c0_1, %c0_2] : memref<8x128xf32, #tpu.memory_space<vmem>>, vector<8x128xf32>
    %c0_3 = arith.constant 0 : index
    %c0_4 = arith.constant 0 : index
    %2 = vector.load %arg3[%c0_3, %c0_4] : memref<8x32xf32, #tpu.memory_space<vmem>>, vector<8x32xf32>
    %c0_5 = arith.constant 0 : index
    %c0_6 = arith.constant 0 : index
    %3 = vector.load %arg4[%c0_5, %c0_6] : memref<8x32xf32, #tpu.memory_space<vmem>>, vector<8x32xf32>
    %c0_7 = arith.constant 0 : index
    %c0_8 = arith.constant 0 : index
    %4 = vector.load %arg5[%c0_7, %c0_8] : memref<1x128xf32, #tpu.memory_space<vmem>>, vector<1x128xf32>
    %c0_9 = arith.constant 0 : index
    %c0_10 = arith.constant 0 : index
    %5 = vector.load %arg6[%c0_9, %c0_10] : memref<32x128xf32, #tpu.memory_space<vmem>>, vector<32x128xf32>
    %c0_11 = arith.constant 0 : index
    %c0_12 = arith.constant 0 : index
    %6 = vector.load %arg7[%c0_11, %c0_12] : memref<32x128xf32, #tpu.memory_space<vmem>>, vector<32x128xf32>
    %c0_13 = arith.constant 0 : index
    %c0_14 = arith.constant 0 : index
    %7 = vector.load %arg8[%c0_13, %c0_14] : memref<32x32xf32, #tpu.memory_space<vmem>>, vector<32x32xf32>
    %c0_15 = arith.constant 0 : index
    %c0_16 = arith.constant 0 : index
    %8 = vector.load %arg9[%c0_15, %c0_16] : memref<32x32xf32, #tpu.memory_space<vmem>>, vector<32x32xf32>
    %cst = arith.constant dense<0.000000e+00> : vector<8xf32>
    %9 = vector.multi_reduction <add>, %0, %cst [1] : vector<8x128xf32> to vector<8xf32>
    %10 = vector.shape_cast %9 : vector<8xf32> to vector<8x1xf32>
    %cst_17 = arith.constant 3.125000e-02 : f32
    %11 = vector.broadcast %cst_17 : f32 to vector<8x1xf32>
    %12 = arith.mulf %10, %11 : vector<8x1xf32>
    %13 = vector.broadcast %12 : vector<8x1xf32> to vector<8x128xf32>
    %14 = arith.subf %0, %13 : vector<8x128xf32>
    %15 = arith.mulf %14, %14 : vector<8x128xf32>
    %16 = vector.broadcast %4 : vector<1x128xf32> to vector<8x128xf32>
    %17 = arith.mulf %15, %16 : vector<8x128xf32>
    %cst_18 = arith.constant dense<0.000000e+00> : vector<8xf32>
    %18 = vector.multi_reduction <add>, %17, %cst_18 [1] : vector<8x128xf32> to vector<8xf32>
    %19 = vector.shape_cast %18 : vector<8xf32> to vector<8x1xf32>
    %cst_19 = arith.constant 3.125000e-02 : f32
    %20 = vector.broadcast %cst_19 : f32 to vector<8x1xf32>
    %21 = arith.mulf %19, %20 : vector<8x1xf32>
    %cst_20 = arith.constant 9.99999974E-6 : f32
    %22 = vector.broadcast %cst_20 : f32 to vector<8x1xf32>
    %23 = arith.addf %21, %22 : vector<8x1xf32>
    %24 = math.rsqrt %23 : vector<8x1xf32>
    %25 = vector.broadcast %24 : vector<8x1xf32> to vector<8x128xf32>
    %26 = arith.mulf %14, %25 : vector<8x128xf32>
    %c0_21 = arith.constant 0 : index
    %c0_22 = arith.constant 0 : index
    %27 = vector.load %arg11[%c0_21, %c0_22] : memref<1x4608xf32, #tpu.memory_space<vmem>>, vector<1x128xf32>
    %28 = vector.broadcast %27 : vector<1x128xf32> to vector<8x128xf32>
    %29 = arith.mulf %26, %28 : vector<8x128xf32>
    %c0_23 = arith.constant 0 : index
    %c128 = arith.constant 128 : index
    %30 = vector.load %arg11[%c0_23, %c128] : memref<1x4608xf32, #tpu.memory_space<vmem>>, vector<1x128xf32>
    %31 = vector.broadcast %30 : vector<1x128xf32> to vector<8x128xf32>
    %32 = arith.addf %29, %31 : vector<8x128xf32>
    %33 = arith.truncf %32 : vector<8x128xf32> to vector<8x128xbf16>
    %c0_24 = arith.constant 0 : index
    %c0_25 = arith.constant 0 : index
    %34 = vector.load %arg10[%c0_24, %c0_25] : memref<128x2560xbf16, #tpu.memory_space<vmem>>, vector<128x384xbf16>
    %cst_26 = arith.constant dense<0.000000e+00> : vector<8x384xf32>
    %35 = tpu.matmul %33, %34, %cst_26 {dimension_numbers = #tpu.dot_dimension_numbers<[1], [0], [0], [1], [0, 0, 1, 1], [], []>} : vector<8x128xbf16>, vector<128x384xbf16>, vector<8x384xf32> -> vector<8x384xf32>
    %c0_27 = arith.constant 0 : index
    %c256 = arith.constant 256 : index
    %36 = vector.load %arg11[%c0_27, %c256] : memref<1x4608xf32, #tpu.memory_space<vmem>>, vector<1x384xf32>
    %37 = vector.broadcast %36 : vector<1x384xf32> to vector<8x384xf32>
    %38 = arith.addf %35, %37 : vector<8x384xf32>
    %39 = vector.extract_strided_slice %38 {offsets = [0, 0], sizes = [8, 128], strides = [1, 1]} : vector<8x384xf32> to vector<8x128xf32>
    %40 = vector.extract_strided_slice %38 {offsets = [0, 128], sizes = [8, 128], strides = [1, 1]} : vector<8x384xf32> to vector<8x128xf32>
    %41 = vector.extract_strided_slice %38 {offsets = [0, 256], sizes = [8, 128], strides = [1, 1]} : vector<8x384xf32> to vector<8x128xf32>
    %42 = tpu.concatenate %40, %40, %40, %40 in 0 : vector<8x128xf32>, vector<8x128xf32>, vector<8x128xf32>, vector<8x128xf32> -> vector<32x128xf32>
    %43 = arith.mulf %42, %5 : vector<32x128xf32>
    %44 = tpu.concatenate %41, %41, %41, %41 in 0 : vector<8x128xf32>, vector<8x128xf32>, vector<8x128xf32>, vector<8x128xf32> -> vector<32x128xf32>
    %45 = arith.mulf %44, %5 : vector<32x128xf32>
    %cst_28 = arith.constant 0.353553385 : f32
    %46 = vector.broadcast %cst_28 : f32 to vector<8x128xf32>
    %47 = arith.mulf %39, %46 : vector<8x128xf32>
    %cst_29 = arith.constant dense<0.000000e+00> : vector<8x32xf32>
    %48 = tpu.matmul %47, %43, %cst_29 {dimension_numbers = #tpu.dot_dimension_numbers<[1], [1], [0], [0], [0, 0, 1, 0], [], []>} : vector<8x128xf32>, vector<32x128xf32>, vector<8x32xf32> -> vector<8x32xf32>
    %49 = arith.addf %48, %2 : vector<8x32xf32>
    %cst_30 = arith.constant dense<0xFF800000> : vector<8xf32>
    %50 = vector.multi_reduction <maximumf>, %49, %cst_30 [1] : vector<8x32xf32> to vector<8xf32>
    %51 = vector.shape_cast %50 : vector<8xf32> to vector<8x1xf32>
    %52 = vector.broadcast %51 : vector<8x1xf32> to vector<8x32xf32>
    %53 = arith.subf %49, %52 : vector<8x32xf32>
    %54 = math.exp %53 : vector<8x32xf32>
    %cst_31 = arith.constant dense<0.000000e+00> : vector<8x32xf32>
    %55 = tpu.matmul %54, %7, %cst_31 {dimension_numbers = #tpu.dot_dimension_numbers<[1], [0], [0], [1], [0, 0, 1, 1], [], []>} : vector<8x32xf32>, vector<32x32xf32>, vector<8x32xf32> -> vector<8x32xf32>
    %56 = tpu.reciprocal %55 {approx = true} : vector<8x32xf32> -> vector<8x32xf32>
    %57 = arith.mulf %54, %56 : vector<8x32xf32>
    %cst_32 = arith.constant dense<0.000000e+00> : vector<8x128xf32>
    %58 = tpu.matmul %57, %45, %cst_32 {dimension_numbers = #tpu.dot_dimension_numbers<[1], [0], [0], [1], [0, 0, 1, 1], [], []>} : vector<8x32xf32>, vector<32x128xf32>, vector<8x128xf32> -> vector<8x128xf32>
    %59 = arith.truncf %58 : vector<8x128xf32> to vector<8x128xbf16>
    %c0_33 = arith.constant 0 : index
    %c384 = arith.constant 384 : index
    %60 = vector.load %arg10[%c0_33, %c384] : memref<128x2560xbf16, #tpu.memory_space<vmem>>, vector<128x128xbf16>
    %cst_34 = arith.constant dense<0.000000e+00> : vector<8x128xf32>
    %61 = tpu.matmul %59, %60, %cst_34 {dimension_numbers = #tpu.dot_dimension_numbers<[1], [0], [0], [1], [0, 0, 1, 1], [], []>} : vector<8x128xbf16>, vector<128x128xbf16>, vector<8x128xf32> -> vector<8x128xf32>
    %c0_35 = arith.constant 0 : index
    %c640 = arith.constant 640 : index
    %62 = vector.load %arg11[%c0_35, %c640] : memref<1x4608xf32, #tpu.memory_space<vmem>>, vector<1x128xf32>
    %63 = vector.broadcast %62 : vector<1x128xf32> to vector<8x128xf32>
    %64 = arith.addf %61, %63 : vector<8x128xf32>
    %65 = arith.addf %64, %0 : vector<8x128xf32>
    %cst_36 = arith.constant dense<0.000000e+00> : vector<8xf32>
    %66 = vector.multi_reduction <add>, %65, %cst_36 [1] : vector<8x128xf32> to vector<8xf32>
    %67 = vector.shape_cast %66 : vector<8xf32> to vector<8x1xf32>
    %cst_37 = arith.constant 3.125000e-02 : f32
    %68 = vector.broadcast %cst_37 : f32 to vector<8x1xf32>
    %69 = arith.mulf %67, %68 : vector<8x1xf32>
    %70 = vector.broadcast %69 : vector<8x1xf32> to vector<8x128xf32>
    %71 = arith.subf %65, %70 : vector<8x128xf32>
    %72 = arith.mulf %71, %71 : vector<8x128xf32>
    %73 = vector.broadcast %4 : vector<1x128xf32> to vector<8x128xf32>
    %74 = arith.mulf %72, %73 : vector<8x128xf32>
    %cst_38 = arith.constant dense<0.000000e+00> : vector<8xf32>
    %75 = vector.multi_reduction <add>, %74, %cst_38 [1] : vector<8x128xf32> to vector<8xf32>
    %76 = vector.shape_cast %75 : vector<8xf32> to vector<8x1xf32>
    %cst_39 = arith.constant 3.125000e-02 : f32
    %77 = vector.broadcast %cst_39 : f32 to vector<8x1xf32>
    %78 = arith.mulf %76, %77 : vector<8x1xf32>
    %cst_40 = arith.constant 9.99999974E-6 : f32
    %79 = vector.broadcast %cst_40 : f32 to vector<8x1xf32>
    %80 = arith.addf %78, %79 : vector<8x1xf32>
    %81 = math.rsqrt %80 : vector<8x1xf32>
    %82 = vector.broadcast %81 : vector<8x1xf32> to vector<8x128xf32>
    %83 = arith.mulf %71, %82 : vector<8x128xf32>
    %c0_41 = arith.constant 0 : index
    %c768 = arith.constant 768 : index
    %84 = vector.load %arg11[%c0_41, %c768] : memref<1x4608xf32, #tpu.memory_space<vmem>>, vector<1x128xf32>
    %85 = vector.broadcast %84 : vector<1x128xf32> to vector<8x128xf32>
    %86 = arith.mulf %83, %85 : vector<8x128xf32>
    %c0_42 = arith.constant 0 : index
    %c896 = arith.constant 896 : index
    %87 = vector.load %arg11[%c0_42, %c896] : memref<1x4608xf32, #tpu.memory_space<vmem>>, vector<1x128xf32>
    %88 = vector.broadcast %87 : vector<1x128xf32> to vector<8x128xf32>
    %89 = arith.addf %86, %88 : vector<8x128xf32>
    %90 = arith.truncf %89 : vector<8x128xf32> to vector<8x128xbf16>
    %c0_43 = arith.constant 0 : index
    %c512 = arith.constant 512 : index
    %91 = vector.load %arg10[%c0_43, %c512] : memref<128x2560xbf16, #tpu.memory_space<vmem>>, vector<128x128xbf16>
    %cst_44 = arith.constant dense<0.000000e+00> : vector<8x128xf32>
    %92 = tpu.matmul %90, %91, %cst_44 {dimension_numbers = #tpu.dot_dimension_numbers<[1], [0], [0], [1], [0, 0, 1, 1], [], []>} : vector<8x128xbf16>, vector<128x128xbf16>, vector<8x128xf32> -> vector<8x128xf32>
    %c0_45 = arith.constant 0 : index
    %c1024 = arith.constant 1024 : index
    %93 = vector.load %arg11[%c0_45, %c1024] : memref<1x4608xf32, #tpu.memory_space<vmem>>, vector<1x128xf32>
    %94 = vector.broadcast %93 : vector<1x128xf32> to vector<8x128xf32>
    %95 = arith.addf %92, %94 : vector<8x128xf32>
    %cst_46 = arith.constant 5.000000e-01 : f32
    %96 = vector.broadcast %cst_46 : f32 to vector<8x128xf32>
    %97 = arith.mulf %96, %95 : vector<8x128xf32>
    %cst_47 = arith.constant 0.707106769 : f32
    %98 = vector.broadcast %cst_47 : f32 to vector<8x128xf32>
    %99 = arith.mulf %95, %98 : vector<8x128xf32>
    %100 = math.erf %99 : vector<8x128xf32>
    %cst_48 = arith.constant 1.000000e+00 : f32
    %101 = vector.broadcast %cst_48 : f32 to vector<8x128xf32>
    %102 = arith.addf %101, %100 : vector<8x128xf32>
    %103 = arith.mulf %97, %102 : vector<8x128xf32>
    %104 = arith.truncf %103 : vector<8x128xf32> to vector<8x128xbf16>
    %c0_49 = arith.constant 0 : index
    %c640_50 = arith.constant 640 : index
    %105 = vector.load %arg10[%c0_49, %c640_50] : memref<128x2560xbf16, #tpu.memory_space<vmem>>, vector<128x128xbf16>
    %cst_51 = arith.constant dense<0.000000e+00> : vector<8x128xf32>
    %106 = tpu.matmul %104, %105, %cst_51 {dimension_numbers = #tpu.dot_dimension_numbers<[1], [0], [0], [1], [0, 0, 1, 1], [], []>} : vector<8x128xbf16>, vector<128x128xbf16>, vector<8x128xf32> -> vector<8x128xf32>
    %c0_52 = arith.constant 0 : index
    %c1152 = arith.constant 1152 : index
    %107 = vector.load %arg11[%c0_52, %c1152] : memref<1x4608xf32, #tpu.memory_space<vmem>>, vector<1x128xf32>
    %108 = vector.broadcast %107 : vector<1x128xf32> to vector<8x128xf32>
    %109 = arith.addf %106, %108 : vector<8x128xf32>
    %110 = arith.addf %109, %65 : vector<8x128xf32>
    %cst_53 = arith.constant dense<0.000000e+00> : vector<8xf32>
    %111 = vector.multi_reduction <add>, %110, %cst_53 [1] : vector<8x128xf32> to vector<8xf32>
    %112 = vector.shape_cast %111 : vector<8xf32> to vector<8x1xf32>
    %cst_54 = arith.constant 3.125000e-02 : f32
    %113 = vector.broadcast %cst_54 : f32 to vector<8x1xf32>
    %114 = arith.mulf %112, %113 : vector<8x1xf32>
    %115 = vector.broadcast %114 : vector<8x1xf32> to vector<8x128xf32>
    %116 = arith.subf %110, %115 : vector<8x128xf32>
    %117 = arith.mulf %116, %116 : vector<8x128xf32>
    %118 = vector.broadcast %4 : vector<1x128xf32> to vector<8x128xf32>
    %119 = arith.mulf %117, %118 : vector<8x128xf32>
    %cst_55 = arith.constant dense<0.000000e+00> : vector<8xf32>
    %120 = vector.multi_reduction <add>, %119, %cst_55 [1] : vector<8x128xf32> to vector<8xf32>
    %121 = vector.shape_cast %120 : vector<8xf32> to vector<8x1xf32>
    %cst_56 = arith.constant 3.125000e-02 : f32
    %122 = vector.broadcast %cst_56 : f32 to vector<8x1xf32>
    %123 = arith.mulf %121, %122 : vector<8x1xf32>
    %cst_57 = arith.constant 9.99999974E-6 : f32
    %124 = vector.broadcast %cst_57 : f32 to vector<8x1xf32>
    %125 = arith.addf %123, %124 : vector<8x1xf32>
    %126 = math.rsqrt %125 : vector<8x1xf32>
    %127 = vector.broadcast %126 : vector<8x1xf32> to vector<8x128xf32>
    %128 = arith.mulf %116, %127 : vector<8x128xf32>
    %c0_58 = arith.constant 0 : index
    %c1280 = arith.constant 1280 : index
    %129 = vector.load %arg11[%c0_58, %c1280] : memref<1x4608xf32, #tpu.memory_space<vmem>>, vector<1x128xf32>
    %130 = vector.broadcast %129 : vector<1x128xf32> to vector<8x128xf32>
    %131 = arith.mulf %128, %130 : vector<8x128xf32>
    %c0_59 = arith.constant 0 : index
    %c1408 = arith.constant 1408 : index
    %132 = vector.load %arg11[%c0_59, %c1408] : memref<1x4608xf32, #tpu.memory_space<vmem>>, vector<1x128xf32>
    %133 = vector.broadcast %132 : vector<1x128xf32> to vector<8x128xf32>
    %134 = arith.addf %131, %133 : vector<8x128xf32>
    %135 = arith.truncf %134 : vector<8x128xf32> to vector<8x128xbf16>
    %c0_60 = arith.constant 0 : index
    %c768_61 = arith.constant 768 : index
    %136 = vector.load %arg10[%c0_60, %c768_61] : memref<128x2560xbf16, #tpu.memory_space<vmem>>, vector<128x384xbf16>
    %cst_62 = arith.constant dense<0.000000e+00> : vector<8x384xf32>
    %137 = tpu.matmul %135, %136, %cst_62 {dimension_numbers = #tpu.dot_dimension_numbers<[1], [0], [0], [1], [0, 0, 1, 1], [], []>} : vector<8x128xbf16>, vector<128x384xbf16>, vector<8x384xf32> -> vector<8x384xf32>
    %c0_63 = arith.constant 0 : index
    %c1536 = arith.constant 1536 : index
    %138 = vector.load %arg11[%c0_63, %c1536] : memref<1x4608xf32, #tpu.memory_space<vmem>>, vector<1x384xf32>
    %139 = vector.broadcast %138 : vector<1x384xf32> to vector<8x384xf32>
    %140 = arith.addf %137, %139 : vector<8x384xf32>
    %141 = vector.extract_strided_slice %140 {offsets = [0, 0], sizes = [8, 128], strides = [1, 1]} : vector<8x384xf32> to vector<8x128xf32>
    %142 = vector.extract_strided_slice %140 {offsets = [0, 128], sizes = [8, 128], strides = [1, 1]} : vector<8x384xf32> to vector<8x128xf32>
    %143 = vector.extract_strided_slice %140 {offsets = [0, 256], sizes = [8, 128], strides = [1, 1]} : vector<8x384xf32> to vector<8x128xf32>
    %144 = tpu.concatenate %142, %142, %142, %142 in 0 : vector<8x128xf32>, vector<8x128xf32>, vector<8x128xf32>, vector<8x128xf32> -> vector<32x128xf32>
    %145 = arith.mulf %144, %5 : vector<32x128xf32>
    %146 = tpu.concatenate %143, %143, %143, %143 in 0 : vector<8x128xf32>, vector<8x128xf32>, vector<8x128xf32>, vector<8x128xf32> -> vector<32x128xf32>
    %147 = arith.mulf %146, %5 : vector<32x128xf32>
    %cst_64 = arith.constant 0.353553385 : f32
    %148 = vector.broadcast %cst_64 : f32 to vector<8x128xf32>
    %149 = arith.mulf %141, %148 : vector<8x128xf32>
    %cst_65 = arith.constant dense<0.000000e+00> : vector<8x32xf32>
    %150 = tpu.matmul %149, %145, %cst_65 {dimension_numbers = #tpu.dot_dimension_numbers<[1], [1], [0], [0], [0, 0, 1, 0], [], []>} : vector<8x128xf32>, vector<32x128xf32>, vector<8x32xf32> -> vector<8x32xf32>
    %151 = arith.addf %150, %2 : vector<8x32xf32>
    %cst_66 = arith.constant dense<0xFF800000> : vector<8xf32>
    %152 = vector.multi_reduction <maximumf>, %151, %cst_66 [1] : vector<8x32xf32> to vector<8xf32>
    %153 = vector.shape_cast %152 : vector<8xf32> to vector<8x1xf32>
    %154 = vector.broadcast %153 : vector<8x1xf32> to vector<8x32xf32>
    %155 = arith.subf %151, %154 : vector<8x32xf32>
    %156 = math.exp %155 : vector<8x32xf32>
    %cst_67 = arith.constant dense<0.000000e+00> : vector<8x32xf32>
    %157 = tpu.matmul %156, %7, %cst_67 {dimension_numbers = #tpu.dot_dimension_numbers<[1], [0], [0], [1], [0, 0, 1, 1], [], []>} : vector<8x32xf32>, vector<32x32xf32>, vector<8x32xf32> -> vector<8x32xf32>
    %158 = tpu.reciprocal %157 {approx = true} : vector<8x32xf32> -> vector<8x32xf32>
    %159 = arith.mulf %156, %158 : vector<8x32xf32>
    %cst_68 = arith.constant dense<0.000000e+00> : vector<8x128xf32>
    %160 = tpu.matmul %159, %147, %cst_68 {dimension_numbers = #tpu.dot_dimension_numbers<[1], [0], [0], [1], [0, 0, 1, 1], [], []>} : vector<8x32xf32>, vector<32x128xf32>, vector<8x128xf32> -> vector<8x128xf32>
    %161 = arith.truncf %160 : vector<8x128xf32> to vector<8x128xbf16>
    %c0_69 = arith.constant 0 : index
    %c1152_70 = arith.constant 1152 : index
    %162 = vector.load %arg10[%c0_69, %c1152_70] : memref<128x2560xbf16, #tpu.memory_space<vmem>>, vector<128x128xbf16>
    %cst_71 = arith.constant dense<0.000000e+00> : vector<8x128xf32>
    %163 = tpu.matmul %161, %162, %cst_71 {dimension_numbers = #tpu.dot_dimension_numbers<[1], [0], [0], [1], [0, 0, 1, 1], [], []>} : vector<8x128xbf16>, vector<128x128xbf16>, vector<8x128xf32> -> vector<8x128xf32>
    %c0_72 = arith.constant 0 : index
    %c1920 = arith.constant 1920 : index
    %164 = vector.load %arg11[%c0_72, %c1920] : memref<1x4608xf32, #tpu.memory_space<vmem>>, vector<1x128xf32>
    %165 = vector.broadcast %164 : vector<1x128xf32> to vector<8x128xf32>
    %166 = arith.addf %163, %165 : vector<8x128xf32>
    %167 = arith.addf %166, %110 : vector<8x128xf32>
    %cst_73 = arith.constant dense<0.000000e+00> : vector<8xf32>
    %168 = vector.multi_reduction <add>, %167, %cst_73 [1] : vector<8x128xf32> to vector<8xf32>
    %169 = vector.shape_cast %168 : vector<8xf32> to vector<8x1xf32>
    %cst_74 = arith.constant 3.125000e-02 : f32
    %170 = vector.broadcast %cst_74 : f32 to vector<8x1xf32>
    %171 = arith.mulf %169, %170 : vector<8x1xf32>
    %172 = vector.broadcast %171 : vector<8x1xf32> to vector<8x128xf32>
    %173 = arith.subf %167, %172 : vector<8x128xf32>
    %174 = arith.mulf %173, %173 : vector<8x128xf32>
    %175 = vector.broadcast %4 : vector<1x128xf32> to vector<8x128xf32>
    %176 = arith.mulf %174, %175 : vector<8x128xf32>
    %cst_75 = arith.constant dense<0.000000e+00> : vector<8xf32>
    %177 = vector.multi_reduction <add>, %176, %cst_75 [1] : vector<8x128xf32> to vector<8xf32>
    %178 = vector.shape_cast %177 : vector<8xf32> to vector<8x1xf32>
    %cst_76 = arith.constant 3.125000e-02 : f32
    %179 = vector.broadcast %cst_76 : f32 to vector<8x1xf32>
    %180 = arith.mulf %178, %179 : vector<8x1xf32>
    %cst_77 = arith.constant 9.99999974E-6 : f32
    %181 = vector.broadcast %cst_77 : f32 to vector<8x1xf32>
    %182 = arith.addf %180, %181 : vector<8x1xf32>
    %183 = math.rsqrt %182 : vector<8x1xf32>
    %184 = vector.broadcast %183 : vector<8x1xf32> to vector<8x128xf32>
    %185 = arith.mulf %173, %184 : vector<8x128xf32>
    %c0_78 = arith.constant 0 : index
    %c2048 = arith.constant 2048 : index
    %186 = vector.load %arg11[%c0_78, %c2048] : memref<1x4608xf32, #tpu.memory_space<vmem>>, vector<1x128xf32>
    %187 = vector.broadcast %186 : vector<1x128xf32> to vector<8x128xf32>
    %188 = arith.mulf %185, %187 : vector<8x128xf32>
    %c0_79 = arith.constant 0 : index
    %c2176 = arith.constant 2176 : index
    %189 = vector.load %arg11[%c0_79, %c2176] : memref<1x4608xf32, #tpu.memory_space<vmem>>, vector<1x128xf32>
    %190 = vector.broadcast %189 : vector<1x128xf32> to vector<8x128xf32>
    %191 = arith.addf %188, %190 : vector<8x128xf32>
    %192 = arith.truncf %191 : vector<8x128xf32> to vector<8x128xbf16>
    %c0_80 = arith.constant 0 : index
    %c1280_81 = arith.constant 1280 : index
    %193 = vector.load %arg10[%c0_80, %c1280_81] : memref<128x2560xbf16, #tpu.memory_space<vmem>>, vector<128x128xbf16>
    %cst_82 = arith.constant dense<0.000000e+00> : vector<8x128xf32>
    %194 = tpu.matmul %192, %193, %cst_82 {dimension_numbers = #tpu.dot_dimension_numbers<[1], [0], [0], [1], [0, 0, 1, 1], [], []>} : vector<8x128xbf16>, vector<128x128xbf16>, vector<8x128xf32> -> vector<8x128xf32>
    %c0_83 = arith.constant 0 : index
    %c2304 = arith.constant 2304 : index
    %195 = vector.load %arg11[%c0_83, %c2304] : memref<1x4608xf32, #tpu.memory_space<vmem>>, vector<1x128xf32>
    %196 = vector.broadcast %195 : vector<1x128xf32> to vector<8x128xf32>
    %197 = arith.addf %194, %196 : vector<8x128xf32>
    %cst_84 = arith.constant 5.000000e-01 : f32
    %198 = vector.broadcast %cst_84 : f32 to vector<8x128xf32>
    %199 = arith.mulf %198, %197 : vector<8x128xf32>
    %cst_85 = arith.constant 0.707106769 : f32
    %200 = vector.broadcast %cst_85 : f32 to vector<8x128xf32>
    %201 = arith.mulf %197, %200 : vector<8x128xf32>
    %202 = math.erf %201 : vector<8x128xf32>
    %cst_86 = arith.constant 1.000000e+00 : f32
    %203 = vector.broadcast %cst_86 : f32 to vector<8x128xf32>
    %204 = arith.addf %203, %202 : vector<8x128xf32>
    %205 = arith.mulf %199, %204 : vector<8x128xf32>
    %206 = arith.truncf %205 : vector<8x128xf32> to vector<8x128xbf16>
    %c0_87 = arith.constant 0 : index
    %c1408_88 = arith.constant 1408 : index
    %207 = vector.load %arg10[%c0_87, %c1408_88] : memref<128x2560xbf16, #tpu.memory_space<vmem>>, vector<128x128xbf16>
    %cst_89 = arith.constant dense<0.000000e+00> : vector<8x128xf32>
    %208 = tpu.matmul %206, %207, %cst_89 {dimension_numbers = #tpu.dot_dimension_numbers<[1], [0], [0], [1], [0, 0, 1, 1], [], []>} : vector<8x128xbf16>, vector<128x128xbf16>, vector<8x128xf32> -> vector<8x128xf32>
    %c0_90 = arith.constant 0 : index
    %c2432 = arith.constant 2432 : index
    %209 = vector.load %arg11[%c0_90, %c2432] : memref<1x4608xf32, #tpu.memory_space<vmem>>, vector<1x128xf32>
    %210 = vector.broadcast %209 : vector<1x128xf32> to vector<8x128xf32>
    %211 = arith.addf %208, %210 : vector<8x128xf32>
    %212 = arith.addf %211, %167 : vector<8x128xf32>
    %cst_91 = arith.constant dense<0.000000e+00> : vector<8xf32>
    %213 = vector.multi_reduction <add>, %212, %cst_91 [1] : vector<8x128xf32> to vector<8xf32>
    %214 = vector.shape_cast %213 : vector<8xf32> to vector<8x1xf32>
    %cst_92 = arith.constant 3.125000e-02 : f32
    %215 = vector.broadcast %cst_92 : f32 to vector<8x1xf32>
    %216 = arith.mulf %214, %215 : vector<8x1xf32>
    %217 = vector.broadcast %216 : vector<8x1xf32> to vector<8x128xf32>
    %218 = arith.subf %212, %217 : vector<8x128xf32>
    %219 = arith.mulf %218, %218 : vector<8x128xf32>
    %220 = vector.broadcast %4 : vector<1x128xf32> to vector<8x128xf32>
    %221 = arith.mulf %219, %220 : vector<8x128xf32>
    %cst_93 = arith.constant dense<0.000000e+00> : vector<8xf32>
    %222 = vector.multi_reduction <add>, %221, %cst_93 [1] : vector<8x128xf32> to vector<8xf32>
    %223 = vector.shape_cast %222 : vector<8xf32> to vector<8x1xf32>
    %cst_94 = arith.constant 3.125000e-02 : f32
    %224 = vector.broadcast %cst_94 : f32 to vector<8x1xf32>
    %225 = arith.mulf %223, %224 : vector<8x1xf32>
    %cst_95 = arith.constant 9.99999974E-6 : f32
    %226 = vector.broadcast %cst_95 : f32 to vector<8x1xf32>
    %227 = arith.addf %225, %226 : vector<8x1xf32>
    %228 = math.rsqrt %227 : vector<8x1xf32>
    %229 = vector.broadcast %228 : vector<8x1xf32> to vector<8x128xf32>
    %230 = arith.mulf %218, %229 : vector<8x128xf32>
    %c0_96 = arith.constant 0 : index
    %c2560 = arith.constant 2560 : index
    %231 = vector.load %arg11[%c0_96, %c2560] : memref<1x4608xf32, #tpu.memory_space<vmem>>, vector<1x128xf32>
    %232 = vector.broadcast %231 : vector<1x128xf32> to vector<8x128xf32>
    %233 = arith.mulf %230, %232 : vector<8x128xf32>
    %c0_97 = arith.constant 0 : index
    %c2688 = arith.constant 2688 : index
    %234 = vector.load %arg11[%c0_97, %c2688] : memref<1x4608xf32, #tpu.memory_space<vmem>>, vector<1x128xf32>
    %235 = vector.broadcast %234 : vector<1x128xf32> to vector<8x128xf32>
    %236 = arith.addf %233, %235 : vector<8x128xf32>
    %237 = arith.truncf %236 : vector<8x128xf32> to vector<8x128xbf16>
    %c0_98 = arith.constant 0 : index
    %c1536_99 = arith.constant 1536 : index
    %238 = vector.load %arg10[%c0_98, %c1536_99] : memref<128x2560xbf16, #tpu.memory_space<vmem>>, vector<128x128xbf16>
    %cst_100 = arith.constant dense<0.000000e+00> : vector<8x128xf32>
    %239 = tpu.matmul %237, %238, %cst_100 {dimension_numbers = #tpu.dot_dimension_numbers<[1], [0], [0], [1], [0, 0, 1, 1], [], []>} : vector<8x128xbf16>, vector<128x128xbf16>, vector<8x128xf32> -> vector<8x128xf32>
    %c0_101 = arith.constant 0 : index
    %c2816 = arith.constant 2816 : index
    %240 = vector.load %arg11[%c0_101, %c2816] : memref<1x4608xf32, #tpu.memory_space<vmem>>, vector<1x128xf32>
    %241 = vector.broadcast %240 : vector<1x128xf32> to vector<8x128xf32>
    %242 = arith.addf %239, %241 : vector<8x128xf32>
    %243 = arith.truncf %1 : vector<8x128xf32> to vector<8x128xbf16>
    %c0_102 = arith.constant 0 : index
    %c1664 = arith.constant 1664 : index
    %244 = vector.load %arg10[%c0_102, %c1664] : memref<128x2560xbf16, #tpu.memory_space<vmem>>, vector<128x256xbf16>
    %cst_103 = arith.constant dense<0.000000e+00> : vector<8x256xf32>
    %245 = tpu.matmul %243, %244, %cst_103 {dimension_numbers = #tpu.dot_dimension_numbers<[1], [0], [0], [1], [0, 0, 1, 1], [], []>} : vector<8x128xbf16>, vector<128x256xbf16>, vector<8x256xf32> -> vector<8x256xf32>
    %c0_104 = arith.constant 0 : index
    %c2944 = arith.constant 2944 : index
    %246 = vector.load %arg11[%c0_104, %c2944] : memref<1x4608xf32, #tpu.memory_space<vmem>>, vector<1x256xf32>
    %247 = vector.broadcast %246 : vector<1x256xf32> to vector<8x256xf32>
    %248 = arith.addf %245, %247 : vector<8x256xf32>
    %249 = vector.extract_strided_slice %248 {offsets = [0, 0], sizes = [8, 128], strides = [1, 1]} : vector<8x256xf32> to vector<8x128xf32>
    %250 = vector.extract_strided_slice %248 {offsets = [0, 128], sizes = [8, 128], strides = [1, 1]} : vector<8x256xf32> to vector<8x128xf32>
    %251 = tpu.concatenate %249, %249, %249, %249 in 0 : vector<8x128xf32>, vector<8x128xf32>, vector<8x128xf32>, vector<8x128xf32> -> vector<32x128xf32>
    %252 = arith.mulf %251, %6 : vector<32x128xf32>
    %253 = tpu.concatenate %250, %250, %250, %250 in 0 : vector<8x128xf32>, vector<8x128xf32>, vector<8x128xf32>, vector<8x128xf32> -> vector<32x128xf32>
    %254 = arith.mulf %253, %6 : vector<32x128xf32>
    %cst_105 = arith.constant 0.353553385 : f32
    %255 = vector.broadcast %cst_105 : f32 to vector<8x128xf32>
    %256 = arith.mulf %242, %255 : vector<8x128xf32>
    %cst_106 = arith.constant dense<0.000000e+00> : vector<8x32xf32>
    %257 = tpu.matmul %256, %252, %cst_106 {dimension_numbers = #tpu.dot_dimension_numbers<[1], [1], [0], [0], [0, 0, 1, 0], [], []>} : vector<8x128xf32>, vector<32x128xf32>, vector<8x32xf32> -> vector<8x32xf32>
    %258 = arith.addf %257, %3 : vector<8x32xf32>
    %cst_107 = arith.constant dense<0xFF800000> : vector<8xf32>
    %259 = vector.multi_reduction <maximumf>, %258, %cst_107 [1] : vector<8x32xf32> to vector<8xf32>
    %260 = vector.shape_cast %259 : vector<8xf32> to vector<8x1xf32>
    %261 = vector.broadcast %260 : vector<8x1xf32> to vector<8x32xf32>
    %262 = arith.subf %258, %261 : vector<8x32xf32>
    %263 = math.exp %262 : vector<8x32xf32>
    %cst_108 = arith.constant dense<0.000000e+00> : vector<8x32xf32>
    %264 = tpu.matmul %263, %8, %cst_108 {dimension_numbers = #tpu.dot_dimension_numbers<[1], [0], [0], [1], [0, 0, 1, 1], [], []>} : vector<8x32xf32>, vector<32x32xf32>, vector<8x32xf32> -> vector<8x32xf32>
    %265 = tpu.reciprocal %264 {approx = true} : vector<8x32xf32> -> vector<8x32xf32>
    %266 = arith.mulf %263, %265 : vector<8x32xf32>
    %cst_109 = arith.constant dense<0.000000e+00> : vector<8x128xf32>
    %267 = tpu.matmul %266, %254, %cst_109 {dimension_numbers = #tpu.dot_dimension_numbers<[1], [0], [0], [1], [0, 0, 1, 1], [], []>} : vector<8x32xf32>, vector<32x128xf32>, vector<8x128xf32> -> vector<8x128xf32>
    %268 = arith.truncf %267 : vector<8x128xf32> to vector<8x128xbf16>
    %c0_110 = arith.constant 0 : index
    %c1920_111 = arith.constant 1920 : index
    %269 = vector.load %arg10[%c0_110, %c1920_111] : memref<128x2560xbf16, #tpu.memory_space<vmem>>, vector<128x128xbf16>
    %cst_112 = arith.constant dense<0.000000e+00> : vector<8x128xf32>
    %270 = tpu.matmul %268, %269, %cst_112 {dimension_numbers = #tpu.dot_dimension_numbers<[1], [0], [0], [1], [0, 0, 1, 1], [], []>} : vector<8x128xbf16>, vector<128x128xbf16>, vector<8x128xf32> -> vector<8x128xf32>
    %c0_113 = arith.constant 0 : index
    %c3200 = arith.constant 3200 : index
    %271 = vector.load %arg11[%c0_113, %c3200] : memref<1x4608xf32, #tpu.memory_space<vmem>>, vector<1x128xf32>
    %272 = vector.broadcast %271 : vector<1x128xf32> to vector<8x128xf32>
    %273 = arith.addf %270, %272 : vector<8x128xf32>
    %274 = arith.addf %273, %212 : vector<8x128xf32>
    %cst_114 = arith.constant dense<0.000000e+00> : vector<8xf32>
    %275 = vector.multi_reduction <add>, %274, %cst_114 [1] : vector<8x128xf32> to vector<8xf32>
    %276 = vector.shape_cast %275 : vector<8xf32> to vector<8x1xf32>
    %cst_115 = arith.constant 3.125000e-02 : f32
    %277 = vector.broadcast %cst_115 : f32 to vector<8x1xf32>
    %278 = arith.mulf %276, %277 : vector<8x1xf32>
    %279 = vector.broadcast %278 : vector<8x1xf32> to vector<8x128xf32>
    %280 = arith.subf %274, %279 : vector<8x128xf32>
    %281 = arith.mulf %280, %280 : vector<8x128xf32>
    %282 = vector.broadcast %4 : vector<1x128xf32> to vector<8x128xf32>
    %283 = arith.mulf %281, %282 : vector<8x128xf32>
    %cst_116 = arith.constant dense<0.000000e+00> : vector<8xf32>
    %284 = vector.multi_reduction <add>, %283, %cst_116 [1] : vector<8x128xf32> to vector<8xf32>
    %285 = vector.shape_cast %284 : vector<8xf32> to vector<8x1xf32>
    %cst_117 = arith.constant 3.125000e-02 : f32
    %286 = vector.broadcast %cst_117 : f32 to vector<8x1xf32>
    %287 = arith.mulf %285, %286 : vector<8x1xf32>
    %cst_118 = arith.constant 9.99999974E-6 : f32
    %288 = vector.broadcast %cst_118 : f32 to vector<8x1xf32>
    %289 = arith.addf %287, %288 : vector<8x1xf32>
    %290 = math.rsqrt %289 : vector<8x1xf32>
    %291 = vector.broadcast %290 : vector<8x1xf32> to vector<8x128xf32>
    %292 = arith.mulf %280, %291 : vector<8x128xf32>
    %c0_119 = arith.constant 0 : index
    %c3328 = arith.constant 3328 : index
    %293 = vector.load %arg11[%c0_119, %c3328] : memref<1x4608xf32, #tpu.memory_space<vmem>>, vector<1x128xf32>
    %294 = vector.broadcast %293 : vector<1x128xf32> to vector<8x128xf32>
    %295 = arith.mulf %292, %294 : vector<8x128xf32>
    %c0_120 = arith.constant 0 : index
    %c3456 = arith.constant 3456 : index
    %296 = vector.load %arg11[%c0_120, %c3456] : memref<1x4608xf32, #tpu.memory_space<vmem>>, vector<1x128xf32>
    %297 = vector.broadcast %296 : vector<1x128xf32> to vector<8x128xf32>
    %298 = arith.addf %295, %297 : vector<8x128xf32>
    %299 = arith.truncf %298 : vector<8x128xf32> to vector<8x128xbf16>
    %c0_121 = arith.constant 0 : index
    %c2048_122 = arith.constant 2048 : index
    %300 = vector.load %arg10[%c0_121, %c2048_122] : memref<128x2560xbf16, #tpu.memory_space<vmem>>, vector<128x128xbf16>
    %cst_123 = arith.constant dense<0.000000e+00> : vector<8x128xf32>
    %301 = tpu.matmul %299, %300, %cst_123 {dimension_numbers = #tpu.dot_dimension_numbers<[1], [0], [0], [1], [0, 0, 1, 1], [], []>} : vector<8x128xbf16>, vector<128x128xbf16>, vector<8x128xf32> -> vector<8x128xf32>
    %c0_124 = arith.constant 0 : index
    %c3584 = arith.constant 3584 : index
    %302 = vector.load %arg11[%c0_124, %c3584] : memref<1x4608xf32, #tpu.memory_space<vmem>>, vector<1x128xf32>
    %303 = vector.broadcast %302 : vector<1x128xf32> to vector<8x128xf32>
    %304 = arith.addf %301, %303 : vector<8x128xf32>
    %cst_125 = arith.constant 5.000000e-01 : f32
    %305 = vector.broadcast %cst_125 : f32 to vector<8x128xf32>
    %306 = arith.mulf %305, %304 : vector<8x128xf32>
    %cst_126 = arith.constant 0.707106769 : f32
    %307 = vector.broadcast %cst_126 : f32 to vector<8x128xf32>
    %308 = arith.mulf %304, %307 : vector<8x128xf32>
    %309 = math.erf %308 : vector<8x128xf32>
    %cst_127 = arith.constant 1.000000e+00 : f32
    %310 = vector.broadcast %cst_127 : f32 to vector<8x128xf32>
    %311 = arith.addf %310, %309 : vector<8x128xf32>
    %312 = arith.mulf %306, %311 : vector<8x128xf32>
    %313 = arith.truncf %312 : vector<8x128xf32> to vector<8x128xbf16>
    %c0_128 = arith.constant 0 : index
    %c2176_129 = arith.constant 2176 : index
    %314 = vector.load %arg10[%c0_128, %c2176_129] : memref<128x2560xbf16, #tpu.memory_space<vmem>>, vector<128x128xbf16>
    %cst_130 = arith.constant dense<0.000000e+00> : vector<8x128xf32>
    %315 = tpu.matmul %313, %314, %cst_130 {dimension_numbers = #tpu.dot_dimension_numbers<[1], [0], [0], [1], [0, 0, 1, 1], [], []>} : vector<8x128xbf16>, vector<128x128xbf16>, vector<8x128xf32> -> vector<8x128xf32>
    %c0_131 = arith.constant 0 : index
    %c3712 = arith.constant 3712 : index
    %316 = vector.load %arg11[%c0_131, %c3712] : memref<1x4608xf32, #tpu.memory_space<vmem>>, vector<1x128xf32>
    %317 = vector.broadcast %316 : vector<1x128xf32> to vector<8x128xf32>
    %318 = arith.addf %315, %317 : vector<8x128xf32>
    %319 = arith.addf %318, %274 : vector<8x128xf32>
    %320 = arith.addf %319, %212 : vector<8x128xf32>
    %cst_132 = arith.constant dense<0.000000e+00> : vector<8xf32>
    %321 = vector.multi_reduction <add>, %320, %cst_132 [1] : vector<8x128xf32> to vector<8xf32>
    %322 = vector.shape_cast %321 : vector<8xf32> to vector<8x1xf32>
    %cst_133 = arith.constant 3.125000e-02 : f32
    %323 = vector.broadcast %cst_133 : f32 to vector<8x1xf32>
    %324 = arith.mulf %322, %323 : vector<8x1xf32>
    %325 = vector.broadcast %324 : vector<8x1xf32> to vector<8x128xf32>
    %326 = arith.subf %320, %325 : vector<8x128xf32>
    %327 = arith.mulf %326, %326 : vector<8x128xf32>
    %328 = vector.broadcast %4 : vector<1x128xf32> to vector<8x128xf32>
    %329 = arith.mulf %327, %328 : vector<8x128xf32>
    %cst_134 = arith.constant dense<0.000000e+00> : vector<8xf32>
    %330 = vector.multi_reduction <add>, %329, %cst_134 [1] : vector<8x128xf32> to vector<8xf32>
    %331 = vector.shape_cast %330 : vector<8xf32> to vector<8x1xf32>
    %cst_135 = arith.constant 3.125000e-02 : f32
    %332 = vector.broadcast %cst_135 : f32 to vector<8x1xf32>
    %333 = arith.mulf %331, %332 : vector<8x1xf32>
    %cst_136 = arith.constant 9.99999974E-6 : f32
    %334 = vector.broadcast %cst_136 : f32 to vector<8x1xf32>
    %335 = arith.addf %333, %334 : vector<8x1xf32>
    %336 = math.rsqrt %335 : vector<8x1xf32>
    %337 = vector.broadcast %336 : vector<8x1xf32> to vector<8x128xf32>
    %338 = arith.mulf %326, %337 : vector<8x128xf32>
    %c0_137 = arith.constant 0 : index
    %c3840 = arith.constant 3840 : index
    %339 = vector.load %arg11[%c0_137, %c3840] : memref<1x4608xf32, #tpu.memory_space<vmem>>, vector<1x128xf32>
    %340 = vector.broadcast %339 : vector<1x128xf32> to vector<8x128xf32>
    %341 = arith.mulf %338, %340 : vector<8x128xf32>
    %c0_138 = arith.constant 0 : index
    %c3968 = arith.constant 3968 : index
    %342 = vector.load %arg11[%c0_138, %c3968] : memref<1x4608xf32, #tpu.memory_space<vmem>>, vector<1x128xf32>
    %343 = vector.broadcast %342 : vector<1x128xf32> to vector<8x128xf32>
    %344 = arith.addf %341, %343 : vector<8x128xf32>
    %345 = arith.truncf %344 : vector<8x128xf32> to vector<8x128xbf16>
    %c0_139 = arith.constant 0 : index
    %c2304_140 = arith.constant 2304 : index
    %346 = vector.load %arg10[%c0_139, %c2304_140] : memref<128x2560xbf16, #tpu.memory_space<vmem>>, vector<128x128xbf16>
    %cst_141 = arith.constant dense<0.000000e+00> : vector<8x128xf32>
    %347 = tpu.matmul %345, %346, %cst_141 {dimension_numbers = #tpu.dot_dimension_numbers<[1], [0], [0], [1], [0, 0, 1, 1], [], []>} : vector<8x128xbf16>, vector<128x128xbf16>, vector<8x128xf32> -> vector<8x128xf32>
    %c0_142 = arith.constant 0 : index
    %c4096 = arith.constant 4096 : index
    %348 = vector.load %arg11[%c0_142, %c4096] : memref<1x4608xf32, #tpu.memory_space<vmem>>, vector<1x128xf32>
    %349 = vector.broadcast %348 : vector<1x128xf32> to vector<8x128xf32>
    %350 = arith.addf %347, %349 : vector<8x128xf32>
    %cst_143 = arith.constant 5.000000e-01 : f32
    %351 = vector.broadcast %cst_143 : f32 to vector<8x128xf32>
    %352 = arith.mulf %351, %350 : vector<8x128xf32>
    %cst_144 = arith.constant 0.707106769 : f32
    %353 = vector.broadcast %cst_144 : f32 to vector<8x128xf32>
    %354 = arith.mulf %350, %353 : vector<8x128xf32>
    %355 = math.erf %354 : vector<8x128xf32>
    %cst_145 = arith.constant 1.000000e+00 : f32
    %356 = vector.broadcast %cst_145 : f32 to vector<8x128xf32>
    %357 = arith.addf %356, %355 : vector<8x128xf32>
    %358 = arith.mulf %352, %357 : vector<8x128xf32>
    %cst_146 = arith.constant dense<0.000000e+00> : vector<8xf32>
    %359 = vector.multi_reduction <add>, %358, %cst_146 [1] : vector<8x128xf32> to vector<8xf32>
    %360 = vector.shape_cast %359 : vector<8xf32> to vector<8x1xf32>
    %cst_147 = arith.constant 3.125000e-02 : f32
    %361 = vector.broadcast %cst_147 : f32 to vector<8x1xf32>
    %362 = arith.mulf %360, %361 : vector<8x1xf32>
    %363 = vector.broadcast %362 : vector<8x1xf32> to vector<8x128xf32>
    %364 = arith.subf %358, %363 : vector<8x128xf32>
    %365 = arith.mulf %364, %364 : vector<8x128xf32>
    %366 = vector.broadcast %4 : vector<1x128xf32> to vector<8x128xf32>
    %367 = arith.mulf %365, %366 : vector<8x128xf32>
    %cst_148 = arith.constant dense<0.000000e+00> : vector<8xf32>
    %368 = vector.multi_reduction <add>, %367, %cst_148 [1] : vector<8x128xf32> to vector<8xf32>
    %369 = vector.shape_cast %368 : vector<8xf32> to vector<8x1xf32>
    %cst_149 = arith.constant 3.125000e-02 : f32
    %370 = vector.broadcast %cst_149 : f32 to vector<8x1xf32>
    %371 = arith.mulf %369, %370 : vector<8x1xf32>
    %cst_150 = arith.constant 9.99999974E-6 : f32
    %372 = vector.broadcast %cst_150 : f32 to vector<8x1xf32>
    %373 = arith.addf %371, %372 : vector<8x1xf32>
    %374 = math.rsqrt %373 : vector<8x1xf32>
    %375 = vector.broadcast %374 : vector<8x1xf32> to vector<8x128xf32>
    %376 = arith.mulf %364, %375 : vector<8x128xf32>
    %c0_151 = arith.constant 0 : index
    %c4224 = arith.constant 4224 : index
    %377 = vector.load %arg11[%c0_151, %c4224] : memref<1x4608xf32, #tpu.memory_space<vmem>>, vector<1x128xf32>
    %378 = vector.broadcast %377 : vector<1x128xf32> to vector<8x128xf32>
    %379 = arith.mulf %376, %378 : vector<8x128xf32>
    %c0_152 = arith.constant 0 : index
    %c4352 = arith.constant 4352 : index
    %380 = vector.load %arg11[%c0_152, %c4352] : memref<1x4608xf32, #tpu.memory_space<vmem>>, vector<1x128xf32>
    %381 = vector.broadcast %380 : vector<1x128xf32> to vector<8x128xf32>
    %382 = arith.addf %379, %381 : vector<8x128xf32>
    %383 = arith.truncf %382 : vector<8x128xf32> to vector<8x128xbf16>
    %c0_153 = arith.constant 0 : index
    %c2432_154 = arith.constant 2432 : index
    %384 = vector.load %arg10[%c0_153, %c2432_154] : memref<128x2560xbf16, #tpu.memory_space<vmem>>, vector<128x128xbf16>
    %cst_155 = arith.constant dense<0.000000e+00> : vector<8x128xf32>
    %385 = tpu.matmul %383, %384, %cst_155 {dimension_numbers = #tpu.dot_dimension_numbers<[1], [0], [0], [1], [0, 0, 1, 1], [], []>} : vector<8x128xbf16>, vector<128x128xbf16>, vector<8x128xf32> -> vector<8x128xf32>
    %c0_156 = arith.constant 0 : index
    %c4480 = arith.constant 4480 : index
    %386 = vector.load %arg11[%c0_156, %c4480] : memref<1x4608xf32, #tpu.memory_space<vmem>>, vector<1x128xf32>
    %387 = vector.broadcast %386 : vector<1x128xf32> to vector<8x128xf32>
    %388 = arith.addf %385, %387 : vector<8x128xf32>
    %389 = arith.truncf %388 : vector<8x128xf32> to vector<8x128xbf16>
    %c0_157 = arith.constant 0 : index
    %c0_158 = arith.constant 0 : index
    %390 = vector.load %arg12[%c0_157, %c0_158] : memref<8x128xbf16, #tpu.memory_space<vmem>>, vector<8x128xbf16>
    tpu.vector_store %arg12[%c0_157, %c0_158], %389 {strides = array<i32>} : memref<8x128xbf16, #tpu.memory_space<vmem>>, vector<8x128xbf16>,
    return
  }
  func.func @transform_0(%arg0: i32) -> (i32, i32) {
    %c0_i32 = arith.constant 0 : i32
    %c0_i32_0 = arith.constant 0 : i32
    return %arg0, %c0_i32 : i32, i32
  }
  func.func @transform_1(%arg0: i32) -> (i32, i32) {
    %c0_i32 = arith.constant 0 : i32
    %c0_i32_0 = arith.constant 0 : i32
    return %arg0, %c0_i32 : i32, i32
  }
  func.func @transform_2(%arg0: i32) -> (i32, i32) {
    %c0_i32 = arith.constant 0 : i32
    %c0_i32_0 = arith.constant 0 : i32
    return %arg0, %c0_i32 : i32, i32
  }
  func.func @transform_3(%arg0: i32) -> (i32, i32) {
    %c0_i32 = arith.constant 0 : i32
    %c0_i32_0 = arith.constant 0 : i32
    return %arg0, %c0_i32 : i32, i32
  }
  func.func @transform_4(%arg0: i32) -> (i32, i32) {
    %c0_i32 = arith.constant 0 : i32
    %c0_i32_0 = arith.constant 0 : i32
    %c0_i32_1 = arith.constant 0 : i32
    return %c0_i32, %c0_i32_0 : i32, i32
  }
  func.func @transform_5(%arg0: i32) -> (i32, i32) {
    %c0_i32 = arith.constant 0 : i32
    %c0_i32_0 = arith.constant 0 : i32
    %c0_i32_1 = arith.constant 0 : i32
    return %c0_i32, %c0_i32_0 : i32, i32
  }
  func.func @transform_6(%arg0: i32) -> (i32, i32) {
    %c0_i32 = arith.constant 0 : i32
    %c0_i32_0 = arith.constant 0 : i32
    %c0_i32_1 = arith.constant 0 : i32
    return %c0_i32, %c0_i32_0 : i32, i32
  }
  func.func @transform_7(%arg0: i32) -> (i32, i32) {
    %c0_i32 = arith.constant 0 : i32
    %c0_i32_0 = arith.constant 0 : i32
    %c0_i32_1 = arith.constant 0 : i32
    return %c0_i32, %c0_i32_0 : i32, i32
  }
  func.func @transform_8(%arg0: i32) -> (i32, i32) {
    %c0_i32 = arith.constant 0 : i32
    %c0_i32_0 = arith.constant 0 : i32
    %c0_i32_1 = arith.constant 0 : i32
    return %c0_i32, %c0_i32_0 : i32, i32
  }
  func.func @transform_9(%arg0: i32) -> (i32, i32) {
    %c0_i32 = arith.constant 0 : i32
    %c0_i32_0 = arith.constant 0 : i32
    %c0_i32_1 = arith.constant 0 : i32
    return %c0_i32, %c0_i32_0 : i32, i32
  }
  func.func @transform_10(%arg0: i32) -> (i32, i32) {
    %c0_i32 = arith.constant 0 : i32
    %c0_i32_0 = arith.constant 0 : i32
    %c0_i32_1 = arith.constant 0 : i32
    return %c0_i32, %c0_i32_0 : i32, i32
  }
  func.func @transform_11(%arg0: i32) -> (i32, i32) {
    %c0_i32 = arith.constant 0 : i32
    %c0_i32_0 = arith.constant 0 : i32
    return %arg0, %c0_i32 : i32, i32
  }
}

module attributes {stable_mosaic.version = 11 : i64} {
  func.func @_fused_forward_kernel(%arg0: i32, %arg1: memref<8x128xf32, #tpu.memory_space<vmem>>, %arg2: memref<8x128xf32, #tpu.memory_space<vmem>>, %arg3: memref<8x32xf32, #tpu.memory_space<vmem>>, %arg4: memref<8x32xf32, #tpu.memory_space<vmem>>, %arg5: memref<1x128xf32, #tpu.memory_space<vmem>>, %arg6: memref<32x128xf32, #tpu.memory_space<vmem>>, %arg7: memref<32x128xf32, #tpu.memory_space<vmem>>, %arg8: memref<32x32xf32, #tpu.memory_space<vmem>>, %arg9: memref<32x32xf32, #tpu.memory_space<vmem>>, %arg10: memref<128x2560xbf16, #tpu.memory_space<vmem>>, %arg11: memref<1x4608xf32, #tpu.memory_space<vmem>>, %arg12: memref<8x128xbf16, #tpu.memory_space<vmem>>) attributes {dimension_semantics = [#tpu.dimension_semantics<parallel>], iteration_bounds = array<i64: 2>, scalar_prefetch = 0 : i64, scratch_operands = 0 : i64, tpu.core_type = #tpu.core_type<tc>, window_params = [{transform_indices = @transform_0, window_bounds = array<i64: 8, 128>}, {transform_indices = @transform_1, window_bounds = array<i64: 8, 128>}, {transform_indices = @transform_2, window_bounds = array<i64: 8, 32>}, {transform_indices = @transform_3, window_bounds = array<i64: 8, 32>}, {pipeline_mode = #tpu.pipeline_mode<synchronous>, transform_indices = @transform_4, window_bounds = array<i64: 1, 128>}, {pipeline_mode = #tpu.pipeline_mode<synchronous>, transform_indices = @transform_5, window_bounds = array<i64: 32, 128>}, {pipeline_mode = #tpu.pipeline_mode<synchronous>, transform_indices = @transform_6, window_bounds = array<i64: 32, 128>}, {pipeline_mode = #tpu.pipeline_mode<synchronous>, transform_indices = @transform_7, window_bounds = array<i64: 32, 32>}, {pipeline_mode = #tpu.pipeline_mode<synchronous>, transform_indices = @transform_8, window_bounds = array<i64: 32, 32>}, {pipeline_mode = #tpu.pipeline_mode<synchronous>, transform_indices = @transform_9, window_bounds = array<i64: 128, 2560>}, {pipeline_mode = #tpu.pipeline_mode<synchronous>, transform_indices = @transform_10, window_bounds = array<i64: 1, 4608>}, {transform_indices = @transform_11, window_bounds = array<i64: 8, 128>}]} {
    %c0 = arith.constant 0 : index
    %c0_0 = arith.constant 0 : index
    %0 = vector.load %arg1[%c0, %c0_0] : memref<8x128xf32, #tpu.memory_space<vmem>>, vector<8x128xf32>
    %c0_1 = arith.constant 0 : index
    %c0_2 = arith.constant 0 : index
    %1 = vector.load %arg2[%c0_1, %c0_2] : memref<8x128xf32, #tpu.memory_space<vmem>>, vector<8x128xf32>
    %c0_3 = arith.constant 0 : index
    %c0_4 = arith.constant 0 : index
    %2 = vector.load %arg3[%c0_3, %c0_4] : memref<8x32xf32, #tpu.memory_space<vmem>>, vector<8x32xf32>
    %c0_5 = arith.constant 0 : index
    %c0_6 = arith.constant 0 : index
    %3 = vector.load %arg4[%c0_5, %c0_6] : memref<8x32xf32, #tpu.memory_space<vmem>>, vector<8x32xf32>
    %c0_7 = arith.constant 0 : index
    %c0_8 = arith.constant 0 : index
    %4 = vector.load %arg5[%c0_7, %c0_8] : memref<1x128xf32, #tpu.memory_space<vmem>>, vector<1x128xf32>
    %c0_9 = arith.constant 0 : index
    %c0_10 = arith.constant 0 : index
    %5 = vector.load %arg6[%c0_9, %c0_10] : memref<32x128xf32, #tpu.memory_space<vmem>>, vector<32x128xf32>
    %c0_11 = arith.constant 0 : index
    %c0_12 = arith.constant 0 : index
    %6 = vector.load %arg7[%c0_11, %c0_12] : memref<32x128xf32, #tpu.memory_space<vmem>>, vector<32x128xf32>
    %c0_13 = arith.constant 0 : index
    %c0_14 = arith.constant 0 : index
    %7 = vector.load %arg8[%c0_13, %c0_14] : memref<32x32xf32, #tpu.memory_space<vmem>>, vector<32x32xf32>
    %c0_15 = arith.constant 0 : index
    %c0_16 = arith.constant 0 : index
    %8 = vector.load %arg9[%c0_15, %c0_16] : memref<32x32xf32, #tpu.memory_space<vmem>>, vector<32x32xf32>
    %cst = arith.constant dense<0.000000e+00> : vector<8xf32>
    %9 = vector.multi_reduction <add>, %0, %cst [1] : vector<8x128xf32> to vector<8xf32>
    %10 = vector.shape_cast %9 : vector<8xf32> to vector<8x1xf32>
    %cst_17 = arith.constant 3.125000e-02 : f32
    %11 = vector.broadcast %cst_17 : f32 to vector<8x1xf32>
    %12 = arith.mulf %10, %11 : vector<8x1xf32>
    %13 = vector.broadcast %12 : vector<8x1xf32> to vector<8x128xf32>
    %14 = arith.subf %0, %13 : vector<8x128xf32>
    %15 = arith.mulf %14, %14 : vector<8x128xf32>
    %16 = vector.broadcast %4 : vector<1x128xf32> to vector<8x128xf32>
    %17 = arith.mulf %15, %16 : vector<8x128xf32>
    %cst_18 = arith.constant dense<0.000000e+00> : vector<8xf32>
    %18 = vector.multi_reduction <add>, %17, %cst_18 [1] : vector<8x128xf32> to vector<8xf32>
    %19 = vector.shape_cast %18 : vector<8xf32> to vector<8x1xf32>
    %cst_19 = arith.constant 3.125000e-02 : f32
    %20 = vector.broadcast %cst_19 : f32 to vector<8x1xf32>
    %21 = arith.mulf %19, %20 : vector<8x1xf32>
    %cst_20 = arith.constant 9.99999974E-6 : f32
    %22 = vector.broadcast %cst_20 : f32 to vector<8x1xf32>
    %23 = arith.addf %21, %22 : vector<8x1xf32>
    %24 = math.rsqrt %23 : vector<8x1xf32>
    %25 = vector.broadcast %24 : vector<8x1xf32> to vector<8x128xf32>
    %26 = arith.mulf %14, %25 : vector<8x128xf32>
    %c0_21 = arith.constant 0 : index
    %c0_22 = arith.constant 0 : index
    %27 = vector.load %arg11[%c0_21, %c0_22] : memref<1x4608xf32, #tpu.memory_space<vmem>>, vector<1x128xf32>
    %28 = vector.broadcast %27 : vector<1x128xf32> to vector<8x128xf32>
    %29 = arith.mulf %26, %28 : vector<8x128xf32>
    %c0_23 = arith.constant 0 : index
    %c128 = arith.constant 128 : index
    %30 = vector.load %arg11[%c0_23, %c128] : memref<1x4608xf32, #tpu.memory_space<vmem>>, vector<1x128xf32>
    %31 = vector.broadcast %30 : vector<1x128xf32> to vector<8x128xf32>
    %32 = arith.addf %29, %31 : vector<8x128xf32>
    %33 = arith.truncf %32 : vector<8x128xf32> to vector<8x128xbf16>
    %c0_24 = arith.constant 0 : index
    %c0_25 = arith.constant 0 : index
    %34 = vector.load %arg10[%c0_24, %c0_25] : memref<128x2560xbf16, #tpu.memory_space<vmem>>, vector<128x384xbf16>
    %cst_26 = arith.constant dense<0.000000e+00> : vector<8x384xf32>
    %35 = tpu.matmul %33, %34, %cst_26 {dimension_numbers = #tpu.dot_dimension_numbers<[1], [0], [0], [1], [0, 0, 1, 1], [], []>} : vector<8x128xbf16>, vector<128x384xbf16>, vector<8x384xf32> -> vector<8x384xf32>
    %c0_27 = arith.constant 0 : index
    %c256 = arith.constant 256 : index
    %36 = vector.load %arg11[%c0_27, %c256] : memref<1x4608xf32, #tpu.memory_space<vmem>>, vector<1x384xf32>
    %37 = vector.broadcast %36 : vector<1x384xf32> to vector<8x384xf32>
    %38 = arith.addf %35, %37 : vector<8x384xf32>
    %39 = vector.extract_strided_slice %38 {offsets = [0, 0], sizes = [8, 128], strides = [1, 1]} : vector<8x384xf32> to vector<8x128xf32>
    %40 = vector.extract_strided_slice %38 {offsets = [0, 128], sizes = [8, 128], strides = [1, 1]} : vector<8x384xf32> to vector<8x128xf32>
    %41 = vector.extract_strided_slice %38 {offsets = [0, 256], sizes = [8, 128], strides = [1, 1]} : vector<8x384xf32> to vector<8x128xf32>
    %42 = tpu.concatenate %40, %40, %40, %40 in 0 : vector<8x128xf32>, vector<8x128xf32>, vector<8x128xf32>, vector<8x128xf32> -> vector<32x128xf32>
    %43 = arith.mulf %42, %5 : vector<32x128xf32>
    %44 = tpu.concatenate %41, %41, %41, %41 in 0 : vector<8x128xf32>, vector<8x128xf32>, vector<8x128xf32>, vector<8x128xf32> -> vector<32x128xf32>
    %45 = arith.mulf %44, %5 : vector<32x128xf32>
    %cst_28 = arith.constant 0.353553385 : f32
    %46 = vector.broadcast %cst_28 : f32 to vector<8x128xf32>
    %47 = arith.mulf %39, %46 : vector<8x128xf32>
    %cst_29 = arith.constant dense<0.000000e+00> : vector<8x32xf32>
    %48 = tpu.matmul %47, %43, %cst_29 {dimension_numbers = #tpu.dot_dimension_numbers<[1], [1], [0], [0], [0, 0, 1, 0], [], []>} : vector<8x128xf32>, vector<32x128xf32>, vector<8x32xf32> -> vector<8x32xf32>
    %49 = arith.addf %48, %2 : vector<8x32xf32>
    %cst_30 = arith.constant dense<0xFF800000> : vector<8xf32>
    %50 = vector.multi_reduction <maximumf>, %49, %cst_30 [1] : vector<8x32xf32> to vector<8xf32>
    %51 = vector.shape_cast %50 : vector<8xf32> to vector<8x1xf32>
    %52 = vector.broadcast %51 : vector<8x1xf32> to vector<8x32xf32>
    %53 = arith.subf %49, %52 : vector<8x32xf32>
    %54 = math.exp %53 : vector<8x32xf32>
    %cst_31 = arith.constant dense<0.000000e+00> : vector<8x32xf32>
    %55 = tpu.matmul %54, %7, %cst_31 {dimension_numbers = #tpu.dot_dimension_numbers<[1], [0], [0], [1], [0, 0, 1, 1], [], []>} : vector<8x32xf32>, vector<32x32xf32>, vector<8x32xf32> -> vector<8x32xf32>
    %56 = tpu.reciprocal %55 {approx = true} : vector<8x32xf32> -> vector<8x32xf32>
    %57 = arith.mulf %54, %56 : vector<8x32xf32>
    %cst_32 = arith.constant dense<0.000000e+00> : vector<8x128xf32>
    %58 = tpu.matmul %57, %45, %cst_32 {dimension_numbers = #tpu.dot_dimension_numbers<[1], [0], [0], [1], [0, 0, 1, 1], [], []>} : vector<8x32xf32>, vector<32x128xf32>, vector<8x128xf32> -> vector<8x128xf32>
    %59 = arith.truncf %58 : vector<8x128xf32> to vector<8x128xbf16>
    %c0_33 = arith.constant 0 : index
    %c384 = arith.constant 384 : index
    %60 = vector.load %arg10[%c0_33, %c384] : memref<128x2560xbf16, #tpu.memory_space<vmem>>, vector<128x128xbf16>
    %cst_34 = arith.constant dense<0.000000e+00> : vector<8x128xf32>
    %61 = tpu.matmul %59, %60, %cst_34 {dimension_numbers = #tpu.dot_dimension_numbers<[1], [0], [0], [1], [0, 0, 1, 1], [], []>} : vector<8x128xbf16>, vector<128x128xbf16>, vector<8x128xf32> -> vector<8x128xf32>
    %c0_35 = arith.constant 0 : index
    %c640 = arith.constant 640 : index
    %62 = vector.load %arg11[%c0_35, %c640] : memref<1x4608xf32, #tpu.memory_space<vmem>>, vector<1x128xf32>
    %63 = vector.broadcast %62 : vector<1x128xf32> to vector<8x128xf32>
    %64 = arith.addf %61, %63 : vector<8x128xf32>
    %65 = arith.addf %64, %0 : vector<8x128xf32>
    %cst_36 = arith.constant dense<0.000000e+00> : vector<8xf32>
    %66 = vector.multi_reduction <add>, %65, %cst_36 [1] : vector<8x128xf32> to vector<8xf32>
    %67 = vector.shape_cast %66 : vector<8xf32> to vector<8x1xf32>
    %cst_37 = arith.constant 3.125000e-02 : f32
    %68 = vector.broadcast %cst_37 : f32 to vector<8x1xf32>
    %69 = arith.mulf %67, %68 : vector<8x1xf32>
    %70 = vector.broadcast %69 : vector<8x1xf32> to vector<8x128xf32>
    %71 = arith.subf %65, %70 : vector<8x128xf32>
    %72 = arith.mulf %71, %71 : vector<8x128xf32>
    %73 = vector.broadcast %4 : vector<1x128xf32> to vector<8x128xf32>
    %74 = arith.mulf %72, %73 : vector<8x128xf32>
    %cst_38 = arith.constant dense<0.000000e+00> : vector<8xf32>
    %75 = vector.multi_reduction <add>, %74, %cst_38 [1] : vector<8x128xf32> to vector<8xf32>
    %76 = vector.shape_cast %75 : vector<8xf32> to vector<8x1xf32>
    %cst_39 = arith.constant 3.125000e-02 : f32
    %77 = vector.broadcast %cst_39 : f32 to vector<8x1xf32>
    %78 = arith.mulf %76, %77 : vector<8x1xf32>
    %cst_40 = arith.constant 9.99999974E-6 : f32
    %79 = vector.broadcast %cst_40 : f32 to vector<8x1xf32>
    %80 = arith.addf %78, %79 : vector<8x1xf32>
    %81 = math.rsqrt %80 : vector<8x1xf32>
    %82 = vector.broadcast %81 : vector<8x1xf32> to vector<8x128xf32>
    %83 = arith.mulf %71, %82 : vector<8x128xf32>
    %c0_41 = arith.constant 0 : index
    %c768 = arith.constant 768 : index
    %84 = vector.load %arg11[%c0_41, %c768] : memref<1x4608xf32, #tpu.memory_space<vmem>>, vector<1x128xf32>
    %85 = vector.broadcast %84 : vector<1x128xf32> to vector<8x128xf32>
    %86 = arith.mulf %83, %85 : vector<8x128xf32>
    %c0_42 = arith.constant 0 : index
    %c896 = arith.constant 896 : index
    %87 = vector.load %arg11[%c0_42, %c896] : memref<1x4608xf32, #tpu.memory_space<vmem>>, vector<1x128xf32>
    %88 = vector.broadcast %87 : vector<1x128xf32> to vector<8x128xf32>
    %89 = arith.addf %86, %88 : vector<8x128xf32>
    %90 = arith.truncf %89 : vector<8x128xf32> to vector<8x128xbf16>
    %c0_43 = arith.constant 0 : index
    %c512 = arith.constant 512 : index
    %91 = vector.load %arg10[%c0_43, %c512] : memref<128x2560xbf16, #tpu.memory_space<vmem>>, vector<128x128xbf16>
    %cst_44 = arith.constant dense<0.000000e+00> : vector<8x128xf32>
    %92 = tpu.matmul %90, %91, %cst_44 {dimension_numbers = #tpu.dot_dimension_numbers<[1], [0], [0], [1], [0, 0, 1, 1], [], []>} : vector<8x128xbf16>, vector<128x128xbf16>, vector<8x128xf32> -> vector<8x128xf32>
    %c0_45 = arith.constant 0 : index
    %c1024 = arith.constant 1024 : index
    %93 = vector.load %arg11[%c0_45, %c1024] : memref<1x4608xf32, #tpu.memory_space<vmem>>, vector<1x128xf32>
    %94 = vector.broadcast %93 : vector<1x128xf32> to vector<8x128xf32>
    %95 = arith.addf %92, %94 : vector<8x128xf32>
    %cst_46 = arith.constant 5.000000e-01 : f32
    %96 = vector.broadcast %cst_46 : f32 to vector<8x128xf32>
    %97 = arith.mulf %96, %95 : vector<8x128xf32>
    %cst_47 = arith.constant 0.707106769 : f32
    %98 = vector.broadcast %cst_47 : f32 to vector<8x128xf32>
    %99 = arith.mulf %95, %98 : vector<8x128xf32>
    %100 = math.erf %99 : vector<8x128xf32>
    %cst_48 = arith.constant 1.000000e+00 : f32
    %101 = vector.broadcast %cst_48 : f32 to vector<8x128xf32>
    %102 = arith.addf %101, %100 : vector<8x128xf32>
    %103 = arith.mulf %97, %102 : vector<8x128xf32>
    %104 = arith.truncf %103 : vector<8x128xf32> to vector<8x128xbf16>
    %c0_49 = arith.constant 0 : index
    %c640_50 = arith.constant 640 : index
    %105 = vector.load %arg10[%c0_49, %c640_50] : memref<128x2560xbf16, #tpu.memory_space<vmem>>, vector<128x128xbf16>
    %cst_51 = arith.constant dense<0.000000e+00> : vector<8x128xf32>
    %106 = tpu.matmul %104, %105, %cst_51 {dimension_numbers = #tpu.dot_dimension_numbers<[1], [0], [0], [1], [0, 0, 1, 1], [], []>} : vector<8x128xbf16>, vector<128x128xbf16>, vector<8x128xf32> -> vector<8x128xf32>
    %c0_52 = arith.constant 0 : index
    %c1152 = arith.constant 1152 : index
    %107 = vector.load %arg11[%c0_52, %c1152] : memref<1x4608xf32, #tpu.memory_space<vmem>>, vector<1x128xf32>
    %108 = vector.broadcast %107 : vector<1x128xf32> to vector<8x128xf32>
    %109 = arith.addf %106, %108 : vector<8x128xf32>
    %110 = arith.addf %109, %65 : vector<8x128xf32>
    %cst_53 = arith.constant dense<0.000000e+00> : vector<8xf32>
    %111 = vector.multi_reduction <add>, %110, %cst_53 [1] : vector<8x128xf32> to vector<8xf32>
    %112 = vector.shape_cast %111 : vector<8xf32> to vector<8x1xf32>
    %cst_54 = arith.constant 3.125000e-02 : f32
    %113 = vector.broadcast %cst_54 : f32 to vector<8x1xf32>
    %114 = arith.mulf %112, %113 : vector<8x1xf32>
    %115 = vector.broadcast %114 : vector<8x1xf32> to vector<8x128xf32>
    %116 = arith.subf %110, %115 : vector<8x128xf32>
    %117 = arith.mulf %116, %116 : vector<8x128xf32>
    %118 = vector.broadcast %4 : vector<1x128xf32> to vector<8x128xf32>
    %119 = arith.mulf %117, %118 : vector<8x128xf32>
    %cst_55 = arith.constant dense<0.000000e+00> : vector<8xf32>
    %120 = vector.multi_reduction <add>, %119, %cst_55 [1] : vector<8x128xf32> to vector<8xf32>
    %121 = vector.shape_cast %120 : vector<8xf32> to vector<8x1xf32>
    %cst_56 = arith.constant 3.125000e-02 : f32
    %122 = vector.broadcast %cst_56 : f32 to vector<8x1xf32>
    %123 = arith.mulf %121, %122 : vector<8x1xf32>
    %cst_57 = arith.constant 9.99999974E-6 : f32
    %124 = vector.broadcast %cst_57 : f32 to vector<8x1xf32>
    %125 = arith.addf %123, %124 : vector<8x1xf32>
    %126 = math.rsqrt %125 : vector<8x1xf32>
    %127 = vector.broadcast %126 : vector<8x1xf32> to vector<8x128xf32>
    %128 = arith.mulf %116, %127 : vector<8x128xf32>
    %c0_58 = arith.constant 0 : index
    %c1280 = arith.constant 1280 : index
    %129 = vector.load %arg11[%c0_58, %c1280] : memref<1x4608xf32, #tpu.memory_space<vmem>>, vector<1x128xf32>
    %130 = vector.broadcast %129 : vector<1x128xf32> to vector<8x128xf32>
    %131 = arith.mulf %128, %130 : vector<8x128xf32>
    %c0_59 = arith.constant 0 : index
    %c1408 = arith.constant 1408 : index
    %132 = vector.load %arg11[%c0_59, %c1408] : memref<1x4608xf32, #tpu.memory_space<vmem>>, vector<1x128xf32>
    %133 = vector.broadcast %132 : vector<1x128xf32> to vector<8x128xf32>
    %134 = arith.addf %131, %133 : vector<8x128xf32>
    %135 = arith.truncf %134 : vector<8x128xf32> to vector<8x128xbf16>
    %c0_60 = arith.constant 0 : index
    %c768_61 = arith.constant 768 : index
    %136 = vector.load %arg10[%c0_60, %c768_61] : memref<128x2560xbf16, #tpu.memory_space<vmem>>, vector<128x384xbf16>
    %cst_62 = arith.constant dense<0.000000e+00> : vector<8x384xf32>
    %137 = tpu.matmul %135, %136, %cst_62 {dimension_numbers = #tpu.dot_dimension_numbers<[1], [0], [0], [1], [0, 0, 1, 1], [], []>} : vector<8x128xbf16>, vector<128x384xbf16>, vector<8x384xf32> -> vector<8x384xf32>
    %c0_63 = arith.constant 0 : index
    %c1536 = arith.constant 1536 : index
    %138 = vector.load %arg11[%c0_63, %c1536] : memref<1x4608xf32, #tpu.memory_space<vmem>>, vector<1x384xf32>
    %139 = vector.broadcast %138 : vector<1x384xf32> to vector<8x384xf32>
    %140 = arith.addf %137, %139 : vector<8x384xf32>
    %141 = vector.extract_strided_slice %140 {offsets = [0, 0], sizes = [8, 128], strides = [1, 1]} : vector<8x384xf32> to vector<8x128xf32>
    %142 = vector.extract_strided_slice %140 {offsets = [0, 128], sizes = [8, 128], strides = [1, 1]} : vector<8x384xf32> to vector<8x128xf32>
    %143 = vector.extract_strided_slice %140 {offsets = [0, 256], sizes = [8, 128], strides = [1, 1]} : vector<8x384xf32> to vector<8x128xf32>
    %144 = tpu.concatenate %142, %142, %142, %142 in 0 : vector<8x128xf32>, vector<8x128xf32>, vector<8x128xf32>, vector<8x128xf32> -> vector<32x128xf32>
    %145 = arith.mulf %144, %5 : vector<32x128xf32>
    %146 = tpu.concatenate %143, %143, %143, %143 in 0 : vector<8x128xf32>, vector<8x128xf32>, vector<8x128xf32>, vector<8x128xf32> -> vector<32x128xf32>
    %147 = arith.mulf %146, %5 : vector<32x128xf32>
    %cst_64 = arith.constant 0.353553385 : f32
    %148 = vector.broadcast %cst_64 : f32 to vector<8x128xf32>
    %149 = arith.mulf %141, %148 : vector<8x128xf32>
    %cst_65 = arith.constant dense<0.000000e+00> : vector<8x32xf32>
    %150 = tpu.matmul %149, %145, %cst_65 {dimension_numbers = #tpu.dot_dimension_numbers<[1], [1], [0], [0], [0, 0, 1, 0], [], []>} : vector<8x128xf32>, vector<32x128xf32>, vector<8x32xf32> -> vector<8x32xf32>
    %151 = arith.addf %150, %2 : vector<8x32xf32>
    %cst_66 = arith.constant dense<0xFF800000> : vector<8xf32>
    %152 = vector.multi_reduction <maximumf>, %151, %cst_66 [1] : vector<8x32xf32> to vector<8xf32>
    %153 = vector.shape_cast %152 : vector<8xf32> to vector<8x1xf32>
    %154 = vector.broadcast %153 : vector<8x1xf32> to vector<8x32xf32>
    %155 = arith.subf %151, %154 : vector<8x32xf32>
    %156 = math.exp %155 : vector<8x32xf32>
    %cst_67 = arith.constant dense<0.000000e+00> : vector<8x32xf32>
    %157 = tpu.matmul %156, %7, %cst_67 {dimension_numbers = #tpu.dot_dimension_numbers<[1], [0], [0], [1], [0, 0, 1, 1], [], []>} : vector<8x32xf32>, vector<32x32xf32>, vector<8x32xf32> -> vector<8x32xf32>
    %158 = tpu.reciprocal %157 {approx = true} : vector<8x32xf32> -> vector<8x32xf32>
    %159 = arith.mulf %156, %158 : vector<8x32xf32>
    %cst_68 = arith.constant dense<0.000000e+00> : vector<8x128xf32>
    %160 = tpu.matmul %159, %147, %cst_68 {dimension_numbers = #tpu.dot_dimension_numbers<[1], [0], [0], [1], [0, 0, 1, 1], [], []>} : vector<8x32xf32>, vector<32x128xf32>, vector<8x128xf32> -> vector<8x128xf32>
    %161 = arith.truncf %160 : vector<8x128xf32> to vector<8x128xbf16>
    %c0_69 = arith.constant 0 : index
    %c1152_70 = arith.constant 1152 : index
    %162 = vector.load %arg10[%c0_69, %c1152_70] : memref<128x2560xbf16, #tpu.memory_space<vmem>>, vector<128x128xbf16>
    %cst_71 = arith.constant dense<0.000000e+00> : vector<8x128xf32>
    %163 = tpu.matmul %161, %162, %cst_71 {dimension_numbers = #tpu.dot_dimension_numbers<[1], [0], [0], [1], [0, 0, 1, 1], [], []>} : vector<8x128xbf16>, vector<128x128xbf16>, vector<8x128xf32> -> vector<8x128xf32>
    %c0_72 = arith.constant 0 : index
    %c1920 = arith.constant 1920 : index
    %164 = vector.load %arg11[%c0_72, %c1920] : memref<1x4608xf32, #tpu.memory_space<vmem>>, vector<1x128xf32>
    %165 = vector.broadcast %164 : vector<1x128xf32> to vector<8x128xf32>
    %166 = arith.addf %163, %165 : vector<8x128xf32>
    %167 = arith.addf %166, %110 : vector<8x128xf32>
    %cst_73 = arith.constant dense<0.000000e+00> : vector<8xf32>
    %168 = vector.multi_reduction <add>, %167, %cst_73 [1] : vector<8x128xf32> to vector<8xf32>
    %169 = vector.shape_cast %168 : vector<8xf32> to vector<8x1xf32>
    %cst_74 = arith.constant 3.125000e-02 : f32
    %170 = vector.broadcast %cst_74 : f32 to vector<8x1xf32>
    %171 = arith.mulf %169, %170 : vector<8x1xf32>
    %172 = vector.broadcast %171 : vector<8x1xf32> to vector<8x128xf32>
    %173 = arith.subf %167, %172 : vector<8x128xf32>
    %174 = arith.mulf %173, %173 : vector<8x128xf32>
    %175 = vector.broadcast %4 : vector<1x128xf32> to vector<8x128xf32>
    %176 = arith.mulf %174, %175 : vector<8x128xf32>
    %cst_75 = arith.constant dense<0.000000e+00> : vector<8xf32>
    %177 = vector.multi_reduction <add>, %176, %cst_75 [1] : vector<8x128xf32> to vector<8xf32>
    %178 = vector.shape_cast %177 : vector<8xf32> to vector<8x1xf32>
    %cst_76 = arith.constant 3.125000e-02 : f32
    %179 = vector.broadcast %cst_76 : f32 to vector<8x1xf32>
    %180 = arith.mulf %178, %179 : vector<8x1xf32>
    %cst_77 = arith.constant 9.99999974E-6 : f32
    %181 = vector.broadcast %cst_77 : f32 to vector<8x1xf32>
    %182 = arith.addf %180, %181 : vector<8x1xf32>
    %183 = math.rsqrt %182 : vector<8x1xf32>
    %184 = vector.broadcast %183 : vector<8x1xf32> to vector<8x128xf32>
    %185 = arith.mulf %173, %184 : vector<8x128xf32>
    %c0_78 = arith.constant 0 : index
    %c2048 = arith.constant 2048 : index
    %186 = vector.load %arg11[%c0_78, %c2048] : memref<1x4608xf32, #tpu.memory_space<vmem>>, vector<1x128xf32>
    %187 = vector.broadcast %186 : vector<1x128xf32> to vector<8x128xf32>
    %188 = arith.mulf %185, %187 : vector<8x128xf32>
    %c0_79 = arith.constant 0 : index
    %c2176 = arith.constant 2176 : index
    %189 = vector.load %arg11[%c0_79, %c2176] : memref<1x4608xf32, #tpu.memory_space<vmem>>, vector<1x128xf32>
    %190 = vector.broadcast %189 : vector<1x128xf32> to vector<8x128xf32>
    %191 = arith.addf %188, %190 : vector<8x128xf32>
    %192 = arith.truncf %191 : vector<8x128xf32> to vector<8x128xbf16>
    %c0_80 = arith.constant 0 : index
    %c1280_81 = arith.constant 1280 : index
    %193 = vector.load %arg10[%c0_80, %c1280_81] : memref<128x2560xbf16, #tpu.memory_space<vmem>>, vector<128x128xbf16>
    %cst_82 = arith.constant dense<0.000000e+00> : vector<8x128xf32>
    %194 = tpu.matmul %192, %193, %cst_82 {dimension_numbers = #tpu.dot_dimension_numbers<[1], [0], [0], [1], [0, 0, 1, 1], [], []>} : vector<8x128xbf16>, vector<128x128xbf16>, vector<8x128xf32> -> vector<8x128xf32>
    %c0_83 = arith.constant 0 : index
    %c2304 = arith.constant 2304 : index
    %195 = vector.load %arg11[%c0_83, %c2304] : memref<1x4608xf32, #tpu.memory_space<vmem>>, vector<1x128xf32>
    %196 = vector.broadcast %195 : vector<1x128xf32> to vector<8x128xf32>
    %197 = arith.addf %194, %196 : vector<8x128xf32>
    %cst_84 = arith.constant 5.000000e-01 : f32
    %198 = vector.broadcast %cst_84 : f32 to vector<8x128xf32>
    %199 = arith.mulf %198, %197 : vector<8x128xf32>
    %cst_85 = arith.constant 0.707106769 : f32
    %200 = vector.broadcast %cst_85 : f32 to vector<8x128xf32>
    %201 = arith.mulf %197, %200 : vector<8x128xf32>
    %202 = math.erf %201 : vector<8x128xf32>
    %cst_86 = arith.constant 1.000000e+00 : f32
    %203 = vector.broadcast %cst_86 : f32 to vector<8x128xf32>
    %204 = arith.addf %203, %202 : vector<8x128xf32>
    %205 = arith.mulf %199, %204 : vector<8x128xf32>
    %206 = arith.truncf %205 : vector<8x128xf32> to vector<8x128xbf16>
    %c0_87 = arith.constant 0 : index
    %c1408_88 = arith.constant 1408 : index
    %207 = vector.load %arg10[%c0_87, %c1408_88] : memref<128x2560xbf16, #tpu.memory_space<vmem>>, vector<128x128xbf16>
    %cst_89 = arith.constant dense<0.000000e+00> : vector<8x128xf32>
    %208 = tpu.matmul %206, %207, %cst_89 {dimension_numbers = #tpu.dot_dimension_numbers<[1], [0], [0], [1], [0, 0, 1, 1], [], []>} : vector<8x128xbf16>, vector<128x128xbf16>, vector<8x128xf32> -> vector<8x128xf32>
    %c0_90 = arith.constant 0 : index
    %c2432 = arith.constant 2432 : index
    %209 = vector.load %arg11[%c0_90, %c2432] : memref<1x4608xf32, #tpu.memory_space<vmem>>, vector<1x128xf32>
    %210 = vector.broadcast %209 : vector<1x128xf32> to vector<8x128xf32>
    %211 = arith.addf %208, %210 : vector<8x128xf32>
    %212 = arith.addf %211, %167 : vector<8x128xf32>
    %cst_91 = arith.constant dense<0.000000e+00> : vector<8xf32>
    %213 = vector.multi_reduction <add>, %212, %cst_91 [1] : vector<8x128xf32> to vector<8xf32>
    %214 = vector.shape_cast %213 : vector<8xf32> to vector<8x1xf32>
    %cst_92 = arith.constant 3.125000e-02 : f32
    %215 = vector.broadcast %cst_92 : f32 to vector<8x1xf32>
    %216 = arith.mulf %214, %215 : vector<8x1xf32>
    %217 = vector.broadcast %216 : vector<8x1xf32> to vector<8x128xf32>
    %218 = arith.subf %212, %217 : vector<8x128xf32>
    %219 = arith.mulf %218, %218 : vector<8x128xf32>
    %220 = vector.broadcast %4 : vector<1x128xf32> to vector<8x128xf32>
    %221 = arith.mulf %219, %220 : vector<8x128xf32>
    %cst_93 = arith.constant dense<0.000000e+00> : vector<8xf32>
    %222 = vector.multi_reduction <add>, %221, %cst_93 [1] : vector<8x128xf32> to vector<8xf32>
    %223 = vector.shape_cast %222 : vector<8xf32> to vector<8x1xf32>
    %cst_94 = arith.constant 3.125000e-02 : f32
    %224 = vector.broadcast %cst_94 : f32 to vector<8x1xf32>
    %225 = arith.mulf %223, %224 : vector<8x1xf32>
    %cst_95 = arith.constant 9.99999974E-6 : f32
    %226 = vector.broadcast %cst_95 : f32 to vector<8x1xf32>
    %227 = arith.addf %225, %226 : vector<8x1xf32>
    %228 = math.rsqrt %227 : vector<8x1xf32>
    %229 = vector.broadcast %228 : vector<8x1xf32> to vector<8x128xf32>
    %230 = arith.mulf %218, %229 : vector<8x128xf32>
    %c0_96 = arith.constant 0 : index
    %c2560 = arith.constant 2560 : index
    %231 = vector.load %arg11[%c0_96, %c2560] : memref<1x4608xf32, #tpu.memory_space<vmem>>, vector<1x128xf32>
    %232 = vector.broadcast %231 : vector<1x128xf32> to vector<8x128xf32>
    %233 = arith.mulf %230, %232 : vector<8x128xf32>
    %c0_97 = arith.constant 0 : index
    %c2688 = arith.constant 2688 : index
    %234 = vector.load %arg11[%c0_97, %c2688] : memref<1x4608xf32, #tpu.memory_space<vmem>>, vector<1x128xf32>
    %235 = vector.broadcast %234 : vector<1x128xf32> to vector<8x128xf32>
    %236 = arith.addf %233, %235 : vector<8x128xf32>
    %237 = arith.truncf %236 : vector<8x128xf32> to vector<8x128xbf16>
    %c0_98 = arith.constant 0 : index
    %c1536_99 = arith.constant 1536 : index
    %238 = vector.load %arg10[%c0_98, %c1536_99] : memref<128x2560xbf16, #tpu.memory_space<vmem>>, vector<128x128xbf16>
    %cst_100 = arith.constant dense<0.000000e+00> : vector<8x128xf32>
    %239 = tpu.matmul %237, %238, %cst_100 {dimension_numbers = #tpu.dot_dimension_numbers<[1], [0], [0], [1], [0, 0, 1, 1], [], []>} : vector<8x128xbf16>, vector<128x128xbf16>, vector<8x128xf32> -> vector<8x128xf32>
    %c0_101 = arith.constant 0 : index
    %c2816 = arith.constant 2816 : index
    %240 = vector.load %arg11[%c0_101, %c2816] : memref<1x4608xf32, #tpu.memory_space<vmem>>, vector<1x128xf32>
    %241 = vector.broadcast %240 : vector<1x128xf32> to vector<8x128xf32>
    %242 = arith.addf %239, %241 : vector<8x128xf32>
    %243 = arith.truncf %1 : vector<8x128xf32> to vector<8x128xbf16>
    %c0_102 = arith.constant 0 : index
    %c1664 = arith.constant 1664 : index
    %244 = vector.load %arg10[%c0_102, %c1664] : memref<128x2560xbf16, #tpu.memory_space<vmem>>, vector<128x256xbf16>
    %cst_103 = arith.constant dense<0.000000e+00> : vector<8x256xf32>
    %245 = tpu.matmul %243, %244, %cst_103 {dimension_numbers = #tpu.dot_dimension_numbers<[1], [0], [0], [1], [0, 0, 1, 1], [], []>} : vector<8x128xbf16>, vector<128x256xbf16>, vector<8x256xf32> -> vector<8x256xf32>
    %c0_104 = arith.constant 0 : index
    %c2944 = arith.constant 2944 : index
    %246 = vector.load %arg11[%c0_104, %c2944] : memref<1x4608xf32, #tpu.memory_space<vmem>>, vector<1x256xf32>
    %247 = vector.broadcast %246 : vector<1x256xf32> to vector<8x256xf32>
    %248 = arith.addf %245, %247 : vector<8x256xf32>
    %249 = vector.extract_strided_slice %248 {offsets = [0, 0], sizes = [8, 128], strides = [1, 1]} : vector<8x256xf32> to vector<8x128xf32>
    %250 = vector.extract_strided_slice %248 {offsets = [0, 128], sizes = [8, 128], strides = [1, 1]} : vector<8x256xf32> to vector<8x128xf32>
    %251 = tpu.concatenate %249, %249, %249, %249 in 0 : vector<8x128xf32>, vector<8x128xf32>, vector<8x128xf32>, vector<8x128xf32> -> vector<32x128xf32>
    %252 = arith.mulf %251, %6 : vector<32x128xf32>
    %253 = tpu.concatenate %250, %250, %250, %250 in 0 : vector<8x128xf32>, vector<8x128xf32>, vector<8x128xf32>, vector<8x128xf32> -> vector<32x128xf32>
    %254 = arith.mulf %253, %6 : vector<32x128xf32>
    %cst_105 = arith.constant 0.353553385 : f32
    %255 = vector.broadcast %cst_105 : f32 to vector<8x128xf32>
    %256 = arith.mulf %242, %255 : vector<8x128xf32>
    %cst_106 = arith.constant dense<0.000000e+00> : vector<8x32xf32>
    %257 = tpu.matmul %256, %252, %cst_106 {dimension_numbers = #tpu.dot_dimension_numbers<[1], [1], [0], [0], [0, 0, 1, 0], [], []>} : vector<8x128xf32>, vector<32x128xf32>, vector<8x32xf32> -> vector<8x32xf32>
    %258 = arith.addf %257, %3 : vector<8x32xf32>
    %cst_107 = arith.constant dense<0xFF800000> : vector<8xf32>
    %259 = vector.multi_reduction <maximumf>, %258, %cst_107 [1] : vector<8x32xf32> to vector<8xf32>
    %260 = vector.shape_cast %259 : vector<8xf32> to vector<8x1xf32>
    %261 = vector.broadcast %260 : vector<8x1xf32> to vector<8x32xf32>
    %262 = arith.subf %258, %261 : vector<8x32xf32>
    %263 = math.exp %262 : vector<8x32xf32>
    %cst_108 = arith.constant dense<0.000000e+00> : vector<8x32xf32>
    %264 = tpu.matmul %263, %8, %cst_108 {dimension_numbers = #tpu.dot_dimension_numbers<[1], [0], [0], [1], [0, 0, 1, 1], [], []>} : vector<8x32xf32>, vector<32x32xf32>, vector<8x32xf32> -> vector<8x32xf32>
    %265 = tpu.reciprocal %264 {approx = true} : vector<8x32xf32> -> vector<8x32xf32>
    %266 = arith.mulf %263, %265 : vector<8x32xf32>
    %cst_109 = arith.constant dense<0.000000e+00> : vector<8x128xf32>
    %267 = tpu.matmul %266, %254, %cst_109 {dimension_numbers = #tpu.dot_dimension_numbers<[1], [0], [0], [1], [0, 0, 1, 1], [], []>} : vector<8x32xf32>, vector<32x128xf32>, vector<8x128xf32> -> vector<8x128xf32>
    %268 = arith.truncf %267 : vector<8x128xf32> to vector<8x128xbf16>
    %c0_110 = arith.constant 0 : index
    %c1920_111 = arith.constant 1920 : index
    %269 = vector.load %arg10[%c0_110, %c1920_111] : memref<128x2560xbf16, #tpu.memory_space<vmem>>, vector<128x128xbf16>
    %cst_112 = arith.constant dense<0.000000e+00> : vector<8x128xf32>
    %270 = tpu.matmul %268, %269, %cst_112 {dimension_numbers = #tpu.dot_dimension_numbers<[1], [0], [0], [1], [0, 0, 1, 1], [], []>} : vector<8x128xbf16>, vector<128x128xbf16>, vector<8x128xf32> -> vector<8x128xf32>
    %c0_113 = arith.constant 0 : index
    %c3200 = arith.constant 3200 : index
    %271 = vector.load %arg11[%c0_113, %c3200] : memref<1x4608xf32, #tpu.memory_space<vmem>>, vector<1x128xf32>
    %272 = vector.broadcast %271 : vector<1x128xf32> to vector<8x128xf32>
    %273 = arith.addf %270, %272 : vector<8x128xf32>
    %274 = arith.addf %273, %212 : vector<8x128xf32>
    %cst_114 = arith.constant dense<0.000000e+00> : vector<8xf32>
    %275 = vector.multi_reduction <add>, %274, %cst_114 [1] : vector<8x128xf32> to vector<8xf32>
    %276 = vector.shape_cast %275 : vector<8xf32> to vector<8x1xf32>
    %cst_115 = arith.constant 3.125000e-02 : f32
    %277 = vector.broadcast %cst_115 : f32 to vector<8x1xf32>
    %278 = arith.mulf %276, %277 : vector<8x1xf32>
    %279 = vector.broadcast %278 : vector<8x1xf32> to vector<8x128xf32>
    %280 = arith.subf %274, %279 : vector<8x128xf32>
    %281 = arith.mulf %280, %280 : vector<8x128xf32>
    %282 = vector.broadcast %4 : vector<1x128xf32> to vector<8x128xf32>
    %283 = arith.mulf %281, %282 : vector<8x128xf32>
    %cst_116 = arith.constant dense<0.000000e+00> : vector<8xf32>
    %284 = vector.multi_reduction <add>, %283, %cst_116 [1] : vector<8x128xf32> to vector<8xf32>
    %285 = vector.shape_cast %284 : vector<8xf32> to vector<8x1xf32>
    %cst_117 = arith.constant 3.125000e-02 : f32
    %286 = vector.broadcast %cst_117 : f32 to vector<8x1xf32>
    %287 = arith.mulf %285, %286 : vector<8x1xf32>
    %cst_118 = arith.constant 9.99999974E-6 : f32
    %288 = vector.broadcast %cst_118 : f32 to vector<8x1xf32>
    %289 = arith.addf %287, %288 : vector<8x1xf32>
    %290 = math.rsqrt %289 : vector<8x1xf32>
    %291 = vector.broadcast %290 : vector<8x1xf32> to vector<8x128xf32>
    %292 = arith.mulf %280, %291 : vector<8x128xf32>
    %c0_119 = arith.constant 0 : index
    %c3328 = arith.constant 3328 : index
    %293 = vector.load %arg11[%c0_119, %c3328] : memref<1x4608xf32, #tpu.memory_space<vmem>>, vector<1x128xf32>
    %294 = vector.broadcast %293 : vector<1x128xf32> to vector<8x128xf32>
    %295 = arith.mulf %292, %294 : vector<8x128xf32>
    %c0_120 = arith.constant 0 : index
    %c3456 = arith.constant 3456 : index
    %296 = vector.load %arg11[%c0_120, %c3456] : memref<1x4608xf32, #tpu.memory_space<vmem>>, vector<1x128xf32>
    %297 = vector.broadcast %296 : vector<1x128xf32> to vector<8x128xf32>
    %298 = arith.addf %295, %297 : vector<8x128xf32>
    %299 = arith.truncf %298 : vector<8x128xf32> to vector<8x128xbf16>
    %c0_121 = arith.constant 0 : index
    %c2048_122 = arith.constant 2048 : index
    %300 = vector.load %arg10[%c0_121, %c2048_122] : memref<128x2560xbf16, #tpu.memory_space<vmem>>, vector<128x128xbf16>
    %cst_123 = arith.constant dense<0.000000e+00> : vector<8x128xf32>
    %301 = tpu.matmul %299, %300, %cst_123 {dimension_numbers = #tpu.dot_dimension_numbers<[1], [0], [0], [1], [0, 0, 1, 1], [], []>} : vector<8x128xbf16>, vector<128x128xbf16>, vector<8x128xf32> -> vector<8x128xf32>
    %c0_124 = arith.constant 0 : index
    %c3584 = arith.constant 3584 : index
    %302 = vector.load %arg11[%c0_124, %c3584] : memref<1x4608xf32, #tpu.memory_space<vmem>>, vector<1x128xf32>
    %303 = vector.broadcast %302 : vector<1x128xf32> to vector<8x128xf32>
    %304 = arith.addf %301, %303 : vector<8x128xf32>
    %cst_125 = arith.constant 5.000000e-01 : f32
    %305 = vector.broadcast %cst_125 : f32 to vector<8x128xf32>
    %306 = arith.mulf %305, %304 : vector<8x128xf32>
    %cst_126 = arith.constant 0.707106769 : f32
    %307 = vector.broadcast %cst_126 : f32 to vector<8x128xf32>
    %308 = arith.mulf %304, %307 : vector<8x128xf32>
    %309 = math.erf %308 : vector<8x128xf32>
    %cst_127 = arith.constant 1.000000e+00 : f32
    %310 = vector.broadcast %cst_127 : f32 to vector<8x128xf32>
    %311 = arith.addf %310, %309 : vector<8x128xf32>
    %312 = arith.mulf %306, %311 : vector<8x128xf32>
    %313 = arith.truncf %312 : vector<8x128xf32> to vector<8x128xbf16>
    %c0_128 = arith.constant 0 : index
    %c2176_129 = arith.constant 2176 : index
    %314 = vector.load %arg10[%c0_128, %c2176_129] : memref<128x2560xbf16, #tpu.memory_space<vmem>>, vector<128x128xbf16>
    %cst_130 = arith.constant dense<0.000000e+00> : vector<8x128xf32>
    %315 = tpu.matmul %313, %314, %cst_130 {dimension_numbers = #tpu.dot_dimension_numbers<[1], [0], [0], [1], [0, 0, 1, 1], [], []>} : vector<8x128xbf16>, vector<128x128xbf16>, vector<8x128xf32> -> vector<8x128xf32>
    %c0_131 = arith.constant 0 : index
    %c3712 = arith.constant 3712 : index
    %316 = vector.load %arg11[%c0_131, %c3712] : memref<1x4608xf32, #tpu.memory_space<vmem>>, vector<1x128xf32>
    %317 = vector.broadcast %316 : vector<1x128xf32> to vector<8x128xf32>
    %318 = arith.addf %315, %317 : vector<8x128xf32>
    %319 = arith.addf %318, %274 : vector<8x128xf32>
    %320 = arith.addf %319, %212 : vector<8x128xf32>
    %cst_132 = arith.constant dense<0.000000e+00> : vector<8xf32>
    %321 = vector.multi_reduction <add>, %320, %cst_132 [1] : vector<8x128xf32> to vector<8xf32>
    %322 = vector.shape_cast %321 : vector<8xf32> to vector<8x1xf32>
    %cst_133 = arith.constant 3.125000e-02 : f32
    %323 = vector.broadcast %cst_133 : f32 to vector<8x1xf32>
    %324 = arith.mulf %322, %323 : vector<8x1xf32>
    %325 = vector.broadcast %324 : vector<8x1xf32> to vector<8x128xf32>
    %326 = arith.subf %320, %325 : vector<8x128xf32>
    %327 = arith.mulf %326, %326 : vector<8x128xf32>
    %328 = vector.broadcast %4 : vector<1x128xf32> to vector<8x128xf32>
    %329 = arith.mulf %327, %328 : vector<8x128xf32>
    %cst_134 = arith.constant dense<0.000000e+00> : vector<8xf32>
    %330 = vector.multi_reduction <add>, %329, %cst_134 [1] : vector<8x128xf32> to vector<8xf32>
    %331 = vector.shape_cast %330 : vector<8xf32> to vector<8x1xf32>
    %cst_135 = arith.constant 3.125000e-02 : f32
    %332 = vector.broadcast %cst_135 : f32 to vector<8x1xf32>
    %333 = arith.mulf %331, %332 : vector<8x1xf32>
    %cst_136 = arith.constant 9.99999974E-6 : f32
    %334 = vector.broadcast %cst_136 : f32 to vector<8x1xf32>
    %335 = arith.addf %333, %334 : vector<8x1xf32>
    %336 = math.rsqrt %335 : vector<8x1xf32>
    %337 = vector.broadcast %336 : vector<8x1xf32> to vector<8x128xf32>
    %338 = arith.mulf %326, %337 : vector<8x128xf32>
    %c0_137 = arith.constant 0 : index
    %c3840 = arith.constant 3840 : index
    %339 = vector.load %arg11[%c0_137, %c3840] : memref<1x4608xf32, #tpu.memory_space<vmem>>, vector<1x128xf32>
    %340 = vector.broadcast %339 : vector<1x128xf32> to vector<8x128xf32>
    %341 = arith.mulf %338, %340 : vector<8x128xf32>
    %c0_138 = arith.constant 0 : index
    %c3968 = arith.constant 3968 : index
    %342 = vector.load %arg11[%c0_138, %c3968] : memref<1x4608xf32, #tpu.memory_space<vmem>>, vector<1x128xf32>
    %343 = vector.broadcast %342 : vector<1x128xf32> to vector<8x128xf32>
    %344 = arith.addf %341, %343 : vector<8x128xf32>
    %345 = arith.truncf %344 : vector<8x128xf32> to vector<8x128xbf16>
    %c0_139 = arith.constant 0 : index
    %c2304_140 = arith.constant 2304 : index
    %346 = vector.load %arg10[%c0_139, %c2304_140] : memref<128x2560xbf16, #tpu.memory_space<vmem>>, vector<128x128xbf16>
    %cst_141 = arith.constant dense<0.000000e+00> : vector<8x128xf32>
    %347 = tpu.matmul %345, %346, %cst_141 {dimension_numbers = #tpu.dot_dimension_numbers<[1], [0], [0], [1], [0, 0, 1, 1], [], []>} : vector<8x128xbf16>, vector<128x128xbf16>, vector<8x128xf32> -> vector<8x128xf32>
    %c0_142 = arith.constant 0 : index
    %c4096 = arith.constant 4096 : index
    %348 = vector.load %arg11[%c0_142, %c4096] : memref<1x4608xf32, #tpu.memory_space<vmem>>, vector<1x128xf32>
    %349 = vector.broadcast %348 : vector<1x128xf32> to vector<8x128xf32>
    %350 = arith.addf %347, %349 : vector<8x128xf32>
    %cst_143 = arith.constant 5.000000e-01 : f32
    %351 = vector.broadcast %cst_143 : f32 to vector<8x128xf32>
    %352 = arith.mulf %351, %350 : vector<8x128xf32>
    %cst_144 = arith.constant 0.707106769 : f32
    %353 = vector.broadcast %cst_144 : f32 to vector<8x128xf32>
    %354 = arith.mulf %350, %353 : vector<8x128xf32>
    %355 = math.erf %354 : vector<8x128xf32>
    %cst_145 = arith.constant 1.000000e+00 : f32
    %356 = vector.broadcast %cst_145 : f32 to vector<8x128xf32>
    %357 = arith.addf %356, %355 : vector<8x128xf32>
    %358 = arith.mulf %352, %357 : vector<8x128xf32>
    %cst_146 = arith.constant dense<0.000000e+00> : vector<8xf32>
    %359 = vector.multi_reduction <add>, %358, %cst_146 [1] : vector<8x128xf32> to vector<8xf32>
    %360 = vector.shape_cast %359 : vector<8xf32> to vector<8x1xf32>
    %cst_147 = arith.constant 3.125000e-02 : f32
    %361 = vector.broadcast %cst_147 : f32 to vector<8x1xf32>
    %362 = arith.mulf %360, %361 : vector<8x1xf32>
    %363 = vector.broadcast %362 : vector<8x1xf32> to vector<8x128xf32>
    %364 = arith.subf %358, %363 : vector<8x128xf32>
    %365 = arith.mulf %364, %364 : vector<8x128xf32>
    %366 = vector.broadcast %4 : vector<1x128xf32> to vector<8x128xf32>
    %367 = arith.mulf %365, %366 : vector<8x128xf32>
    %cst_148 = arith.constant dense<0.000000e+00> : vector<8xf32>
    %368 = vector.multi_reduction <add>, %367, %cst_148 [1] : vector<8x128xf32> to vector<8xf32>
    %369 = vector.shape_cast %368 : vector<8xf32> to vector<8x1xf32>
    %cst_149 = arith.constant 3.125000e-02 : f32
    %370 = vector.broadcast %cst_149 : f32 to vector<8x1xf32>
    %371 = arith.mulf %369, %370 : vector<8x1xf32>
    %cst_150 = arith.constant 9.99999974E-6 : f32
    %372 = vector.broadcast %cst_150 : f32 to vector<8x1xf32>
    %373 = arith.addf %371, %372 : vector<8x1xf32>
    %374 = math.rsqrt %373 : vector<8x1xf32>
    %375 = vector.broadcast %374 : vector<8x1xf32> to vector<8x128xf32>
    %376 = arith.mulf %364, %375 : vector<8x128xf32>
    %c0_151 = arith.constant 0 : index
    %c4224 = arith.constant 4224 : index
    %377 = vector.load %arg11[%c0_151, %c4224] : memref<1x4608xf32, #tpu.memory_space<vmem>>, vector<1x128xf32>
    %378 = vector.broadcast %377 : vector<1x128xf32> to vector<8x128xf32>
    %379 = arith.mulf %376, %378 : vector<8x128xf32>
    %c0_152 = arith.constant 0 : index
    %c4352 = arith.constant 4352 : index
    %380 = vector.load %arg11[%c0_152, %c4352] : memref<1x4608xf32, #tpu.memory_space<vmem>>, vector<1x128xf32>
    %381 = vector.broadcast %380 : vector<1x128xf32> to vector<8x128xf32>
    %382 = arith.addf %379, %381 : vector<8x128xf32>
    %383 = arith.truncf %382 : vector<8x128xf32> to vector<8x128xbf16>
    %c0_153 = arith.constant 0 : index
    %c2432_154 = arith.constant 2432 : index
    %384 = vector.load %arg10[%c0_153, %c2432_154] : memref<128x2560xbf16, #tpu.memory_space<vmem>>, vector<128x128xbf16>
    %cst_155 = arith.constant dense<0.000000e+00> : vector<8x128xf32>
    %385 = tpu.matmul %383, %384, %cst_155 {dimension_numbers = #tpu.dot_dimension_numbers<[1], [0], [0], [1], [0, 0, 1, 1], [], []>} : vector<8x128xbf16>, vector<128x128xbf16>, vector<8x128xf32> -> vector<8x128xf32>
    %c0_156 = arith.constant 0 : index
    %c4480 = arith.constant 4480 : index
    %386 = vector.load %arg11[%c0_156, %c4480] : memref<1x4608xf32, #tpu.memory_space<vmem>>, vector<1x128xf32>
    %387 = vector.broadcast %386 : vector<1x128xf32> to vector<8x128xf32>
    %388 = arith.addf %385, %387 : vector<8x128xf32>
    %389 = arith.truncf %388 : vector<8x128xf32> to vector<8x128xbf16>
    %c0_157 = arith.constant 0 : index
    %c0_158 = arith.constant 0 : index
    %390 = vector.load %arg12[%c0_157, %c0_158] : memref<8x128xbf16, #tpu.memory_space<vmem>>, vector<8x128xbf16>
    tpu.vector_store %arg12[%c0_157, %c0_158], %389 {strides = array<i32>} : memref<8x128xbf16, #tpu.memory_space<vmem>>, vector<8x128xbf16>,
    return
  }
  func.func @transform_0(%arg0: i32) -> (i32, i32) {
    %c0_i32 = arith.constant 0 : i32
    %c0_i32_0 = arith.constant 0 : i32
    return %arg0, %c0_i32 : i32, i32
  }
  func.func @transform_1(%arg0: i32) -> (i32, i32) {
    %c0_i32 = arith.constant 0 : i32
    %c0_i32_0 = arith.constant 0 : i32
    return %arg0, %c0_i32 : i32, i32
  }
  func.func @transform_2(%arg0: i32) -> (i32, i32) {
    %c0_i32 = arith.constant 0 : i32
    %c0_i32_0 = arith.constant 0 : i32
    return %arg0, %c0_i32 : i32, i32
  }
  func.func @transform_3(%arg0: i32) -> (i32, i32) {
    %c0_i32 = arith.constant 0 : i32
    %c0_i32_0 = arith.constant 0 : i32
    return %arg0, %c0_i32 : i32, i32
  }
  func.func @transform_4(%arg0: i32) -> (i32, i32) {
    %c0_i32 = arith.constant 0 : i32
    %c0_i32_0 = arith.constant 0 : i32
    %c0_i32_1 = arith.constant 0 : i32
    return %c0_i32, %c0_i32_0 : i32, i32
  }
  func.func @transform_5(%arg0: i32) -> (i32, i32) {
    %c0_i32 = arith.constant 0 : i32
    %c0_i32_0 = arith.constant 0 : i32
    %c0_i32_1 = arith.constant 0 : i32
    return %c0_i32, %c0_i32_0 : i32, i32
  }
  func.func @transform_6(%arg0: i32) -> (i32, i32) {
    %c0_i32 = arith.constant 0 : i32
    %c0_i32_0 = arith.constant 0 : i32
    %c0_i32_1 = arith.constant 0 : i32
    return %c0_i32, %c0_i32_0 : i32, i32
  }
  func.func @transform_7(%arg0: i32) -> (i32, i32) {
    %c0_i32 = arith.constant 0 : i32
    %c0_i32_0 = arith.constant 0 : i32
    %c0_i32_1 = arith.constant 0 : i32
    return %c0_i32, %c0_i32_0 : i32, i32
  }
  func.func @transform_8(%arg0: i32) -> (i32, i32) {
    %c0_i32 = arith.constant 0 : i32
    %c0_i32_0 = arith.constant 0 : i32
    %c0_i32_1 = arith.constant 0 : i32
    return %c0_i32, %c0_i32_0 : i32, i32
  }
  func.func @transform_9(%arg0: i32) -> (i32, i32) {
    %c0_i32 = arith.constant 0 : i32
    %c0_i32_0 = arith.constant 0 : i32
    %c0_i32_1 = arith.constant 0 : i32
    return %c0_i32, %c0_i32_0 : i32, i32
  }
  func.func @transform_10(%arg0: i32) -> (i32, i32) {
    %c0_i32 = arith.constant 0 : i32
    %c0_i32_0 = arith.constant 0 : i32
    %c0_i32_1 = arith.constant 0 : i32
    return %c0_i32, %c0_i32_0 : i32, i32
  }
  func.func @transform_11(%arg0: i32) -> (i32, i32) {
    %c0_i32 = arith.constant 0 : i32
    %c0_i32_0 = arith.constant 0 : i32
    return %arg0, %c0_i32 : i32, i32
  }
}

</mosaic_0001>

<llo_original>
// kernel: tpu_custom_call.1
$region0: #{tpu_custom_call.1}
  #allocation0 [shape = 'u32[]', space=smem, size = 0x4, offset = 0x4, fixed_abs, tag = 'smem constant byte address 0x4 - core index']
  #allocation1 [shape = 'u32[144,128]{1,0:T(1,128)}', space=vmem, size = 0x12000, scoped, tag = 'internal scratch']
  %s0 = inlined_call_operand.hbm [shape: f32[16,128], index: 0, kind: input, shape index: {}]
  %s1 = inlined_call_operand.hbm [shape: f32[16,128], index: 1, kind: input, shape index: {}]
  %s2 = inlined_call_operand.hbm [shape: f32[16,32], index: 2, kind: input, shape index: {}]
  %s3 = inlined_call_operand.hbm [shape: f32[16,32], index: 3, kind: input, shape index: {}]
  %s4 = inlined_call_operand.vmem [shape: f32[1,128], index: 4, kind: input, shape index: {}]
  %s5 = inlined_call_operand.hbm [shape: f32[32,128], index: 5, kind: input, shape index: {}]
  %s6 = inlined_call_operand.hbm [shape: f32[32,128], index: 6, kind: input, shape index: {}]
  %s7 = inlined_call_operand.hbm [shape: f32[32,32], index: 7, kind: input, shape index: {}]
  %s8 = inlined_call_operand.hbm [shape: f32[32,32], index: 8, kind: input, shape index: {}]
  %s9 = inlined_call_operand.hbm [shape: bf16[128,2560], index: 9, kind: input, shape index: {}]
  %s10 = inlined_call_operand.vmem [shape: f32[1,4608], index: 10, kind: input, shape index: {}]
  %s11 = inlined_call_operand.hbm [shape: bf16[16,128], index: 11, kind: output, shape index: {}]
  %s12 = sld [smem:[#allocation0]]
  $region113: #{tpu_custom_call.1} parent=0
    _
  %s14 = ssub.s32 1, %s12
  %s15 = scalar_select 0, %s14, %s12
  $region1: #{tpu_custom_call.1} parent=0
    #allocation2 [shape = 'u8[8192]{0}', space=vmem, size = 0x2000, scoped, tag = 'input window, operand 0']
    #allocation3 [shape = 's32[2]{0}', space=sflag, size = 0x8, scoped, tag = 'scoped memory for tpu_custom_call.1']
    #allocation4 [shape = 's32[2]{0}', space=sflag, size = 0x8, scoped, tag = 'scoped memory for tpu_custom_call.1']
    #allocation5 [shape = 'u8[8192]{0}', space=vmem, size = 0x2000, scoped, tag = 'input window, operand 1']
    #allocation6 [shape = 's32[2]{0}', space=sflag, size = 0x8, scoped, tag = 'scoped memory for tpu_custom_call.1']
    #allocation7 [shape = 'u8[8192]{0}', space=vmem, size = 0x2000, scoped, tag = 'input window, operand 2']
    #allocation8 [shape = 'u8[8192]{0}', space=vmem, size = 0x2000, scoped, tag = 'input window, operand 3']
    #allocation9 [shape = 's32[2]{0}', space=sflag, size = 0x8, scoped, tag = 'scoped memory for tpu_custom_call.1']
    #allocation10 [shape = 'u8[16384]{0}', space=vmem, size = 0x4000, scoped, tag = 'input window, operand 5, single buffered']
    #allocation11 [shape = 'u8[16384]{0}', space=vmem, size = 0x4000, scoped, tag = 'input window, operand 6, single buffered']
    #allocation12 [shape = 's32[1]{0}', space=sflag, size = 0x4, scoped, tag = 'scoped memory for tpu_custom_call.1']
    #allocation13 [shape = 'u8[16384]{0}', space=vmem, size = 0x4000, scoped, tag = 'input window, operand 7, single buffered']
    #allocation14 [shape = 'u8[16384]{0}', space=vmem, size = 0x4000, scoped, tag = 'input window, operand 8, single buffered']
    #allocation15 [shape = 's32[1]{0}', space=sflag, size = 0x4, scoped, tag = 'scoped memory for tpu_custom_call.1']
    #allocation16 [shape = 'u8[655360]{0}', space=vmem, size = 0xa0000, scoped, tag = 'input window, operand 9, single buffered']
    #allocation17 [shape = 'u8[4096]{0}', space=vmem, size = 0x1000, scoped, tag = 'output window, operand 0']
    %16 = vsyncpa [#allocation3], 0
    %s17 = scalar_lea.sflag [#allocation3], 1
    %18 = vsyncpa %s17, 0
    %19 = vsyncpa [#allocation6], 0
    %s20 = scalar_lea.sflag [#allocation6], 1
    %21 = vsyncpa %s20, 0
    %22 = vsyncpa [#allocation9], 0
    %s23 = scalar_lea.sflag [#allocation9], 1
    %24 = vsyncpa %s23, 0
    %25 = vsyncpa [#allocation12], 0
    %26 = vsyncpa [#allocation15], 0
    %27 = vsyncpa [#allocation4], 0
    %s28 = scalar_lea.sflag [#allocation4], 1
    %29 = vsyncpa %s28, 0
    loop: start=0, step=1, limit=4
    $region2: #{tpu_custom_call.1} parent=1 // loop_pre_header
      _
    $region3: #{tpu_custom_call.1} parent=1 // loop_header
      %s31 = sphi 0, %s35
      %p32 = scmp.ge.s32.totalorder %s31, 4
      %s41 = sphi 0, %s43
      %s44 = sphi 0, %s41
      %s45 = sphi 0, %s44
      %s61 = sphi 0, %s45
      %s67 = sphi 0, %s69
      %s70 = sphi 0, %s67
      %s71 = sphi 0, %s70
      %s87 = sphi 0, %s71
      %s93 = sphi 0, %s95
      %s96 = sphi 0, %s93
      %s97 = sphi 0, %s96
      %s113 = sphi 0, %s97
      %s119 = sphi 0, %s121
      %s122 = sphi 0, %s119
      %s123 = sphi 0, %s122
      %s139 = sphi 0, %s123
      %s143 = sphi 0, %s143
      %s145 = sphi 0, %s143
      %s146 = sphi 0, %s145
      %s160 = sphi 0, %s146
      %s164 = sphi 0, %s164
      %s166 = sphi 0, %s164
      %s167 = sphi 0, %s166
      %s181 = sphi 0, %s167
      %s185 = sphi 0, %s185
      %s187 = sphi 0, %s185
      %s188 = sphi 0, %s187
      %s202 = sphi 0, %s188
      %s206 = sphi 0, %s206
      %s208 = sphi 0, %s206
      %s209 = sphi 0, %s208
      %s223 = sphi 0, %s209
      %s227 = sphi 0, %s227
      %s229 = sphi 0, %s227
      %s230 = sphi 0, %s229
      %s244 = sphi 0, %s230
      %s248 = sphi 0, %s248
      %s250 = sphi 0, %s248
      %s251 = sphi 0, %s250
      %s265 = sphi 0, %s251
      %s269 = sphi 0, %s269
      %s271 = sphi 0, %s269
      %s272 = sphi 0, %s271
      %s286 = sphi 0, %s272
      %s292 = sphi 0, %s294
      %s295 = sphi 0, %s292
      %s296 = sphi 0, %s295
      %s312 = sphi 0, %s296
    $region4: #{tpu_custom_call.1} parent=1 // loop_header_branch
      %34 = sbr.rel (%p32) target = $region8
    $region5: #{tpu_custom_call.1} parent=1 // loop_body
      %s36 = ssub.s32 %s31, 1
      %s37 = ssub.s32 %s31, 2
      %s38 = sadd.s32 %s31, 1
      %s39 = ssub.s32 %s31, %s38
      %p40 = scmp.eq.s32.totalorder %s39, 0
      %s42 = sadd.s32 %s41, 1
      %s43 = scalar_select %p40, %s41, %s42
      %p46 = pneg %p40
      %p47 = scmp.eq.s32.totalorder %s31, 1
      %p48 = por %p46, %p47
      %p49 = scmp.ne.s32.totalorder %s41, %s44
      %p50 = scmp.eq.s32.totalorder %s31, 0
      %p51 = por %p49, %p50
      %p52 = scmp.ne.s32.totalorder %s41, %s44
      %p53 = scmp.eq.s32.totalorder %s36, 1
      %p54 = por %p52, %p53
      %p55 = scmp.ne.s32.totalorder %s44, %s45
      %p56 = scmp.eq.s32.totalorder %s36, 0
      %p57 = por %p55, %p56
      %p58 = scmp.ne.s32.totalorder %s44, %s45
      %p59 = scmp.eq.s32.totalorder %s37, 1
      %p60 = por %p58, %p59
      %p62 = scmp.ne.s32.totalorder %s45, %s61
      %p63 = scmp.eq.s32.totalorder %s37, 0
      %p64 = por %p62, %p63
      %s65 = ssub.s32 %s31, %s38
      %p66 = scmp.eq.s32.totalorder %s65, 0
      %s68 = sadd.s32 %s67, 1
      %s69 = scalar_select %p66, %s67, %s68
      %p72 = pneg %p66
      %p73 = scmp.eq.s32.totalorder %s31, 1
      %p74 = por %p72, %p73
      %p75 = scmp.ne.s32.totalorder %s67, %s70
      %p76 = scmp.eq.s32.totalorder %s31, 0
      %p77 = por %p75, %p76
      %p78 = scmp.ne.s32.totalorder %s67, %s70
      %p79 = scmp.eq.s32.totalorder %s36, 1
      %p80 = por %p78, %p79
      %p81 = scmp.ne.s32.totalorder %s70, %s71
      %p82 = scmp.eq.s32.totalorder %s36, 0
      %p83 = por %p81, %p82
      %p84 = scmp.ne.s32.totalorder %s70, %s71
      %p85 = scmp.eq.s32.totalorder %s37, 1
      %p86 = por %p84, %p85
      %p88 = scmp.ne.s32.totalorder %s71, %s87
      %p89 = scmp.eq.s32.totalorder %s37, 0
      %p90 = por %p88, %p89
      %s91 = ssub.s32 %s31, %s38
      %p92 = scmp.eq.s32.totalorder %s91, 0
      %s94 = sadd.s32 %s93, 1
      %s95 = scalar_select %p92, %s93, %s94
      %p98 = pneg %p92
      %p99 = scmp.eq.s32.totalorder %s31, 1
      %p100 = por %p98, %p99
      %p101 = scmp.ne.s32.totalorder %s93, %s96
      %p102 = scmp.eq.s32.totalorder %s31, 0
      %p103 = por %p101, %p102
      %p104 = scmp.ne.s32.totalorder %s93, %s96
      %p105 = scmp.eq.s32.totalorder %s36, 1
      %p106 = por %p104, %p105
      %p107 = scmp.ne.s32.totalorder %s96, %s97
      %p108 = scmp.eq.s32.totalorder %s36, 0
      %p109 = por %p107, %p108
      %p110 = scmp.ne.s32.totalorder %s96, %s97
      %p111 = scmp.eq.s32.totalorder %s37, 1
      %p112 = por %p110, %p111
      %p114 = scmp.ne.s32.totalorder %s97, %s113
      %p115 = scmp.eq.s32.totalorder %s37, 0
      %p116 = por %p114, %p115
      %s117 = ssub.s32 %s31, %s38
      %p118 = scmp.eq.s32.totalorder %s117, 0
      %s120 = sadd.s32 %s119, 1
      %s121 = scalar_select %p118, %s119, %s120
      %p124 = pneg %p118
      %p125 = scmp.eq.s32.totalorder %s31, 1
      %p126 = por %p124, %p125
      %p127 = scmp.ne.s32.totalorder %s119, %s122
      %p128 = scmp.eq.s32.totalorder %s31, 0
      %p129 = por %p127, %p128
      %p130 = scmp.ne.s32.totalorder %s119, %s122
      %p131 = scmp.eq.s32.totalorder %s36, 1
      %p132 = por %p130, %p131
      %p133 = scmp.ne.s32.totalorder %s122, %s123
      %p134 = scmp.eq.s32.totalorder %s36, 0
      %p135 = por %p133, %p134
      %p136 = scmp.ne.s32.totalorder %s122, %s123
      %p137 = scmp.eq.s32.totalorder %s37, 1
      %p138 = por %p136, %p137
      %p140 = scmp.ne.s32.totalorder %s123, %s139
      %p141 = scmp.eq.s32.totalorder %s37, 0
      %p142 = por %p140, %p141
      %s144 = sadd.s32 %s143, 1
      %p147 = scmp.eq.s32.totalorder %s31, 1
      %p148 = scmp.ne.s32.totalorder %s143, %s145
      %p149 = scmp.eq.s32.totalorder %s31, 0
      %p150 = por %p148, %p149
      %p151 = scmp.ne.s32.totalorder %s143, %s145
      %p152 = scmp.eq.s32.totalorder %s36, 1
      %p153 = por %p151, %p152
      %p154 = scmp.ne.s32.totalorder %s145, %s146
      %p155 = scmp.eq.s32.totalorder %s36, 0
      %p156 = por %p154, %p155
      %p157 = scmp.ne.s32.totalorder %s145, %s146
      %p158 = scmp.eq.s32.totalorder %s37, 1
      %p159 = por %p157, %p158
      %p161 = scmp.ne.s32.totalorder %s146, %s160
      %p162 = scmp.eq.s32.totalorder %s37, 0
      %p163 = por %p161, %p162
      %s165 = sadd.s32 %s164, 1
      %p168 = scmp.eq.s32.totalorder %s31, 1
      %p169 = scmp.ne.s32.totalorder %s164, %s166
      %p170 = scmp.eq.s32.totalorder %s31, 0
      %p171 = por %p169, %p170
      %p172 = scmp.ne.s32.totalorder %s164, %s166
      %p173 = scmp.eq.s32.totalorder %s36, 1
      %p174 = por %p172, %p173
      %p175 = scmp.ne.s32.totalorder %s166, %s167
      %p176 = scmp.eq.s32.totalorder %s36, 0
      %p177 = por %p175, %p176
      %p178 = scmp.ne.s32.totalorder %s166, %s167
      %p179 = scmp.eq.s32.totalorder %s37, 1
      %p180 = por %p178, %p179
      %p182 = scmp.ne.s32.totalorder %s167, %s181
      %p183 = scmp.eq.s32.totalorder %s37, 0
      %p184 = por %p182, %p183
      %s186 = sadd.s32 %s185, 1
      %p189 = scmp.eq.s32.totalorder %s31, 1
      %p190 = scmp.ne.s32.totalorder %s185, %s187
      %p191 = scmp.eq.s32.totalorder %s31, 0
      %p192 = por %p190, %p191
      %p193 = scmp.ne.s32.totalorder %s185, %s187
      %p194 = scmp.eq.s32.totalorder %s36, 1
      %p195 = por %p193, %p194
      %p196 = scmp.ne.s32.totalorder %s187, %s188
      %p197 = scmp.eq.s32.totalorder %s36, 0
      %p198 = por %p196, %p197
      %p199 = scmp.ne.s32.totalorder %s187, %s188
      %p200 = scmp.eq.s32.totalorder %s37, 1
      %p201 = por %p199, %p200
      %p203 = scmp.ne.s32.totalorder %s188, %s202
      %p204 = scmp.eq.s32.totalorder %s37, 0
      %p205 = por %p203, %p204
      %s207 = sadd.s32 %s206, 1
      %p210 = scmp.eq.s32.totalorder %s31, 1
      %p211 = scmp.ne.s32.totalorder %s206, %s208
      %p212 = scmp.eq.s32.totalorder %s31, 0
      %p213 = por %p211, %p212
      %p214 = scmp.ne.s32.totalorder %s206, %s208
      %p215 = scmp.eq.s32.totalorder %s36, 1
      %p216 = por %p214, %p215
      %p217 = scmp.ne.s32.totalorder %s208, %s209
      %p218 = scmp.eq.s32.totalorder %s36, 0
      %p219 = por %p217, %p218
      %p220 = scmp.ne.s32.totalorder %s208, %s209
      %p221 = scmp.eq.s32.totalorder %s37, 1
      %p222 = por %p220, %p221
      %p224 = scmp.ne.s32.totalorder %s209, %s223
      %p225 = scmp.eq.s32.totalorder %s37, 0
      %p226 = por %p224, %p225
      %s228 = sadd.s32 %s227, 1
      %p231 = scmp.eq.s32.totalorder %s31, 1
      %p232 = scmp.ne.s32.totalorder %s227, %s229
      %p233 = scmp.eq.s32.totalorder %s31, 0
      %p234 = por %p232, %p233
      %p235 = scmp.ne.s32.totalorder %s227, %s229
      %p236 = scmp.eq.s32.totalorder %s36, 1
      %p237 = por %p235, %p236
      %p238 = scmp.ne.s32.totalorder %s229, %s230
      %p239 = scmp.eq.s32.totalorder %s36, 0
      %p240 = por %p238, %p239
      %p241 = scmp.ne.s32.totalorder %s229, %s230
      %p242 = scmp.eq.s32.totalorder %s37, 1
      %p243 = por %p241, %p242
      %p245 = scmp.ne.s32.totalorder %s230, %s244
      %p246 = scmp.eq.s32.totalorder %s37, 0
      %p247 = por %p245, %p246
      %s249 = sadd.s32 %s248, 1
      %p252 = scmp.eq.s32.totalorder %s31, 1
      %p253 = scmp.ne.s32.totalorder %s248, %s250
      %p254 = scmp.eq.s32.totalorder %s31, 0
      %p255 = por %p253, %p254
      %p256 = scmp.ne.s32.totalorder %s248, %s250
      %p257 = scmp.eq.s32.totalorder %s36, 1
      %p258 = por %p256, %p257
      %p259 = scmp.ne.s32.totalorder %s250, %s251
      %p260 = scmp.eq.s32.totalorder %s36, 0
      %p261 = por %p259, %p260
      %p262 = scmp.ne.s32.totalorder %s250, %s251
      %p263 = scmp.eq.s32.totalorder %s37, 1
      %p264 = por %p262, %p263
      %p266 = scmp.ne.s32.totalorder %s251, %s265
      %p267 = scmp.eq.s32.totalorder %s37, 0
      %p268 = por %p266, %p267
      %s270 = sadd.s32 %s269, 1
      %p273 = scmp.eq.s32.totalorder %s31, 1
      %p274 = scmp.ne.s32.totalorder %s269, %s271
      %p275 = scmp.eq.s32.totalorder %s31, 0
      %p276 = por %p274, %p275
      %p277 = scmp.ne.s32.totalorder %s269, %s271
      %p278 = scmp.eq.s32.totalorder %s36, 1
      %p279 = por %p277, %p278
      %p280 = scmp.ne.s32.totalorder %s271, %s272
      %p281 = scmp.eq.s32.totalorder %s36, 0
      %p282 = por %p280, %p281
      %p283 = scmp.ne.s32.totalorder %s271, %s272
      %p284 = scmp.eq.s32.totalorder %s37, 1
      %p285 = por %p283, %p284
      %p287 = scmp.ne.s32.totalorder %s272, %s286
      %p288 = scmp.eq.s32.totalorder %s37, 0
      %p289 = por %p287, %p288
      %s290 = ssub.s32 %s31, %s38
      %p291 = scmp.eq.s32.totalorder %s290, 0
      %s293 = sadd.s32 %s292, 1
      %s294 = scalar_select %p291, %s292, %s293
      %p297 = pneg %p291
      %p298 = scmp.eq.s32.totalorder %s31, 1
      %p299 = por %p297, %p298
      %p300 = scmp.ne.s32.totalorder %s292, %s295
      %p301 = scmp.eq.s32.totalorder %s31, 0
      %p302 = por %p300, %p301
      %p303 = scmp.ne.s32.totalorder %s292, %s295
      %p304 = scmp.eq.s32.totalorder %s36, 1
      %p305 = por %p303, %p304
      %p306 = scmp.ne.s32.totalorder %s295, %s296
      %p307 = scmp.eq.s32.totalorder %s36, 0
      %p308 = por %p306, %p307
      %p309 = scmp.ne.s32.totalorder %s295, %s296
      %p310 = scmp.eq.s32.totalorder %s37, 1
      %p311 = por %p309, %p310
      %p313 = scmp.ne.s32.totalorder %s296, %s312
      %p314 = scmp.eq.s32.totalorder %s37, 0
      %p315 = por %p313, %p314
      %p316 = scmp.le.s32.totalorder 1, %s31
      %p317 = scmp.lt.s32.totalorder %s31, 3
      %p318 = pnand %p316, %p317
      %p319 = pneg %p318
      // Predicated region
      $region9: #{tpu_custom_call.1} parent=5 // pred_check
        _
      $region10: #{tpu_custom_call.1} parent=5 // pred_check_branch
        %321 = sbr.rel (%p318) target = $region12
      $region11: #{tpu_custom_call.1} parent=5 // pred_region
        %s322 = ssub.s32 %s31, 1
        // Predicated region
        $region13: #{tpu_custom_call.1} parent=11 // pred_check
          %p323 = pneg %p156
        $region14: #{tpu_custom_call.1} parent=11 // pred_check_branch
          %325 = sbr.rel (%p323) target = $region16
        $region15: #{tpu_custom_call.1} parent=11 // pred_region
          _
        $region16: #{tpu_custom_call.1} parent=11 // pred_fallthru
          _
        // Predicated region
        $region17: #{tpu_custom_call.1} parent=11 // pred_check
          %p326 = pneg %p177
        $region18: #{tpu_custom_call.1} parent=11 // pred_check_branch
          %328 = sbr.rel (%p326) target = $region20
        $region19: #{tpu_custom_call.1} parent=11 // pred_region
          %s330 = ssub.s32 512, 512
          %331 = vsyncadd [#allocation9], %s330
          %s332 = sshll.u32 [#allocation10], 4
          %s333 = int_to_ptr.vmem [resolvable:$true] %s332
          %338 = dma.hbm_to_vmem [thread:$0]  %s5, 512, %s333, [#allocation9], 128, 128, 8
        $region20: #{tpu_custom_call.1} parent=11 // pred_fallthru
          _
        // Predicated region
        $region21: #{tpu_custom_call.1} parent=11 // pred_check
          %p339 = pneg %p198
        $region22: #{tpu_custom_call.1} parent=11 // pred_check_branch
          %341 = sbr.rel (%p339) target = $region24
        $region23: #{tpu_custom_call.1} parent=11 // pred_region
          %s343 = ssub.s32 512, 512
          %344 = vsyncadd [#allocation12], %s343
          %s345 = sshll.u32 [#allocation11], 4
          %s346 = int_to_ptr.vmem [resolvable:$true] %s345
          %351 = dma.hbm_to_vmem [thread:$0]  %s6, 512, %s346, [#allocation12], 128, 128, 8
        $region24: #{tpu_custom_call.1} parent=11 // pred_fallthru
          _
        // Predicated region
        $region25: #{tpu_custom_call.1} parent=11 // pred_check
          %p352 = pneg %p219
        $region26: #{tpu_custom_call.1} parent=11 // pred_check_branch
          %354 = sbr.rel (%p352) target = $region28
        $region27: #{tpu_custom_call.1} parent=11 // pred_region
          %s356 = ssub.s32 512, 512
          %357 = vsyncadd [#allocation12], %s356
          %s358 = sshll.u32 [#allocation13], 4
          %s359 = int_to_ptr.vmem [resolvable:$true] %s358
          %364 = dma.hbm_to_vmem [thread:$0]  %s7, 512, %s359, [#allocation12], 128, 128, 8
        $region28: #{tpu_custom_call.1} parent=11 // pred_fallthru
          _
        // Predicated region
        $region29: #{tpu_custom_call.1} parent=11 // pred_check
          %p365 = pneg %p240
        $region30: #{tpu_custom_call.1} parent=11 // pred_check_branch
          %367 = sbr.rel (%p365) target = $region32
        $region31: #{tpu_custom_call.1} parent=11 // pred_region
          %s369 = ssub.s32 512, 512
          %370 = vsyncadd [#allocation15], %s369
          %s371 = sshll.u32 [#allocation14], 4
          %s372 = int_to_ptr.vmem [resolvable:$true] %s371
          %377 = dma.hbm_to_vmem [thread:$0]  %s8, 512, %s372, [#allocation15], 128, 128, 8
        $region32: #{tpu_custom_call.1} parent=11 // pred_fallthru
          _
        // Predicated region
        $region33: #{tpu_custom_call.1} parent=11 // pred_check
          %p378 = pneg %p261
        $region34: #{tpu_custom_call.1} parent=11 // pred_check_branch
          %380 = sbr.rel (%p378) target = $region36
        $region35: #{tpu_custom_call.1} parent=11 // pred_region
          %s382 = ssub.s32 20480, 20480
          %383 = vsyncadd [#allocation15], %s382
          %s384 = sshll.u32 [#allocation16], 4
          %s385 = int_to_ptr.vmem [resolvable:$true] %s384
          %390 = dma.hbm_to_vmem [thread:$0]  %s9, 20480, %s385, [#allocation15], 1280, 1280, 80
        $region36: #{tpu_custom_call.1} parent=11 // pred_fallthru
          _
        // Predicated region
        $region37: #{tpu_custom_call.1} parent=11 // pred_check
          %p391 = pneg %p282
        $region38: #{tpu_custom_call.1} parent=11 // pred_check_branch
          %393 = sbr.rel (%p391) target = $region40
        $region39: #{tpu_custom_call.1} parent=11 // pred_region
          _
        $region40: #{tpu_custom_call.1} parent=11 // pred_fallthru
          _
      $region12: #{tpu_custom_call.1} parent=5 // pred_fallthru
        _
      %p394 = scmp.lt.s32.totalorder %s31, 2
      // Predicated region
      $region41: #{tpu_custom_call.1} parent=5 // pred_check
        %p395 = pneg %p394
      $region42: #{tpu_custom_call.1} parent=5 // pred_check_branch
        %397 = sbr.rel (%p395) target = $region44
      $region43: #{tpu_custom_call.1} parent=5 // pred_region
        // Predicated region
        $region45: #{tpu_custom_call.1} parent=43 // pred_check
          %p398 = pneg %p51
        $region46: #{tpu_custom_call.1} parent=43 // pred_check_branch
          %400 = sbr.rel (%p398) target = $region48
        $region47: #{tpu_custom_call.1} parent=43 // pred_region
          %s401 = sand.u32 %s41, 1
          %s402 = scalar_lea.sflag [#allocation3], %s401
          %s403 = sand.u32 %s41, 1
          %s404 = smul.addr %s403, 8
          %s405 = scalar_lea.vmem [#allocation2], %s404
          %s407 = ssub.s32 128, 128
          %408 = vsyncadd %s402, %s407
          %s409 = smul.addr %s31, 128
          %s410 = scalar_lea.hbm %s0, %s409
          %s412 = sshll.u32 %s405, 4
          %s413 = int_to_ptr.vmem [resolvable:$true] %s412
          %415 = dma.hbm_to_vmem [thread:$0]  %s410, 128, %s413, %s402
        $region48: #{tpu_custom_call.1} parent=43 // pred_fallthru
          _
        // Predicated region
        $region49: #{tpu_custom_call.1} parent=43 // pred_check
          %p416 = pneg %p77
        $region50: #{tpu_custom_call.1} parent=43 // pred_check_branch
          %418 = sbr.rel (%p416) target = $region52
        $region51: #{tpu_custom_call.1} parent=43 // pred_region
          %s419 = sand.u32 %s31, 1
          %s420 = scalar_lea.sflag [#allocation6], %s419
          %s421 = sand.u32 %s67, 1
          %s422 = smul.addr %s421, 8
          %s423 = scalar_lea.vmem [#allocation5], %s422
          %s425 = ssub.s32 128, 128
          %426 = vsyncadd %s420, %s425
          %s427 = smul.addr %s31, 128
          %s428 = scalar_lea.hbm %s1, %s427
          %s430 = sshll.u32 %s423, 4
          %s431 = int_to_ptr.vmem [resolvable:$true] %s430
          %433 = dma.hbm_to_vmem [thread:$0]  %s428, 128, %s431, %s420
        $region52: #{tpu_custom_call.1} parent=43 // pred_fallthru
          _
        // Predicated region
        $region53: #{tpu_custom_call.1} parent=43 // pred_check
          %p434 = pneg %p103
        $region54: #{tpu_custom_call.1} parent=43 // pred_check_branch
          %436 = sbr.rel (%p434) target = $region56
        $region55: #{tpu_custom_call.1} parent=43 // pred_region
          %s437 = sand.u32 %s31, 1
          %s438 = scalar_lea.sflag [#allocation6], %s437
          %s439 = sand.u32 %s93, 1
          %s440 = smul.addr %s439, 8
          %s441 = scalar_lea.vmem [#allocation7], %s440
          %s443 = ssub.s32 128, 128
          %444 = vsyncadd %s438, %s443
          %s445 = smul.addr %s31, 128
          %s446 = scalar_lea.hbm %s2, %s445
          %s448 = sshll.u32 %s441, 4
          %s449 = int_to_ptr.vmem [resolvable:$true] %s448
          %451 = dma.hbm_to_vmem [thread:$0]  %s446, 128, %s449, %s438
        $region56: #{tpu_custom_call.1} parent=43 // pred_fallthru
          _
        // Predicated region
        $region57: #{tpu_custom_call.1} parent=43 // pred_check
          %p452 = pneg %p129
        $region58: #{tpu_custom_call.1} parent=43 // pred_check_branch
          %454 = sbr.rel (%p452) target = $region60
        $region59: #{tpu_custom_call.1} parent=43 // pred_region
          %s455 = sand.u32 %s31, 1
          %s456 = scalar_lea.sflag [#allocation9], %s455
          %s457 = sand.u32 %s119, 1
          %s458 = smul.addr %s457, 8
          %s459 = scalar_lea.vmem [#allocation8], %s458
          %s461 = ssub.s32 128, 128
          %462 = vsyncadd %s456, %s461
          %s463 = smul.addr %s31, 128
          %s464 = scalar_lea.hbm %s3, %s463
          %s466 = sshll.u32 %s459, 4
          %s467 = int_to_ptr.vmem [resolvable:$true] %s466
          %469 = dma.hbm_to_vmem [thread:$0]  %s464, 128, %s467, %s456
        $region60: #{tpu_custom_call.1} parent=43 // pred_fallthru
          _
      $region44: #{tpu_custom_call.1} parent=5 // pred_fallthru
        _
      %p470 = scmp.le.s32.totalorder 1, %s31
      %p471 = scmp.lt.s32.totalorder %s31, 3
      %p472 = pnand %p470, %p471
      %p473 = pneg %p472
      // Predicated region
      $region61: #{tpu_custom_call.1} parent=5 // pred_check
        _
      $region62: #{tpu_custom_call.1} parent=5 // pred_check_branch
        %475 = sbr.rel (%p472) target = $region64
      $region63: #{tpu_custom_call.1} parent=5 // pred_region
        %s476 = ssub.s32 %s31, 1
        %s477 = sand.u32 %s44, 1
        %s478 = scalar_lea.sflag [#allocation3], %s477
        %s479 = sand.u32 %s44, 1
        %s480 = smul.addr %s479, 8
        %s481 = scalar_lea.vmem [#allocation2], %s480
        // Predicated region
        $region65: #{tpu_custom_call.1} parent=63 // pred_check
          %p482 = pneg %p57
        $region66: #{tpu_custom_call.1} parent=63 // pred_check_branch
          %484 = sbr.rel (%p482) target = $region68
        $region67: #{tpu_custom_call.1} parent=63 // pred_region
          %485 = dma.done %s478, 128
        $region68: #{tpu_custom_call.1} parent=63 // pred_fallthru
          _
        %s486 = sand.u32 %s36, 1
        %s487 = scalar_lea.sflag [#allocation6], %s486
        %s488 = sand.u32 %s70, 1
        %s489 = smul.addr %s488, 8
        %s490 = scalar_lea.vmem [#allocation5], %s489
        // Predicated region
        $region69: #{tpu_custom_call.1} parent=63 // pred_check
          %p491 = pneg %p83
        $region70: #{tpu_custom_call.1} parent=63 // pred_check_branch
          %493 = sbr.rel (%p491) target = $region72
        $region71: #{tpu_custom_call.1} parent=63 // pred_region
          %494 = dma.done %s487, 128
        $region72: #{tpu_custom_call.1} parent=63 // pred_fallthru
          _
        %s495 = sand.u32 %s36, 1
        %s496 = scalar_lea.sflag [#allocation6], %s495
        %s497 = sand.u32 %s96, 1
        %s498 = smul.addr %s497, 8
        %s499 = scalar_lea.vmem [#allocation7], %s498
        // Predicated region
        $region73: #{tpu_custom_call.1} parent=63 // pred_check
          %p500 = pneg %p109
        $region74: #{tpu_custom_call.1} parent=63 // pred_check_branch
          %502 = sbr.rel (%p500) target = $region76
        $region75: #{tpu_custom_call.1} parent=63 // pred_region
          %503 = dma.done %s496, 128
        $region76: #{tpu_custom_call.1} parent=63 // pred_fallthru
          _
        %s504 = sand.u32 %s36, 1
        %s505 = scalar_lea.sflag [#allocation9], %s504
        %s506 = sand.u32 %s122, 1
        %s507 = smul.addr %s506, 8
        %s508 = scalar_lea.vmem [#allocation8], %s507
        // Predicated region
        $region77: #{tpu_custom_call.1} parent=63 // pred_check
          %p509 = pneg %p135
        $region78: #{tpu_custom_call.1} parent=63 // pred_check_branch
          %511 = sbr.rel (%p509) target = $region80
        $region79: #{tpu_custom_call.1} parent=63 // pred_region
          %512 = dma.done %s505, 128
        $region80: #{tpu_custom_call.1} parent=63 // pred_fallthru
          _
        // Predicated region
        $region81: #{tpu_custom_call.1} parent=63 // pred_check
          %p513 = pneg %p177
        $region82: #{tpu_custom_call.1} parent=63 // pred_check_branch
          %515 = sbr.rel (%p513) target = $region84
        $region83: #{tpu_custom_call.1} parent=63 // pred_region
          %516 = dma.done [#allocation9], 512
        $region84: #{tpu_custom_call.1} parent=63 // pred_fallthru
          _
        // Predicated region
        $region85: #{tpu_custom_call.1} parent=63 // pred_check
          %p517 = pneg %p198
        $region86: #{tpu_custom_call.1} parent=63 // pred_check_branch
          %519 = sbr.rel (%p517) target = $region88
        $region87: #{tpu_custom_call.1} parent=63 // pred_region
          %520 = dma.done [#allocation12], 512
        $region88: #{tpu_custom_call.1} parent=63 // pred_fallthru
          _
        // Predicated region
        $region89: #{tpu_custom_call.1} parent=63 // pred_check
          %p521 = pneg %p219
        $region90: #{tpu_custom_call.1} parent=63 // pred_check_branch
          %523 = sbr.rel (%p521) target = $region92
        $region91: #{tpu_custom_call.1} parent=63 // pred_region
          %524 = dma.done [#allocation12], 512
        $region92: #{tpu_custom_call.1} parent=63 // pred_fallthru
          _
        // Predicated region
        $region93: #{tpu_custom_call.1} parent=63 // pred_check
          %p525 = pneg %p240
        $region94: #{tpu_custom_call.1} parent=63 // pred_check_branch
          %527 = sbr.rel (%p525) target = $region96
        $region95: #{tpu_custom_call.1} parent=63 // pred_region
          %528 = dma.done [#allocation15], 512
        $region96: #{tpu_custom_call.1} parent=63 // pred_fallthru
          _
        // Predicated region
        $region97: #{tpu_custom_call.1} parent=63 // pred_check
          %p529 = pneg %p261
        $region98: #{tpu_custom_call.1} parent=63 // pred_check_branch
          %531 = sbr.rel (%p529) target = $region100
        $region99: #{tpu_custom_call.1} parent=63 // pred_region
          %532 = dma.done [#allocation15], 20480
        $region100: #{tpu_custom_call.1} parent=63 // pred_fallthru
          _
        %s533 = sand.u32 %s44, 1
        %s534 = scalar_lea.sflag [#allocation3], %s533
        %s535 = sand.u32 %s44, 1
        %s536 = smul.addr %s535, 8
        %s537 = scalar_lea.vmem [#allocation2], %s536
        %p538 = pneg %p57
        %p539 = pneg %p54
        %s540 = sand.u32 %s36, 1
        %s541 = scalar_lea.sflag [#allocation6], %s540
        %s542 = sand.u32 %s70, 1
        %s543 = smul.addr %s542, 8
        %s544 = scalar_lea.vmem [#allocation5], %s543
        %p545 = pneg %p83
        %p546 = pneg %p80
        %s547 = sand.u32 %s36, 1
        %s548 = scalar_lea.sflag [#allocation6], %s547
        %s549 = sand.u32 %s96, 1
        %s550 = smul.addr %s549, 8
        %s551 = scalar_lea.vmem [#allocation7], %s550
        %p552 = pneg %p109
        %p553 = pneg %p106
        %s554 = sand.u32 %s36, 1
        %s555 = scalar_lea.sflag [#allocation9], %s554
        %s556 = sand.u32 %s122, 1
        %s557 = smul.addr %s556, 8
        %s558 = scalar_lea.vmem [#allocation8], %s557
        %p559 = pneg %p135
        %p560 = pneg %p132
        %p561 = pneg %p156
        %p562 = pneg %p153
        %p563 = pneg %p177
        %p564 = pneg %p174
        %p565 = pneg %p198
        %p566 = pneg %p195
        %p567 = pneg %p219
        %p568 = pneg %p216
        %p569 = pneg %p240
        %p570 = pneg %p237
        %p571 = pneg %p261
        %p572 = pneg %p258
        %p573 = pneg %p282
        %p574 = pneg %p279
        %p575 = pneg %p308
        %p576 = pneg %p305
        %s577 = sand.u32 %s295, 1
        %s578 = scalar_lea.sflag [#allocation4], %s577
        %s579 = sand.u32 %s295, 1
        %s580 = smul.addr %s579, 4
        %s581 = scalar_lea.vmem [#allocation17], %s580
        %v583 = vld [vmem:[%s481] sm:$0xff]
        %v584 = vld [vmem:[%s490] sm:$0xff]
        %v585 = vld [vmem:[%s499] sm:$0xff]
        %v586 = vld [vmem:[%s508] sm:$0xff]
        %v587 = vld [vmem:[%s4] sm:$0x1]
        %v588 = vld [vmem:[#allocation10] sm:$0xff]
        %v589 = vld [vmem:[#allocation10 + $0x8] sm:$0xff]
        %v590 = vld [vmem:[#allocation10 + $0x10] sm:$0xff]
        %v591 = vld [vmem:[#allocation10 + $0x18] sm:$0xff]
        %v592 = vld [vmem:[#allocation11] sm:$0xff]
        %v593 = vld [vmem:[#allocation11 + $0x8] sm:$0xff]
        %v594 = vld [vmem:[#allocation11 + $0x10] sm:$0xff]
        %v595 = vld [vmem:[#allocation11 + $0x18] sm:$0xff]
        %v596 = vld [vmem:[#allocation13] sm:$0xff]
        %v597 = vld [vmem:[#allocation13 + $0x8] sm:$0xff]
        %v598 = vld [vmem:[#allocation13 + $0x10] sm:$0xff]
        %v599 = vld [vmem:[#allocation13 + $0x18] sm:$0xff]
        %v600 = vld [vmem:[#allocation14] sm:$0xff]
        %v601 = vld [vmem:[#allocation14 + $0x8] sm:$0xff]
        %v602 = vld [vmem:[#allocation14 + $0x10] sm:$0xff]
        %v603 = vld [vmem:[#allocation14 + $0x18] sm:$0xff]
        %604 = vadd.xlane.f32.xlu0 %v583
        %v605 = vpop.xlane.xlu0 %604
        %v606 = vmul.f32 %v605, 0.03125
        %v607 = vsub.f32 %v583, %v606
        %v608 = vmul.f32 %v607, %v607
        %v610 = vlaneseq
        %v611 = vshrl.u32 %v610, 7
        %v612 = vsub.s32 0, %v611
        %v613 = vrot.slane %v587, %v612
        %v615 = vmul.f32 %v608, %v613
        %616 = vadd.xlane.f32.xlu0 %v615
        %v617 = vpop.xlane.xlu0 %616
        %v618 = vmul.f32 %v617, 0.03125
        %v619 = vadd.f32 %v618, 1e-05
        %v620 = vrsqrt.pop %v619
        %v621 = vmul.f32 %v607, %v620
        %v622 = vld [vmem:[%s10] sm:$0x1]
        %v624 = vlaneseq
        %v625 = vshrl.u32 %v624, 7
        %v626 = vsub.s32 0, %v625
        %v627 = vrot.slane %v622, %v626
        %v629 = vmul.f32 %v621, %v627
        %v630 = vld [vmem:[%s10 + $0x1] sm:$0x1]
        %v632 = vlaneseq
        %v633 = vshrl.u32 %v632, 7
        %v634 = vsub.s32 0, %v633
        %v635 = vrot.slane %v630, %v634
        %v637 = vadd.f32 %v629, %v635
        %v638 = vpack.c.bf16 %v637, %v637
        %v639 = vld [vmem:[#allocation16] sm:$0xff]
        %v640 = vld [vmem:[#allocation16 + $0x8] sm:$0xf]
        %v641 = vld [vmem:[#allocation16 + $0x50] sm:$0xff]
        %v642 = vld [vmem:[#allocation16 + $0x58] sm:$0xf]
        %v643 = vld [vmem:[#allocation16 + $0xa0] sm:$0xff]
        %v644 = vld [vmem:[#allocation16 + $0xa8] sm:$0xf]
        %v645 = vld [vmem:[#allocation16 + $0xf0] sm:$0xff]
        %v646 = vld [vmem:[#allocation16 + $0xf8] sm:$0xf]
        %v647 = vld [vmem:[#allocation16 + $0x140] sm:$0xff]
        %v648 = vld [vmem:[#allocation16 + $0x148] sm:$0xf]
        %v649 = vld [vmem:[#allocation16 + $0x190] sm:$0xff]
        %v650 = vld [vmem:[#allocation16 + $0x198] sm:$0xf]
        %v651 = vld [vmem:[#allocation16 + $0x1e0] sm:$0xff]
        %v652 = vld [vmem:[#allocation16 + $0x1e8] sm:$0xf]
        %v653 = vld [vmem:[#allocation16 + $0x230] sm:$0xff]
        %v654 = vld [vmem:[#allocation16 + $0x238] sm:$0xf]
        %v655 = vld [vmem:[#allocation16 + $0x280] sm:$0xff]
        %v656 = vld [vmem:[#allocation16 + $0x288] sm:$0xf]
        %v657 = vld [vmem:[#allocation16 + $0x2d0] sm:$0xff]
        %v658 = vld [vmem:[#allocation16 + $0x2d8] sm:$0xf]
        %v659 = vld [vmem:[#allocation16 + $0x320] sm:$0xff]
        %v660 = vld [vmem:[#allocation16 + $0x328] sm:$0xf]
        %v661 = vld [vmem:[#allocation16 + $0x370] sm:$0xff]
        %v662 = vld [vmem:[#allocation16 + $0x378] sm:$0xf]
        %v663 = vld [vmem:[#allocation16 + $0x3c0] sm:$0xff]
        %v664 = vld [vmem:[#allocation16 + $0x3c8] sm:$0xf]
        %v665 = vld [vmem:[#allocation16 + $0x410] sm:$0xff]
        %v666 = vld [vmem:[#allocation16 + $0x418] sm:$0xf]
        %v667 = vld [vmem:[#allocation16 + $0x460] sm:$0xff]
        %v668 = vld [vmem:[#allocation16 + $0x468] sm:$0xf]
        %v669 = vld [vmem:[#allocation16 + $0x4b0] sm:$0xff]
        %v670 = vld [vmem:[#allocation16 + $0x4b8] sm:$0xf]
        %v671 = vld [vmem:[%s10 + $0x2] sm:$0x7]
        %v673 = vlaneseq
        %v674 = vshrl.u32 %v673, 7
        %v675 = vsub.s32 0, %v674
        %v676 = vrot.slane %v671, %v675
        %v677 = vlaneseq
        %v678 = vshrl.u32 %v677, 7
        %v679 = vsub.s32 1, %v678
        %v680 = vrot.slane %v671, %v679
        %v681 = vlaneseq
        %v682 = vshrl.u32 %v681, 7
        %v683 = vsub.s32 2, %v682
        %v684 = vrot.slane %v671, %v683
        %v720 = vunpack.c.l.b16 %v639
        %v721 = vunpack.c.h.b16 %v639
        %v722 = vunpack.c.l.b16 %v640
        %v723 = vunpack.c.l.b16 %v641
        %v724 = vunpack.c.h.b16 %v641
        %v725 = vunpack.c.l.b16 %v642
        %v726 = vunpack.c.l.b16 %v643
        %v727 = vunpack.c.h.b16 %v643
        %v728 = vunpack.c.l.b16 %v644
        %v729 = vunpack.c.l.b16 %v645
        %v730 = vunpack.c.h.b16 %v645
        %v731 = vunpack.c.l.b16 %v646
        %v732 = vunpack.c.l.b16 %v647
        %v733 = vunpack.c.h.b16 %v647
        %v734 = vunpack.c.l.b16 %v648
        %v735 = vunpack.c.l.b16 %v649
        %v736 = vunpack.c.h.b16 %v649
        %v737 = vunpack.c.l.b16 %v650
        %v738 = vunpack.c.l.b16 %v651
        %v739 = vunpack.c.h.b16 %v651
        %v740 = vunpack.c.l.b16 %v652
        %v741 = vunpack.c.l.b16 %v653
        %v742 = vunpack.c.h.b16 %v653
        %v743 = vunpack.c.l.b16 %v654
        %v744 = vunpack.c.l.b16 %v655
        %v745 = vunpack.c.h.b16 %v655
        %v746 = vunpack.c.l.b16 %v656
        %v747 = vunpack.c.l.b16 %v657
        %v748 = vunpack.c.h.b16 %v657
        %v749 = vunpack.c.l.b16 %v658
        %v750 = vunpack.c.l.b16 %v659
        %v751 = vunpack.c.h.b16 %v659
        %v752 = vunpack.c.l.b16 %v660
        %v753 = vunpack.c.l.b16 %v661
        %v754 = vunpack.c.h.b16 %v661
        %v755 = vunpack.c.l.b16 %v662
        %v756 = vunpack.c.l.b16 %v663
        %v757 = vunpack.c.h.b16 %v663
        %v758 = vunpack.c.l.b16 %v664
        %v759 = vunpack.c.l.b16 %v665
        %v760 = vunpack.c.h.b16 %v665
        %v761 = vunpack.c.l.b16 %v666
        %v762 = vunpack.c.l.b16 %v667
        %v763 = vunpack.c.h.b16 %v667
        %v764 = vunpack.c.l.b16 %v668
        %v765 = vunpack.c.l.b16 %v669
        %v766 = vunpack.c.h.b16 %v669
        %v767 = vunpack.c.l.b16 %v670
        %v768 = vpack.c.b16 %v723, %v720
        %v769 = vpack.c.b16 %v724, %v721
        %v770 = vpack.c.b16 %v725, %v722
        %v771 = vpack.c.b16 %v729, %v726
        %v772 = vpack.c.b16 %v730, %v727
        %v773 = vpack.c.b16 %v731, %v728
        %v774 = vpack.c.b16 %v735, %v732
        %v775 = vpack.c.b16 %v736, %v733
        %v776 = vpack.c.b16 %v737, %v734
        %v777 = vpack.c.b16 %v741, %v738
        %v778 = vpack.c.b16 %v742, %v739
        %v779 = vpack.c.b16 %v743, %v740
        %v780 = vpack.c.b16 %v747, %v744
        %v781 = vpack.c.b16 %v748, %v745
        %v782 = vpack.c.b16 %v749, %v746
        %v783 = vpack.c.b16 %v753, %v750
        %v784 = vpack.c.b16 %v754, %v751
        %v785 = vpack.c.b16 %v755, %v752
        %v786 = vpack.c.b16 %v759, %v756
        %v787 = vpack.c.b16 %v760, %v757
        %v788 = vpack.c.b16 %v761, %v758
        %v789 = vpack.c.b16 %v765, %v762
        %v790 = vpack.c.b16 %v766, %v763
        %v791 = vpack.c.b16 %v767, %v764
        %816 = vmatprep.subr.bf16.mxu0 %v769
        %817 = vmatpush1.bf16.msra.mxu0 %v768
        %818 = vmatprep.subr.bf16.mxu0 %v772
        %819 = vmatpush1.bf16.msra.mxu0 %v771
        %820 = vmatprep.subr.bf16.mxu0 %v775
        %821 = vmatpush1.bf16.msra.mxu0 %v774
        %822 = vmatprep.subr.bf16.mxu0 %v778
        %823 = vmatpush1.bf16.msra.mxu0 %v777
        %824 = vmatprep.subr.bf16.mxu0 %v781
        %825 = vmatpush1.bf16.msra.mxu0 %v780
        %826 = vmatprep.subr.bf16.mxu0 %v784
        %827 = vmatpush1.bf16.msra.mxu0 %v783
        %828 = vmatprep.subr.bf16.mxu0 %v787
        %829 = vmatpush1.bf16.msra.mxu0 %v786
        %830 = vmatprep.subr.bf16.mxu0 %v790
        %831 = vmatpush1.bf16.msra.mxu0 %v789
        %832 = vmatprep.subr.bf16.mxu0 0
        %833 = vmatpush1.bf16.msra.mxu0 0
        %834 = vmatprep.subr.bf16.mxu0 0
        %835 = vmatpush1.bf16.msra.mxu0 0
        %836 = vmatprep.subr.bf16.mxu0 0
        %837 = vmatpush1.bf16.msra.mxu0 0
        %838 = vmatprep.subr.bf16.mxu0 0
        %839 = vmatpush1.bf16.msra.mxu0 0
        %840 = vmatprep.subr.bf16.mxu0 0
        %841 = vmatpush1.bf16.msra.mxu0 0
        %842 = vmatprep.subr.bf16.mxu0 0
        %843 = vmatpush1.bf16.msra.mxu0 0
        %844 = vmatprep.subr.bf16.mxu0 0
        %845 = vmatpush1.bf16.msra.mxu0 0
        %846 = vmatprep.subr.bf16.mxu0 0
        %847 = vmatpush1.bf16.msra.mxu0 0
        %848 = vmatprep.mubr.bf16.mxu0 0
        %849 = vmatmul.mubr.bf16.gmra.mrb[0].mxu0 %v638
        %v850 = vpop.f32.mrb[0].mxu0
        %v851 = vadd.f32 %v676, %v850
        %v852 = vpop.f32.mrb[0].mxu0
        %v853 = vadd.f32 %v680, %v852
        %v854 = vpop.f32.mrb[0].mxu0
        %v855 = vpop.f32.mrb[0].mxu0
        %856 = vdwg.mxu0
        %857 = vmatprep.subr.bf16.mxu0 0
        %858 = vmatpush1.bf16.msra.mxu0 %v770
        %859 = vmatprep.subr.bf16.mxu0 0
        %860 = vmatpush1.bf16.msra.mxu0 %v773
        %861 = vmatprep.subr.bf16.mxu0 0
        %862 = vmatpush1.bf16.msra.mxu0 %v776
        %863 = vmatprep.subr.bf16.mxu0 0
        %864 = vmatpush1.bf16.msra.mxu0 %v779
        %865 = vmatprep.subr.bf16.mxu0 0
        %866 = vmatpush1.bf16.msra.mxu0 %v782
        %867 = vmatprep.subr.bf16.mxu0 0
        %868 = vmatpush1.bf16.msra.mxu0 %v785
        %869 = vmatprep.subr.bf16.mxu0 0
        %870 = vmatpush1.bf16.msra.mxu0 %v788
        %871 = vmatprep.subr.bf16.mxu0 0
        %872 = vmatpush1.bf16.msra.mxu0 %v791
        %873 = vmatprep.subr.bf16.mxu0 0
        %874 = vmatpush1.bf16.msra.mxu0 0
        %875 = vmatprep.subr.bf16.mxu0 0
        %876 = vmatpush1.bf16.msra.mxu0 0
        %877 = vmatprep.subr.bf16.mxu0 0
        %878 = vmatpush1.bf16.msra.mxu0 0
        %879 = vmatprep.subr.bf16.mxu0 0
        %880 = vmatpush1.bf16.msra.mxu0 0
        %881 = vmatprep.subr.bf16.mxu0 0
        %882 = vmatpush1.bf16.msra.mxu0 0
        %883 = vmatprep.subr.bf16.mxu0 0
        %884 = vmatpush1.bf16.msra.mxu0 0
        %885 = vmatprep.subr.bf16.mxu0 0
        %886 = vmatpush1.bf16.msra.mxu0 0
        %887 = vmatprep.subr.bf16.mxu0 0
        %888 = vmatpush1.bf16.msra.mxu0 0
        %889 = vmatprep.mubr.bf16.mxu0 0
        %890 = vmatmul.mubr.bf16.gmra.mrb[0].mxu0 %v638
        %v891 = vpop.f32.mrb[0].mxu0
        %v892 = vadd.f32 %v684, %v891
        %v893 = vpop.f32.mrb[0].mxu0
        %v894 = vpop.f32.mrb[0].mxu0
        %v895 = vpop.f32.mrb[0].mxu0
        %896 = vdwg.mxu0
        %v897 = vmul.f32 %v853, %v588
        %v898 = vmul.f32 %v853, %v589
        %v899 = vmul.f32 %v853, %v590
        %v900 = vmul.f32 %v853, %v591
        %v901 = vmul.f32 %v892, %v588
        %v902 = vmul.f32 %v892, %v589
        %v903 = vmul.f32 %v892, %v590
        %v904 = vmul.f32 %v892, %v591
        %v905 = vmul.f32 %v851, 0.35355338
        %906 = vmatprep.subr.mxu0 0.0
        %907 = vmatpush1.xpose.msra.mxu0 %v897
        %908 = vmatprep.subr.mxu0 0.0
        %909 = vmatpush1.xpose.msra.mxu0 %v898
        %910 = vmatprep.subr.mxu0 0.0
        %911 = vmatpush1.xpose.msra.mxu0 %v899
        %912 = vmatprep.subr.mxu0 0.0
        %913 = vmatpush1.xpose.msra.mxu0 %v900
        %914 = vmatprep.subr.mxu0 0.0
        %915 = vmatpush1.xpose.msra.mxu0 0.0
        %916 = vmatprep.subr.mxu0 0.0
        %917 = vmatpush1.xpose.msra.mxu0 0.0
        %918 = vmatprep.subr.mxu0 0.0
        %919 = vmatpush1.xpose.msra.mxu0 0.0
        %920 = vmatprep.subr.mxu0 0.0
        %921 = vmatpush1.xpose.msra.mxu0 0.0
        %922 = vmatprep.subr.mxu0 0.0
        %923 = vmatpush1.xpose.msra.mxu0 0.0
        %924 = vmatprep.subr.mxu0 0.0
        %925 = vmatpush1.xpose.msra.mxu0 0.0
        %926 = vmatprep.subr.mxu0 0.0
        %927 = vmatpush1.xpose.msra.mxu0 0.0
        %928 = vmatprep.subr.mxu0 0.0
        %929 = vmatpush1.xpose.msra.mxu0 0.0
        %930 = vmatprep.subr.mxu0 0.0
        %931 = vmatpush1.xpose.msra.mxu0 0.0
        %932 = vmatprep.subr.mxu0 0.0
        %933 = vmatpush1.xpose.msra.mxu0 0.0
        %934 = vmatprep.subr.mxu0 0.0
        %935 = vmatpush1.xpose.msra.mxu0 0.0
        %936 = vmatprep.subr.mxu0 0.0
        %937 = vmatpush1.xpose.msra.mxu0 0.0
        %938 = vmatprep.subr.mxu0 0.0
        %939 = vmatpush1.xpose.msra.mxu0 0.0
        %940 = vmatprep.subr.mxu0 0.0
        %941 = vmatpush1.xpose.msra.mxu0 0.0
        %942 = vmatprep.subr.mxu0 0.0
        %943 = vmatpush1.xpose.msra.mxu0 0.0
        %944 = vmatprep.subr.mxu0 0.0
        %945 = vmatpush1.xpose.msra.mxu0 0.0
        %946 = vmatprep.subr.mxu0 0.0
        %947 = vmatpush1.xpose.msra.mxu0 0.0
        %948 = vmatprep.subr.mxu0 0.0
        %949 = vmatpush1.xpose.msra.mxu0 0.0
        %950 = vmatprep.subr.mxu0 0.0
        %951 = vmatpush1.xpose.msra.mxu0 0.0
        %952 = vmatprep.subr.mxu0 0.0
        %953 = vmatpush1.xpose.msra.mxu0 0.0
        %954 = vmatprep.subr.mxu0 0.0
        %955 = vmatpush1.xpose.msra.mxu0 0.0
        %956 = vmatprep.subr.mxu0 0.0
        %957 = vmatpush1.xpose.msra.mxu0 0.0
        %958 = vmatprep.subr.mxu0 0.0
        %959 = vmatpush1.xpose.msra.mxu0 0.0
        %960 = vmatprep.subr.mxu0 0.0
        %961 = vmatpush1.xpose.msra.mxu0 0.0
        %962 = vmatprep.subr.mxu0 0.0
        %963 = vmatpush1.xpose.msra.mxu0 0.0
        %964 = vmatprep.subr.mxu0 0.0
        %965 = vmatpush1.xpose.msra.mxu0 0.0
        %966 = vmatprep.subr.mxu0 0.0
        %967 = vmatpush1.xpose.msra.mxu0 0.0
        %968 = vmatprep.subr.mxu0 0.0
        %969 = vmatpush1.xpose.msra.mxu0 0.0
        %970 = vmatprep.mubr.f32.mxu0 0.0
        %971 = vmatmul.mubr.f32.gmra.mrb[0].mxu0 %v905
        %v972 = vpop.f32.mrb[0].mxu0
        %v973 = vadd.f32 %v585, %v972
        %v974 = vpop.f32.mrb[0].mxu0
        %975 = vdwg.mxu0
        %vm976 = vcmask 261120
        %v977 = vsel %vm976, %v973, -inf
        %978 = vmax.xlane.f32.xlu0 %v977
        %v979 = vpop.xlane.xlu0 %978
        %v980 = vsub.f32 %v973, %v979
        %v981 = vmul.f32 %v980, 1.442695
        %v982 = vpow.pop %v981
        %v984 = vsel %vm976, %v982, 0
        %986 = vmatprep.subr.mxu0 0.0
        %987 = vmatpush1.msra.mxu0 %v596
        %988 = vmatprep.subr.mxu0 0.0
        %989 = vmatpush1.msra.mxu0 %v597
        %990 = vmatprep.subr.mxu0 0.0
        %991 = vmatpush1.msra.mxu0 %v598
        %992 = vmatprep.subr.mxu0 0.0
        %993 = vmatpush1.msra.mxu0 %v599
        %994 = vmatprep.subr.mxu0 0.0
        %995 = vmatpush1.msra.mxu0 0.0
        %996 = vmatprep.subr.mxu0 0.0
        %997 = vmatpush1.msra.mxu0 0.0
        %998 = vmatprep.subr.mxu0 0.0
        %999 = vmatpush1.msra.mxu0 0.0
        %1000 = vmatprep.subr.mxu0 0.0
        %1001 = vmatpush1.msra.mxu0 0.0
        %1002 = vmatprep.subr.mxu0 0.0
        %1003 = vmatpush1.msra.mxu0 0.0
        %1004 = vmatprep.subr.mxu0 0.0
        %1005 = vmatpush1.msra.mxu0 0.0
        %1006 = vmatprep.subr.mxu0 0.0
        %1007 = vmatpush1.msra.mxu0 0.0
        %1008 = vmatprep.subr.mxu0 0.0
        %1009 = vmatpush1.msra.mxu0 0.0
        %1010 = vmatprep.subr.mxu0 0.0
        %1011 = vmatpush1.msra.mxu0 0.0
        %1012 = vmatprep.subr.mxu0 0.0
        %1013 = vmatpush1.msra.mxu0 0.0
        %1014 = vmatprep.subr.mxu0 0.0
        %1015 = vmatpush1.msra.mxu0 0.0
        %1016 = vmatprep.subr.mxu0 0.0
        %1017 = vmatpush1.msra.mxu0 0.0
        %1018 = vmatprep.subr.mxu0 0.0
        %1019 = vmatpush1.msra.mxu0 0.0
        %1020 = vmatprep.subr.mxu0 0.0
        %1021 = vmatpush1.msra.mxu0 0.0
        %1022 = vmatprep.subr.mxu0 0.0
        %1023 = vmatpush1.msra.mxu0 0.0
        %1024 = vmatprep.subr.mxu0 0.0
        %1025 = vmatpush1.msra.mxu0 0.0
        %1026 = vmatprep.subr.mxu0 0.0
        %1027 = vmatpush1.msra.mxu0 0.0
        %1028 = vmatprep.subr.mxu0 0.0
        %1029 = vmatpush1.msra.mxu0 0.0
        %1030 = vmatprep.subr.mxu0 0.0
        %1031 = vmatpush1.msra.mxu0 0.0
        %1032 = vmatprep.subr.mxu0 0.0
        %1033 = vmatpush1.msra.mxu0 0.0
        %1034 = vmatprep.subr.mxu0 0.0
        %1035 = vmatpush1.msra.mxu0 0.0
        %1036 = vmatprep.subr.mxu0 0.0
        %1037 = vmatpush1.msra.mxu0 0.0
        %1038 = vmatprep.subr.mxu0 0.0
        %1039 = vmatpush1.msra.mxu0 0.0
        %1040 = vmatprep.subr.mxu0 0.0
        %1041 = vmatpush1.msra.mxu0 0.0
        %1042 = vmatprep.subr.mxu0 0.0
        %1043 = vmatpush1.msra.mxu0 0.0
        %1044 = vmatprep.subr.mxu0 0.0
        %1045 = vmatpush1.msra.mxu0 0.0
        %1046 = vmatprep.subr.mxu0 0.0
        %1047 = vmatpush1.msra.mxu0 0.0
        %1048 = vmatprep.subr.mxu0 0.0
        %1049 = vmatpush1.msra.mxu0 0.0
        %1050 = vmatprep.mubr.f32.mxu0 0.0
        %1051 = vmatmul.mubr.f32.gmra.mrb[0].mxu0 %v984
        %v1052 = vpop.f32.mrb[0].mxu0
        %v1053 = vadd.f32 0.0, %v1052
        %v1054 = vpop.f32.mrb[0].mxu0
        %1055 = vdwg.mxu0
        %v1056 = vrcp.pop %v1053
        %v1057 = vmul.f32 %v982, %v1056
        %v1059 = vsel %vm976, %v1057, 0
        %1061 = vmatprep.subr.mxu0 0.0
        %1062 = vmatpush1.msra.mxu0 %v901
        %1063 = vmatprep.subr.mxu0 0.0
        %1064 = vmatpush1.msra.mxu0 %v902
        %1065 = vmatprep.subr.mxu0 0.0
        %1066 = vmatpush1.msra.mxu0 %v903
        %1067 = vmatprep.subr.mxu0 0.0
        %1068 = vmatpush1.msra.mxu0 %v904
        %1069 = vmatprep.subr.mxu0 0.0
        %1070 = vmatpush1.msra.mxu0 0.0
        %1071 = vmatprep.subr.mxu0 0.0
        %1072 = vmatpush1.msra.mxu0 0.0
        %1073 = vmatprep.subr.mxu0 0.0
        %1074 = vmatpush1.msra.mxu0 0.0
        %1075 = vmatprep.subr.mxu0 0.0
        %1076 = vmatpush1.msra.mxu0 0.0
        %1077 = vmatprep.subr.mxu0 0.0
        %1078 = vmatpush1.msra.mxu0 0.0
        %1079 = vmatprep.subr.mxu0 0.0
        %1080 = vmatpush1.msra.mxu0 0.0
        %1081 = vmatprep.subr.mxu0 0.0
        %1082 = vmatpush1.msra.mxu0 0.0
        %1083 = vmatprep.subr.mxu0 0.0
        %1084 = vmatpush1.msra.mxu0 0.0
        %1085 = vmatprep.subr.mxu0 0.0
        %1086 = vmatpush1.msra.mxu0 0.0
        %1087 = vmatprep.subr.mxu0 0.0
        %1088 = vmatpush1.msra.mxu0 0.0
        %1089 = vmatprep.subr.mxu0 0.0
        %1090 = vmatpush1.msra.mxu0 0.0
        %1091 = vmatprep.subr.mxu0 0.0
        %1092 = vmatpush1.msra.mxu0 0.0
        %1093 = vmatprep.subr.mxu0 0.0
        %1094 = vmatpush1.msra.mxu0 0.0
        %1095 = vmatprep.subr.mxu0 0.0
        %1096 = vmatpush1.msra.mxu0 0.0
        %1097 = vmatprep.subr.mxu0 0.0
        %1098 = vmatpush1.msra.mxu0 0.0
        %1099 = vmatprep.subr.mxu0 0.0
        %1100 = vmatpush1.msra.mxu0 0.0
        %1101 = vmatprep.subr.mxu0 0.0
        %1102 = vmatpush1.msra.mxu0 0.0
        %1103 = vmatprep.subr.mxu0 0.0
        %1104 = vmatpush1.msra.mxu0 0.0
        %1105 = vmatprep.subr.mxu0 0.0
        %1106 = vmatpush1.msra.mxu0 0.0
        %1107 = vmatprep.subr.mxu0 0.0
        %1108 = vmatpush1.msra.mxu0 0.0
        %1109 = vmatprep.subr.mxu0 0.0
        %1110 = vmatpush1.msra.mxu0 0.0
        %1111 = vmatprep.subr.mxu0 0.0
        %1112 = vmatpush1.msra.mxu0 0.0
        %1113 = vmatprep.subr.mxu0 0.0
        %1114 = vmatpush1.msra.mxu0 0.0
        %1115 = vmatprep.subr.mxu0 0.0
        %1116 = vmatpush1.msra.mxu0 0.0
        %1117 = vmatprep.subr.mxu0 0.0
        %1118 = vmatpush1.msra.mxu0 0.0
        %1119 = vmatprep.subr.mxu0 0.0
        %1120 = vmatpush1.msra.mxu0 0.0
        %1121 = vmatprep.subr.mxu0 0.0
        %1122 = vmatpush1.msra.mxu0 0.0
        %1123 = vmatprep.subr.mxu0 0.0
        %1124 = vmatpush1.msra.mxu0 0.0
        %1125 = vmatprep.mubr.f32.mxu0 0.0
        %1126 = vmatmul.mubr.f32.gmra.mrb[0].mxu0 %v1059
        %v1127 = vpop.f32.mrb[0].mxu0
        %v1128 = vadd.f32 0.0, %v1127
        %v1129 = vpop.f32.mrb[0].mxu0
        %1130 = vdwg.mxu0
        %v1131 = vpack.c.bf16 %v1128, %v1128
        %v1132 = vld [vmem:[#allocation16 + $0xc] sm:$0xf]
        %v1133 = vld [vmem:[#allocation16 + $0x5c] sm:$0xf]
        %v1134 = vld [vmem:[#allocation16 + $0xac] sm:$0xf]
        %v1135 = vld [vmem:[#allocation16 + $0xfc] sm:$0xf]
        %v1136 = vld [vmem:[#allocation16 + $0x14c] sm:$0xf]
        %v1137 = vld [vmem:[#allocation16 + $0x19c] sm:$0xf]
        %v1138 = vld [vmem:[#allocation16 + $0x1ec] sm:$0xf]
        %v1139 = vld [vmem:[#allocation16 + $0x23c] sm:$0xf]
        %v1140 = vld [vmem:[#allocation16 + $0x28c] sm:$0xf]
        %v1141 = vld [vmem:[#allocation16 + $0x2dc] sm:$0xf]
        %v1142 = vld [vmem:[#allocation16 + $0x32c] sm:$0xf]
        %v1143 = vld [vmem:[#allocation16 + $0x37c] sm:$0xf]
        %v1144 = vld [vmem:[#allocation16 + $0x3cc] sm:$0xf]
        %v1145 = vld [vmem:[#allocation16 + $0x41c] sm:$0xf]
        %v1146 = vld [vmem:[#allocation16 + $0x46c] sm:$0xf]
        %v1147 = vld [vmem:[#allocation16 + $0x4bc] sm:$0xf]
        %v1148 = vld [vmem:[%s10 + $0x5] sm:$0x1]
        %v1150 = vlaneseq
        %v1151 = vshrl.u32 %v1150, 7
        %v1152 = vsub.s32 0, %v1151
        %v1153 = vrot.slane %v1148, %v1152
        %v1171 = vunpack.c.l.b16 %v1132
        %v1172 = vunpack.c.l.b16 %v1133
        %v1173 = vunpack.c.l.b16 %v1134
        %v1174 = vunpack.c.l.b16 %v1135
        %v1175 = vunpack.c.l.b16 %v1136
        %v1176 = vunpack.c.l.b16 %v1137
        %v1177 = vunpack.c.l.b16 %v1138
        %v1178 = vunpack.c.l.b16 %v1139
        %v1179 = vunpack.c.l.b16 %v1140
        %v1180 = vunpack.c.l.b16 %v1141
        %v1181 = vunpack.c.l.b16 %v1142
        %v1182 = vunpack.c.l.b16 %v1143
        %v1183 = vunpack.c.l.b16 %v1144
        %v1184 = vunpack.c.l.b16 %v1145
        %v1185 = vunpack.c.l.b16 %v1146
        %v1186 = vunpack.c.l.b16 %v1147
        %v1187 = vpack.c.b16 %v1172, %v1171
        %v1188 = vpack.c.b16 %v1174, %v1173
        %v1189 = vpack.c.b16 %v1176, %v1175
        %v1190 = vpack.c.b16 %v1178, %v1177
        %v1191 = vpack.c.b16 %v1180, %v1179
        %v1192 = vpack.c.b16 %v1182, %v1181
        %v1193 = vpack.c.b16 %v1184, %v1183
        %v1194 = vpack.c.b16 %v1186, %v1185
        %1203 = vmatprep.subr.bf16.mxu0 0
        %1204 = vmatpush1.bf16.msra.mxu0 %v1187
        %1205 = vmatprep.subr.bf16.mxu0 0
        %1206 = vmatpush1.bf16.msra.mxu0 %v1188
        %1207 = vmatprep.subr.bf16.mxu0 0
        %1208 = vmatpush1.bf16.msra.mxu0 %v1189
        %1209 = vmatprep.subr.bf16.mxu0 0
        %1210 = vmatpush1.bf16.msra.mxu0 %v1190
        %1211 = vmatprep.subr.bf16.mxu0 0
        %1212 = vmatpush1.bf16.msra.mxu0 %v1191
        %1213 = vmatprep.subr.bf16.mxu0 0
        %1214 = vmatpush1.bf16.msra.mxu0 %v1192
        %1215 = vmatprep.subr.bf16.mxu0 0
        %1216 = vmatpush1.bf16.msra.mxu0 %v1193
        %1217 = vmatprep.subr.bf16.mxu0 0
        %1218 = vmatpush1.bf16.msra.mxu0 %v1194
        %1219 = vmatprep.subr.bf16.mxu0 0
        %1220 = vmatpush1.bf16.msra.mxu0 0
        %1221 = vmatprep.subr.bf16.mxu0 0
        %1222 = vmatpush1.bf16.msra.mxu0 0
        %1223 = vmatprep.subr.bf16.mxu0 0
        %1224 = vmatpush1.bf16.msra.mxu0 0
        %1225 = vmatprep.subr.bf16.mxu0 0
        %1226 = vmatpush1.bf16.msra.mxu0 0
        %1227 = vmatprep.subr.bf16.mxu0 0
        %1228 = vmatpush1.bf16.msra.mxu0 0
        %1229 = vmatprep.subr.bf16.mxu0 0
        %1230 = vmatpush1.bf16.msra.mxu0 0
        %1231 = vmatprep.subr.bf16.mxu0 0
        %1232 = vmatpush1.bf16.msra.mxu0 0
        %1233 = vmatprep.subr.bf16.mxu0 0
        %1234 = vmatpush1.bf16.msra.mxu0 0
        %1235 = vmatprep.mubr.bf16.mxu0 0
        %1236 = vmatmul.mubr.bf16.gmra.mrb[0].mxu0 %v1131
        %v1237 = vpop.f32.mrb[0].mxu0
        %v1238 = vadd.f32 %v1153, %v1237
        %v1239 = vpop.f32.mrb[0].mxu0
        %v1240 = vpop.f32.mrb[0].mxu0
        %v1241 = vpop.f32.mrb[0].mxu0
        %1242 = vdwg.mxu0
        %v1243 = vadd.f32 %v1238, %v583
        %1244 = vadd.xlane.f32.xlu0 %v1243
        %v1245 = vpop.xlane.xlu0 %1244
        %v1246 = vmul.f32 %v1245, 0.03125
        %v1247 = vsub.f32 %v1243, %v1246
        %v1248 = vmul.f32 %v1247, %v1247
        %v1249 = vmul.f32 %v1248, %v613
        %1250 = vadd.xlane.f32.xlu0 %v1249
        %v1251 = vpop.xlane.xlu0 %1250
        %v1252 = vmul.f32 %v1251, 0.03125
        %v1253 = vadd.f32 %v1252, 1e-05
        %v1254 = vrsqrt.pop %v1253
        %v1255 = vmul.f32 %v1247, %v1254
        %v1256 = vld [vmem:[%s10 + $0x6] sm:$0x1]
        %v1258 = vlaneseq
        %v1259 = vshrl.u32 %v1258, 7
        %v1260 = vsub.s32 0, %v1259
        %v1261 = vrot.slane %v1256, %v1260
        %v1263 = vmul.f32 %v1255, %v1261
        %v1264 = vld [vmem:[%s10 + $0x7] sm:$0x1]
        %v1266 = vlaneseq
        %v1267 = vshrl.u32 %v1266, 7
        %v1268 = vsub.s32 0, %v1267
        %v1269 = vrot.slane %v1264, %v1268
        %v1271 = vadd.f32 %v1263, %v1269
        %v1272 = vpack.c.bf16 %v1271, %v1271
        %v1273 = vld [vmem:[#allocation16 + $0x10] sm:$0xf]
        %v1274 = vld [vmem:[#allocation16 + $0x60] sm:$0xf]
        %v1275 = vld [vmem:[#allocation16 + $0xb0] sm:$0xf]
        %v1276 = vld [vmem:[#allocation16 + $0x100] sm:$0xf]
        %v1277 = vld [vmem:[#allocation16 + $0x150] sm:$0xf]
        %v1278 = vld [vmem:[#allocation16 + $0x1a0] sm:$0xf]
        %v1279 = vld [vmem:[#allocation16 + $0x1f0] sm:$0xf]
        %v1280 = vld [vmem:[#allocation16 + $0x240] sm:$0xf]
        %v1281 = vld [vmem:[#allocation16 + $0x290] sm:$0xf]
        %v1282 = vld [vmem:[#allocation16 + $0x2e0] sm:$0xf]
        %v1283 = vld [vmem:[#allocation16 + $0x330] sm:$0xf]
        %v1284 = vld [vmem:[#allocation16 + $0x380] sm:$0xf]
        %v1285 = vld [vmem:[#allocation16 + $0x3d0] sm:$0xf]
        %v1286 = vld [vmem:[#allocation16 + $0x420] sm:$0xf]
        %v1287 = vld [vmem:[#allocation16 + $0x470] sm:$0xf]
        %v1288 = vld [vmem:[#allocation16 + $0x4c0] sm:$0xf]
        %v1289 = vld [vmem:[%s10 + $0x8] sm:$0x1]
        %v1291 = vlaneseq
        %v1292 = vshrl.u32 %v1291, 7
        %v1293 = vsub.s32 0, %v1292
        %v1294 = vrot.slane %v1289, %v1293
        %v1312 = vunpack.c.l.b16 %v1273
        %v1313 = vunpack.c.l.b16 %v1274
        %v1314 = vunpack.c.l.b16 %v1275
        %v1315 = vunpack.c.l.b16 %v1276
        %v1316 = vunpack.c.l.b16 %v1277
        %v1317 = vunpack.c.l.b16 %v1278
        %v1318 = vunpack.c.l.b16 %v1279
        %v1319 = vunpack.c.l.b16 %v1280
        %v1320 = vunpack.c.l.b16 %v1281
        %v1321 = vunpack.c.l.b16 %v1282
        %v1322 = vunpack.c.l.b16 %v1283
        %v1323 = vunpack.c.l.b16 %v1284
        %v1324 = vunpack.c.l.b16 %v1285
        %v1325 = vunpack.c.l.b16 %v1286
        %v1326 = vunpack.c.l.b16 %v1287
        %v1327 = vunpack.c.l.b16 %v1288
        %v1328 = vpack.c.b16 %v1313, %v1312
        %v1329 = vpack.c.b16 %v1315, %v1314
        %v1330 = vpack.c.b16 %v1317, %v1316
        %v1331 = vpack.c.b16 %v1319, %v1318
        %v1332 = vpack.c.b16 %v1321, %v1320
        %v1333 = vpack.c.b16 %v1323, %v1322
        %v1334 = vpack.c.b16 %v1325, %v1324
        %v1335 = vpack.c.b16 %v1327, %v1326
        %1344 = vmatprep.subr.bf16.mxu0 0
        %1345 = vmatpush1.bf16.msra.mxu0 %v1328
        %1346 = vmatprep.subr.bf16.mxu0 0
        %1347 = vmatpush1.bf16.msra.mxu0 %v1329
        %1348 = vmatprep.subr.bf16.mxu0 0
        %1349 = vmatpush1.bf16.msra.mxu0 %v1330
        %1350 = vmatprep.subr.bf16.mxu0 0
        %1351 = vmatpush1.bf16.msra.mxu0 %v1331
        %1352 = vmatprep.subr.bf16.mxu0 0
        %1353 = vmatpush1.bf16.msra.mxu0 %v1332
        %1354 = vmatprep.subr.bf16.mxu0 0
        %1355 = vmatpush1.bf16.msra.mxu0 %v1333
        %1356 = vmatprep.subr.bf16.mxu0 0
        %1357 = vmatpush1.bf16.msra.mxu0 %v1334
        %1358 = vmatprep.subr.bf16.mxu0 0
        %1359 = vmatpush1.bf16.msra.mxu0 %v1335
        %1360 = vmatprep.subr.bf16.mxu0 0
        %1361 = vmatpush1.bf16.msra.mxu0 0
        %1362 = vmatprep.subr.bf16.mxu0 0
        %1363 = vmatpush1.bf16.msra.mxu0 0
        %1364 = vmatprep.subr.bf16.mxu0 0
        %1365 = vmatpush1.bf16.msra.mxu0 0
        %1366 = vmatprep.subr.bf16.mxu0 0
        %1367 = vmatpush1.bf16.msra.mxu0 0
        %1368 = vmatprep.subr.bf16.mxu0 0
        %1369 = vmatpush1.bf16.msra.mxu0 0
        %1370 = vmatprep.subr.bf16.mxu0 0
        %1371 = vmatpush1.bf16.msra.mxu0 0
        %1372 = vmatprep.subr.bf16.mxu0 0
        %1373 = vmatpush1.bf16.msra.mxu0 0
        %1374 = vmatprep.subr.bf16.mxu0 0
        %1375 = vmatpush1.bf16.msra.mxu0 0
        %1376 = vmatprep.mubr.bf16.mxu0 0
        %1377 = vmatmul.mubr.bf16.gmra.mrb[0].mxu0 %v1272
        %v1378 = vpop.f32.mrb[0].mxu0
        %v1379 = vadd.f32 %v1294, %v1378
        %v1380 = vpop.f32.mrb[0].mxu0
        %v1381 = vpop.f32.mrb[0].mxu0
        %v1382 = vpop.f32.mrb[0].mxu0
        %1383 = vdwg.mxu0
        %v1384 = vmul.f32 %v1379, 0.5
        %v1385 = vmul.f32 %v1379, 0.70710677
        %v1386 = verf.f32.pop %v1385
        %v1387 = vadd.f32 %v1386, 1.0
        %v1388 = vmul.f32 %v1384, %v1387
        %v1389 = vpack.c.bf16 %v1388, %v1388
        %v1390 = vld [vmem:[#allocation16 + $0x14] sm:$0xf]
        %v1391 = vld [vmem:[#allocation16 + $0x64] sm:$0xf]
        %v1392 = vld [vmem:[#allocation16 + $0xb4] sm:$0xf]
        %v1393 = vld [vmem:[#allocation16 + $0x104] sm:$0xf]
        %v1394 = vld [vmem:[#allocation16 + $0x154] sm:$0xf]
        %v1395 = vld [vmem:[#allocation16 + $0x1a4] sm:$0xf]
        %v1396 = vld [vmem:[#allocation16 + $0x1f4] sm:$0xf]
        %v1397 = vld [vmem:[#allocation16 + $0x244] sm:$0xf]
        %v1398 = vld [vmem:[#allocation16 + $0x294] sm:$0xf]
        %v1399 = vld [vmem:[#allocation16 + $0x2e4] sm:$0xf]
        %v1400 = vld [vmem:[#allocation16 + $0x334] sm:$0xf]
        %v1401 = vld [vmem:[#allocation16 + $0x384] sm:$0xf]
        %v1402 = vld [vmem:[#allocation16 + $0x3d4] sm:$0xf]
        %v1403 = vld [vmem:[#allocation16 + $0x424] sm:$0xf]
        %v1404 = vld [vmem:[#allocation16 + $0x474] sm:$0xf]
        %v1405 = vld [vmem:[#allocation16 + $0x4c4] sm:$0xf]
        %v1406 = vld [vmem:[%s10 + $0x9] sm:$0x1]
        %v1408 = vlaneseq
        %v1409 = vshrl.u32 %v1408, 7
        %v1410 = vsub.s32 0, %v1409
        %v1411 = vrot.slane %v1406, %v1410
        %v1429 = vunpack.c.l.b16 %v1390
        %v1430 = vunpack.c.l.b16 %v1391
        %v1431 = vunpack.c.l.b16 %v1392
        %v1432 = vunpack.c.l.b16 %v1393
        %v1433 = vunpack.c.l.b16 %v1394
        %v1434 = vunpack.c.l.b16 %v1395
        %v1435 = vunpack.c.l.b16 %v1396
        %v1436 = vunpack.c.l.b16 %v1397
        %v1437 = vunpack.c.l.b16 %v1398
        %v1438 = vunpack.c.l.b16 %v1399
        %v1439 = vunpack.c.l.b16 %v1400
        %v1440 = vunpack.c.l.b16 %v1401
        %v1441 = vunpack.c.l.b16 %v1402
        %v1442 = vunpack.c.l.b16 %v1403
        %v1443 = vunpack.c.l.b16 %v1404
        %v1444 = vunpack.c.l.b16 %v1405
        %v1445 = vpack.c.b16 %v1430, %v1429
        %v1446 = vpack.c.b16 %v1432, %v1431
        %v1447 = vpack.c.b16 %v1434, %v1433
        %v1448 = vpack.c.b16 %v1436, %v1435
        %v1449 = vpack.c.b16 %v1438, %v1437
        %v1450 = vpack.c.b16 %v1440, %v1439
        %v1451 = vpack.c.b16 %v1442, %v1441
        %v1452 = vpack.c.b16 %v1444, %v1443
        %1461 = vmatprep.subr.bf16.mxu0 0
        %1462 = vmatpush1.bf16.msra.mxu0 %v1445
        %1463 = vmatprep.subr.bf16.mxu0 0
        %1464 = vmatpush1.bf16.msra.mxu0 %v1446
        %1465 = vmatprep.subr.bf16.mxu0 0
        %1466 = vmatpush1.bf16.msra.mxu0 %v1447
        %1467 = vmatprep.subr.bf16.mxu0 0
        %1468 = vmatpush1.bf16.msra.mxu0 %v1448
        %1469 = vmatprep.subr.bf16.mxu0 0
        %1470 = vmatpush1.bf16.msra.mxu0 %v1449
        %1471 = vmatprep.subr.bf16.mxu0 0
        %1472 = vmatpush1.bf16.msra.mxu0 %v1450
        %1473 = vmatprep.subr.bf16.mxu0 0
        %1474 = vmatpush1.bf16.msra.mxu0 %v1451
        %1475 = vmatprep.subr.bf16.mxu0 0
        %1476 = vmatpush1.bf16.msra.mxu0 %v1452
        %1477 = vmatprep.subr.bf16.mxu0 0
        %1478 = vmatpush1.bf16.msra.mxu0 0
        %1479 = vmatprep.subr.bf16.mxu0 0
        %1480 = vmatpush1.bf16.msra.mxu0 0
        %1481 = vmatprep.subr.bf16.mxu0 0
        %1482 = vmatpush1.bf16.msra.mxu0 0
        %1483 = vmatprep.subr.bf16.mxu0 0
        %1484 = vmatpush1.bf16.msra.mxu0 0
        %1485 = vmatprep.subr.bf16.mxu0 0
        %1486 = vmatpush1.bf16.msra.mxu0 0
        %1487 = vmatprep.subr.bf16.mxu0 0
        %1488 = vmatpush1.bf16.msra.mxu0 0
        %1489 = vmatprep.subr.bf16.mxu0 0
        %1490 = vmatpush1.bf16.msra.mxu0 0
        %1491 = vmatprep.subr.bf16.mxu0 0
        %1492 = vmatpush1.bf16.msra.mxu0 0
        %1493 = vmatprep.mubr.bf16.mxu0 0
        %1494 = vmatmul.mubr.bf16.gmra.mrb[0].mxu0 %v1389
        %v1495 = vpop.f32.mrb[0].mxu0
        %v1496 = vadd.f32 %v1411, %v1495
        %v1497 = vpop.f32.mrb[0].mxu0
        %v1498 = vpop.f32.mrb[0].mxu0
        %v1499 = vpop.f32.mrb[0].mxu0
        %1500 = vdwg.mxu0
        %v1501 = vadd.f32 %v1496, %v1243
        %1502 = vadd.xlane.f32.xlu0 %v1501
        %v1503 = vpop.xlane.xlu0 %1502
        %v1504 = vmul.f32 %v1503, 0.03125
        %v1505 = vsub.f32 %v1501, %v1504
        %v1506 = vmul.f32 %v1505, %v1505
        %v1507 = vmul.f32 %v1506, %v613
        %1508 = vadd.xlane.f32.xlu0 %v1507
        %v1509 = vpop.xlane.xlu0 %1508
        %v1510 = vmul.f32 %v1509, 0.03125
        %v1511 = vadd.f32 %v1510, 1e-05
        %v1512 = vrsqrt.pop %v1511
        %v1513 = vmul.f32 %v1505, %v1512
        %v1514 = vld [vmem:[%s10 + $0xa] sm:$0x1]
        %v1516 = vlaneseq
        %v1517 = vshrl.u32 %v1516, 7
        %v1518 = vsub.s32 0, %v1517
        %v1519 = vrot.slane %v1514, %v1518
        %v1521 = vmul.f32 %v1513, %v1519
        %v1522 = vld [vmem:[%s10 + $0xb] sm:$0x1]
        %v1524 = vlaneseq
        %v1525 = vshrl.u32 %v1524, 7
        %v1526 = vsub.s32 0, %v1525
        %v1527 = vrot.slane %v1522, %v1526
        %v1529 = vadd.f32 %v1521, %v1527
        %v1530 = vpack.c.bf16 %v1529, %v1529
        %v1531 = vld [vmem:[#allocation16 + $0x18] sm:$0xff]
        %v1532 = vld [vmem:[#allocation16 + $0x20] sm:$0xf]
        %v1533 = vld [vmem:[#allocation16 + $0x68] sm:$0xff]
        %v1534 = vld [vmem:[#allocation16 + $0x70] sm:$0xf]
        %v1535 = vld [vmem:[#allocation16 + $0xb8] sm:$0xff]
        %v1536 = vld [vmem:[#allocation16 + $0xc0] sm:$0xf]
        %v1537 = vld [vmem:[#allocation16 + $0x108] sm:$0xff]
        %v1538 = vld [vmem:[#allocation16 + $0x110] sm:$0xf]
        %v1539 = vld [vmem:[#allocation16 + $0x158] sm:$0xff]
        %v1540 = vld [vmem:[#allocation16 + $0x160] sm:$0xf]
        %v1541 = vld [vmem:[#allocation16 + $0x1a8] sm:$0xff]
        %v1542 = vld [vmem:[#allocation16 + $0x1b0] sm:$0xf]
        %v1543 = vld [vmem:[#allocation16 + $0x1f8] sm:$0xff]
        %v1544 = vld [vmem:[#allocation16 + $0x200] sm:$0xf]
        %v1545 = vld [vmem:[#allocation16 + $0x248] sm:$0xff]
        %v1546 = vld [vmem:[#allocation16 + $0x250] sm:$0xf]
        %v1547 = vld [vmem:[#allocation16 + $0x298] sm:$0xff]
        %v1548 = vld [vmem:[#allocation16 + $0x2a0] sm:$0xf]
        %v1549 = vld [vmem:[#allocation16 + $0x2e8] sm:$0xff]
        %v1550 = vld [vmem:[#allocation16 + $0x2f0] sm:$0xf]
        %v1551 = vld [vmem:[#allocation16 + $0x338] sm:$0xff]
        %v1552 = vld [vmem:[#allocation16 + $0x340] sm:$0xf]
        %v1553 = vld [vmem:[#allocation16 + $0x388] sm:$0xff]
        %v1554 = vld [vmem:[#allocation16 + $0x390] sm:$0xf]
        %v1555 = vld [vmem:[#allocation16 + $0x3d8] sm:$0xff]
        %v1556 = vld [vmem:[#allocation16 + $0x3e0] sm:$0xf]
        %v1557 = vld [vmem:[#allocation16 + $0x428] sm:$0xff]
        %v1558 = vld [vmem:[#allocation16 + $0x430] sm:$0xf]
        %v1559 = vld [vmem:[#allocation16 + $0x478] sm:$0xff]
        %v1560 = vld [vmem:[#allocation16 + $0x480] sm:$0xf]
        %v1561 = vld [vmem:[#allocation16 + $0x4c8] sm:$0xff]
        %v1562 = vld [vmem:[#allocation16 + $0x4d0] sm:$0xf]
        %v1563 = vld [vmem:[%s10 + $0xc] sm:$0x7]
        %v1565 = vlaneseq
        %v1566 = vshrl.u32 %v1565, 7
        %v1567 = vsub.s32 0, %v1566
        %v1568 = vrot.slane %v1563, %v1567
        %v1569 = vlaneseq
        %v1570 = vshrl.u32 %v1569, 7
        %v1571 = vsub.s32 1, %v1570
        %v1572 = vrot.slane %v1563, %v1571
        %v1573 = vlaneseq
        %v1574 = vshrl.u32 %v1573, 7
        %v1575 = vsub.s32 2, %v1574
        %v1576 = vrot.slane %v1563, %v1575
        %v1612 = vunpack.c.l.b16 %v1531
        %v1613 = vunpack.c.h.b16 %v1531
        %v1614 = vunpack.c.l.b16 %v1532
        %v1615 = vunpack.c.l.b16 %v1533
        %v1616 = vunpack.c.h.b16 %v1533
        %v1617 = vunpack.c.l.b16 %v1534
        %v1618 = vunpack.c.l.b16 %v1535
        %v1619 = vunpack.c.h.b16 %v1535
        %v1620 = vunpack.c.l.b16 %v1536
        %v1621 = vunpack.c.l.b16 %v1537
        %v1622 = vunpack.c.h.b16 %v1537
        %v1623 = vunpack.c.l.b16 %v1538
        %v1624 = vunpack.c.l.b16 %v1539
        %v1625 = vunpack.c.h.b16 %v1539
        %v1626 = vunpack.c.l.b16 %v1540
        %v1627 = vunpack.c.l.b16 %v1541
        %v1628 = vunpack.c.h.b16 %v1541
        %v1629 = vunpack.c.l.b16 %v1542
        %v1630 = vunpack.c.l.b16 %v1543
        %v1631 = vunpack.c.h.b16 %v1543
        %v1632 = vunpack.c.l.b16 %v1544
        %v1633 = vunpack.c.l.b16 %v1545
        %v1634 = vunpack.c.h.b16 %v1545
        %v1635 = vunpack.c.l.b16 %v1546
        %v1636 = vunpack.c.l.b16 %v1547
        %v1637 = vunpack.c.h.b16 %v1547
        %v1638 = vunpack.c.l.b16 %v1548
        %v1639 = vunpack.c.l.b16 %v1549
        %v1640 = vunpack.c.h.b16 %v1549
        %v1641 = vunpack.c.l.b16 %v1550
        %v1642 = vunpack.c.l.b16 %v1551
        %v1643 = vunpack.c.h.b16 %v1551
        %v1644 = vunpack.c.l.b16 %v1552
        %v1645 = vunpack.c.l.b16 %v1553
        %v1646 = vunpack.c.h.b16 %v1553
        %v1647 = vunpack.c.l.b16 %v1554
        %v1648 = vunpack.c.l.b16 %v1555
        %v1649 = vunpack.c.h.b16 %v1555
        %v1650 = vunpack.c.l.b16 %v1556
        %v1651 = vunpack.c.l.b16 %v1557
        %v1652 = vunpack.c.h.b16 %v1557
        %v1653 = vunpack.c.l.b16 %v1558
        %v1654 = vunpack.c.l.b16 %v1559
        %v1655 = vunpack.c.h.b16 %v1559
        %v1656 = vunpack.c.l.b16 %v1560
        %v1657 = vunpack.c.l.b16 %v1561
        %v1658 = vunpack.c.h.b16 %v1561
        %v1659 = vunpack.c.l.b16 %v1562
        %v1660 = vpack.c.b16 %v1615, %v1612
        %v1661 = vpack.c.b16 %v1616, %v1613
        %v1662 = vpack.c.b16 %v1617, %v1614
        %v1663 = vpack.c.b16 %v1621, %v1618
        %v1664 = vpack.c.b16 %v1622, %v1619
        %v1665 = vpack.c.b16 %v1623, %v1620
        %v1666 = vpack.c.b16 %v1627, %v1624
        %v1667 = vpack.c.b16 %v1628, %v1625
        %v1668 = vpack.c.b16 %v1629, %v1626
        %v1669 = vpack.c.b16 %v1633, %v1630
        %v1670 = vpack.c.b16 %v1634, %v1631
        %v1671 = vpack.c.b16 %v1635, %v1632
        %v1672 = vpack.c.b16 %v1639, %v1636
        %v1673 = vpack.c.b16 %v1640, %v1637
        %v1674 = vpack.c.b16 %v1641, %v1638
        %v1675 = vpack.c.b16 %v1645, %v1642
        %v1676 = vpack.c.b16 %v1646, %v1643
        %v1677 = vpack.c.b16 %v1647, %v1644
        %v1678 = vpack.c.b16 %v1651, %v1648
        %v1679 = vpack.c.b16 %v1652, %v1649
        %v1680 = vpack.c.b16 %v1653, %v1650
        %v1681 = vpack.c.b16 %v1657, %v1654
        %v1682 = vpack.c.b16 %v1658, %v1655
        %v1683 = vpack.c.b16 %v1659, %v1656
        %1708 = vmatprep.subr.bf16.mxu0 %v1661
        %1709 = vmatpush1.bf16.msra.mxu0 %v1660
        %1710 = vmatprep.subr.bf16.mxu0 %v1664
        %1711 = vmatpush1.bf16.msra.mxu0 %v1663
        %1712 = vmatprep.subr.bf16.mxu0 %v1667
        %1713 = vmatpush1.bf16.msra.mxu0 %v1666
        %1714 = vmatprep.subr.bf16.mxu0 %v1670
        %1715 = vmatpush1.bf16.msra.mxu0 %v1669
        %1716 = vmatprep.subr.bf16.mxu0 %v1673
        %1717 = vmatpush1.bf16.msra.mxu0 %v1672
        %1718 = vmatprep.subr.bf16.mxu0 %v1676
        %1719 = vmatpush1.bf16.msra.mxu0 %v1675
        %1720 = vmatprep.subr.bf16.mxu0 %v1679
        %1721 = vmatpush1.bf16.msra.mxu0 %v1678
        %1722 = vmatprep.subr.bf16.mxu0 %v1682
        %1723 = vmatpush1.bf16.msra.mxu0 %v1681
        %1724 = vmatprep.subr.bf16.mxu0 0
        %1725 = vmatpush1.bf16.msra.mxu0 0
        %1726 = vmatprep.subr.bf16.mxu0 0
        %1727 = vmatpush1.bf16.msra.mxu0 0
        %1728 = vmatprep.subr.bf16.mxu0 0
        %1729 = vmatpush1.bf16.msra.mxu0 0
        %1730 = vmatprep.subr.bf16.mxu0 0
        %1731 = vmatpush1.bf16.msra.mxu0 0
        %1732 = vmatprep.subr.bf16.mxu0 0
        %1733 = vmatpush1.bf16.msra.mxu0 0
        %1734 = vmatprep.subr.bf16.mxu0 0
        %1735 = vmatpush1.bf16.msra.mxu0 0
        %1736 = vmatprep.subr.bf16.mxu0 0
        %1737 = vmatpush1.bf16.msra.mxu0 0
        %1738 = vmatprep.subr.bf16.mxu0 0
        %1739 = vmatpush1.bf16.msra.mxu0 0
        %1740 = vmatprep.mubr.bf16.mxu0 0
        %1741 = vmatmul.mubr.bf16.gmra.mrb[0].mxu0 %v1530
        %v1742 = vpop.f32.mrb[0].mxu0
        %v1743 = vadd.f32 %v1568, %v1742
        %v1744 = vpop.f32.mrb[0].mxu0
        %v1745 = vadd.f32 %v1572, %v1744
        %v1746 = vpop.f32.mrb[0].mxu0
        %v1747 = vpop.f32.mrb[0].mxu0
        %1748 = vdwg.mxu0
        %1749 = vmatprep.subr.bf16.mxu0 0
        %1750 = vmatpush1.bf16.msra.mxu0 %v1662
        %1751 = vmatprep.subr.bf16.mxu0 0
        %1752 = vmatpush1.bf16.msra.mxu0 %v1665
        %1753 = vmatprep.subr.bf16.mxu0 0
        %1754 = vmatpush1.bf16.msra.mxu0 %v1668
        %1755 = vmatprep.subr.bf16.mxu0 0
        %1756 = vmatpush1.bf16.msra.mxu0 %v1671
        %1757 = vmatprep.subr.bf16.mxu0 0
        %1758 = vmatpush1.bf16.msra.mxu0 %v1674
        %1759 = vmatprep.subr.bf16.mxu0 0
        %1760 = vmatpush1.bf16.msra.mxu0 %v1677
        %1761 = vmatprep.subr.bf16.mxu0 0
        %1762 = vmatpush1.bf16.msra.mxu0 %v1680
        %1763 = vmatprep.subr.bf16.mxu0 0
        %1764 = vmatpush1.bf16.msra.mxu0 %v1683
        %1765 = vmatprep.subr.bf16.mxu0 0
        %1766 = vmatpush1.bf16.msra.mxu0 0
        %1767 = vmatprep.subr.bf16.mxu0 0
        %1768 = vmatpush1.bf16.msra.mxu0 0
        %1769 = vmatprep.subr.bf16.mxu0 0
        %1770 = vmatpush1.bf16.msra.mxu0 0
        %1771 = vmatprep.subr.bf16.mxu0 0
        %1772 = vmatpush1.bf16.msra.mxu0 0
        %1773 = vmatprep.subr.bf16.mxu0 0
        %1774 = vmatpush1.bf16.msra.mxu0 0
        %1775 = vmatprep.subr.bf16.mxu0 0
        %1776 = vmatpush1.bf16.msra.mxu0 0
        %1777 = vmatprep.subr.bf16.mxu0 0
        %1778 = vmatpush1.bf16.msra.mxu0 0
        %1779 = vmatprep.subr.bf16.mxu0 0
        %1780 = vmatpush1.bf16.msra.mxu0 0
        %1781 = vmatprep.mubr.bf16.mxu0 0
        %1782 = vmatmul.mubr.bf16.gmra.mrb[0].mxu0 %v1530
        %v1783 = vpop.f32.mrb[0].mxu0
        %v1784 = vadd.f32 %v1576, %v1783
        %v1785 = vpop.f32.mrb[0].mxu0
        %v1786 = vpop.f32.mrb[0].mxu0
        %v1787 = vpop.f32.mrb[0].mxu0
        %1788 = vdwg.mxu0
        %v1789 = vmul.f32 %v1745, %v588
        %v1790 = vmul.f32 %v1745, %v589
        %v1791 = vmul.f32 %v1745, %v590
        %v1792 = vmul.f32 %v1745, %v591
        %v1793 = vmul.f32 %v1784, %v588
        %v1794 = vmul.f32 %v1784, %v589
        %v1795 = vmul.f32 %v1784, %v590
        %v1796 = vmul.f32 %v1784, %v591
        %v1797 = vmul.f32 %v1743, 0.35355338
        %1798 = vmatprep.subr.mxu0 0.0
        %1799 = vmatpush1.xpose.msra.mxu0 %v1789
        %1800 = vmatprep.subr.mxu0 0.0
        %1801 = vmatpush1.xpose.msra.mxu0 %v1790
        %1802 = vmatprep.subr.mxu0 0.0
        %1803 = vmatpush1.xpose.msra.mxu0 %v1791
        %1804 = vmatprep.subr.mxu0 0.0
        %1805 = vmatpush1.xpose.msra.mxu0 %v1792
        %1806 = vmatprep.subr.mxu0 0.0
        %1807 = vmatpush1.xpose.msra.mxu0 0.0
        %1808 = vmatprep.subr.mxu0 0.0
        %1809 = vmatpush1.xpose.msra.mxu0 0.0
        %1810 = vmatprep.subr.mxu0 0.0
        %1811 = vmatpush1.xpose.msra.mxu0 0.0
        %1812 = vmatprep.subr.mxu0 0.0
        %1813 = vmatpush1.xpose.msra.mxu0 0.0
        %1814 = vmatprep.subr.mxu0 0.0
        %1815 = vmatpush1.xpose.msra.mxu0 0.0
        %1816 = vmatprep.subr.mxu0 0.0
        %1817 = vmatpush1.xpose.msra.mxu0 0.0
        %1818 = vmatprep.subr.mxu0 0.0
        %1819 = vmatpush1.xpose.msra.mxu0 0.0
        %1820 = vmatprep.subr.mxu0 0.0
        %1821 = vmatpush1.xpose.msra.mxu0 0.0
        %1822 = vmatprep.subr.mxu0 0.0
        %1823 = vmatpush1.xpose.msra.mxu0 0.0
        %1824 = vmatprep.subr.mxu0 0.0
        %1825 = vmatpush1.xpose.msra.mxu0 0.0
        %1826 = vmatprep.subr.mxu0 0.0
        %1827 = vmatpush1.xpose.msra.mxu0 0.0
        %1828 = vmatprep.subr.mxu0 0.0
        %1829 = vmatpush1.xpose.msra.mxu0 0.0
        %1830 = vmatprep.subr.mxu0 0.0
        %1831 = vmatpush1.xpose.msra.mxu0 0.0
        %1832 = vmatprep.subr.mxu0 0.0
        %1833 = vmatpush1.xpose.msra.mxu0 0.0
        %1834 = vmatprep.subr.mxu0 0.0
        %1835 = vmatpush1.xpose.msra.mxu0 0.0
        %1836 = vmatprep.subr.mxu0 0.0
        %1837 = vmatpush1.xpose.msra.mxu0 0.0
        %1838 = vmatprep.subr.mxu0 0.0
        %1839 = vmatpush1.xpose.msra.mxu0 0.0
        %1840 = vmatprep.subr.mxu0 0.0
        %1841 = vmatpush1.xpose.msra.mxu0 0.0
        %1842 = vmatprep.subr.mxu0 0.0
        %1843 = vmatpush1.xpose.msra.mxu0 0.0
        %1844 = vmatprep.subr.mxu0 0.0
        %1845 = vmatpush1.xpose.msra.mxu0 0.0
        %1846 = vmatprep.subr.mxu0 0.0
        %1847 = vmatpush1.xpose.msra.mxu0 0.0
        %1848 = vmatprep.subr.mxu0 0.0
        %1849 = vmatpush1.xpose.msra.mxu0 0.0
        %1850 = vmatprep.subr.mxu0 0.0
        %1851 = vmatpush1.xpose.msra.mxu0 0.0
        %1852 = vmatprep.subr.mxu0 0.0
        %1853 = vmatpush1.xpose.msra.mxu0 0.0
        %1854 = vmatprep.subr.mxu0 0.0
        %1855 = vmatpush1.xpose.msra.mxu0 0.0
        %1856 = vmatprep.subr.mxu0 0.0
        %1857 = vmatpush1.xpose.msra.mxu0 0.0
        %1858 = vmatprep.subr.mxu0 0.0
        %1859 = vmatpush1.xpose.msra.mxu0 0.0
        %1860 = vmatprep.subr.mxu0 0.0
        %1861 = vmatpush1.xpose.msra.mxu0 0.0
        %1862 = vmatprep.mubr.f32.mxu0 0.0
        %1863 = vmatmul.mubr.f32.gmra.mrb[0].mxu0 %v1797
        %v1864 = vpop.f32.mrb[0].mxu0
        %v1865 = vadd.f32 %v585, %v1864
        %v1866 = vpop.f32.mrb[0].mxu0
        %1867 = vdwg.mxu0
        %v1868 = vsel %vm976, %v1865, -inf
        %1869 = vmax.xlane.f32.xlu0 %v1868
        %v1870 = vpop.xlane.xlu0 %1869
        %v1871 = vsub.f32 %v1865, %v1870
        %v1872 = vmul.f32 %v1871, 1.442695
        %v1873 = vpow.pop %v1872
        %v1875 = vsel %vm976, %v1873, 0
        %1877 = vmatprep.subr.mxu0 0.0
        %1878 = vmatpush1.msra.mxu0 %v596
        %1879 = vmatprep.subr.mxu0 0.0
        %1880 = vmatpush1.msra.mxu0 %v597
        %1881 = vmatprep.subr.mxu0 0.0
        %1882 = vmatpush1.msra.mxu0 %v598
        %1883 = vmatprep.subr.mxu0 0.0
        %1884 = vmatpush1.msra.mxu0 %v599
        %1885 = vmatprep.subr.mxu0 0.0
        %1886 = vmatpush1.msra.mxu0 0.0
        %1887 = vmatprep.subr.mxu0 0.0
        %1888 = vmatpush1.msra.mxu0 0.0
        %1889 = vmatprep.subr.mxu0 0.0
        %1890 = vmatpush1.msra.mxu0 0.0
        %1891 = vmatprep.subr.mxu0 0.0
        %1892 = vmatpush1.msra.mxu0 0.0
        %1893 = vmatprep.subr.mxu0 0.0
        %1894 = vmatpush1.msra.mxu0 0.0
        %1895 = vmatprep.subr.mxu0 0.0
        %1896 = vmatpush1.msra.mxu0 0.0
        %1897 = vmatprep.subr.mxu0 0.0
        %1898 = vmatpush1.msra.mxu0 0.0
        %1899 = vmatprep.subr.mxu0 0.0
        %1900 = vmatpush1.msra.mxu0 0.0
        %1901 = vmatprep.subr.mxu0 0.0
        %1902 = vmatpush1.msra.mxu0 0.0
        %1903 = vmatprep.subr.mxu0 0.0
        %1904 = vmatpush1.msra.mxu0 0.0
        %1905 = vmatprep.subr.mxu0 0.0
        %1906 = vmatpush1.msra.mxu0 0.0
        %1907 = vmatprep.subr.mxu0 0.0
        %1908 = vmatpush1.msra.mxu0 0.0
        %1909 = vmatprep.subr.mxu0 0.0
        %1910 = vmatpush1.msra.mxu0 0.0
        %1911 = vmatprep.subr.mxu0 0.0
        %1912 = vmatpush1.msra.mxu0 0.0
        %1913 = vmatprep.subr.mxu0 0.0
        %1914 = vmatpush1.msra.mxu0 0.0
        %1915 = vmatprep.subr.mxu0 0.0
        %1916 = vmatpush1.msra.mxu0 0.0
        %1917 = vmatprep.subr.mxu0 0.0
        %1918 = vmatpush1.msra.mxu0 0.0
        %1919 = vmatprep.subr.mxu0 0.0
        %1920 = vmatpush1.msra.mxu0 0.0
        %1921 = vmatprep.subr.mxu0 0.0
        %1922 = vmatpush1.msra.mxu0 0.0
        %1923 = vmatprep.subr.mxu0 0.0
        %1924 = vmatpush1.msra.mxu0 0.0
        %1925 = vmatprep.subr.mxu0 0.0
        %1926 = vmatpush1.msra.mxu0 0.0
        %1927 = vmatprep.subr.mxu0 0.0
        %1928 = vmatpush1.msra.mxu0 0.0
        %1929 = vmatprep.subr.mxu0 0.0
        %1930 = vmatpush1.msra.mxu0 0.0
        %1931 = vmatprep.subr.mxu0 0.0
        %1932 = vmatpush1.msra.mxu0 0.0
        %1933 = vmatprep.subr.mxu0 0.0
        %1934 = vmatpush1.msra.mxu0 0.0
        %1935 = vmatprep.subr.mxu0 0.0
        %1936 = vmatpush1.msra.mxu0 0.0
        %1937 = vmatprep.subr.mxu0 0.0
        %1938 = vmatpush1.msra.mxu0 0.0
        %1939 = vmatprep.subr.mxu0 0.0
        %1940 = vmatpush1.msra.mxu0 0.0
        %1941 = vmatprep.mubr.f32.mxu0 0.0
        %1942 = vmatmul.mubr.f32.gmra.mrb[0].mxu0 %v1875
        %v1943 = vpop.f32.mrb[0].mxu0
        %v1944 = vadd.f32 0.0, %v1943
        %v1945 = vpop.f32.mrb[0].mxu0
        %1946 = vdwg.mxu0
        %v1947 = vrcp.pop %v1944
        %v1948 = vmul.f32 %v1873, %v1947
        %v1950 = vsel %vm976, %v1948, 0
        %1952 = vmatprep.subr.mxu0 0.0
        %1953 = vmatpush1.msra.mxu0 %v1793
        %1954 = vmatprep.subr.mxu0 0.0
        %1955 = vmatpush1.msra.mxu0 %v1794
        %1956 = vmatprep.subr.mxu0 0.0
        %1957 = vmatpush1.msra.mxu0 %v1795
        %1958 = vmatprep.subr.mxu0 0.0
        %1959 = vmatpush1.msra.mxu0 %v1796
        %1960 = vmatprep.subr.mxu0 0.0
        %1961 = vmatpush1.msra.mxu0 0.0
        %1962 = vmatprep.subr.mxu0 0.0
        %1963 = vmatpush1.msra.mxu0 0.0
        %1964 = vmatprep.subr.mxu0 0.0
        %1965 = vmatpush1.msra.mxu0 0.0
        %1966 = vmatprep.subr.mxu0 0.0
        %1967 = vmatpush1.msra.mxu0 0.0
        %1968 = vmatprep.subr.mxu0 0.0
        %1969 = vmatpush1.msra.mxu0 0.0
        %1970 = vmatprep.subr.mxu0 0.0
        %1971 = vmatpush1.msra.mxu0 0.0
        %1972 = vmatprep.subr.mxu0 0.0
        %1973 = vmatpush1.msra.mxu0 0.0
        %1974 = vmatprep.subr.mxu0 0.0
        %1975 = vmatpush1.msra.mxu0 0.0
        %1976 = vmatprep.subr.mxu0 0.0
        %1977 = vmatpush1.msra.mxu0 0.0
        %1978 = vmatprep.subr.mxu0 0.0
        %1979 = vmatpush1.msra.mxu0 0.0
        %1980 = vmatprep.subr.mxu0 0.0
        %1981 = vmatpush1.msra.mxu0 0.0
        %1982 = vmatprep.subr.mxu0 0.0
        %1983 = vmatpush1.msra.mxu0 0.0
        %1984 = vmatprep.subr.mxu0 0.0
        %1985 = vmatpush1.msra.mxu0 0.0
        %1986 = vmatprep.subr.mxu0 0.0
        %1987 = vmatpush1.msra.mxu0 0.0
        %1988 = vmatprep.subr.mxu0 0.0
        %1989 = vmatpush1.msra.mxu0 0.0
        %1990 = vmatprep.subr.mxu0 0.0
        %1991 = vmatpush1.msra.mxu0 0.0
        %1992 = vmatprep.subr.mxu0 0.0
        %1993 = vmatpush1.msra.mxu0 0.0
        %1994 = vmatprep.subr.mxu0 0.0
        %1995 = vmatpush1.msra.mxu0 0.0
        %1996 = vmatprep.subr.mxu0 0.0
        %1997 = vmatpush1.msra.mxu0 0.0
        %1998 = vmatprep.subr.mxu0 0.0
        %1999 = vmatpush1.msra.mxu0 0.0
        %2000 = vmatprep.subr.mxu0 0.0
        %2001 = vmatpush1.msra.mxu0 0.0
        %2002 = vmatprep.subr.mxu0 0.0
        %2003 = vmatpush1.msra.mxu0 0.0
        %2004 = vmatprep.subr.mxu0 0.0
        %2005 = vmatpush1.msra.mxu0 0.0
        %2006 = vmatprep.subr.mxu0 0.0
        %2007 = vmatpush1.msra.mxu0 0.0
        %2008 = vmatprep.subr.mxu0 0.0
        %2009 = vmatpush1.msra.mxu0 0.0
        %2010 = vmatprep.subr.mxu0 0.0
        %2011 = vmatpush1.msra.mxu0 0.0
        %2012 = vmatprep.subr.mxu0 0.0
        %2013 = vmatpush1.msra.mxu0 0.0
        %2014 = vmatprep.subr.mxu0 0.0
        %2015 = vmatpush1.msra.mxu0 0.0
        %2016 = vmatprep.mubr.f32.mxu0 0.0
        %2017 = vmatmul.mubr.f32.gmra.mrb[0].mxu0 %v1950
        %v2018 = vpop.f32.mrb[0].mxu0
        %v2019 = vadd.f32 0.0, %v2018
        %v2020 = vpop.f32.mrb[0].mxu0
        %2021 = vdwg.mxu0
        %v2022 = vpack.c.bf16 %v2019, %v2019
        %v2023 = vld [vmem:[#allocation16 + $0x24] sm:$0xf]
        %v2024 = vld [vmem:[#allocation16 + $0x74] sm:$0xf]
        %v2025 = vld [vmem:[#allocation16 + $0xc4] sm:$0xf]
        %v2026 = vld [vmem:[#allocation16 + $0x114] sm:$0xf]
        %v2027 = vld [vmem:[#allocation16 + $0x164] sm:$0xf]
        %v2028 = vld [vmem:[#allocation16 + $0x1b4] sm:$0xf]
        %v2029 = vld [vmem:[#allocation16 + $0x204] sm:$0xf]
        %v2030 = vld [vmem:[#allocation16 + $0x254] sm:$0xf]
        %v2031 = vld [vmem:[#allocation16 + $0x2a4] sm:$0xf]
        %v2032 = vld [vmem:[#allocation16 + $0x2f4] sm:$0xf]
        %v2033 = vld [vmem:[#allocation16 + $0x344] sm:$0xf]
        %v2034 = vld [vmem:[#allocation16 + $0x394] sm:$0xf]
        %v2035 = vld [vmem:[#allocation16 + $0x3e4] sm:$0xf]
        %v2036 = vld [vmem:[#allocation16 + $0x434] sm:$0xf]
        %v2037 = vld [vmem:[#allocation16 + $0x484] sm:$0xf]
        %v2038 = vld [vmem:[#allocation16 + $0x4d4] sm:$0xf]
        %v2039 = vld [vmem:[%s10 + $0xf] sm:$0x1]
        %v2041 = vlaneseq
        %v2042 = vshrl.u32 %v2041, 7
        %v2043 = vsub.s32 0, %v2042
        %v2044 = vrot.slane %v2039, %v2043
        %v2062 = vunpack.c.l.b16 %v2023
        %v2063 = vunpack.c.l.b16 %v2024
        %v2064 = vunpack.c.l.b16 %v2025
        %v2065 = vunpack.c.l.b16 %v2026
        %v2066 = vunpack.c.l.b16 %v2027
        %v2067 = vunpack.c.l.b16 %v2028
        %v2068 = vunpack.c.l.b16 %v2029
        %v2069 = vunpack.c.l.b16 %v2030
        %v2070 = vunpack.c.l.b16 %v2031
        %v2071 = vunpack.c.l.b16 %v2032
        %v2072 = vunpack.c.l.b16 %v2033
        %v2073 = vunpack.c.l.b16 %v2034
        %v2074 = vunpack.c.l.b16 %v2035
        %v2075 = vunpack.c.l.b16 %v2036
        %v2076 = vunpack.c.l.b16 %v2037
        %v2077 = vunpack.c.l.b16 %v2038
        %v2078 = vpack.c.b16 %v2063, %v2062
        %v2079 = vpack.c.b16 %v2065, %v2064
        %v2080 = vpack.c.b16 %v2067, %v2066
        %v2081 = vpack.c.b16 %v2069, %v2068
        %v2082 = vpack.c.b16 %v2071, %v2070
        %v2083 = vpack.c.b16 %v2073, %v2072
        %v2084 = vpack.c.b16 %v2075, %v2074
        %v2085 = vpack.c.b16 %v2077, %v2076
        %2094 = vmatprep.subr.bf16.mxu0 0
        %2095 = vmatpush1.bf16.msra.mxu0 %v2078
        %2096 = vmatprep.subr.bf16.mxu0 0
        %2097 = vmatpush1.bf16.msra.mxu0 %v2079
        %2098 = vmatprep.subr.bf16.mxu0 0
        %2099 = vmatpush1.bf16.msra.mxu0 %v2080
        %2100 = vmatprep.subr.bf16.mxu0 0
        %2101 = vmatpush1.bf16.msra.mxu0 %v2081
        %2102 = vmatprep.subr.bf16.mxu0 0
        %2103 = vmatpush1.bf16.msra.mxu0 %v2082
        %2104 = vmatprep.subr.bf16.mxu0 0
        %2105 = vmatpush1.bf16.msra.mxu0 %v2083
        %2106 = vmatprep.subr.bf16.mxu0 0
        %2107 = vmatpush1.bf16.msra.mxu0 %v2084
        %2108 = vmatprep.subr.bf16.mxu0 0
        %2109 = vmatpush1.bf16.msra.mxu0 %v2085
        %2110 = vmatprep.subr.bf16.mxu0 0
        %2111 = vmatpush1.bf16.msra.mxu0 0
        %2112 = vmatprep.subr.bf16.mxu0 0
        %2113 = vmatpush1.bf16.msra.mxu0 0
        %2114 = vmatprep.subr.bf16.mxu0 0
        %2115 = vmatpush1.bf16.msra.mxu0 0
        %2116 = vmatprep.subr.bf16.mxu0 0
        %2117 = vmatpush1.bf16.msra.mxu0 0
        %2118 = vmatprep.subr.bf16.mxu0 0
        %2119 = vmatpush1.bf16.msra.mxu0 0
        %2120 = vmatprep.subr.bf16.mxu0 0
        %2121 = vmatpush1.bf16.msra.mxu0 0
        %2122 = vmatprep.subr.bf16.mxu0 0
        %2123 = vmatpush1.bf16.msra.mxu0 0
        %2124 = vmatprep.subr.bf16.mxu0 0
        %2125 = vmatpush1.bf16.msra.mxu0 0
        %2126 = vmatprep.mubr.bf16.mxu0 0
        %2127 = vmatmul.mubr.bf16.gmra.mrb[0].mxu0 %v2022
        %v2128 = vpop.f32.mrb[0].mxu0
        %v2129 = vadd.f32 %v2044, %v2128
        %v2130 = vpop.f32.mrb[0].mxu0
        %v2131 = vpop.f32.mrb[0].mxu0
        %v2132 = vpop.f32.mrb[0].mxu0
        %2133 = vdwg.mxu0
        %v2134 = vadd.f32 %v2129, %v1501
        %2135 = vadd.xlane.f32.xlu0 %v2134
        %v2136 = vpop.xlane.xlu0 %2135
        %v2137 = vmul.f32 %v2136, 0.03125
        %v2138 = vsub.f32 %v2134, %v2137
        %v2139 = vmul.f32 %v2138, %v2138
        %v2140 = vmul.f32 %v2139, %v613
        %2141 = vadd.xlane.f32.xlu0 %v2140
        %v2142 = vpop.xlane.xlu0 %2141
        %v2143 = vmul.f32 %v2142, 0.03125
        %v2144 = vadd.f32 %v2143, 1e-05
        %v2145 = vrsqrt.pop %v2144
        %v2146 = vmul.f32 %v2138, %v2145
        %v2147 = vld [vmem:[%s10 + $0x10] sm:$0x1]
        %v2149 = vlaneseq
        %v2150 = vshrl.u32 %v2149, 7
        %v2151 = vsub.s32 0, %v2150
        %v2152 = vrot.slane %v2147, %v2151
        %v2154 = vmul.f32 %v2146, %v2152
        %v2155 = vld [vmem:[%s10 + $0x11] sm:$0x1]
        %v2157 = vlaneseq
        %v2158 = vshrl.u32 %v2157, 7
        %v2159 = vsub.s32 0, %v2158
        %v2160 = vrot.slane %v2155, %v2159
        %v2162 = vadd.f32 %v2154, %v2160
        %v2163 = vpack.c.bf16 %v2162, %v2162
        %v2164 = vld [vmem:[#allocation16 + $0x28] sm:$0xf]
        %v2165 = vld [vmem:[#allocation16 + $0x78] sm:$0xf]
        %v2166 = vld [vmem:[#allocation16 + $0xc8] sm:$0xf]
        %v2167 = vld [vmem:[#allocation16 + $0x118] sm:$0xf]
        %v2168 = vld [vmem:[#allocation16 + $0x168] sm:$0xf]
        %v2169 = vld [vmem:[#allocation16 + $0x1b8] sm:$0xf]
        %v2170 = vld [vmem:[#allocation16 + $0x208] sm:$0xf]
        %v2171 = vld [vmem:[#allocation16 + $0x258] sm:$0xf]
        %v2172 = vld [vmem:[#allocation16 + $0x2a8] sm:$0xf]
        %v2173 = vld [vmem:[#allocation16 + $0x2f8] sm:$0xf]
        %v2174 = vld [vmem:[#allocation16 + $0x348] sm:$0xf]
        %v2175 = vld [vmem:[#allocation16 + $0x398] sm:$0xf]
        %v2176 = vld [vmem:[#allocation16 + $0x3e8] sm:$0xf]
        %v2177 = vld [vmem:[#allocation16 + $0x438] sm:$0xf]
        %v2178 = vld [vmem:[#allocation16 + $0x488] sm:$0xf]
        %v2179 = vld [vmem:[#allocation16 + $0x4d8] sm:$0xf]
        %v2180 = vld [vmem:[%s10 + $0x12] sm:$0x1]
        %v2182 = vlaneseq
        %v2183 = vshrl.u32 %v2182, 7
        %v2184 = vsub.s32 0, %v2183
        %v2185 = vrot.slane %v2180, %v2184
        %v2203 = vunpack.c.l.b16 %v2164
        %v2204 = vunpack.c.l.b16 %v2165
        %v2205 = vunpack.c.l.b16 %v2166
        %v2206 = vunpack.c.l.b16 %v2167
        %v2207 = vunpack.c.l.b16 %v2168
        %v2208 = vunpack.c.l.b16 %v2169
        %v2209 = vunpack.c.l.b16 %v2170
        %v2210 = vunpack.c.l.b16 %v2171
        %v2211 = vunpack.c.l.b16 %v2172
        %v2212 = vunpack.c.l.b16 %v2173
        %v2213 = vunpack.c.l.b16 %v2174
        %v2214 = vunpack.c.l.b16 %v2175
        %v2215 = vunpack.c.l.b16 %v2176
        %v2216 = vunpack.c.l.b16 %v2177
        %v2217 = vunpack.c.l.b16 %v2178
        %v2218 = vunpack.c.l.b16 %v2179
        %v2219 = vpack.c.b16 %v2204, %v2203
        %v2220 = vpack.c.b16 %v2206, %v2205
        %v2221 = vpack.c.b16 %v2208, %v2207
        %v2222 = vpack.c.b16 %v2210, %v2209
        %v2223 = vpack.c.b16 %v2212, %v2211
        %v2224 = vpack.c.b16 %v2214, %v2213
        %v2225 = vpack.c.b16 %v2216, %v2215
        %v2226 = vpack.c.b16 %v2218, %v2217
        %2235 = vmatprep.subr.bf16.mxu0 0
        %2236 = vmatpush1.bf16.msra.mxu0 %v2219
        %2237 = vmatprep.subr.bf16.mxu0 0
        %2238 = vmatpush1.bf16.msra.mxu0 %v2220
        %2239 = vmatprep.subr.bf16.mxu0 0
        %2240 = vmatpush1.bf16.msra.mxu0 %v2221
        %2241 = vmatprep.subr.bf16.mxu0 0
        %2242 = vmatpush1.bf16.msra.mxu0 %v2222
        %2243 = vmatprep.subr.bf16.mxu0 0
        %2244 = vmatpush1.bf16.msra.mxu0 %v2223
        %2245 = vmatprep.subr.bf16.mxu0 0
        %2246 = vmatpush1.bf16.msra.mxu0 %v2224
        %2247 = vmatprep.subr.bf16.mxu0 0
        %2248 = vmatpush1.bf16.msra.mxu0 %v2225
        %2249 = vmatprep.subr.bf16.mxu0 0
        %2250 = vmatpush1.bf16.msra.mxu0 %v2226
        %2251 = vmatprep.subr.bf16.mxu0 0
        %2252 = vmatpush1.bf16.msra.mxu0 0
        %2253 = vmatprep.subr.bf16.mxu0 0
        %2254 = vmatpush1.bf16.msra.mxu0 0
        %2255 = vmatprep.subr.bf16.mxu0 0
        %2256 = vmatpush1.bf16.msra.mxu0 0
        %2257 = vmatprep.subr.bf16.mxu0 0
        %2258 = vmatpush1.bf16.msra.mxu0 0
        %2259 = vmatprep.subr.bf16.mxu0 0
        %2260 = vmatpush1.bf16.msra.mxu0 0
        %2261 = vmatprep.subr.bf16.mxu0 0
        %2262 = vmatpush1.bf16.msra.mxu0 0
        %2263 = vmatprep.subr.bf16.mxu0 0
        %2264 = vmatpush1.bf16.msra.mxu0 0
        %2265 = vmatprep.subr.bf16.mxu0 0
        %2266 = vmatpush1.bf16.msra.mxu0 0
        %2267 = vmatprep.mubr.bf16.mxu0 0
        %2268 = vmatmul.mubr.bf16.gmra.mrb[0].mxu0 %v2163
        %v2269 = vpop.f32.mrb[0].mxu0
        %v2270 = vadd.f32 %v2185, %v2269
        %v2271 = vpop.f32.mrb[0].mxu0
        %v2272 = vpop.f32.mrb[0].mxu0
        %v2273 = vpop.f32.mrb[0].mxu0
        %2274 = vdwg.mxu0
        %v2275 = vmul.f32 %v2270, 0.5
        %v2276 = vmul.f32 %v2270, 0.70710677
        %v2277 = verf.f32.pop %v2276
        %v2278 = vadd.f32 %v2277, 1.0
        %v2279 = vmul.f32 %v2275, %v2278
        %v2280 = vpack.c.bf16 %v2279, %v2279
        %v2281 = vld [vmem:[#allocation16 + $0x2c] sm:$0xf]
        %v2282 = vld [vmem:[#allocation16 + $0x7c] sm:$0xf]
        %v2283 = vld [vmem:[#allocation16 + $0xcc] sm:$0xf]
        %v2284 = vld [vmem:[#allocation16 + $0x11c] sm:$0xf]
        %v2285 = vld [vmem:[#allocation16 + $0x16c] sm:$0xf]
        %v2286 = vld [vmem:[#allocation16 + $0x1bc] sm:$0xf]
        %v2287 = vld [vmem:[#allocation16 + $0x20c] sm:$0xf]
        %v2288 = vld [vmem:[#allocation16 + $0x25c] sm:$0xf]
        %v2289 = vld [vmem:[#allocation16 + $0x2ac] sm:$0xf]
        %v2290 = vld [vmem:[#allocation16 + $0x2fc] sm:$0xf]
        %v2291 = vld [vmem:[#allocation16 + $0x34c] sm:$0xf]
        %v2292 = vld [vmem:[#allocation16 + $0x39c] sm:$0xf]
        %v2293 = vld [vmem:[#allocation16 + $0x3ec] sm:$0xf]
        %v2294 = vld [vmem:[#allocation16 + $0x43c] sm:$0xf]
        %v2295 = vld [vmem:[#allocation16 + $0x48c] sm:$0xf]
        %v2296 = vld [vmem:[#allocation16 + $0x4dc] sm:$0xf]
        %v2297 = vld [vmem:[%s10 + $0x13] sm:$0x1]
        %v2299 = vlaneseq
        %v2300 = vshrl.u32 %v2299, 7
        %v2301 = vsub.s32 0, %v2300
        %v2302 = vrot.slane %v2297, %v2301
        %v2320 = vunpack.c.l.b16 %v2281
        %v2321 = vunpack.c.l.b16 %v2282
        %v2322 = vunpack.c.l.b16 %v2283
        %v2323 = vunpack.c.l.b16 %v2284
        %v2324 = vunpack.c.l.b16 %v2285
        %v2325 = vunpack.c.l.b16 %v2286
        %v2326 = vunpack.c.l.b16 %v2287
        %v2327 = vunpack.c.l.b16 %v2288
        %v2328 = vunpack.c.l.b16 %v2289
        %v2329 = vunpack.c.l.b16 %v2290
        %v2330 = vunpack.c.l.b16 %v2291
        %v2331 = vunpack.c.l.b16 %v2292
        %v2332 = vunpack.c.l.b16 %v2293
        %v2333 = vunpack.c.l.b16 %v2294
        %v2334 = vunpack.c.l.b16 %v2295
        %v2335 = vunpack.c.l.b16 %v2296
        %v2336 = vpack.c.b16 %v2321, %v2320
        %v2337 = vpack.c.b16 %v2323, %v2322
        %v2338 = vpack.c.b16 %v2325, %v2324
        %v2339 = vpack.c.b16 %v2327, %v2326
        %v2340 = vpack.c.b16 %v2329, %v2328
        %v2341 = vpack.c.b16 %v2331, %v2330
        %v2342 = vpack.c.b16 %v2333, %v2332
        %v2343 = vpack.c.b16 %v2335, %v2334
        %2352 = vmatprep.subr.bf16.mxu0 0
        %2353 = vmatpush1.bf16.msra.mxu0 %v2336
        %2354 = vmatprep.subr.bf16.mxu0 0
        %2355 = vmatpush1.bf16.msra.mxu0 %v2337
        %2356 = vmatprep.subr.bf16.mxu0 0
        %2357 = vmatpush1.bf16.msra.mxu0 %v2338
        %2358 = vmatprep.subr.bf16.mxu0 0
        %2359 = vmatpush1.bf16.msra.mxu0 %v2339
        %2360 = vmatprep.subr.bf16.mxu0 0
        %2361 = vmatpush1.bf16.msra.mxu0 %v2340
        %2362 = vmatprep.subr.bf16.mxu0 0
        %2363 = vmatpush1.bf16.msra.mxu0 %v2341
        %2364 = vmatprep.subr.bf16.mxu0 0
        %2365 = vmatpush1.bf16.msra.mxu0 %v2342
        %2366 = vmatprep.subr.bf16.mxu0 0
        %2367 = vmatpush1.bf16.msra.mxu0 %v2343
        %2368 = vmatprep.subr.bf16.mxu0 0
        %2369 = vmatpush1.bf16.msra.mxu0 0
        %2370 = vmatprep.subr.bf16.mxu0 0
        %2371 = vmatpush1.bf16.msra.mxu0 0
        %2372 = vmatprep.subr.bf16.mxu0 0
        %2373 = vmatpush1.bf16.msra.mxu0 0
        %2374 = vmatprep.subr.bf16.mxu0 0
        %2375 = vmatpush1.bf16.msra.mxu0 0
        %2376 = vmatprep.subr.bf16.mxu0 0
        %2377 = vmatpush1.bf16.msra.mxu0 0
        %2378 = vmatprep.subr.bf16.mxu0 0
        %2379 = vmatpush1.bf16.msra.mxu0 0
        %2380 = vmatprep.subr.bf16.mxu0 0
        %2381 = vmatpush1.bf16.msra.mxu0 0
        %2382 = vmatprep.subr.bf16.mxu0 0
        %2383 = vmatpush1.bf16.msra.mxu0 0
        %2384 = vmatprep.mubr.bf16.mxu0 0
        %2385 = vmatmul.mubr.bf16.gmra.mrb[0].mxu0 %v2280
        %v2386 = vpop.f32.mrb[0].mxu0
        %v2387 = vadd.f32 %v2302, %v2386
        %v2388 = vpop.f32.mrb[0].mxu0
        %v2389 = vpop.f32.mrb[0].mxu0
        %v2390 = vpop.f32.mrb[0].mxu0
        %2391 = vdwg.mxu0
        %v2392 = vadd.f32 %v2387, %v2134
        %2393 = vadd.xlane.f32.xlu0 %v2392
        %v2394 = vpop.xlane.xlu0 %2393
        %v2395 = vmul.f32 %v2394, 0.03125
        %v2396 = vsub.f32 %v2392, %v2395
        %v2397 = vmul.f32 %v2396, %v2396
        %v2398 = vmul.f32 %v2397, %v613
        %2399 = vadd.xlane.f32.xlu0 %v2398
        %v2400 = vpop.xlane.xlu0 %2399
        %v2401 = vmul.f32 %v2400, 0.03125
        %v2402 = vadd.f32 %v2401, 1e-05
        %v2403 = vrsqrt.pop %v2402
        %v2404 = vmul.f32 %v2396, %v2403
        %v2405 = vld [vmem:[%s10 + $0x14] sm:$0x1]
        %v2407 = vlaneseq
        %v2408 = vshrl.u32 %v2407, 7
        %v2409 = vsub.s32 0, %v2408
        %v2410 = vrot.slane %v2405, %v2409
        %v2412 = vmul.f32 %v2404, %v2410
        %v2413 = vld [vmem:[%s10 + $0x15] sm:$0x1]
        %v2415 = vlaneseq
        %v2416 = vshrl.u32 %v2415, 7
        %v2417 = vsub.s32 0, %v2416
        %v2418 = vrot.slane %v2413, %v2417
        %v2420 = vadd.f32 %v2412, %v2418
        %v2421 = vpack.c.bf16 %v2420, %v2420
        %v2422 = vld [vmem:[#allocation16 + $0x30] sm:$0xf]
        %v2423 = vld [vmem:[#allocation16 + $0x80] sm:$0xf]
        %v2424 = vld [vmem:[#allocation16 + $0xd0] sm:$0xf]
        %v2425 = vld [vmem:[#allocation16 + $0x120] sm:$0xf]
        %v2426 = vld [vmem:[#allocation16 + $0x170] sm:$0xf]
        %v2427 = vld [vmem:[#allocation16 + $0x1c0] sm:$0xf]
        %v2428 = vld [vmem:[#allocation16 + $0x210] sm:$0xf]
        %v2429 = vld [vmem:[#allocation16 + $0x260] sm:$0xf]
        %v2430 = vld [vmem:[#allocation16 + $0x2b0] sm:$0xf]
        %v2431 = vld [vmem:[#allocation16 + $0x300] sm:$0xf]
        %v2432 = vld [vmem:[#allocation16 + $0x350] sm:$0xf]
        %v2433 = vld [vmem:[#allocation16 + $0x3a0] sm:$0xf]
        %v2434 = vld [vmem:[#allocation16 + $0x3f0] sm:$0xf]
        %v2435 = vld [vmem:[#allocation16 + $0x440] sm:$0xf]
        %v2436 = vld [vmem:[#allocation16 + $0x490] sm:$0xf]
        %v2437 = vld [vmem:[#allocation16 + $0x4e0] sm:$0xf]
        %v2438 = vld [vmem:[%s10 + $0x16] sm:$0x1]
        %v2440 = vlaneseq
        %v2441 = vshrl.u32 %v2440, 7
        %v2442 = vsub.s32 0, %v2441
        %v2443 = vrot.slane %v2438, %v2442
        %v2461 = vunpack.c.l.b16 %v2422
        %v2462 = vunpack.c.l.b16 %v2423
        %v2463 = vunpack.c.l.b16 %v2424
        %v2464 = vunpack.c.l.b16 %v2425
        %v2465 = vunpack.c.l.b16 %v2426
        %v2466 = vunpack.c.l.b16 %v2427
        %v2467 = vunpack.c.l.b16 %v2428
        %v2468 = vunpack.c.l.b16 %v2429
        %v2469 = vunpack.c.l.b16 %v2430
        %v2470 = vunpack.c.l.b16 %v2431
        %v2471 = vunpack.c.l.b16 %v2432
        %v2472 = vunpack.c.l.b16 %v2433
        %v2473 = vunpack.c.l.b16 %v2434
        %v2474 = vunpack.c.l.b16 %v2435
        %v2475 = vunpack.c.l.b16 %v2436
        %v2476 = vunpack.c.l.b16 %v2437
        %v2477 = vpack.c.b16 %v2462, %v2461
        %v2478 = vpack.c.b16 %v2464, %v2463
        %v2479 = vpack.c.b16 %v2466, %v2465
        %v2480 = vpack.c.b16 %v2468, %v2467
        %v2481 = vpack.c.b16 %v2470, %v2469
        %v2482 = vpack.c.b16 %v2472, %v2471
        %v2483 = vpack.c.b16 %v2474, %v2473
        %v2484 = vpack.c.b16 %v2476, %v2475
        %2493 = vmatprep.subr.bf16.mxu0 0
        %2494 = vmatpush1.bf16.msra.mxu0 %v2477
        %2495 = vmatprep.subr.bf16.mxu0 0
        %2496 = vmatpush1.bf16.msra.mxu0 %v2478
        %2497 = vmatprep.subr.bf16.mxu0 0
        %2498 = vmatpush1.bf16.msra.mxu0 %v2479
        %2499 = vmatprep.subr.bf16.mxu0 0
        %2500 = vmatpush1.bf16.msra.mxu0 %v2480
        %2501 = vmatprep.subr.bf16.mxu0 0
        %2502 = vmatpush1.bf16.msra.mxu0 %v2481
        %2503 = vmatprep.subr.bf16.mxu0 0
        %2504 = vmatpush1.bf16.msra.mxu0 %v2482
        %2505 = vmatprep.subr.bf16.mxu0 0
        %2506 = vmatpush1.bf16.msra.mxu0 %v2483
        %2507 = vmatprep.subr.bf16.mxu0 0
        %2508 = vmatpush1.bf16.msra.mxu0 %v2484
        %2509 = vmatprep.subr.bf16.mxu0 0
        %2510 = vmatpush1.bf16.msra.mxu0 0
        %2511 = vmatprep.subr.bf16.mxu0 0
        %2512 = vmatpush1.bf16.msra.mxu0 0
        %2513 = vmatprep.subr.bf16.mxu0 0
        %2514 = vmatpush1.bf16.msra.mxu0 0
        %2515 = vmatprep.subr.bf16.mxu0 0
        %2516 = vmatpush1.bf16.msra.mxu0 0
        %2517 = vmatprep.subr.bf16.mxu0 0
        %2518 = vmatpush1.bf16.msra.mxu0 0
        %2519 = vmatprep.subr.bf16.mxu0 0
        %2520 = vmatpush1.bf16.msra.mxu0 0
        %2521 = vmatprep.subr.bf16.mxu0 0
        %2522 = vmatpush1.bf16.msra.mxu0 0
        %2523 = vmatprep.subr.bf16.mxu0 0
        %2524 = vmatpush1.bf16.msra.mxu0 0
        %2525 = vmatprep.mubr.bf16.mxu0 0
        %2526 = vmatmul.mubr.bf16.gmra.mrb[0].mxu0 %v2421
        %v2527 = vpop.f32.mrb[0].mxu0
        %v2528 = vadd.f32 %v2443, %v2527
        %v2529 = vpop.f32.mrb[0].mxu0
        %v2530 = vpop.f32.mrb[0].mxu0
        %v2531 = vpop.f32.mrb[0].mxu0
        %2532 = vdwg.mxu0
        %v2533 = vpack.c.bf16 %v584, %v584
        %v2534 = vld [vmem:[#allocation16 + $0x34] sm:$0xff]
        %v2535 = vld [vmem:[#allocation16 + $0x84] sm:$0xff]
        %v2536 = vld [vmem:[#allocation16 + $0xd4] sm:$0xff]
        %v2537 = vld [vmem:[#allocation16 + $0x124] sm:$0xff]
        %v2538 = vld [vmem:[#allocation16 + $0x174] sm:$0xff]
        %v2539 = vld [vmem:[#allocation16 + $0x1c4] sm:$0xff]
        %v2540 = vld [vmem:[#allocation16 + $0x214] sm:$0xff]
        %v2541 = vld [vmem:[#allocation16 + $0x264] sm:$0xff]
        %v2542 = vld [vmem:[#allocation16 + $0x2b4] sm:$0xff]
        %v2543 = vld [vmem:[#allocation16 + $0x304] sm:$0xff]
        %v2544 = vld [vmem:[#allocation16 + $0x354] sm:$0xff]
        %v2545 = vld [vmem:[#allocation16 + $0x3a4] sm:$0xff]
        %v2546 = vld [vmem:[#allocation16 + $0x3f4] sm:$0xff]
        %v2547 = vld [vmem:[#allocation16 + $0x444] sm:$0xff]
        %v2548 = vld [vmem:[#allocation16 + $0x494] sm:$0xff]
        %v2549 = vld [vmem:[#allocation16 + $0x4e4] sm:$0xff]
        %v2550 = vld [vmem:[%s10 + $0x17] sm:$0x3]
        %v2552 = vlaneseq
        %v2553 = vshrl.u32 %v2552, 7
        %v2554 = vsub.s32 0, %v2553
        %v2555 = vrot.slane %v2550, %v2554
        %v2556 = vlaneseq
        %v2557 = vshrl.u32 %v2556, 7
        %v2558 = vsub.s32 1, %v2557
        %v2559 = vrot.slane %v2550, %v2558
        %v2578 = vunpack.c.l.b16 %v2534
        %v2579 = vunpack.c.h.b16 %v2534
        %v2580 = vunpack.c.l.b16 %v2535
        %v2581 = vunpack.c.h.b16 %v2535
        %v2582 = vunpack.c.l.b16 %v2536
        %v2583 = vunpack.c.h.b16 %v2536
        %v2584 = vunpack.c.l.b16 %v2537
        %v2585 = vunpack.c.h.b16 %v2537
        %v2586 = vunpack.c.l.b16 %v2538
        %v2587 = vunpack.c.h.b16 %v2538
        %v2588 = vunpack.c.l.b16 %v2539
        %v2589 = vunpack.c.h.b16 %v2539
        %v2590 = vunpack.c.l.b16 %v2540
        %v2591 = vunpack.c.h.b16 %v2540
        %v2592 = vunpack.c.l.b16 %v2541
        %v2593 = vunpack.c.h.b16 %v2541
        %v2594 = vunpack.c.l.b16 %v2542
        %v2595 = vunpack.c.h.b16 %v2542
        %v2596 = vunpack.c.l.b16 %v2543
        %v2597 = vunpack.c.h.b16 %v2543
        %v2598 = vunpack.c.l.b16 %v2544
        %v2599 = vunpack.c.h.b16 %v2544
        %v2600 = vunpack.c.l.b16 %v2545
        %v2601 = vunpack.c.h.b16 %v2545
        %v2602 = vunpack.c.l.b16 %v2546
        %v2603 = vunpack.c.h.b16 %v2546
        %v2604 = vunpack.c.l.b16 %v2547
        %v2605 = vunpack.c.h.b16 %v2547
        %v2606 = vunpack.c.l.b16 %v2548
        %v2607 = vunpack.c.h.b16 %v2548
        %v2608 = vunpack.c.l.b16 %v2549
        %v2609 = vunpack.c.h.b16 %v2549
        %v2610 = vpack.c.b16 %v2580, %v2578
        %v2611 = vpack.c.b16 %v2581, %v2579
        %v2612 = vpack.c.b16 %v2584, %v2582
        %v2613 = vpack.c.b16 %v2585, %v2583
        %v2614 = vpack.c.b16 %v2588, %v2586
        %v2615 = vpack.c.b16 %v2589, %v2587
        %v2616 = vpack.c.b16 %v2592, %v2590
        %v2617 = vpack.c.b16 %v2593, %v2591
        %v2618 = vpack.c.b16 %v2596, %v2594
        %v2619 = vpack.c.b16 %v2597, %v2595
        %v2620 = vpack.c.b16 %v2600, %v2598
        %v2621 = vpack.c.b16 %v2601, %v2599
        %v2622 = vpack.c.b16 %v2604, %v2602
        %v2623 = vpack.c.b16 %v2605, %v2603
        %v2624 = vpack.c.b16 %v2608, %v2606
        %v2625 = vpack.c.b16 %v2609, %v2607
        %2642 = vmatprep.subr.bf16.mxu0 %v2611
        %2643 = vmatpush1.bf16.msra.mxu0 %v2610
        %2644 = vmatprep.subr.bf16.mxu0 %v2613
        %2645 = vmatpush1.bf16.msra.mxu0 %v2612
        %2646 = vmatprep.subr.bf16.mxu0 %v2615
        %2647 = vmatpush1.bf16.msra.mxu0 %v2614
        %2648 = vmatprep.subr.bf16.mxu0 %v2617
        %2649 = vmatpush1.bf16.msra.mxu0 %v2616
        %2650 = vmatprep.subr.bf16.mxu0 %v2619
        %2651 = vmatpush1.bf16.msra.mxu0 %v2618
        %2652 = vmatprep.subr.bf16.mxu0 %v2621
        %2653 = vmatpush1.bf16.msra.mxu0 %v2620
        %2654 = vmatprep.subr.bf16.mxu0 %v2623
        %2655 = vmatpush1.bf16.msra.mxu0 %v2622
        %2656 = vmatprep.subr.bf16.mxu0 %v2625
        %2657 = vmatpush1.bf16.msra.mxu0 %v2624
        %2658 = vmatprep.subr.bf16.mxu0 0
        %2659 = vmatpush1.bf16.msra.mxu0 0
        %2660 = vmatprep.subr.bf16.mxu0 0
        %2661 = vmatpush1.bf16.msra.mxu0 0
        %2662 = vmatprep.subr.bf16.mxu0 0
        %2663 = vmatpush1.bf16.msra.mxu0 0
        %2664 = vmatprep.subr.bf16.mxu0 0
        %2665 = vmatpush1.bf16.msra.mxu0 0
        %2666 = vmatprep.subr.bf16.mxu0 0
        %2667 = vmatpush1.bf16.msra.mxu0 0
        %2668 = vmatprep.subr.bf16.mxu0 0
        %2669 = vmatpush1.bf16.msra.mxu0 0
        %2670 = vmatprep.subr.bf16.mxu0 0
        %2671 = vmatpush1.bf16.msra.mxu0 0
        %2672 = vmatprep.subr.bf16.mxu0 0
        %2673 = vmatpush1.bf16.msra.mxu0 0
        %2674 = vmatprep.mubr.bf16.mxu0 0
        %2675 = vmatmul.mubr.bf16.gmra.mrb[0].mxu0 %v2533
        %v2676 = vpop.f32.mrb[0].mxu0
        %v2677 = vadd.f32 %v2555, %v2676
        %v2678 = vpop.f32.mrb[0].mxu0
        %v2679 = vadd.f32 %v2559, %v2678
        %v2680 = vpop.f32.mrb[0].mxu0
        %v2681 = vpop.f32.mrb[0].mxu0
        %2682 = vdwg.mxu0
        %v2683 = vmul.f32 %v2677, %v592
        %v2684 = vmul.f32 %v2677, %v593
        %v2685 = vmul.f32 %v2677, %v594
        %v2686 = vmul.f32 %v2677, %v595
        %v2687 = vmul.f32 %v2679, %v592
        %v2688 = vmul.f32 %v2679, %v593
        %v2689 = vmul.f32 %v2679, %v594
        %v2690 = vmul.f32 %v2679, %v595
        %v2691 = vmul.f32 %v2528, 0.35355338
        %2692 = vmatprep.subr.mxu0 0.0
        %2693 = vmatpush1.xpose.msra.mxu0 %v2683
        %2694 = vmatprep.subr.mxu0 0.0
        %2695 = vmatpush1.xpose.msra.mxu0 %v2684
        %2696 = vmatprep.subr.mxu0 0.0
        %2697 = vmatpush1.xpose.msra.mxu0 %v2685
        %2698 = vmatprep.subr.mxu0 0.0
        %2699 = vmatpush1.xpose.msra.mxu0 %v2686
        %2700 = vmatprep.subr.mxu0 0.0
        %2701 = vmatpush1.xpose.msra.mxu0 0.0
        %2702 = vmatprep.subr.mxu0 0.0
        %2703 = vmatpush1.xpose.msra.mxu0 0.0
        %2704 = vmatprep.subr.mxu0 0.0
        %2705 = vmatpush1.xpose.msra.mxu0 0.0
        %2706 = vmatprep.subr.mxu0 0.0
        %2707 = vmatpush1.xpose.msra.mxu0 0.0
        %2708 = vmatprep.subr.mxu0 0.0
        %2709 = vmatpush1.xpose.msra.mxu0 0.0
        %2710 = vmatprep.subr.mxu0 0.0
        %2711 = vmatpush1.xpose.msra.mxu0 0.0
        %2712 = vmatprep.subr.mxu0 0.0
        %2713 = vmatpush1.xpose.msra.mxu0 0.0
        %2714 = vmatprep.subr.mxu0 0.0
        %2715 = vmatpush1.xpose.msra.mxu0 0.0
        %2716 = vmatprep.subr.mxu0 0.0
        %2717 = vmatpush1.xpose.msra.mxu0 0.0
        %2718 = vmatprep.subr.mxu0 0.0
        %2719 = vmatpush1.xpose.msra.mxu0 0.0
        %2720 = vmatprep.subr.mxu0 0.0
        %2721 = vmatpush1.xpose.msra.mxu0 0.0
        %2722 = vmatprep.subr.mxu0 0.0
        %2723 = vmatpush1.xpose.msra.mxu0 0.0
        %2724 = vmatprep.subr.mxu0 0.0
        %2725 = vmatpush1.xpose.msra.mxu0 0.0
        %2726 = vmatprep.subr.mxu0 0.0
        %2727 = vmatpush1.xpose.msra.mxu0 0.0
        %2728 = vmatprep.subr.mxu0 0.0
        %2729 = vmatpush1.xpose.msra.mxu0 0.0
        %2730 = vmatprep.subr.mxu0 0.0
        %2731 = vmatpush1.xpose.msra.mxu0 0.0
        %2732 = vmatprep.subr.mxu0 0.0
        %2733 = vmatpush1.xpose.msra.mxu0 0.0
        %2734 = vmatprep.subr.mxu0 0.0
        %2735 = vmatpush1.xpose.msra.mxu0 0.0
        %2736 = vmatprep.subr.mxu0 0.0
        %2737 = vmatpush1.xpose.msra.mxu0 0.0
        %2738 = vmatprep.subr.mxu0 0.0
        %2739 = vmatpush1.xpose.msra.mxu0 0.0
        %2740 = vmatprep.subr.mxu0 0.0
        %2741 = vmatpush1.xpose.msra.mxu0 0.0
        %2742 = vmatprep.subr.mxu0 0.0
        %2743 = vmatpush1.xpose.msra.mxu0 0.0
        %2744 = vmatprep.subr.mxu0 0.0
        %2745 = vmatpush1.xpose.msra.mxu0 0.0
        %2746 = vmatprep.subr.mxu0 0.0
        %2747 = vmatpush1.xpose.msra.mxu0 0.0
        %2748 = vmatprep.subr.mxu0 0.0
        %2749 = vmatpush1.xpose.msra.mxu0 0.0
        %2750 = vmatprep.subr.mxu0 0.0
        %2751 = vmatpush1.xpose.msra.mxu0 0.0
        %2752 = vmatprep.subr.mxu0 0.0
        %2753 = vmatpush1.xpose.msra.mxu0 0.0
        %2754 = vmatprep.subr.mxu0 0.0
        %2755 = vmatpush1.xpose.msra.mxu0 0.0
        %2756 = vmatprep.mubr.f32.mxu0 0.0
        %2757 = vmatmul.mubr.f32.gmra.mrb[0].mxu0 %v2691
        %v2758 = vpop.f32.mrb[0].mxu0
        %v2759 = vadd.f32 %v586, %v2758
        %v2760 = vpop.f32.mrb[0].mxu0
        %2761 = vdwg.mxu0
        %v2762 = vsel %vm976, %v2759, -inf
        %2763 = vmax.xlane.f32.xlu0 %v2762
        %v2764 = vpop.xlane.xlu0 %2763
        %v2765 = vsub.f32 %v2759, %v2764
        %v2766 = vmul.f32 %v2765, 1.442695
        %v2767 = vpow.pop %v2766
        %v2769 = vsel %vm976, %v2767, 0
        %2771 = vmatprep.subr.mxu0 0.0
        %2772 = vmatpush1.msra.mxu0 %v600
        %2773 = vmatprep.subr.mxu0 0.0
        %2774 = vmatpush1.msra.mxu0 %v601
        %2775 = vmatprep.subr.mxu0 0.0
        %2776 = vmatpush1.msra.mxu0 %v602
        %2777 = vmatprep.subr.mxu0 0.0
        %2778 = vmatpush1.msra.mxu0 %v603
        %2779 = vmatprep.subr.mxu0 0.0
        %2780 = vmatpush1.msra.mxu0 0.0
        %2781 = vmatprep.subr.mxu0 0.0
        %2782 = vmatpush1.msra.mxu0 0.0
        %2783 = vmatprep.subr.mxu0 0.0
        %2784 = vmatpush1.msra.mxu0 0.0
        %2785 = vmatprep.subr.mxu0 0.0
        %2786 = vmatpush1.msra.mxu0 0.0
        %2787 = vmatprep.subr.mxu0 0.0
        %2788 = vmatpush1.msra.mxu0 0.0
        %2789 = vmatprep.subr.mxu0 0.0
        %2790 = vmatpush1.msra.mxu0 0.0
        %2791 = vmatprep.subr.mxu0 0.0
        %2792 = vmatpush1.msra.mxu0 0.0
        %2793 = vmatprep.subr.mxu0 0.0
        %2794 = vmatpush1.msra.mxu0 0.0
        %2795 = vmatprep.subr.mxu0 0.0
        %2796 = vmatpush1.msra.mxu0 0.0
        %2797 = vmatprep.subr.mxu0 0.0
        %2798 = vmatpush1.msra.mxu0 0.0
        %2799 = vmatprep.subr.mxu0 0.0
        %2800 = vmatpush1.msra.mxu0 0.0
        %2801 = vmatprep.subr.mxu0 0.0
        %2802 = vmatpush1.msra.mxu0 0.0
        %2803 = vmatprep.subr.mxu0 0.0
        %2804 = vmatpush1.msra.mxu0 0.0
        %2805 = vmatprep.subr.mxu0 0.0
        %2806 = vmatpush1.msra.mxu0 0.0
        %2807 = vmatprep.subr.mxu0 0.0
        %2808 = vmatpush1.msra.mxu0 0.0
        %2809 = vmatprep.subr.mxu0 0.0
        %2810 = vmatpush1.msra.mxu0 0.0
        %2811 = vmatprep.subr.mxu0 0.0
        %2812 = vmatpush1.msra.mxu0 0.0
        %2813 = vmatprep.subr.mxu0 0.0
        %2814 = vmatpush1.msra.mxu0 0.0
        %2815 = vmatprep.subr.mxu0 0.0
        %2816 = vmatpush1.msra.mxu0 0.0
        %2817 = vmatprep.subr.mxu0 0.0
        %2818 = vmatpush1.msra.mxu0 0.0
        %2819 = vmatprep.subr.mxu0 0.0
        %2820 = vmatpush1.msra.mxu0 0.0
        %2821 = vmatprep.subr.mxu0 0.0
        %2822 = vmatpush1.msra.mxu0 0.0
        %2823 = vmatprep.subr.mxu0 0.0
        %2824 = vmatpush1.msra.mxu0 0.0
        %2825 = vmatprep.subr.mxu0 0.0
        %2826 = vmatpush1.msra.mxu0 0.0
        %2827 = vmatprep.subr.mxu0 0.0
        %2828 = vmatpush1.msra.mxu0 0.0
        %2829 = vmatprep.subr.mxu0 0.0
        %2830 = vmatpush1.msra.mxu0 0.0
        %2831 = vmatprep.subr.mxu0 0.0
        %2832 = vmatpush1.msra.mxu0 0.0
        %2833 = vmatprep.subr.mxu0 0.0
        %2834 = vmatpush1.msra.mxu0 0.0
        %2835 = vmatprep.mubr.f32.mxu0 0.0
        %2836 = vmatmul.mubr.f32.gmra.mrb[0].mxu0 %v2769
        %v2837 = vpop.f32.mrb[0].mxu0
        %v2838 = vadd.f32 0.0, %v2837
        %v2839 = vpop.f32.mrb[0].mxu0
        %2840 = vdwg.mxu0
        %v2841 = vrcp.pop %v2838
        %v2842 = vmul.f32 %v2767, %v2841
        %v2844 = vsel %vm976, %v2842, 0
        %2846 = vmatprep.subr.mxu0 0.0
        %2847 = vmatpush1.msra.mxu0 %v2687
        %2848 = vmatprep.subr.mxu0 0.0
        %2849 = vmatpush1.msra.mxu0 %v2688
        %2850 = vmatprep.subr.mxu0 0.0
        %2851 = vmatpush1.msra.mxu0 %v2689
        %2852 = vmatprep.subr.mxu0 0.0
        %2853 = vmatpush1.msra.mxu0 %v2690
        %2854 = vmatprep.subr.mxu0 0.0
        %2855 = vmatpush1.msra.mxu0 0.0
        %2856 = vmatprep.subr.mxu0 0.0
        %2857 = vmatpush1.msra.mxu0 0.0
        %2858 = vmatprep.subr.mxu0 0.0
        %2859 = vmatpush1.msra.mxu0 0.0
        %2860 = vmatprep.subr.mxu0 0.0
        %2861 = vmatpush1.msra.mxu0 0.0
        %2862 = vmatprep.subr.mxu0 0.0
        %2863 = vmatpush1.msra.mxu0 0.0
        %2864 = vmatprep.subr.mxu0 0.0
        %2865 = vmatpush1.msra.mxu0 0.0
        %2866 = vmatprep.subr.mxu0 0.0
        %2867 = vmatpush1.msra.mxu0 0.0
        %2868 = vmatprep.subr.mxu0 0.0
        %2869 = vmatpush1.msra.mxu0 0.0
        %2870 = vmatprep.subr.mxu0 0.0
        %2871 = vmatpush1.msra.mxu0 0.0
        %2872 = vmatprep.subr.mxu0 0.0
        %2873 = vmatpush1.msra.mxu0 0.0
        %2874 = vmatprep.subr.mxu0 0.0
        %2875 = vmatpush1.msra.mxu0 0.0
        %2876 = vmatprep.subr.mxu0 0.0
        %2877 = vmatpush1.msra.mxu0 0.0
        %2878 = vmatprep.subr.mxu0 0.0
        %2879 = vmatpush1.msra.mxu0 0.0
        %2880 = vmatprep.subr.mxu0 0.0
        %2881 = vmatpush1.msra.mxu0 0.0
        %2882 = vmatprep.subr.mxu0 0.0
        %2883 = vmatpush1.msra.mxu0 0.0
        %2884 = vmatprep.subr.mxu0 0.0
        %2885 = vmatpush1.msra.mxu0 0.0
        %2886 = vmatprep.subr.mxu0 0.0
        %2887 = vmatpush1.msra.mxu0 0.0
        %2888 = vmatprep.subr.mxu0 0.0
        %2889 = vmatpush1.msra.mxu0 0.0
        %2890 = vmatprep.subr.mxu0 0.0
        %2891 = vmatpush1.msra.mxu0 0.0
        %2892 = vmatprep.subr.mxu0 0.0
        %2893 = vmatpush1.msra.mxu0 0.0
        %2894 = vmatprep.subr.mxu0 0.0
        %2895 = vmatpush1.msra.mxu0 0.0
        %2896 = vmatprep.subr.mxu0 0.0
        %2897 = vmatpush1.msra.mxu0 0.0
        %2898 = vmatprep.subr.mxu0 0.0
        %2899 = vmatpush1.msra.mxu0 0.0
        %2900 = vmatprep.subr.mxu0 0.0
        %2901 = vmatpush1.msra.mxu0 0.0
        %2902 = vmatprep.subr.mxu0 0.0
        %2903 = vmatpush1.msra.mxu0 0.0
        %2904 = vmatprep.subr.mxu0 0.0
        %2905 = vmatpush1.msra.mxu0 0.0
        %2906 = vmatprep.subr.mxu0 0.0
        %2907 = vmatpush1.msra.mxu0 0.0
        %2908 = vmatprep.subr.mxu0 0.0
        %2909 = vmatpush1.msra.mxu0 0.0
        %2910 = vmatprep.mubr.f32.mxu0 0.0
        %2911 = vmatmul.mubr.f32.gmra.mrb[0].mxu0 %v2844
        %v2912 = vpop.f32.mrb[0].mxu0
        %v2913 = vadd.f32 0.0, %v2912
        %v2914 = vpop.f32.mrb[0].mxu0
        %2915 = vdwg.mxu0
        %v2916 = vpack.c.bf16 %v2913, %v2913
        %v2917 = vld [vmem:[#allocation16 + $0x3c] sm:$0xf]
        %v2918 = vld [vmem:[#allocation16 + $0x8c] sm:$0xf]
        %v2919 = vld [vmem:[#allocation16 + $0xdc] sm:$0xf]
        %v2920 = vld [vmem:[#allocation16 + $0x12c] sm:$0xf]
        %v2921 = vld [vmem:[#allocation16 + $0x17c] sm:$0xf]
        %v2922 = vld [vmem:[#allocation16 + $0x1cc] sm:$0xf]
        %v2923 = vld [vmem:[#allocation16 + $0x21c] sm:$0xf]
        %v2924 = vld [vmem:[#allocation16 + $0x26c] sm:$0xf]
        %v2925 = vld [vmem:[#allocation16 + $0x2bc] sm:$0xf]
        %v2926 = vld [vmem:[#allocation16 + $0x30c] sm:$0xf]
        %v2927 = vld [vmem:[#allocation16 + $0x35c] sm:$0xf]
        %v2928 = vld [vmem:[#allocation16 + $0x3ac] sm:$0xf]
        %v2929 = vld [vmem:[#allocation16 + $0x3fc] sm:$0xf]
        %v2930 = vld [vmem:[#allocation16 + $0x44c] sm:$0xf]
        %v2931 = vld [vmem:[#allocation16 + $0x49c] sm:$0xf]
        %v2932 = vld [vmem:[#allocation16 + $0x4ec] sm:$0xf]
        %v2933 = vld [vmem:[%s10 + $0x19] sm:$0x1]
        %v2935 = vlaneseq
        %v2936 = vshrl.u32 %v2935, 7
        %v2937 = vsub.s32 0, %v2936
        %v2938 = vrot.slane %v2933, %v2937
        %v2956 = vunpack.c.l.b16 %v2917
        %v2957 = vunpack.c.l.b16 %v2918
        %v2958 = vunpack.c.l.b16 %v2919
        %v2959 = vunpack.c.l.b16 %v2920
        %v2960 = vunpack.c.l.b16 %v2921
        %v2961 = vunpack.c.l.b16 %v2922
        %v2962 = vunpack.c.l.b16 %v2923
        %v2963 = vunpack.c.l.b16 %v2924
        %v2964 = vunpack.c.l.b16 %v2925
        %v2965 = vunpack.c.l.b16 %v2926
        %v2966 = vunpack.c.l.b16 %v2927
        %v2967 = vunpack.c.l.b16 %v2928
        %v2968 = vunpack.c.l.b16 %v2929
        %v2969 = vunpack.c.l.b16 %v2930
        %v2970 = vunpack.c.l.b16 %v2931
        %v2971 = vunpack.c.l.b16 %v2932
        %v2972 = vpack.c.b16 %v2957, %v2956
        %v2973 = vpack.c.b16 %v2959, %v2958
        %v2974 = vpack.c.b16 %v2961, %v2960
        %v2975 = vpack.c.b16 %v2963, %v2962
        %v2976 = vpack.c.b16 %v2965, %v2964
        %v2977 = vpack.c.b16 %v2967, %v2966
        %v2978 = vpack.c.b16 %v2969, %v2968
        %v2979 = vpack.c.b16 %v2971, %v2970
        %2988 = vmatprep.subr.bf16.mxu0 0
        %2989 = vmatpush1.bf16.msra.mxu0 %v2972
        %2990 = vmatprep.subr.bf16.mxu0 0
        %2991 = vmatpush1.bf16.msra.mxu0 %v2973
        %2992 = vmatprep.subr.bf16.mxu0 0
        %2993 = vmatpush1.bf16.msra.mxu0 %v2974
        %2994 = vmatprep.subr.bf16.mxu0 0
        %2995 = vmatpush1.bf16.msra.mxu0 %v2975
        %2996 = vmatprep.subr.bf16.mxu0 0
        %2997 = vmatpush1.bf16.msra.mxu0 %v2976
        %2998 = vmatprep.subr.bf16.mxu0 0
        %2999 = vmatpush1.bf16.msra.mxu0 %v2977
        %3000 = vmatprep.subr.bf16.mxu0 0
        %3001 = vmatpush1.bf16.msra.mxu0 %v2978
        %3002 = vmatprep.subr.bf16.mxu0 0
        %3003 = vmatpush1.bf16.msra.mxu0 %v2979
        %3004 = vmatprep.subr.bf16.mxu0 0
        %3005 = vmatpush1.bf16.msra.mxu0 0
        %3006 = vmatprep.subr.bf16.mxu0 0
        %3007 = vmatpush1.bf16.msra.mxu0 0
        %3008 = vmatprep.subr.bf16.mxu0 0
        %3009 = vmatpush1.bf16.msra.mxu0 0
        %3010 = vmatprep.subr.bf16.mxu0 0
        %3011 = vmatpush1.bf16.msra.mxu0 0
        %3012 = vmatprep.subr.bf16.mxu0 0
        %3013 = vmatpush1.bf16.msra.mxu0 0
        %3014 = vmatprep.subr.bf16.mxu0 0
        %3015 = vmatpush1.bf16.msra.mxu0 0
        %3016 = vmatprep.subr.bf16.mxu0 0
        %3017 = vmatpush1.bf16.msra.mxu0 0
        %3018 = vmatprep.subr.bf16.mxu0 0
        %3019 = vmatpush1.bf16.msra.mxu0 0
        %3020 = vmatprep.mubr.bf16.mxu0 0
        %3021 = vmatmul.mubr.bf16.gmra.mrb[0].mxu0 %v2916
        %v3022 = vpop.f32.mrb[0].mxu0
        %v3023 = vadd.f32 %v2938, %v3022
        %v3024 = vpop.f32.mrb[0].mxu0
        %v3025 = vpop.f32.mrb[0].mxu0
        %v3026 = vpop.f32.mrb[0].mxu0
        %3027 = vdwg.mxu0
        %v3028 = vadd.f32 %v3023, %v2392
        %3029 = vadd.xlane.f32.xlu0 %v3028
        %v3030 = vpop.xlane.xlu0 %3029
        %v3031 = vmul.f32 %v3030, 0.03125
        %v3032 = vsub.f32 %v3028, %v3031
        %v3033 = vmul.f32 %v3032, %v3032
        %v3034 = vmul.f32 %v3033, %v613
        %3035 = vadd.xlane.f32.xlu0 %v3034
        %v3036 = vpop.xlane.xlu0 %3035
        %v3037 = vmul.f32 %v3036, 0.03125
        %v3038 = vadd.f32 %v3037, 1e-05
        %v3039 = vrsqrt.pop %v3038
        %v3040 = vmul.f32 %v3032, %v3039
        %v3041 = vld [vmem:[%s10 + $0x1a] sm:$0x1]
        %v3043 = vlaneseq
        %v3044 = vshrl.u32 %v3043, 7
        %v3045 = vsub.s32 0, %v3044
        %v3046 = vrot.slane %v3041, %v3045
        %v3048 = vmul.f32 %v3040, %v3046
        %v3049 = vld [vmem:[%s10 + $0x1b] sm:$0x1]
        %v3051 = vlaneseq
        %v3052 = vshrl.u32 %v3051, 7
        %v3053 = vsub.s32 0, %v3052
        %v3054 = vrot.slane %v3049, %v3053
        %v3056 = vadd.f32 %v3048, %v3054
        %v3057 = vpack.c.bf16 %v3056, %v3056
        %v3058 = vld [vmem:[#allocation16 + $0x40] sm:$0xf]
        %v3059 = vld [vmem:[#allocation16 + $0x90] sm:$0xf]
        %v3060 = vld [vmem:[#allocation16 + $0xe0] sm:$0xf]
        %v3061 = vld [vmem:[#allocation16 + $0x130] sm:$0xf]
        %v3062 = vld [vmem:[#allocation16 + $0x180] sm:$0xf]
        %v3063 = vld [vmem:[#allocation16 + $0x1d0] sm:$0xf]
        %v3064 = vld [vmem:[#allocation16 + $0x220] sm:$0xf]
        %v3065 = vld [vmem:[#allocation16 + $0x270] sm:$0xf]
        %v3066 = vld [vmem:[#allocation16 + $0x2c0] sm:$0xf]
        %v3067 = vld [vmem:[#allocation16 + $0x310] sm:$0xf]
        %v3068 = vld [vmem:[#allocation16 + $0x360] sm:$0xf]
        %v3069 = vld [vmem:[#allocation16 + $0x3b0] sm:$0xf]
        %v3070 = vld [vmem:[#allocation16 + $0x400] sm:$0xf]
        %v3071 = vld [vmem:[#allocation16 + $0x450] sm:$0xf]
        %v3072 = vld [vmem:[#allocation16 + $0x4a0] sm:$0xf]
        %v3073 = vld [vmem:[#allocation16 + $0x4f0] sm:$0xf]
        %v3074 = vld [vmem:[%s10 + $0x1c] sm:$0x1]
        %v3076 = vlaneseq
        %v3077 = vshrl.u32 %v3076, 7
        %v3078 = vsub.s32 0, %v3077
        %v3079 = vrot.slane %v3074, %v3078
        %v3097 = vunpack.c.l.b16 %v3058
        %v3098 = vunpack.c.l.b16 %v3059
        %v3099 = vunpack.c.l.b16 %v3060
        %v3100 = vunpack.c.l.b16 %v3061
        %v3101 = vunpack.c.l.b16 %v3062
        %v3102 = vunpack.c.l.b16 %v3063
        %v3103 = vunpack.c.l.b16 %v3064
        %v3104 = vunpack.c.l.b16 %v3065
        %v3105 = vunpack.c.l.b16 %v3066
        %v3106 = vunpack.c.l.b16 %v3067
        %v3107 = vunpack.c.l.b16 %v3068
        %v3108 = vunpack.c.l.b16 %v3069
        %v3109 = vunpack.c.l.b16 %v3070
        %v3110 = vunpack.c.l.b16 %v3071
        %v3111 = vunpack.c.l.b16 %v3072
        %v3112 = vunpack.c.l.b16 %v3073
        %v3113 = vpack.c.b16 %v3098, %v3097
        %v3114 = vpack.c.b16 %v3100, %v3099
        %v3115 = vpack.c.b16 %v3102, %v3101
        %v3116 = vpack.c.b16 %v3104, %v3103
        %v3117 = vpack.c.b16 %v3106, %v3105
        %v3118 = vpack.c.b16 %v3108, %v3107
        %v3119 = vpack.c.b16 %v3110, %v3109
        %v3120 = vpack.c.b16 %v3112, %v3111
        %3129 = vmatprep.subr.bf16.mxu0 0
        %3130 = vmatpush1.bf16.msra.mxu0 %v3113
        %3131 = vmatprep.subr.bf16.mxu0 0
        %3132 = vmatpush1.bf16.msra.mxu0 %v3114
        %3133 = vmatprep.subr.bf16.mxu0 0
        %3134 = vmatpush1.bf16.msra.mxu0 %v3115
        %3135 = vmatprep.subr.bf16.mxu0 0
        %3136 = vmatpush1.bf16.msra.mxu0 %v3116
        %3137 = vmatprep.subr.bf16.mxu0 0
        %3138 = vmatpush1.bf16.msra.mxu0 %v3117
        %3139 = vmatprep.subr.bf16.mxu0 0
        %3140 = vmatpush1.bf16.msra.mxu0 %v3118
        %3141 = vmatprep.subr.bf16.mxu0 0
        %3142 = vmatpush1.bf16.msra.mxu0 %v3119
        %3143 = vmatprep.subr.bf16.mxu0 0
        %3144 = vmatpush1.bf16.msra.mxu0 %v3120
        %3145 = vmatprep.subr.bf16.mxu0 0
        %3146 = vmatpush1.bf16.msra.mxu0 0
        %3147 = vmatprep.subr.bf16.mxu0 0
        %3148 = vmatpush1.bf16.msra.mxu0 0
        %3149 = vmatprep.subr.bf16.mxu0 0
        %3150 = vmatpush1.bf16.msra.mxu0 0
        %3151 = vmatprep.subr.bf16.mxu0 0
        %3152 = vmatpush1.bf16.msra.mxu0 0
        %3153 = vmatprep.subr.bf16.mxu0 0
        %3154 = vmatpush1.bf16.msra.mxu0 0
        %3155 = vmatprep.subr.bf16.mxu0 0
        %3156 = vmatpush1.bf16.msra.mxu0 0
        %3157 = vmatprep.subr.bf16.mxu0 0
        %3158 = vmatpush1.bf16.msra.mxu0 0
        %3159 = vmatprep.subr.bf16.mxu0 0
        %3160 = vmatpush1.bf16.msra.mxu0 0
        %3161 = vmatprep.mubr.bf16.mxu0 0
        %3162 = vmatmul.mubr.bf16.gmra.mrb[0].mxu0 %v3057
        %v3163 = vpop.f32.mrb[0].mxu0
        %v3164 = vadd.f32 %v3079, %v3163
        %v3165 = vpop.f32.mrb[0].mxu0
        %v3166 = vpop.f32.mrb[0].mxu0
        %v3167 = vpop.f32.mrb[0].mxu0
        %3168 = vdwg.mxu0
        %v3169 = vmul.f32 %v3164, 0.5
        %v3170 = vmul.f32 %v3164, 0.70710677
        %v3171 = verf.f32.pop %v3170
        %v3172 = vadd.f32 %v3171, 1.0
        %v3173 = vmul.f32 %v3169, %v3172
        %v3174 = vpack.c.bf16 %v3173, %v3173
        %v3175 = vld [vmem:[#allocation16 + $0x44] sm:$0xf]
        %v3176 = vld [vmem:[#allocation16 + $0x94] sm:$0xf]
        %v3177 = vld [vmem:[#allocation16 + $0xe4] sm:$0xf]
        %v3178 = vld [vmem:[#allocation16 + $0x134] sm:$0xf]
        %v3179 = vld [vmem:[#allocation16 + $0x184] sm:$0xf]
        %v3180 = vld [vmem:[#allocation16 + $0x1d4] sm:$0xf]
        %v3181 = vld [vmem:[#allocation16 + $0x224] sm:$0xf]
        %v3182 = vld [vmem:[#allocation16 + $0x274] sm:$0xf]
        %v3183 = vld [vmem:[#allocation16 + $0x2c4] sm:$0xf]
        %v3184 = vld [vmem:[#allocation16 + $0x314] sm:$0xf]
        %v3185 = vld [vmem:[#allocation16 + $0x364] sm:$0xf]
        %v3186 = vld [vmem:[#allocation16 + $0x3b4] sm:$0xf]
        %v3187 = vld [vmem:[#allocation16 + $0x404] sm:$0xf]
        %v3188 = vld [vmem:[#allocation16 + $0x454] sm:$0xf]
        %v3189 = vld [vmem:[#allocation16 + $0x4a4] sm:$0xf]
        %v3190 = vld [vmem:[#allocation16 + $0x4f4] sm:$0xf]
        %v3191 = vld [vmem:[%s10 + $0x1d] sm:$0x1]
        %v3193 = vlaneseq
        %v3194 = vshrl.u32 %v3193, 7
        %v3195 = vsub.s32 0, %v3194
        %v3196 = vrot.slane %v3191, %v3195
        %v3214 = vunpack.c.l.b16 %v3175
        %v3215 = vunpack.c.l.b16 %v3176
        %v3216 = vunpack.c.l.b16 %v3177
        %v3217 = vunpack.c.l.b16 %v3178
        %v3218 = vunpack.c.l.b16 %v3179
        %v3219 = vunpack.c.l.b16 %v3180
        %v3220 = vunpack.c.l.b16 %v3181
        %v3221 = vunpack.c.l.b16 %v3182
        %v3222 = vunpack.c.l.b16 %v3183
        %v3223 = vunpack.c.l.b16 %v3184
        %v3224 = vunpack.c.l.b16 %v3185
        %v3225 = vunpack.c.l.b16 %v3186
        %v3226 = vunpack.c.l.b16 %v3187
        %v3227 = vunpack.c.l.b16 %v3188
        %v3228 = vunpack.c.l.b16 %v3189
        %v3229 = vunpack.c.l.b16 %v3190
        %v3230 = vpack.c.b16 %v3215, %v3214
        %v3231 = vpack.c.b16 %v3217, %v3216
        %v3232 = vpack.c.b16 %v3219, %v3218
        %v3233 = vpack.c.b16 %v3221, %v3220
        %v3234 = vpack.c.b16 %v3223, %v3222
        %v3235 = vpack.c.b16 %v3225, %v3224
        %v3236 = vpack.c.b16 %v3227, %v3226
        %v3237 = vpack.c.b16 %v3229, %v3228
        %3246 = vmatprep.subr.bf16.mxu0 0
        %3247 = vmatpush1.bf16.msra.mxu0 %v3230
        %3248 = vmatprep.subr.bf16.mxu0 0
        %3249 = vmatpush1.bf16.msra.mxu0 %v3231
        %3250 = vmatprep.subr.bf16.mxu0 0
        %3251 = vmatpush1.bf16.msra.mxu0 %v3232
        %3252 = vmatprep.subr.bf16.mxu0 0
        %3253 = vmatpush1.bf16.msra.mxu0 %v3233
        %3254 = vmatprep.subr.bf16.mxu0 0
        %3255 = vmatpush1.bf16.msra.mxu0 %v3234
        %3256 = vmatprep.subr.bf16.mxu0 0
        %3257 = vmatpush1.bf16.msra.mxu0 %v3235
        %3258 = vmatprep.subr.bf16.mxu0 0
        %3259 = vmatpush1.bf16.msra.mxu0 %v3236
        %3260 = vmatprep.subr.bf16.mxu0 0
        %3261 = vmatpush1.bf16.msra.mxu0 %v3237
        %3262 = vmatprep.subr.bf16.mxu0 0
        %3263 = vmatpush1.bf16.msra.mxu0 0
        %3264 = vmatprep.subr.bf16.mxu0 0
        %3265 = vmatpush1.bf16.msra.mxu0 0
        %3266 = vmatprep.subr.bf16.mxu0 0
        %3267 = vmatpush1.bf16.msra.mxu0 0
        %3268 = vmatprep.subr.bf16.mxu0 0
        %3269 = vmatpush1.bf16.msra.mxu0 0
        %3270 = vmatprep.subr.bf16.mxu0 0
        %3271 = vmatpush1.bf16.msra.mxu0 0
        %3272 = vmatprep.subr.bf16.mxu0 0
        %3273 = vmatpush1.bf16.msra.mxu0 0
        %3274 = vmatprep.subr.bf16.mxu0 0
        %3275 = vmatpush1.bf16.msra.mxu0 0
        %3276 = vmatprep.subr.bf16.mxu0 0
        %3277 = vmatpush1.bf16.msra.mxu0 0
        %3278 = vmatprep.mubr.bf16.mxu0 0
        %3279 = vmatmul.mubr.bf16.gmra.mrb[0].mxu0 %v3174
        %v3280 = vpop.f32.mrb[0].mxu0
        %v3281 = vadd.f32 %v3196, %v3280
        %v3282 = vpop.f32.mrb[0].mxu0
        %v3283 = vpop.f32.mrb[0].mxu0
        %v3284 = vpop.f32.mrb[0].mxu0
        %3285 = vdwg.mxu0
        %v3286 = vadd.f32 %v3281, %v3028
        %v3287 = vadd.f32 %v3286, %v2392
        %3288 = vadd.xlane.f32.xlu0 %v3287
        %v3289 = vpop.xlane.xlu0 %3288
        %v3290 = vmul.f32 %v3289, 0.03125
        %v3291 = vsub.f32 %v3287, %v3290
        %v3292 = vmul.f32 %v3291, %v3291
        %v3293 = vmul.f32 %v3292, %v613
        %3294 = vadd.xlane.f32.xlu0 %v3293
        %v3295 = vpop.xlane.xlu0 %3294
        %v3296 = vmul.f32 %v3295, 0.03125
        %v3297 = vadd.f32 %v3296, 1e-05
        %v3298 = vrsqrt.pop %v3297
        %v3299 = vmul.f32 %v3291, %v3298
        %v3300 = vld [vmem:[%s10 + $0x1e] sm:$0x1]
        %v3302 = vlaneseq
        %v3303 = vshrl.u32 %v3302, 7
        %v3304 = vsub.s32 0, %v3303
        %v3305 = vrot.slane %v3300, %v3304
        %v3307 = vmul.f32 %v3299, %v3305
        %v3308 = vld [vmem:[%s10 + $0x1f] sm:$0x1]
        %v3310 = vlaneseq
        %v3311 = vshrl.u32 %v3310, 7
        %v3312 = vsub.s32 0, %v3311
        %v3313 = vrot.slane %v3308, %v3312
        %v3315 = vadd.f32 %v3307, %v3313
        %v3316 = vpack.c.bf16 %v3315, %v3315
        %v3317 = vld [vmem:[#allocation16 + $0x48] sm:$0xf]
        %v3318 = vld [vmem:[#allocation16 + $0x98] sm:$0xf]
        %v3319 = vld [vmem:[#allocation16 + $0xe8] sm:$0xf]
        %v3320 = vld [vmem:[#allocation16 + $0x138] sm:$0xf]
        %v3321 = vld [vmem:[#allocation16 + $0x188] sm:$0xf]
        %v3322 = vld [vmem:[#allocation16 + $0x1d8] sm:$0xf]
        %v3323 = vld [vmem:[#allocation16 + $0x228] sm:$0xf]
        %v3324 = vld [vmem:[#allocation16 + $0x278] sm:$0xf]
        %v3325 = vld [vmem:[#allocation16 + $0x2c8] sm:$0xf]
        %v3326 = vld [vmem:[#allocation16 + $0x318] sm:$0xf]
        %v3327 = vld [vmem:[#allocation16 + $0x368] sm:$0xf]
        %v3328 = vld [vmem:[#allocation16 + $0x3b8] sm:$0xf]
        %v3329 = vld [vmem:[#allocation16 + $0x408] sm:$0xf]
        %v3330 = vld [vmem:[#allocation16 + $0x458] sm:$0xf]
        %v3331 = vld [vmem:[#allocation16 + $0x4a8] sm:$0xf]
        %v3332 = vld [vmem:[#allocation16 + $0x4f8] sm:$0xf]
        %v3333 = vld [vmem:[%s10 + $0x20] sm:$0x1]
        %v3335 = vlaneseq
        %v3336 = vshrl.u32 %v3335, 7
        %v3337 = vsub.s32 0, %v3336
        %v3338 = vrot.slane %v3333, %v3337
        %v3356 = vunpack.c.l.b16 %v3317
        %v3357 = vunpack.c.l.b16 %v3318
        %v3358 = vunpack.c.l.b16 %v3319
        %v3359 = vunpack.c.l.b16 %v3320
        %v3360 = vunpack.c.l.b16 %v3321
        %v3361 = vunpack.c.l.b16 %v3322
        %v3362 = vunpack.c.l.b16 %v3323
        %v3363 = vunpack.c.l.b16 %v3324
        %v3364 = vunpack.c.l.b16 %v3325
        %v3365 = vunpack.c.l.b16 %v3326
        %v3366 = vunpack.c.l.b16 %v3327
        %v3367 = vunpack.c.l.b16 %v3328
        %v3368 = vunpack.c.l.b16 %v3329
        %v3369 = vunpack.c.l.b16 %v3330
        %v3370 = vunpack.c.l.b16 %v3331
        %v3371 = vunpack.c.l.b16 %v3332
        %v3372 = vpack.c.b16 %v3357, %v3356
        %v3373 = vpack.c.b16 %v3359, %v3358
        %v3374 = vpack.c.b16 %v3361, %v3360
        %v3375 = vpack.c.b16 %v3363, %v3362
        %v3376 = vpack.c.b16 %v3365, %v3364
        %v3377 = vpack.c.b16 %v3367, %v3366
        %v3378 = vpack.c.b16 %v3369, %v3368
        %v3379 = vpack.c.b16 %v3371, %v3370
        %3388 = vmatprep.subr.bf16.mxu0 0
        %3389 = vmatpush1.bf16.msra.mxu0 %v3372
        %3390 = vmatprep.subr.bf16.mxu0 0
        %3391 = vmatpush1.bf16.msra.mxu0 %v3373
        %3392 = vmatprep.subr.bf16.mxu0 0
        %3393 = vmatpush1.bf16.msra.mxu0 %v3374
        %3394 = vmatprep.subr.bf16.mxu0 0
        %3395 = vmatpush1.bf16.msra.mxu0 %v3375
        %3396 = vmatprep.subr.bf16.mxu0 0
        %3397 = vmatpush1.bf16.msra.mxu0 %v3376
        %3398 = vmatprep.subr.bf16.mxu0 0
        %3399 = vmatpush1.bf16.msra.mxu0 %v3377
        %3400 = vmatprep.subr.bf16.mxu0 0
        %3401 = vmatpush1.bf16.msra.mxu0 %v3378
        %3402 = vmatprep.subr.bf16.mxu0 0
        %3403 = vmatpush1.bf16.msra.mxu0 %v3379
        %3404 = vmatprep.subr.bf16.mxu0 0
        %3405 = vmatpush1.bf16.msra.mxu0 0
        %3406 = vmatprep.subr.bf16.mxu0 0
        %3407 = vmatpush1.bf16.msra.mxu0 0
        %3408 = vmatprep.subr.bf16.mxu0 0
        %3409 = vmatpush1.bf16.msra.mxu0 0
        %3410 = vmatprep.subr.bf16.mxu0 0
        %3411 = vmatpush1.bf16.msra.mxu0 0
        %3412 = vmatprep.subr.bf16.mxu0 0
        %3413 = vmatpush1.bf16.msra.mxu0 0
        %3414 = vmatprep.subr.bf16.mxu0 0
        %3415 = vmatpush1.bf16.msra.mxu0 0
        %3416 = vmatprep.subr.bf16.mxu0 0
        %3417 = vmatpush1.bf16.msra.mxu0 0
        %3418 = vmatprep.subr.bf16.mxu0 0
        %3419 = vmatpush1.bf16.msra.mxu0 0
        %3420 = vmatprep.mubr.bf16.mxu0 0
        %3421 = vmatmul.mubr.bf16.gmra.mrb[0].mxu0 %v3316
        %v3422 = vpop.f32.mrb[0].mxu0
        %v3423 = vadd.f32 %v3338, %v3422
        %v3424 = vpop.f32.mrb[0].mxu0
        %v3425 = vpop.f32.mrb[0].mxu0
        %v3426 = vpop.f32.mrb[0].mxu0
        %3427 = vdwg.mxu0
        %v3428 = vmul.f32 %v3423, 0.5
        %v3429 = vmul.f32 %v3423, 0.70710677
        %v3430 = verf.f32.pop %v3429
        %v3431 = vadd.f32 %v3430, 1.0
        %v3432 = vmul.f32 %v3428, %v3431
        %3433 = vadd.xlane.f32.xlu0 %v3432
        %v3434 = vpop.xlane.xlu0 %3433
        %v3435 = vmul.f32 %v3434, 0.03125
        %v3436 = vsub.f32 %v3432, %v3435
        %v3437 = vmul.f32 %v3436, %v3436
        %v3438 = vmul.f32 %v3437, %v613
        %3439 = vadd.xlane.f32.xlu0 %v3438
        %v3440 = vpop.xlane.xlu0 %3439
        %v3441 = vmul.f32 %v3440, 0.03125
        %v3442 = vadd.f32 %v3441, 1e-05
        %v3443 = vrsqrt.pop %v3442
        %v3444 = vmul.f32 %v3436, %v3443
        %v3445 = vld [vmem:[%s10 + $0x21] sm:$0x1]
        %v3447 = vlaneseq
        %v3448 = vshrl.u32 %v3447, 7
        %v3449 = vsub.s32 0, %v3448
        %v3450 = vrot.slane %v3445, %v3449
        %v3452 = vmul.f32 %v3444, %v3450
        %v3453 = vld [vmem:[%s10 + $0x22] sm:$0x1]
        %v3455 = vlaneseq
        %v3456 = vshrl.u32 %v3455, 7
        %v3457 = vsub.s32 0, %v3456
        %v3458 = vrot.slane %v3453, %v3457
        %v3460 = vadd.f32 %v3452, %v3458
        %v3461 = vpack.c.bf16 %v3460, %v3460
        %v3462 = vld [vmem:[#allocation16 + $0x4c] sm:$0xf]
        %v3463 = vld [vmem:[#allocation16 + $0x9c] sm:$0xf]
        %v3464 = vld [vmem:[#allocation16 + $0xec] sm:$0xf]
        %v3465 = vld [vmem:[#allocation16 + $0x13c] sm:$0xf]
        %v3466 = vld [vmem:[#allocation16 + $0x18c] sm:$0xf]
        %v3467 = vld [vmem:[#allocation16 + $0x1dc] sm:$0xf]
        %v3468 = vld [vmem:[#allocation16 + $0x22c] sm:$0xf]
        %v3469 = vld [vmem:[#allocation16 + $0x27c] sm:$0xf]
        %v3470 = vld [vmem:[#allocation16 + $0x2cc] sm:$0xf]
        %v3471 = vld [vmem:[#allocation16 + $0x31c] sm:$0xf]
        %v3472 = vld [vmem:[#allocation16 + $0x36c] sm:$0xf]
        %v3473 = vld [vmem:[#allocation16 + $0x3bc] sm:$0xf]
        %v3474 = vld [vmem:[#allocation16 + $0x40c] sm:$0xf]
        %v3475 = vld [vmem:[#allocation16 + $0x45c] sm:$0xf]
        %v3476 = vld [vmem:[#allocation16 + $0x4ac] sm:$0xf]
        %v3477 = vld [vmem:[#allocation16 + $0x4fc] sm:$0xf]
        %v3478 = vld [vmem:[%s10 + $0x23] sm:$0x1]
        %v3480 = vlaneseq
        %v3481 = vshrl.u32 %v3480, 7
        %v3482 = vsub.s32 0, %v3481
        %v3483 = vrot.slane %v3478, %v3482
        %v3501 = vunpack.c.l.b16 %v3462
        %v3502 = vunpack.c.l.b16 %v3463
        %v3503 = vunpack.c.l.b16 %v3464
        %v3504 = vunpack.c.l.b16 %v3465
        %v3505 = vunpack.c.l.b16 %v3466
        %v3506 = vunpack.c.l.b16 %v3467
        %v3507 = vunpack.c.l.b16 %v3468
        %v3508 = vunpack.c.l.b16 %v3469
        %v3509 = vunpack.c.l.b16 %v3470
        %v3510 = vunpack.c.l.b16 %v3471
        %v3511 = vunpack.c.l.b16 %v3472
        %v3512 = vunpack.c.l.b16 %v3473
        %v3513 = vunpack.c.l.b16 %v3474
        %v3514 = vunpack.c.l.b16 %v3475
        %v3515 = vunpack.c.l.b16 %v3476
        %v3516 = vunpack.c.l.b16 %v3477
        %v3517 = vpack.c.b16 %v3502, %v3501
        %v3518 = vpack.c.b16 %v3504, %v3503
        %v3519 = vpack.c.b16 %v3506, %v3505
        %v3520 = vpack.c.b16 %v3508, %v3507
        %v3521 = vpack.c.b16 %v3510, %v3509
        %v3522 = vpack.c.b16 %v3512, %v3511
        %v3523 = vpack.c.b16 %v3514, %v3513
        %v3524 = vpack.c.b16 %v3516, %v3515
        %3533 = vmatprep.subr.bf16.mxu0 0
        %3534 = vmatpush1.bf16.msra.mxu0 %v3517
        %3535 = vmatprep.subr.bf16.mxu0 0
        %3536 = vmatpush1.bf16.msra.mxu0 %v3518
        %3537 = vmatprep.subr.bf16.mxu0 0
        %3538 = vmatpush1.bf16.msra.mxu0 %v3519
        %3539 = vmatprep.subr.bf16.mxu0 0
        %3540 = vmatpush1.bf16.msra.mxu0 %v3520
        %3541 = vmatprep.subr.bf16.mxu0 0
        %3542 = vmatpush1.bf16.msra.mxu0 %v3521
        %3543 = vmatprep.subr.bf16.mxu0 0
        %3544 = vmatpush1.bf16.msra.mxu0 %v3522
        %3545 = vmatprep.subr.bf16.mxu0 0
        %3546 = vmatpush1.bf16.msra.mxu0 %v3523
        %3547 = vmatprep.subr.bf16.mxu0 0
        %3548 = vmatpush1.bf16.msra.mxu0 %v3524
        %3549 = vmatprep.subr.bf16.mxu0 0
        %3550 = vmatpush1.bf16.msra.mxu0 0
        %3551 = vmatprep.subr.bf16.mxu0 0
        %3552 = vmatpush1.bf16.msra.mxu0 0
        %3553 = vmatprep.subr.bf16.mxu0 0
        %3554 = vmatpush1.bf16.msra.mxu0 0
        %3555 = vmatprep.subr.bf16.mxu0 0
        %3556 = vmatpush1.bf16.msra.mxu0 0
        %3557 = vmatprep.subr.bf16.mxu0 0
        %3558 = vmatpush1.bf16.msra.mxu0 0
        %3559 = vmatprep.subr.bf16.mxu0 0
        %3560 = vmatpush1.bf16.msra.mxu0 0
        %3561 = vmatprep.subr.bf16.mxu0 0
        %3562 = vmatpush1.bf16.msra.mxu0 0
        %3563 = vmatprep.subr.bf16.mxu0 0
        %3564 = vmatpush1.bf16.msra.mxu0 0
        %3565 = vmatprep.mubr.bf16.mxu0 0
        %3566 = vmatmul.mubr.bf16.gmra.mrb[0].mxu0 %v3461
        %v3567 = vpop.f32.mrb[0].mxu0
        %v3568 = vadd.f32 %v3483, %v3567
        %v3569 = vpop.f32.mrb[0].mxu0
        %v3570 = vpop.f32.mrb[0].mxu0
        %v3571 = vpop.f32.mrb[0].mxu0
        %3572 = vdwg.mxu0
        %v3573 = vpack.c.bf16 %v3568, %v3568
        %3574 = vst [vmem:[%s581] sm:$0xf] %v3573
        %s3575 = sand.u32 %s295, 1
        %s3576 = scalar_lea.sflag [#allocation4], %s3575
        %s3577 = sand.u32 %s295, 1
        %s3578 = smul.addr %s3577, 4
        %s3579 = scalar_lea.vmem [#allocation17], %s3578
        // Predicated region
        $region101: #{tpu_custom_call.1} parent=63 // pred_check
          %p3580 = pneg %p305
        $region102: #{tpu_custom_call.1} parent=63 // pred_check_branch
          %3582 = sbr.rel (%p3580) target = $region104
        $region103: #{tpu_custom_call.1} parent=63 // pred_region
          %s3584 = ssub.s32 64, 64
          %3585 = vsyncadd %s3576, %s3584
          %s3586 = smul.addr %s36, 64
          %s3587 = scalar_lea.hbm %s11, %s3586
          %s3589 = sshll.u32 %s3579, 4
          %s3590 = int_to_ptr.vmem [resolvable:$true] %s3589
          %3592 = dma.vmem_to_hbm [thread:$0]  %s3590, 64, %s3587, %s3576
        $region104: #{tpu_custom_call.1} parent=63 // pred_fallthru
          _
      $region64: #{tpu_custom_call.1} parent=5 // pred_fallthru
        _
      %p3593 = scmp.le.s32.totalorder 2, %s31
      // Predicated region
      $region105: #{tpu_custom_call.1} parent=5 // pred_check
        %p3594 = pneg %p3593
      $region106: #{tpu_custom_call.1} parent=5 // pred_check_branch
        %3596 = sbr.rel (%p3594) target = $region108
      $region107: #{tpu_custom_call.1} parent=5 // pred_region
        %s3597 = ssub.s32 %s31, 2
        // Predicated region
        $region109: #{tpu_custom_call.1} parent=107 // pred_check
          %p3598 = pneg %p311
        $region110: #{tpu_custom_call.1} parent=107 // pred_check_branch
          %3600 = sbr.rel (%p3598) target = $region112
        $region111: #{tpu_custom_call.1} parent=107 // pred_region
          %s3601 = sand.u32 %s296, 1
          %s3602 = scalar_lea.sflag [#allocation4], %s3601
          %s3603 = sand.u32 %s296, 1
          %s3604 = smul.addr %s3603, 4
          %s3605 = scalar_lea.vmem [#allocation17], %s3604
          %3606 = dma.done %s3602, 64
        $region112: #{tpu_custom_call.1} parent=107 // pred_fallthru
          _
      $region108: #{tpu_custom_call.1} parent=5 // pred_fallthru
        _
    $region6: #{tpu_custom_call.1} parent=1 // loop_footer
      %s35 = sadd.s32 1, %s31
    $region7: #{tpu_custom_call.1} parent=1 // loop_footer_branch
      %30 = sbr.rel target = $region3
    $region8: #{tpu_custom_call.1} parent=1 // loop_exit
      _
    %3607 = vsyncpa [#allocation3], 1
    %s3608 = scalar_lea.sflag [#allocation3], 1
    %3609 = vsyncpa %s3608, 1
    %3610 = vsyncpa [#allocation6], 1
    %s3611 = scalar_lea.sflag [#allocation6], 1
    %3612 = vsyncpa %s3611, 1
    %3613 = vsyncpa [#allocation9], 1
    %s3614 = scalar_lea.sflag [#allocation9], 1
    %3615 = vsyncpa %s3614, 1
    %3616 = vsyncpa [#allocation12], 1
    %3617 = vsyncpa [#allocation15], 1
    %3618 = vsyncpa [#allocation4], 1
    %s3619 = scalar_lea.sflag [#allocation4], 1
    %3620 = vsyncpa %s3619, 1

// kernel: tpu_custom_call.1
$region0: #{tpu_custom_call.1}
  #allocation0 [shape = 'u32[]', space=smem, size = 0x4, offset = 0x4, fixed_abs, tag = 'smem constant byte address 0x4 - core index']
  #allocation1 [shape = 'u32[144,128]{1,0:T(1,128)}', space=vmem, size = 0x12000, scoped, tag = 'internal scratch']
  %s0 = inlined_call_operand.hbm [shape: f32[16,128], index: 0, kind: input, shape index: {}]
  %s1 = inlined_call_operand.hbm [shape: f32[16,128], index: 1, kind: input, shape index: {}]
  %s2 = inlined_call_operand.hbm [shape: f32[16,32], index: 2, kind: input, shape index: {}]
  %s3 = inlined_call_operand.hbm [shape: f32[16,32], index: 3, kind: input, shape index: {}]
  %s4 = inlined_call_operand.vmem [shape: f32[1,128], index: 4, kind: input, shape index: {}]
  %s5 = inlined_call_operand.hbm [shape: f32[32,128], index: 5, kind: input, shape index: {}]
  %s6 = inlined_call_operand.hbm [shape: f32[32,128], index: 6, kind: input, shape index: {}]
  %s7 = inlined_call_operand.hbm [shape: f32[32,32], index: 7, kind: input, shape index: {}]
  %s8 = inlined_call_operand.hbm [shape: f32[32,32], index: 8, kind: input, shape index: {}]
  %s9 = inlined_call_operand.hbm [shape: bf16[128,2560], index: 9, kind: input, shape index: {}]
  %s10 = inlined_call_operand.vmem [shape: f32[1,4608], index: 10, kind: input, shape index: {}]
  %s11 = inlined_call_operand.hbm [shape: bf16[16,128], index: 11, kind: output, shape index: {}]
  %s12 = sld [smem:[#allocation0]]
  $region113: #{tpu_custom_call.1} parent=0
    _
  %s14 = ssub.s32 1, %s12
  %s15 = scalar_select 0, %s14, %s12
  $region1: #{tpu_custom_call.1} parent=0
    #allocation2 [shape = 'u8[8192]{0}', space=vmem, size = 0x2000, scoped, tag = 'input window, operand 0']
    #allocation3 [shape = 's32[2]{0}', space=sflag, size = 0x8, scoped, tag = 'scoped memory for tpu_custom_call.1']
    #allocation4 [shape = 's32[2]{0}', space=sflag, size = 0x8, scoped, tag = 'scoped memory for tpu_custom_call.1']
    #allocation5 [shape = 'u8[8192]{0}', space=vmem, size = 0x2000, scoped, tag = 'input window, operand 1']
    #allocation6 [shape = 's32[2]{0}', space=sflag, size = 0x8, scoped, tag = 'scoped memory for tpu_custom_call.1']
    #allocation7 [shape = 'u8[8192]{0}', space=vmem, size = 0x2000, scoped, tag = 'input window, operand 2']
    #allocation8 [shape = 'u8[8192]{0}', space=vmem, size = 0x2000, scoped, tag = 'input window, operand 3']
    #allocation9 [shape = 's32[2]{0}', space=sflag, size = 0x8, scoped, tag = 'scoped memory for tpu_custom_call.1']
    #allocation10 [shape = 'u8[16384]{0}', space=vmem, size = 0x4000, scoped, tag = 'input window, operand 5, single buffered']
    #allocation11 [shape = 'u8[16384]{0}', space=vmem, size = 0x4000, scoped, tag = 'input window, operand 6, single buffered']
    #allocation12 [shape = 's32[1]{0}', space=sflag, size = 0x4, scoped, tag = 'scoped memory for tpu_custom_call.1']
    #allocation13 [shape = 'u8[16384]{0}', space=vmem, size = 0x4000, scoped, tag = 'input window, operand 7, single buffered']
    #allocation14 [shape = 'u8[16384]{0}', space=vmem, size = 0x4000, scoped, tag = 'input window, operand 8, single buffered']
    #allocation15 [shape = 's32[1]{0}', space=sflag, size = 0x4, scoped, tag = 'scoped memory for tpu_custom_call.1']
    #allocation16 [shape = 'u8[655360]{0}', space=vmem, size = 0xa0000, scoped, tag = 'input window, operand 9, single buffered']
    #allocation17 [shape = 'u8[4096]{0}', space=vmem, size = 0x1000, scoped, tag = 'output window, operand 0']
    %16 = vsyncpa [#allocation3], 0
    %s17 = scalar_lea.sflag [#allocation3], 1
    %18 = vsyncpa %s17, 0
    %19 = vsyncpa [#allocation6], 0
    %s20 = scalar_lea.sflag [#allocation6], 1
    %21 = vsyncpa %s20, 0
    %22 = vsyncpa [#allocation9], 0
    %s23 = scalar_lea.sflag [#allocation9], 1
    %24 = vsyncpa %s23, 0
    %25 = vsyncpa [#allocation12], 0
    %26 = vsyncpa [#allocation15], 0
    %27 = vsyncpa [#allocation4], 0
    %s28 = scalar_lea.sflag [#allocation4], 1
    %29 = vsyncpa %s28, 0
    loop: start=0, step=1, limit=4
    $region2: #{tpu_custom_call.1} parent=1 // loop_pre_header
      _
    $region3: #{tpu_custom_call.1} parent=1 // loop_header
      %s31 = sphi 0, %s35
      %p32 = scmp.ge.s32.totalorder %s31, 4
      %s41 = sphi 0, %s43
      %s44 = sphi 0, %s41
      %s45 = sphi 0, %s44
      %s61 = sphi 0, %s45
      %s67 = sphi 0, %s69
      %s70 = sphi 0, %s67
      %s71 = sphi 0, %s70
      %s87 = sphi 0, %s71
      %s93 = sphi 0, %s95
      %s96 = sphi 0, %s93
      %s97 = sphi 0, %s96
      %s113 = sphi 0, %s97
      %s119 = sphi 0, %s121
      %s122 = sphi 0, %s119
      %s123 = sphi 0, %s122
      %s139 = sphi 0, %s123
      %s143 = sphi 0, %s143
      %s145 = sphi 0, %s143
      %s146 = sphi 0, %s145
      %s160 = sphi 0, %s146
      %s164 = sphi 0, %s164
      %s166 = sphi 0, %s164
      %s167 = sphi 0, %s166
      %s181 = sphi 0, %s167
      %s185 = sphi 0, %s185
      %s187 = sphi 0, %s185
      %s188 = sphi 0, %s187
      %s202 = sphi 0, %s188
      %s206 = sphi 0, %s206
      %s208 = sphi 0, %s206
      %s209 = sphi 0, %s208
      %s223 = sphi 0, %s209
      %s227 = sphi 0, %s227
      %s229 = sphi 0, %s227
      %s230 = sphi 0, %s229
      %s244 = sphi 0, %s230
      %s248 = sphi 0, %s248
      %s250 = sphi 0, %s248
      %s251 = sphi 0, %s250
      %s265 = sphi 0, %s251
      %s269 = sphi 0, %s269
      %s271 = sphi 0, %s269
      %s272 = sphi 0, %s271
      %s286 = sphi 0, %s272
      %s292 = sphi 0, %s294
      %s295 = sphi 0, %s292
      %s296 = sphi 0, %s295
      %s312 = sphi 0, %s296
    $region4: #{tpu_custom_call.1} parent=1 // loop_header_branch
      %34 = sbr.rel (%p32) target = $region8
    $region5: #{tpu_custom_call.1} parent=1 // loop_body
      %s36 = ssub.s32 %s31, 1
      %s37 = ssub.s32 %s31, 2
      %s38 = sadd.s32 %s31, 1
      %s39 = ssub.s32 %s31, %s38
      %p40 = scmp.eq.s32.totalorder %s39, 0
      %s42 = sadd.s32 %s41, 1
      %s43 = scalar_select %p40, %s41, %s42
      %p46 = pneg %p40
      %p47 = scmp.eq.s32.totalorder %s31, 1
      %p48 = por %p46, %p47
      %p49 = scmp.ne.s32.totalorder %s41, %s44
      %p50 = scmp.eq.s32.totalorder %s31, 0
      %p51 = por %p49, %p50
      %p52 = scmp.ne.s32.totalorder %s41, %s44
      %p53 = scmp.eq.s32.totalorder %s36, 1
      %p54 = por %p52, %p53
      %p55 = scmp.ne.s32.totalorder %s44, %s45
      %p56 = scmp.eq.s32.totalorder %s36, 0
      %p57 = por %p55, %p56
      %p58 = scmp.ne.s32.totalorder %s44, %s45
      %p59 = scmp.eq.s32.totalorder %s37, 1
      %p60 = por %p58, %p59
      %p62 = scmp.ne.s32.totalorder %s45, %s61
      %p63 = scmp.eq.s32.totalorder %s37, 0
      %p64 = por %p62, %p63
      %s65 = ssub.s32 %s31, %s38
      %p66 = scmp.eq.s32.totalorder %s65, 0
      %s68 = sadd.s32 %s67, 1
      %s69 = scalar_select %p66, %s67, %s68
      %p72 = pneg %p66
      %p73 = scmp.eq.s32.totalorder %s31, 1
      %p74 = por %p72, %p73
      %p75 = scmp.ne.s32.totalorder %s67, %s70
      %p76 = scmp.eq.s32.totalorder %s31, 0
      %p77 = por %p75, %p76
      %p78 = scmp.ne.s32.totalorder %s67, %s70
      %p79 = scmp.eq.s32.totalorder %s36, 1
      %p80 = por %p78, %p79
      %p81 = scmp.ne.s32.totalorder %s70, %s71
      %p82 = scmp.eq.s32.totalorder %s36, 0
      %p83 = por %p81, %p82
      %p84 = scmp.ne.s32.totalorder %s70, %s71
      %p85 = scmp.eq.s32.totalorder %s37, 1
      %p86 = por %p84, %p85
      %p88 = scmp.ne.s32.totalorder %s71, %s87
      %p89 = scmp.eq.s32.totalorder %s37, 0
      %p90 = por %p88, %p89
      %s91 = ssub.s32 %s31, %s38
      %p92 = scmp.eq.s32.totalorder %s91, 0
      %s94 = sadd.s32 %s93, 1
      %s95 = scalar_select %p92, %s93, %s94
      %p98 = pneg %p92
      %p99 = scmp.eq.s32.totalorder %s31, 1
      %p100 = por %p98, %p99
      %p101 = scmp.ne.s32.totalorder %s93, %s96
      %p102 = scmp.eq.s32.totalorder %s31, 0
      %p103 = por %p101, %p102
      %p104 = scmp.ne.s32.totalorder %s93, %s96
      %p105 = scmp.eq.s32.totalorder %s36, 1
      %p106 = por %p104, %p105
      %p107 = scmp.ne.s32.totalorder %s96, %s97
      %p108 = scmp.eq.s32.totalorder %s36, 0
      %p109 = por %p107, %p108
      %p110 = scmp.ne.s32.totalorder %s96, %s97
      %p111 = scmp.eq.s32.totalorder %s37, 1
      %p112 = por %p110, %p111
      %p114 = scmp.ne.s32.totalorder %s97, %s113
      %p115 = scmp.eq.s32.totalorder %s37, 0
      %p116 = por %p114, %p115
      %s117 = ssub.s32 %s31, %s38
      %p118 = scmp.eq.s32.totalorder %s117, 0
      %s120 = sadd.s32 %s119, 1
      %s121 = scalar_select %p118, %s119, %s120
      %p124 = pneg %p118
      %p125 = scmp.eq.s32.totalorder %s31, 1
      %p126 = por %p124, %p125
      %p127 = scmp.ne.s32.totalorder %s119, %s122
      %p128 = scmp.eq.s32.totalorder %s31, 0
      %p129 = por %p127, %p128
      %p130 = scmp.ne.s32.totalorder %s119, %s122
      %p131 = scmp.eq.s32.totalorder %s36, 1
      %p132 = por %p130, %p131
      %p133 = scmp.ne.s32.totalorder %s122, %s123
      %p134 = scmp.eq.s32.totalorder %s36, 0
      %p135 = por %p133, %p134
      %p136 = scmp.ne.s32.totalorder %s122, %s123
      %p137 = scmp.eq.s32.totalorder %s37, 1
      %p138 = por %p136, %p137
      %p140 = scmp.ne.s32.totalorder %s123, %s139
      %p141 = scmp.eq.s32.totalorder %s37, 0
      %p142 = por %p140, %p141
      %s144 = sadd.s32 %s143, 1
      %p147 = scmp.eq.s32.totalorder %s31, 1
      %p148 = scmp.ne.s32.totalorder %s143, %s145
      %p149 = scmp.eq.s32.totalorder %s31, 0
      %p150 = por %p148, %p149
      %p151 = scmp.ne.s32.totalorder %s143, %s145
      %p152 = scmp.eq.s32.totalorder %s36, 1
      %p153 = por %p151, %p152
      %p154 = scmp.ne.s32.totalorder %s145, %s146
      %p155 = scmp.eq.s32.totalorder %s36, 0
      %p156 = por %p154, %p155
      %p157 = scmp.ne.s32.totalorder %s145, %s146
      %p158 = scmp.eq.s32.totalorder %s37, 1
      %p159 = por %p157, %p158
      %p161 = scmp.ne.s32.totalorder %s146, %s160
      %p162 = scmp.eq.s32.totalorder %s37, 0
      %p163 = por %p161, %p162
      %s165 = sadd.s32 %s164, 1
      %p168 = scmp.eq.s32.totalorder %s31, 1
      %p169 = scmp.ne.s32.totalorder %s164, %s166
      %p170 = scmp.eq.s32.totalorder %s31, 0
      %p171 = por %p169, %p170
      %p172 = scmp.ne.s32.totalorder %s164, %s166
      %p173 = scmp.eq.s32.totalorder %s36, 1
      %p174 = por %p172, %p173
      %p175 = scmp.ne.s32.totalorder %s166, %s167
      %p176 = scmp.eq.s32.totalorder %s36, 0
      %p177 = por %p175, %p176
      %p178 = scmp.ne.s32.totalorder %s166, %s167
      %p179 = scmp.eq.s32.totalorder %s37, 1
      %p180 = por %p178, %p179
      %p182 = scmp.ne.s32.totalorder %s167, %s181
      %p183 = scmp.eq.s32.totalorder %s37, 0
      %p184 = por %p182, %p183
      %s186 = sadd.s32 %s185, 1
      %p189 = scmp.eq.s32.totalorder %s31, 1
      %p190 = scmp.ne.s32.totalorder %s185, %s187
      %p191 = scmp.eq.s32.totalorder %s31, 0
      %p192 = por %p190, %p191
      %p193 = scmp.ne.s32.totalorder %s185, %s187
      %p194 = scmp.eq.s32.totalorder %s36, 1
      %p195 = por %p193, %p194
      %p196 = scmp.ne.s32.totalorder %s187, %s188
      %p197 = scmp.eq.s32.totalorder %s36, 0
      %p198 = por %p196, %p197
      %p199 = scmp.ne.s32.totalorder %s187, %s188
      %p200 = scmp.eq.s32.totalorder %s37, 1
      %p201 = por %p199, %p200
      %p203 = scmp.ne.s32.totalorder %s188, %s202
      %p204 = scmp.eq.s32.totalorder %s37, 0
      %p205 = por %p203, %p204
      %s207 = sadd.s32 %s206, 1
      %p210 = scmp.eq.s32.totalorder %s31, 1
      %p211 = scmp.ne.s32.totalorder %s206, %s208
      %p212 = scmp.eq.s32.totalorder %s31, 0
      %p213 = por %p211, %p212
      %p214 = scmp.ne.s32.totalorder %s206, %s208
      %p215 = scmp.eq.s32.totalorder %s36, 1
      %p216 = por %p214, %p215
      %p217 = scmp.ne.s32.totalorder %s208, %s209
      %p218 = scmp.eq.s32.totalorder %s36, 0
      %p219 = por %p217, %p218
      %p220 = scmp.ne.s32.totalorder %s208, %s209
      %p221 = scmp.eq.s32.totalorder %s37, 1
      %p222 = por %p220, %p221
      %p224 = scmp.ne.s32.totalorder %s209, %s223
      %p225 = scmp.eq.s32.totalorder %s37, 0
      %p226 = por %p224, %p225
      %s228 = sadd.s32 %s227, 1
      %p231 = scmp.eq.s32.totalorder %s31, 1
      %p232 = scmp.ne.s32.totalorder %s227, %s229
      %p233 = scmp.eq.s32.totalorder %s31, 0
      %p234 = por %p232, %p233
      %p235 = scmp.ne.s32.totalorder %s227, %s229
      %p236 = scmp.eq.s32.totalorder %s36, 1
      %p237 = por %p235, %p236
      %p238 = scmp.ne.s32.totalorder %s229, %s230
      %p239 = scmp.eq.s32.totalorder %s36, 0
      %p240 = por %p238, %p239
      %p241 = scmp.ne.s32.totalorder %s229, %s230
      %p242 = scmp.eq.s32.totalorder %s37, 1
      %p243 = por %p241, %p242
      %p245 = scmp.ne.s32.totalorder %s230, %s244
      %p246 = scmp.eq.s32.totalorder %s37, 0
      %p247 = por %p245, %p246
      %s249 = sadd.s32 %s248, 1
      %p252 = scmp.eq.s32.totalorder %s31, 1
      %p253 = scmp.ne.s32.totalorder %s248, %s250
      %p254 = scmp.eq.s32.totalorder %s31, 0
      %p255 = por %p253, %p254
      %p256 = scmp.ne.s32.totalorder %s248, %s250
      %p257 = scmp.eq.s32.totalorder %s36, 1
      %p258 = por %p256, %p257
      %p259 = scmp.ne.s32.totalorder %s250, %s251
      %p260 = scmp.eq.s32.totalorder %s36, 0
      %p261 = por %p259, %p260
      %p262 = scmp.ne.s32.totalorder %s250, %s251
      %p263 = scmp.eq.s32.totalorder %s37, 1
      %p264 = por %p262, %p263
      %p266 = scmp.ne.s32.totalorder %s251, %s265
      %p267 = scmp.eq.s32.totalorder %s37, 0
      %p268 = por %p266, %p267
      %s270 = sadd.s32 %s269, 1
      %p273 = scmp.eq.s32.totalorder %s31, 1
      %p274 = scmp.ne.s32.totalorder %s269, %s271
      %p275 = scmp.eq.s32.totalorder %s31, 0
      %p276 = por %p274, %p275
      %p277 = scmp.ne.s32.totalorder %s269, %s271
      %p278 = scmp.eq.s32.totalorder %s36, 1
      %p279 = por %p277, %p278
      %p280 = scmp.ne.s32.totalorder %s271, %s272
      %p281 = scmp.eq.s32.totalorder %s36, 0
      %p282 = por %p280, %p281
      %p283 = scmp.ne.s32.totalorder %s271, %s272
      %p284 = scmp.eq.s32.totalorder %s37, 1
      %p285 = por %p283, %p284
      %p287 = scmp.ne.s32.totalorder %s272, %s286
      %p288 = scmp.eq.s32.totalorder %s37, 0
      %p289 = por %p287, %p288
      %s290 = ssub.s32 %s31, %s38
      %p291 = scmp.eq.s32.totalorder %s290, 0
      %s293 = sadd.s32 %s292, 1
      %s294 = scalar_select %p291, %s292, %s293
      %p297 = pneg %p291
      %p298 = scmp.eq.s32.totalorder %s31, 1
      %p299 = por %p297, %p298
      %p300 = scmp.ne.s32.totalorder %s292, %s295
      %p301 = scmp.eq.s32.totalorder %s31, 0
      %p302 = por %p300, %p301
      %p303 = scmp.ne.s32.totalorder %s292, %s295
      %p304 = scmp.eq.s32.totalorder %s36, 1
      %p305 = por %p303, %p304
      %p306 = scmp.ne.s32.totalorder %s295, %s296
      %p307 = scmp.eq.s32.totalorder %s36, 0
      %p308 = por %p306, %p307
      %p309 = scmp.ne.s32.totalorder %s295, %s296
      %p310 = scmp.eq.s32.totalorder %s37, 1
      %p311 = por %p309, %p310
      %p313 = scmp.ne.s32.totalorder %s296, %s312
      %p314 = scmp.eq.s32.totalorder %s37, 0
      %p315 = por %p313, %p314
      %p316 = scmp.le.s32.totalorder 1, %s31
      %p317 = scmp.lt.s32.totalorder %s31, 3
      %p318 = pnand %p316, %p317
      %p319 = pneg %p318
      // Predicated region
      $region9: #{tpu_custom_call.1} parent=5 // pred_check
        _
      $region10: #{tpu_custom_call.1} parent=5 // pred_check_branch
        %321 = sbr.rel (%p318) target = $region12
      $region11: #{tpu_custom_call.1} parent=5 // pred_region
        %s322 = ssub.s32 %s31, 1
        // Predicated region
        $region13: #{tpu_custom_call.1} parent=11 // pred_check
          %p323 = pneg %p156
        $region14: #{tpu_custom_call.1} parent=11 // pred_check_branch
          %325 = sbr.rel (%p323) target = $region16
        $region15: #{tpu_custom_call.1} parent=11 // pred_region
          _
        $region16: #{tpu_custom_call.1} parent=11 // pred_fallthru
          _
        // Predicated region
        $region17: #{tpu_custom_call.1} parent=11 // pred_check
          %p326 = pneg %p177
        $region18: #{tpu_custom_call.1} parent=11 // pred_check_branch
          %328 = sbr.rel (%p326) target = $region20
        $region19: #{tpu_custom_call.1} parent=11 // pred_region
          %s330 = ssub.s32 512, 512
          %331 = vsyncadd [#allocation9], %s330
          %s332 = sshll.u32 [#allocation10], 4
          %s333 = int_to_ptr.vmem [resolvable:$true] %s332
          %338 = dma.hbm_to_vmem [thread:$0]  %s5, 512, %s333, [#allocation9], 128, 128, 8
        $region20: #{tpu_custom_call.1} parent=11 // pred_fallthru
          _
        // Predicated region
        $region21: #{tpu_custom_call.1} parent=11 // pred_check
          %p339 = pneg %p198
        $region22: #{tpu_custom_call.1} parent=11 // pred_check_branch
          %341 = sbr.rel (%p339) target = $region24
        $region23: #{tpu_custom_call.1} parent=11 // pred_region
          %s343 = ssub.s32 512, 512
          %344 = vsyncadd [#allocation12], %s343
          %s345 = sshll.u32 [#allocation11], 4
          %s346 = int_to_ptr.vmem [resolvable:$true] %s345
          %351 = dma.hbm_to_vmem [thread:$0]  %s6, 512, %s346, [#allocation12], 128, 128, 8
        $region24: #{tpu_custom_call.1} parent=11 // pred_fallthru
          _
        // Predicated region
        $region25: #{tpu_custom_call.1} parent=11 // pred_check
          %p352 = pneg %p219
        $region26: #{tpu_custom_call.1} parent=11 // pred_check_branch
          %354 = sbr.rel (%p352) target = $region28
        $region27: #{tpu_custom_call.1} parent=11 // pred_region
          %s356 = ssub.s32 512, 512
          %357 = vsyncadd [#allocation12], %s356
          %s358 = sshll.u32 [#allocation13], 4
          %s359 = int_to_ptr.vmem [resolvable:$true] %s358
          %364 = dma.hbm_to_vmem [thread:$0]  %s7, 512, %s359, [#allocation12], 128, 128, 8
        $region28: #{tpu_custom_call.1} parent=11 // pred_fallthru
          _
        // Predicated region
        $region29: #{tpu_custom_call.1} parent=11 // pred_check
          %p365 = pneg %p240
        $region30: #{tpu_custom_call.1} parent=11 // pred_check_branch
          %367 = sbr.rel (%p365) target = $region32
        $region31: #{tpu_custom_call.1} parent=11 // pred_region
          %s369 = ssub.s32 512, 512
          %370 = vsyncadd [#allocation15], %s369
          %s371 = sshll.u32 [#allocation14], 4
          %s372 = int_to_ptr.vmem [resolvable:$true] %s371
          %377 = dma.hbm_to_vmem [thread:$0]  %s8, 512, %s372, [#allocation15], 128, 128, 8
        $region32: #{tpu_custom_call.1} parent=11 // pred_fallthru
          _
        // Predicated region
        $region33: #{tpu_custom_call.1} parent=11 // pred_check
          %p378 = pneg %p261
        $region34: #{tpu_custom_call.1} parent=11 // pred_check_branch
          %380 = sbr.rel (%p378) target = $region36
        $region35: #{tpu_custom_call.1} parent=11 // pred_region
          %s382 = ssub.s32 20480, 20480
          %383 = vsyncadd [#allocation15], %s382
          %s384 = sshll.u32 [#allocation16], 4
          %s385 = int_to_ptr.vmem [resolvable:$true] %s384
          %390 = dma.hbm_to_vmem [thread:$0]  %s9, 20480, %s385, [#allocation15], 1280, 1280, 80
        $region36: #{tpu_custom_call.1} parent=11 // pred_fallthru
          _
        // Predicated region
        $region37: #{tpu_custom_call.1} parent=11 // pred_check
          %p391 = pneg %p282
        $region38: #{tpu_custom_call.1} parent=11 // pred_check_branch
          %393 = sbr.rel (%p391) target = $region40
        $region39: #{tpu_custom_call.1} parent=11 // pred_region
          _
        $region40: #{tpu_custom_call.1} parent=11 // pred_fallthru
          _
      $region12: #{tpu_custom_call.1} parent=5 // pred_fallthru
        _
      %p394 = scmp.lt.s32.totalorder %s31, 2
      // Predicated region
      $region41: #{tpu_custom_call.1} parent=5 // pred_check
        %p395 = pneg %p394
      $region42: #{tpu_custom_call.1} parent=5 // pred_check_branch
        %397 = sbr.rel (%p395) target = $region44
      $region43: #{tpu_custom_call.1} parent=5 // pred_region
        // Predicated region
        $region45: #{tpu_custom_call.1} parent=43 // pred_check
          %p398 = pneg %p51
        $region46: #{tpu_custom_call.1} parent=43 // pred_check_branch
          %400 = sbr.rel (%p398) target = $region48
        $region47: #{tpu_custom_call.1} parent=43 // pred_region
          %s401 = sand.u32 %s41, 1
          %s402 = scalar_lea.sflag [#allocation3], %s401
          %s403 = sand.u32 %s41, 1
          %s404 = smul.addr %s403, 8
          %s405 = scalar_lea.vmem [#allocation2], %s404
          %s407 = ssub.s32 128, 128
          %408 = vsyncadd %s402, %s407
          %s409 = smul.addr %s31, 128
          %s410 = scalar_lea.hbm %s0, %s409
          %s412 = sshll.u32 %s405, 4
          %s413 = int_to_ptr.vmem [resolvable:$true] %s412
          %415 = dma.hbm_to_vmem [thread:$0]  %s410, 128, %s413, %s402
        $region48: #{tpu_custom_call.1} parent=43 // pred_fallthru
          _
        // Predicated region
        $region49: #{tpu_custom_call.1} parent=43 // pred_check
          %p416 = pneg %p77
        $region50: #{tpu_custom_call.1} parent=43 // pred_check_branch
          %418 = sbr.rel (%p416) target = $region52
        $region51: #{tpu_custom_call.1} parent=43 // pred_region
          %s419 = sand.u32 %s31, 1
          %s420 = scalar_lea.sflag [#allocation6], %s419
          %s421 = sand.u32 %s67, 1
          %s422 = smul.addr %s421, 8
          %s423 = scalar_lea.vmem [#allocation5], %s422
          %s425 = ssub.s32 128, 128
          %426 = vsyncadd %s420, %s425
          %s427 = smul.addr %s31, 128
          %s428 = scalar_lea.hbm %s1, %s427
          %s430 = sshll.u32 %s423, 4
          %s431 = int_to_ptr.vmem [resolvable:$true] %s430
          %433 = dma.hbm_to_vmem [thread:$0]  %s428, 128, %s431, %s420
        $region52: #{tpu_custom_call.1} parent=43 // pred_fallthru
          _
        // Predicated region
        $region53: #{tpu_custom_call.1} parent=43 // pred_check
          %p434 = pneg %p103
        $region54: #{tpu_custom_call.1} parent=43 // pred_check_branch
          %436 = sbr.rel (%p434) target = $region56
        $region55: #{tpu_custom_call.1} parent=43 // pred_region
          %s437 = sand.u32 %s31, 1
          %s438 = scalar_lea.sflag [#allocation6], %s437
          %s439 = sand.u32 %s93, 1
          %s440 = smul.addr %s439, 8
          %s441 = scalar_lea.vmem [#allocation7], %s440
          %s443 = ssub.s32 128, 128
          %444 = vsyncadd %s438, %s443
          %s445 = smul.addr %s31, 128
          %s446 = scalar_lea.hbm %s2, %s445
          %s448 = sshll.u32 %s441, 4
          %s449 = int_to_ptr.vmem [resolvable:$true] %s448
          %451 = dma.hbm_to_vmem [thread:$0]  %s446, 128, %s449, %s438
        $region56: #{tpu_custom_call.1} parent=43 // pred_fallthru
          _
        // Predicated region
        $region57: #{tpu_custom_call.1} parent=43 // pred_check
          %p452 = pneg %p129
        $region58: #{tpu_custom_call.1} parent=43 // pred_check_branch
          %454 = sbr.rel (%p452) target = $region60
        $region59: #{tpu_custom_call.1} parent=43 // pred_region
          %s455 = sand.u32 %s31, 1
          %s456 = scalar_lea.sflag [#allocation9], %s455
          %s457 = sand.u32 %s119, 1
          %s458 = smul.addr %s457, 8
          %s459 = scalar_lea.vmem [#allocation8], %s458
          %s461 = ssub.s32 128, 128
          %462 = vsyncadd %s456, %s461
          %s463 = smul.addr %s31, 128
          %s464 = scalar_lea.hbm %s3, %s463
          %s466 = sshll.u32 %s459, 4
          %s467 = int_to_ptr.vmem [resolvable:$true] %s466
          %469 = dma.hbm_to_vmem [thread:$0]  %s464, 128, %s467, %s456
        $region60: #{tpu_custom_call.1} parent=43 // pred_fallthru
          _
      $region44: #{tpu_custom_call.1} parent=5 // pred_fallthru
        _
      %p470 = scmp.le.s32.totalorder 1, %s31
      %p471 = scmp.lt.s32.totalorder %s31, 3
      %p472 = pnand %p470, %p471
      %p473 = pneg %p472
      // Predicated region
      $region61: #{tpu_custom_call.1} parent=5 // pred_check
        _
      $region62: #{tpu_custom_call.1} parent=5 // pred_check_branch
        %475 = sbr.rel (%p472) target = $region64
      $region63: #{tpu_custom_call.1} parent=5 // pred_region
        %s476 = ssub.s32 %s31, 1
        %s477 = sand.u32 %s44, 1
        %s478 = scalar_lea.sflag [#allocation3], %s477
        %s479 = sand.u32 %s44, 1
        %s480 = smul.addr %s479, 8
        %s481 = scalar_lea.vmem [#allocation2], %s480
        // Predicated region
        $region65: #{tpu_custom_call.1} parent=63 // pred_check
          %p482 = pneg %p57
        $region66: #{tpu_custom_call.1} parent=63 // pred_check_branch
          %484 = sbr.rel (%p482) target = $region68
        $region67: #{tpu_custom_call.1} parent=63 // pred_region
          %485 = dma.done %s478, 128
        $region68: #{tpu_custom_call.1} parent=63 // pred_fallthru
          _
        %s486 = sand.u32 %s36, 1
        %s487 = scalar_lea.sflag [#allocation6], %s486
        %s488 = sand.u32 %s70, 1
        %s489 = smul.addr %s488, 8
        %s490 = scalar_lea.vmem [#allocation5], %s489
        // Predicated region
        $region69: #{tpu_custom_call.1} parent=63 // pred_check
          %p491 = pneg %p83
        $region70: #{tpu_custom_call.1} parent=63 // pred_check_branch
          %493 = sbr.rel (%p491) target = $region72
        $region71: #{tpu_custom_call.1} parent=63 // pred_region
          %494 = dma.done %s487, 128
        $region72: #{tpu_custom_call.1} parent=63 // pred_fallthru
          _
        %s495 = sand.u32 %s36, 1
        %s496 = scalar_lea.sflag [#allocation6], %s495
        %s497 = sand.u32 %s96, 1
        %s498 = smul.addr %s497, 8
        %s499 = scalar_lea.vmem [#allocation7], %s498
        // Predicated region
        $region73: #{tpu_custom_call.1} parent=63 // pred_check
          %p500 = pneg %p109
        $region74: #{tpu_custom_call.1} parent=63 // pred_check_branch
          %502 = sbr.rel (%p500) target = $region76
        $region75: #{tpu_custom_call.1} parent=63 // pred_region
          %503 = dma.done %s496, 128
        $region76: #{tpu_custom_call.1} parent=63 // pred_fallthru
          _
        %s504 = sand.u32 %s36, 1
        %s505 = scalar_lea.sflag [#allocation9], %s504
        %s506 = sand.u32 %s122, 1
        %s507 = smul.addr %s506, 8
        %s508 = scalar_lea.vmem [#allocation8], %s507
        // Predicated region
        $region77: #{tpu_custom_call.1} parent=63 // pred_check
          %p509 = pneg %p135
        $region78: #{tpu_custom_call.1} parent=63 // pred_check_branch
          %511 = sbr.rel (%p509) target = $region80
        $region79: #{tpu_custom_call.1} parent=63 // pred_region
          %512 = dma.done %s505, 128
        $region80: #{tpu_custom_call.1} parent=63 // pred_fallthru
          _
        // Predicated region
        $region81: #{tpu_custom_call.1} parent=63 // pred_check
          %p513 = pneg %p177
        $region82: #{tpu_custom_call.1} parent=63 // pred_check_branch
          %515 = sbr.rel (%p513) target = $region84
        $region83: #{tpu_custom_call.1} parent=63 // pred_region
          %516 = dma.done [#allocation9], 512
        $region84: #{tpu_custom_call.1} parent=63 // pred_fallthru
          _
        // Predicated region
        $region85: #{tpu_custom_call.1} parent=63 // pred_check
          %p517 = pneg %p198
        $region86: #{tpu_custom_call.1} parent=63 // pred_check_branch
          %519 = sbr.rel (%p517) target = $region88
        $region87: #{tpu_custom_call.1} parent=63 // pred_region
          %520 = dma.done [#allocation12], 512
        $region88: #{tpu_custom_call.1} parent=63 // pred_fallthru
          _
        // Predicated region
        $region89: #{tpu_custom_call.1} parent=63 // pred_check
          %p521 = pneg %p219
        $region90: #{tpu_custom_call.1} parent=63 // pred_check_branch
          %523 = sbr.rel (%p521) target = $region92
        $region91: #{tpu_custom_call.1} parent=63 // pred_region
          %524 = dma.done [#allocation12], 512
        $region92: #{tpu_custom_call.1} parent=63 // pred_fallthru
          _
        // Predicated region
        $region93: #{tpu_custom_call.1} parent=63 // pred_check
          %p525 = pneg %p240
        $region94: #{tpu_custom_call.1} parent=63 // pred_check_branch
          %527 = sbr.rel (%p525) target = $region96
        $region95: #{tpu_custom_call.1} parent=63 // pred_region
          %528 = dma.done [#allocation15], 512
        $region96: #{tpu_custom_call.1} parent=63 // pred_fallthru
          _
        // Predicated region
        $region97: #{tpu_custom_call.1} parent=63 // pred_check
          %p529 = pneg %p261
        $region98: #{tpu_custom_call.1} parent=63 // pred_check_branch
          %531 = sbr.rel (%p529) target = $region100
        $region99: #{tpu_custom_call.1} parent=63 // pred_region
          %532 = dma.done [#allocation15], 20480
        $region100: #{tpu_custom_call.1} parent=63 // pred_fallthru
          _
        %s533 = sand.u32 %s44, 1
        %s534 = scalar_lea.sflag [#allocation3], %s533
        %s535 = sand.u32 %s44, 1
        %s536 = smul.addr %s535, 8
        %s537 = scalar_lea.vmem [#allocation2], %s536
        %p538 = pneg %p57
        %p539 = pneg %p54
        %s540 = sand.u32 %s36, 1
        %s541 = scalar_lea.sflag [#allocation6], %s540
        %s542 = sand.u32 %s70, 1
        %s543 = smul.addr %s542, 8
        %s544 = scalar_lea.vmem [#allocation5], %s543
        %p545 = pneg %p83
        %p546 = pneg %p80
        %s547 = sand.u32 %s36, 1
        %s548 = scalar_lea.sflag [#allocation6], %s547
        %s549 = sand.u32 %s96, 1
        %s550 = smul.addr %s549, 8
        %s551 = scalar_lea.vmem [#allocation7], %s550
        %p552 = pneg %p109
        %p553 = pneg %p106
        %s554 = sand.u32 %s36, 1
        %s555 = scalar_lea.sflag [#allocation9], %s554
        %s556 = sand.u32 %s122, 1
        %s557 = smul.addr %s556, 8
        %s558 = scalar_lea.vmem [#allocation8], %s557
        %p559 = pneg %p135
        %p560 = pneg %p132
        %p561 = pneg %p156
        %p562 = pneg %p153
        %p563 = pneg %p177
        %p564 = pneg %p174
        %p565 = pneg %p198
        %p566 = pneg %p195
        %p567 = pneg %p219
        %p568 = pneg %p216
        %p569 = pneg %p240
        %p570 = pneg %p237
        %p571 = pneg %p261
        %p572 = pneg %p258
        %p573 = pneg %p282
        %p574 = pneg %p279
        %p575 = pneg %p308
        %p576 = pneg %p305
        %s577 = sand.u32 %s295, 1
        %s578 = scalar_lea.sflag [#allocation4], %s577
        %s579 = sand.u32 %s295, 1
        %s580 = smul.addr %s579, 4
        %s581 = scalar_lea.vmem [#allocation17], %s580
        %v583 = vld [vmem:[%s481] sm:$0xff]
        %v584 = vld [vmem:[%s490] sm:$0xff]
        %v585 = vld [vmem:[%s499] sm:$0xff]
        %v586 = vld [vmem:[%s508] sm:$0xff]
        %v587 = vld [vmem:[%s4] sm:$0x1]
        %v588 = vld [vmem:[#allocation10] sm:$0xff]
        %v589 = vld [vmem:[#allocation10 + $0x8] sm:$0xff]
        %v590 = vld [vmem:[#allocation10 + $0x10] sm:$0xff]
        %v591 = vld [vmem:[#allocation10 + $0x18] sm:$0xff]
        %v592 = vld [vmem:[#allocation11] sm:$0xff]
        %v593 = vld [vmem:[#allocation11 + $0x8] sm:$0xff]
        %v594 = vld [vmem:[#allocation11 + $0x10] sm:$0xff]
        %v595 = vld [vmem:[#allocation11 + $0x18] sm:$0xff]
        %v596 = vld [vmem:[#allocation13] sm:$0xff]
        %v597 = vld [vmem:[#allocation13 + $0x8] sm:$0xff]
        %v598 = vld [vmem:[#allocation13 + $0x10] sm:$0xff]
        %v599 = vld [vmem:[#allocation13 + $0x18] sm:$0xff]
        %v600 = vld [vmem:[#allocation14] sm:$0xff]
        %v601 = vld [vmem:[#allocation14 + $0x8] sm:$0xff]
        %v602 = vld [vmem:[#allocation14 + $0x10] sm:$0xff]
        %v603 = vld [vmem:[#allocation14 + $0x18] sm:$0xff]
        %604 = vadd.xlane.f32.xlu0 %v583
        %v605 = vpop.xlane.xlu0 %604
        %v606 = vmul.f32 %v605, 0.03125
        %v607 = vsub.f32 %v583, %v606
        %v608 = vmul.f32 %v607, %v607
        %v610 = vlaneseq
        %v611 = vshrl.u32 %v610, 7
        %v612 = vsub.s32 0, %v611
        %v613 = vrot.slane %v587, %v612
        %v615 = vmul.f32 %v608, %v613
        %616 = vadd.xlane.f32.xlu0 %v615
        %v617 = vpop.xlane.xlu0 %616
        %v618 = vmul.f32 %v617, 0.03125
        %v619 = vadd.f32 %v618, 1e-05
        %v620 = vrsqrt.pop %v619
        %v621 = vmul.f32 %v607, %v620
        %v622 = vld [vmem:[%s10] sm:$0x1]
        %v624 = vlaneseq
        %v625 = vshrl.u32 %v624, 7
        %v626 = vsub.s32 0, %v625
        %v627 = vrot.slane %v622, %v626
        %v629 = vmul.f32 %v621, %v627
        %v630 = vld [vmem:[%s10 + $0x1] sm:$0x1]
        %v632 = vlaneseq
        %v633 = vshrl.u32 %v632, 7
        %v634 = vsub.s32 0, %v633
        %v635 = vrot.slane %v630, %v634
        %v637 = vadd.f32 %v629, %v635
        %v638 = vpack.c.bf16 %v637, %v637
        %v639 = vld [vmem:[#allocation16] sm:$0xff]
        %v640 = vld [vmem:[#allocation16 + $0x8] sm:$0xf]
        %v641 = vld [vmem:[#allocation16 + $0x50] sm:$0xff]
        %v642 = vld [vmem:[#allocation16 + $0x58] sm:$0xf]
        %v643 = vld [vmem:[#allocation16 + $0xa0] sm:$0xff]
        %v644 = vld [vmem:[#allocation16 + $0xa8] sm:$0xf]
        %v645 = vld [vmem:[#allocation16 + $0xf0] sm:$0xff]
        %v646 = vld [vmem:[#allocation16 + $0xf8] sm:$0xf]
        %v647 = vld [vmem:[#allocation16 + $0x140] sm:$0xff]
        %v648 = vld [vmem:[#allocation16 + $0x148] sm:$0xf]
        %v649 = vld [vmem:[#allocation16 + $0x190] sm:$0xff]
        %v650 = vld [vmem:[#allocation16 + $0x198] sm:$0xf]
        %v651 = vld [vmem:[#allocation16 + $0x1e0] sm:$0xff]
        %v652 = vld [vmem:[#allocation16 + $0x1e8] sm:$0xf]
        %v653 = vld [vmem:[#allocation16 + $0x230] sm:$0xff]
        %v654 = vld [vmem:[#allocation16 + $0x238] sm:$0xf]
        %v655 = vld [vmem:[#allocation16 + $0x280] sm:$0xff]
        %v656 = vld [vmem:[#allocation16 + $0x288] sm:$0xf]
        %v657 = vld [vmem:[#allocation16 + $0x2d0] sm:$0xff]
        %v658 = vld [vmem:[#allocation16 + $0x2d8] sm:$0xf]
        %v659 = vld [vmem:[#allocation16 + $0x320] sm:$0xff]
        %v660 = vld [vmem:[#allocation16 + $0x328] sm:$0xf]
        %v661 = vld [vmem:[#allocation16 + $0x370] sm:$0xff]
        %v662 = vld [vmem:[#allocation16 + $0x378] sm:$0xf]
        %v663 = vld [vmem:[#allocation16 + $0x3c0] sm:$0xff]
        %v664 = vld [vmem:[#allocation16 + $0x3c8] sm:$0xf]
        %v665 = vld [vmem:[#allocation16 + $0x410] sm:$0xff]
        %v666 = vld [vmem:[#allocation16 + $0x418] sm:$0xf]
        %v667 = vld [vmem:[#allocation16 + $0x460] sm:$0xff]
        %v668 = vld [vmem:[#allocation16 + $0x468] sm:$0xf]
        %v669 = vld [vmem:[#allocation16 + $0x4b0] sm:$0xff]
        %v670 = vld [vmem:[#allocation16 + $0x4b8] sm:$0xf]
        %v671 = vld [vmem:[%s10 + $0x2] sm:$0x7]
        %v673 = vlaneseq
        %v674 = vshrl.u32 %v673, 7
        %v675 = vsub.s32 0, %v674
        %v676 = vrot.slane %v671, %v675
        %v677 = vlaneseq
        %v678 = vshrl.u32 %v677, 7
        %v679 = vsub.s32 1, %v678
        %v680 = vrot.slane %v671, %v679
        %v681 = vlaneseq
        %v682 = vshrl.u32 %v681, 7
        %v683 = vsub.s32 2, %v682
        %v684 = vrot.slane %v671, %v683
        %v720 = vunpack.c.l.b16 %v639
        %v721 = vunpack.c.h.b16 %v639
        %v722 = vunpack.c.l.b16 %v640
        %v723 = vunpack.c.l.b16 %v641
        %v724 = vunpack.c.h.b16 %v641
        %v725 = vunpack.c.l.b16 %v642
        %v726 = vunpack.c.l.b16 %v643
        %v727 = vunpack.c.h.b16 %v643
        %v728 = vunpack.c.l.b16 %v644
        %v729 = vunpack.c.l.b16 %v645
        %v730 = vunpack.c.h.b16 %v645
        %v731 = vunpack.c.l.b16 %v646
        %v732 = vunpack.c.l.b16 %v647
        %v733 = vunpack.c.h.b16 %v647
        %v734 = vunpack.c.l.b16 %v648
        %v735 = vunpack.c.l.b16 %v649
        %v736 = vunpack.c.h.b16 %v649
        %v737 = vunpack.c.l.b16 %v650
        %v738 = vunpack.c.l.b16 %v651
        %v739 = vunpack.c.h.b16 %v651
        %v740 = vunpack.c.l.b16 %v652
        %v741 = vunpack.c.l.b16 %v653
        %v742 = vunpack.c.h.b16 %v653
        %v743 = vunpack.c.l.b16 %v654
        %v744 = vunpack.c.l.b16 %v655
        %v745 = vunpack.c.h.b16 %v655
        %v746 = vunpack.c.l.b16 %v656
        %v747 = vunpack.c.l.b16 %v657
        %v748 = vunpack.c.h.b16 %v657
        %v749 = vunpack.c.l.b16 %v658
        %v750 = vunpack.c.l.b16 %v659
        %v751 = vunpack.c.h.b16 %v659
        %v752 = vunpack.c.l.b16 %v660
        %v753 = vunpack.c.l.b16 %v661
        %v754 = vunpack.c.h.b16 %v661
        %v755 = vunpack.c.l.b16 %v662
        %v756 = vunpack.c.l.b16 %v663
        %v757 = vunpack.c.h.b16 %v663
        %v758 = vunpack.c.l.b16 %v664
        %v759 = vunpack.c.l.b16 %v665
        %v760 = vunpack.c.h.b16 %v665
        %v761 = vunpack.c.l.b16 %v666
        %v762 = vunpack.c.l.b16 %v667
        %v763 = vunpack.c.h.b16 %v667
        %v764 = vunpack.c.l.b16 %v668
        %v765 = vunpack.c.l.b16 %v669
        %v766 = vunpack.c.h.b16 %v669
        %v767 = vunpack.c.l.b16 %v670
        %v768 = vpack.c.b16 %v723, %v720
        %v769 = vpack.c.b16 %v724, %v721
        %v770 = vpack.c.b16 %v725, %v722
        %v771 = vpack.c.b16 %v729, %v726
        %v772 = vpack.c.b16 %v730, %v727
        %v773 = vpack.c.b16 %v731, %v728
        %v774 = vpack.c.b16 %v735, %v732
        %v775 = vpack.c.b16 %v736, %v733
        %v776 = vpack.c.b16 %v737, %v734
        %v777 = vpack.c.b16 %v741, %v738
        %v778 = vpack.c.b16 %v742, %v739
        %v779 = vpack.c.b16 %v743, %v740
        %v780 = vpack.c.b16 %v747, %v744
        %v781 = vpack.c.b16 %v748, %v745
        %v782 = vpack.c.b16 %v749, %v746
        %v783 = vpack.c.b16 %v753, %v750
        %v784 = vpack.c.b16 %v754, %v751
        %v785 = vpack.c.b16 %v755, %v752
        %v786 = vpack.c.b16 %v759, %v756
        %v787 = vpack.c.b16 %v760, %v757
        %v788 = vpack.c.b16 %v761, %v758
        %v789 = vpack.c.b16 %v765, %v762
        %v790 = vpack.c.b16 %v766, %v763
        %v791 = vpack.c.b16 %v767, %v764
        %816 = vmatprep.subr.bf16.mxu0 %v769
        %817 = vmatpush1.bf16.msra.mxu0 %v768
        %818 = vmatprep.subr.bf16.mxu0 %v772
        %819 = vmatpush1.bf16.msra.mxu0 %v771
        %820 = vmatprep.subr.bf16.mxu0 %v775
        %821 = vmatpush1.bf16.msra.mxu0 %v774
        %822 = vmatprep.subr.bf16.mxu0 %v778
        %823 = vmatpush1.bf16.msra.mxu0 %v777
        %824 = vmatprep.subr.bf16.mxu0 %v781
        %825 = vmatpush1.bf16.msra.mxu0 %v780
        %826 = vmatprep.subr.bf16.mxu0 %v784
        %827 = vmatpush1.bf16.msra.mxu0 %v783
        %828 = vmatprep.subr.bf16.mxu0 %v787
        %829 = vmatpush1.bf16.msra.mxu0 %v786
        %830 = vmatprep.subr.bf16.mxu0 %v790
        %831 = vmatpush1.bf16.msra.mxu0 %v789
        %832 = vmatprep.subr.bf16.mxu0 0
        %833 = vmatpush1.bf16.msra.mxu0 0
        %834 = vmatprep.subr.bf16.mxu0 0
        %835 = vmatpush1.bf16.msra.mxu0 0
        %836 = vmatprep.subr.bf16.mxu0 0
        %837 = vmatpush1.bf16.msra.mxu0 0
        %838 = vmatprep.subr.bf16.mxu0 0
        %839 = vmatpush1.bf16.msra.mxu0 0
        %840 = vmatprep.subr.bf16.mxu0 0
        %841 = vmatpush1.bf16.msra.mxu0 0
        %842 = vmatprep.subr.bf16.mxu0 0
        %843 = vmatpush1.bf16.msra.mxu0 0
        %844 = vmatprep.subr.bf16.mxu0 0
        %845 = vmatpush1.bf16.msra.mxu0 0
        %846 = vmatprep.subr.bf16.mxu0 0
        %847 = vmatpush1.bf16.msra.mxu0 0
        %848 = vmatprep.mubr.bf16.mxu0 0
        %849 = vmatmul.mubr.bf16.gmra.mrb[0].mxu0 %v638
        %v850 = vpop.f32.mrb[0].mxu0
        %v851 = vadd.f32 %v676, %v850
        %v852 = vpop.f32.mrb[0].mxu0
        %v853 = vadd.f32 %v680, %v852
        %v854 = vpop.f32.mrb[0].mxu0
        %v855 = vpop.f32.mrb[0].mxu0
        %856 = vdwg.mxu0
        %857 = vmatprep.subr.bf16.mxu0 0
        %858 = vmatpush1.bf16.msra.mxu0 %v770
        %859 = vmatprep.subr.bf16.mxu0 0
        %860 = vmatpush1.bf16.msra.mxu0 %v773
        %861 = vmatprep.subr.bf16.mxu0 0
        %862 = vmatpush1.bf16.msra.mxu0 %v776
        %863 = vmatprep.subr.bf16.mxu0 0
        %864 = vmatpush1.bf16.msra.mxu0 %v779
        %865 = vmatprep.subr.bf16.mxu0 0
        %866 = vmatpush1.bf16.msra.mxu0 %v782
        %867 = vmatprep.subr.bf16.mxu0 0
        %868 = vmatpush1.bf16.msra.mxu0 %v785
        %869 = vmatprep.subr.bf16.mxu0 0
        %870 = vmatpush1.bf16.msra.mxu0 %v788
        %871 = vmatprep.subr.bf16.mxu0 0
        %872 = vmatpush1.bf16.msra.mxu0 %v791
        %873 = vmatprep.subr.bf16.mxu0 0
        %874 = vmatpush1.bf16.msra.mxu0 0
        %875 = vmatprep.subr.bf16.mxu0 0
        %876 = vmatpush1.bf16.msra.mxu0 0
        %877 = vmatprep.subr.bf16.mxu0 0
        %878 = vmatpush1.bf16.msra.mxu0 0
        %879 = vmatprep.subr.bf16.mxu0 0
        %880 = vmatpush1.bf16.msra.mxu0 0
        %881 = vmatprep.subr.bf16.mxu0 0
        %882 = vmatpush1.bf16.msra.mxu0 0
        %883 = vmatprep.subr.bf16.mxu0 0
        %884 = vmatpush1.bf16.msra.mxu0 0
        %885 = vmatprep.subr.bf16.mxu0 0
        %886 = vmatpush1.bf16.msra.mxu0 0
        %887 = vmatprep.subr.bf16.mxu0 0
        %888 = vmatpush1.bf16.msra.mxu0 0
        %889 = vmatprep.mubr.bf16.mxu0 0
        %890 = vmatmul.mubr.bf16.gmra.mrb[0].mxu0 %v638
        %v891 = vpop.f32.mrb[0].mxu0
        %v892 = vadd.f32 %v684, %v891
        %v893 = vpop.f32.mrb[0].mxu0
        %v894 = vpop.f32.mrb[0].mxu0
        %v895 = vpop.f32.mrb[0].mxu0
        %896 = vdwg.mxu0
        %v897 = vmul.f32 %v853, %v588
        %v898 = vmul.f32 %v853, %v589
        %v899 = vmul.f32 %v853, %v590
        %v900 = vmul.f32 %v853, %v591
        %v901 = vmul.f32 %v892, %v588
        %v902 = vmul.f32 %v892, %v589
        %v903 = vmul.f32 %v892, %v590
        %v904 = vmul.f32 %v892, %v591
        %v905 = vmul.f32 %v851, 0.35355338
        %906 = vmatprep.subr.mxu0 0.0
        %907 = vmatpush1.xpose.msra.mxu0 %v897
        %908 = vmatprep.subr.mxu0 0.0
        %909 = vmatpush1.xpose.msra.mxu0 %v898
        %910 = vmatprep.subr.mxu0 0.0
        %911 = vmatpush1.xpose.msra.mxu0 %v899
        %912 = vmatprep.subr.mxu0 0.0
        %913 = vmatpush1.xpose.msra.mxu0 %v900
        %914 = vmatprep.subr.mxu0 0.0
        %915 = vmatpush1.xpose.msra.mxu0 0.0
        %916 = vmatprep.subr.mxu0 0.0
        %917 = vmatpush1.xpose.msra.mxu0 0.0
        %918 = vmatprep.subr.mxu0 0.0
        %919 = vmatpush1.xpose.msra.mxu0 0.0
        %920 = vmatprep.subr.mxu0 0.0
        %921 = vmatpush1.xpose.msra.mxu0 0.0
        %922 = vmatprep.subr.mxu0 0.0
        %923 = vmatpush1.xpose.msra.mxu0 0.0
        %924 = vmatprep.subr.mxu0 0.0
        %925 = vmatpush1.xpose.msra.mxu0 0.0
        %926 = vmatprep.subr.mxu0 0.0
        %927 = vmatpush1.xpose.msra.mxu0 0.0
        %928 = vmatprep.subr.mxu0 0.0
        %929 = vmatpush1.xpose.msra.mxu0 0.0
        %930 = vmatprep.subr.mxu0 0.0
        %931 = vmatpush1.xpose.msra.mxu0 0.0
        %932 = vmatprep.subr.mxu0 0.0
        %933 = vmatpush1.xpose.msra.mxu0 0.0
        %934 = vmatprep.subr.mxu0 0.0
        %935 = vmatpush1.xpose.msra.mxu0 0.0
        %936 = vmatprep.subr.mxu0 0.0
        %937 = vmatpush1.xpose.msra.mxu0 0.0
        %938 = vmatprep.subr.mxu0 0.0
        %939 = vmatpush1.xpose.msra.mxu0 0.0
        %940 = vmatprep.subr.mxu0 0.0
        %941 = vmatpush1.xpose.msra.mxu0 0.0
        %942 = vmatprep.subr.mxu0 0.0
        %943 = vmatpush1.xpose.msra.mxu0 0.0
        %944 = vmatprep.subr.mxu0 0.0
        %945 = vmatpush1.xpose.msra.mxu0 0.0
        %946 = vmatprep.subr.mxu0 0.0
        %947 = vmatpush1.xpose.msra.mxu0 0.0
        %948 = vmatprep.subr.mxu0 0.0
        %949 = vmatpush1.xpose.msra.mxu0 0.0
        %950 = vmatprep.subr.mxu0 0.0
        %951 = vmatpush1.xpose.msra.mxu0 0.0
        %952 = vmatprep.subr.mxu0 0.0
        %953 = vmatpush1.xpose.msra.mxu0 0.0
        %954 = vmatprep.subr.mxu0 0.0
        %955 = vmatpush1.xpose.msra.mxu0 0.0
        %956 = vmatprep.subr.mxu0 0.0
        %957 = vmatpush1.xpose.msra.mxu0 0.0
        %958 = vmatprep.subr.mxu0 0.0
        %959 = vmatpush1.xpose.msra.mxu0 0.0
        %960 = vmatprep.subr.mxu0 0.0
        %961 = vmatpush1.xpose.msra.mxu0 0.0
        %962 = vmatprep.subr.mxu0 0.0
        %963 = vmatpush1.xpose.msra.mxu0 0.0
        %964 = vmatprep.subr.mxu0 0.0
        %965 = vmatpush1.xpose.msra.mxu0 0.0
        %966 = vmatprep.subr.mxu0 0.0
        %967 = vmatpush1.xpose.msra.mxu0 0.0
        %968 = vmatprep.subr.mxu0 0.0
        %969 = vmatpush1.xpose.msra.mxu0 0.0
        %970 = vmatprep.mubr.f32.mxu0 0.0
        %971 = vmatmul.mubr.f32.gmra.mrb[0].mxu0 %v905
        %v972 = vpop.f32.mrb[0].mxu0
        %v973 = vadd.f32 %v585, %v972
        %v974 = vpop.f32.mrb[0].mxu0
        %975 = vdwg.mxu0
        %vm976 = vcmask 261120
        %v977 = vsel %vm976, %v973, -inf
        %978 = vmax.xlane.f32.xlu0 %v977
        %v979 = vpop.xlane.xlu0 %978
        %v980 = vsub.f32 %v973, %v979
        %v981 = vmul.f32 %v980, 1.442695
        %v982 = vpow.pop %v981
        %v984 = vsel %vm976, %v982, 0
        %986 = vmatprep.subr.mxu0 0.0
        %987 = vmatpush1.msra.mxu0 %v596
        %988 = vmatprep.subr.mxu0 0.0
        %989 = vmatpush1.msra.mxu0 %v597
        %990 = vmatprep.subr.mxu0 0.0
        %991 = vmatpush1.msra.mxu0 %v598
        %992 = vmatprep.subr.mxu0 0.0
        %993 = vmatpush1.msra.mxu0 %v599
        %994 = vmatprep.subr.mxu0 0.0
        %995 = vmatpush1.msra.mxu0 0.0
        %996 = vmatprep.subr.mxu0 0.0
        %997 = vmatpush1.msra.mxu0 0.0
        %998 = vmatprep.subr.mxu0 0.0
        %999 = vmatpush1.msra.mxu0 0.0
        %1000 = vmatprep.subr.mxu0 0.0
        %1001 = vmatpush1.msra.mxu0 0.0
        %1002 = vmatprep.subr.mxu0 0.0
        %1003 = vmatpush1.msra.mxu0 0.0
        %1004 = vmatprep.subr.mxu0 0.0
        %1005 = vmatpush1.msra.mxu0 0.0
        %1006 = vmatprep.subr.mxu0 0.0
        %1007 = vmatpush1.msra.mxu0 0.0
        %1008 = vmatprep.subr.mxu0 0.0
        %1009 = vmatpush1.msra.mxu0 0.0
        %1010 = vmatprep.subr.mxu0 0.0
        %1011 = vmatpush1.msra.mxu0 0.0
        %1012 = vmatprep.subr.mxu0 0.0
        %1013 = vmatpush1.msra.mxu0 0.0
        %1014 = vmatprep.subr.mxu0 0.0
        %1015 = vmatpush1.msra.mxu0 0.0
        %1016 = vmatprep.subr.mxu0 0.0
        %1017 = vmatpush1.msra.mxu0 0.0
        %1018 = vmatprep.subr.mxu0 0.0
        %1019 = vmatpush1.msra.mxu0 0.0
        %1020 = vmatprep.subr.mxu0 0.0
        %1021 = vmatpush1.msra.mxu0 0.0
        %1022 = vmatprep.subr.mxu0 0.0
        %1023 = vmatpush1.msra.mxu0 0.0
        %1024 = vmatprep.subr.mxu0 0.0
        %1025 = vmatpush1.msra.mxu0 0.0
        %1026 = vmatprep.subr.mxu0 0.0
        %1027 = vmatpush1.msra.mxu0 0.0
        %1028 = vmatprep.subr.mxu0 0.0
        %1029 = vmatpush1.msra.mxu0 0.0
        %1030 = vmatprep.subr.mxu0 0.0
        %1031 = vmatpush1.msra.mxu0 0.0
        %1032 = vmatprep.subr.mxu0 0.0
        %1033 = vmatpush1.msra.mxu0 0.0
        %1034 = vmatprep.subr.mxu0 0.0
        %1035 = vmatpush1.msra.mxu0 0.0
        %1036 = vmatprep.subr.mxu0 0.0
        %1037 = vmatpush1.msra.mxu0 0.0
        %1038 = vmatprep.subr.mxu0 0.0
        %1039 = vmatpush1.msra.mxu0 0.0
        %1040 = vmatprep.subr.mxu0 0.0
        %1041 = vmatpush1.msra.mxu0 0.0
        %1042 = vmatprep.subr.mxu0 0.0
        %1043 = vmatpush1.msra.mxu0 0.0
        %1044 = vmatprep.subr.mxu0 0.0
        %1045 = vmatpush1.msra.mxu0 0.0
        %1046 = vmatprep.subr.mxu0 0.0
        %1047 = vmatpush1.msra.mxu0 0.0
        %1048 = vmatprep.subr.mxu0 0.0
        %1049 = vmatpush1.msra.mxu0 0.0
        %1050 = vmatprep.mubr.f32.mxu0 0.0
        %1051 = vmatmul.mubr.f32.gmra.mrb[0].mxu0 %v984
        %v1052 = vpop.f32.mrb[0].mxu0
        %v1053 = vadd.f32 0.0, %v1052
        %v1054 = vpop.f32.mrb[0].mxu0
        %1055 = vdwg.mxu0
        %v1056 = vrcp.pop %v1053
        %v1057 = vmul.f32 %v982, %v1056
        %v1059 = vsel %vm976, %v1057, 0
        %1061 = vmatprep.subr.mxu0 0.0
        %1062 = vmatpush1.msra.mxu0 %v901
        %1063 = vmatprep.subr.mxu0 0.0
        %1064 = vmatpush1.msra.mxu0 %v902
        %1065 = vmatprep.subr.mxu0 0.0
        %1066 = vmatpush1.msra.mxu0 %v903
        %1067 = vmatprep.subr.mxu0 0.0
        %1068 = vmatpush1.msra.mxu0 %v904
        %1069 = vmatprep.subr.mxu0 0.0
        %1070 = vmatpush1.msra.mxu0 0.0
        %1071 = vmatprep.subr.mxu0 0.0
        %1072 = vmatpush1.msra.mxu0 0.0
        %1073 = vmatprep.subr.mxu0 0.0
        %1074 = vmatpush1.msra.mxu0 0.0
        %1075 = vmatprep.subr.mxu0 0.0
        %1076 = vmatpush1.msra.mxu0 0.0
        %1077 = vmatprep.subr.mxu0 0.0
        %1078 = vmatpush1.msra.mxu0 0.0
        %1079 = vmatprep.subr.mxu0 0.0
        %1080 = vmatpush1.msra.mxu0 0.0
        %1081 = vmatprep.subr.mxu0 0.0
        %1082 = vmatpush1.msra.mxu0 0.0
        %1083 = vmatprep.subr.mxu0 0.0
        %1084 = vmatpush1.msra.mxu0 0.0
        %1085 = vmatprep.subr.mxu0 0.0
        %1086 = vmatpush1.msra.mxu0 0.0
        %1087 = vmatprep.subr.mxu0 0.0
        %1088 = vmatpush1.msra.mxu0 0.0
        %1089 = vmatprep.subr.mxu0 0.0
        %1090 = vmatpush1.msra.mxu0 0.0
        %1091 = vmatprep.subr.mxu0 0.0
        %1092 = vmatpush1.msra.mxu0 0.0
        %1093 = vmatprep.subr.mxu0 0.0
        %1094 = vmatpush1.msra.mxu0 0.0
        %1095 = vmatprep.subr.mxu0 0.0
        %1096 = vmatpush1.msra.mxu0 0.0
        %1097 = vmatprep.subr.mxu0 0.0
        %1098 = vmatpush1.msra.mxu0 0.0
        %1099 = vmatprep.subr.mxu0 0.0
        %1100 = vmatpush1.msra.mxu0 0.0
        %1101 = vmatprep.subr.mxu0 0.0
        %1102 = vmatpush1.msra.mxu0 0.0
        %1103 = vmatprep.subr.mxu0 0.0
        %1104 = vmatpush1.msra.mxu0 0.0
        %1105 = vmatprep.subr.mxu0 0.0
        %1106 = vmatpush1.msra.mxu0 0.0
        %1107 = vmatprep.subr.mxu0 0.0
        %1108 = vmatpush1.msra.mxu0 0.0
        %1109 = vmatprep.subr.mxu0 0.0
        %1110 = vmatpush1.msra.mxu0 0.0
        %1111 = vmatprep.subr.mxu0 0.0
        %1112 = vmatpush1.msra.mxu0 0.0
        %1113 = vmatprep.subr.mxu0 0.0
        %1114 = vmatpush1.msra.mxu0 0.0
        %1115 = vmatprep.subr.mxu0 0.0
        %1116 = vmatpush1.msra.mxu0 0.0
        %1117 = vmatprep.subr.mxu0 0.0
        %1118 = vmatpush1.msra.mxu0 0.0
        %1119 = vmatprep.subr.mxu0 0.0
        %1120 = vmatpush1.msra.mxu0 0.0
        %1121 = vmatprep.subr.mxu0 0.0
        %1122 = vmatpush1.msra.mxu0 0.0
        %1123 = vmatprep.subr.mxu0 0.0
        %1124 = vmatpush1.msra.mxu0 0.0
        %1125 = vmatprep.mubr.f32.mxu0 0.0
        %1126 = vmatmul.mubr.f32.gmra.mrb[0].mxu0 %v1059
        %v1127 = vpop.f32.mrb[0].mxu0
        %v1128 = vadd.f32 0.0, %v1127
        %v1129 = vpop.f32.mrb[0].mxu0
        %1130 = vdwg.mxu0
        %v1131 = vpack.c.bf16 %v1128, %v1128
        %v1132 = vld [vmem:[#allocation16 + $0xc] sm:$0xf]
        %v1133 = vld [vmem:[#allocation16 + $0x5c] sm:$0xf]
        %v1134 = vld [vmem:[#allocation16 + $0xac] sm:$0xf]
        %v1135 = vld [vmem:[#allocation16 + $0xfc] sm:$0xf]
        %v1136 = vld [vmem:[#allocation16 + $0x14c] sm:$0xf]
        %v1137 = vld [vmem:[#allocation16 + $0x19c] sm:$0xf]
        %v1138 = vld [vmem:[#allocation16 + $0x1ec] sm:$0xf]
        %v1139 = vld [vmem:[#allocation16 + $0x23c] sm:$0xf]
        %v1140 = vld [vmem:[#allocation16 + $0x28c] sm:$0xf]
        %v1141 = vld [vmem:[#allocation16 + $0x2dc] sm:$0xf]
        %v1142 = vld [vmem:[#allocation16 + $0x32c] sm:$0xf]
        %v1143 = vld [vmem:[#allocation16 + $0x37c] sm:$0xf]
        %v1144 = vld [vmem:[#allocation16 + $0x3cc] sm:$0xf]
        %v1145 = vld [vmem:[#allocation16 + $0x41c] sm:$0xf]
        %v1146 = vld [vmem:[#allocation16 + $0x46c] sm:$0xf]
        %v1147 = vld [vmem:[#allocation16 + $0x4bc] sm:$0xf]
        %v1148 = vld [vmem:[%s10 + $0x5] sm:$0x1]
        %v1150 = vlaneseq
        %v1151 = vshrl.u32 %v1150, 7
        %v1152 = vsub.s32 0, %v1151
        %v1153 = vrot.slane %v1148, %v1152
        %v1171 = vunpack.c.l.b16 %v1132
        %v1172 = vunpack.c.l.b16 %v1133
        %v1173 = vunpack.c.l.b16 %v1134
        %v1174 = vunpack.c.l.b16 %v1135
        %v1175 = vunpack.c.l.b16 %v1136
        %v1176 = vunpack.c.l.b16 %v1137
        %v1177 = vunpack.c.l.b16 %v1138
        %v1178 = vunpack.c.l.b16 %v1139
        %v1179 = vunpack.c.l.b16 %v1140
        %v1180 = vunpack.c.l.b16 %v1141
        %v1181 = vunpack.c.l.b16 %v1142
        %v1182 = vunpack.c.l.b16 %v1143
        %v1183 = vunpack.c.l.b16 %v1144
        %v1184 = vunpack.c.l.b16 %v1145
        %v1185 = vunpack.c.l.b16 %v1146
        %v1186 = vunpack.c.l.b16 %v1147
        %v1187 = vpack.c.b16 %v1172, %v1171
        %v1188 = vpack.c.b16 %v1174, %v1173
        %v1189 = vpack.c.b16 %v1176, %v1175
        %v1190 = vpack.c.b16 %v1178, %v1177
        %v1191 = vpack.c.b16 %v1180, %v1179
        %v1192 = vpack.c.b16 %v1182, %v1181
        %v1193 = vpack.c.b16 %v1184, %v1183
        %v1194 = vpack.c.b16 %v1186, %v1185
        %1203 = vmatprep.subr.bf16.mxu0 0
        %1204 = vmatpush1.bf16.msra.mxu0 %v1187
        %1205 = vmatprep.subr.bf16.mxu0 0
        %1206 = vmatpush1.bf16.msra.mxu0 %v1188
        %1207 = vmatprep.subr.bf16.mxu0 0
        %1208 = vmatpush1.bf16.msra.mxu0 %v1189
        %1209 = vmatprep.subr.bf16.mxu0 0
        %1210 = vmatpush1.bf16.msra.mxu0 %v1190
        %1211 = vmatprep.subr.bf16.mxu0 0
        %1212 = vmatpush1.bf16.msra.mxu0 %v1191
        %1213 = vmatprep.subr.bf16.mxu0 0
        %1214 = vmatpush1.bf16.msra.mxu0 %v1192
        %1215 = vmatprep.subr.bf16.mxu0 0
        %1216 = vmatpush1.bf16.msra.mxu0 %v1193
        %1217 = vmatprep.subr.bf16.mxu0 0
        %1218 = vmatpush1.bf16.msra.mxu0 %v1194
        %1219 = vmatprep.subr.bf16.mxu0 0
        %1220 = vmatpush1.bf16.msra.mxu0 0
        %1221 = vmatprep.subr.bf16.mxu0 0
        %1222 = vmatpush1.bf16.msra.mxu0 0
        %1223 = vmatprep.subr.bf16.mxu0 0
        %1224 = vmatpush1.bf16.msra.mxu0 0
        %1225 = vmatprep.subr.bf16.mxu0 0
        %1226 = vmatpush1.bf16.msra.mxu0 0
        %1227 = vmatprep.subr.bf16.mxu0 0
        %1228 = vmatpush1.bf16.msra.mxu0 0
        %1229 = vmatprep.subr.bf16.mxu0 0
        %1230 = vmatpush1.bf16.msra.mxu0 0
        %1231 = vmatprep.subr.bf16.mxu0 0
        %1232 = vmatpush1.bf16.msra.mxu0 0
        %1233 = vmatprep.subr.bf16.mxu0 0
        %1234 = vmatpush1.bf16.msra.mxu0 0
        %1235 = vmatprep.mubr.bf16.mxu0 0
        %1236 = vmatmul.mubr.bf16.gmra.mrb[0].mxu0 %v1131
        %v1237 = vpop.f32.mrb[0].mxu0
        %v1238 = vadd.f32 %v1153, %v1237
        %v1239 = vpop.f32.mrb[0].mxu0
        %v1240 = vpop.f32.mrb[0].mxu0
        %v1241 = vpop.f32.mrb[0].mxu0
        %1242 = vdwg.mxu0
        %v1243 = vadd.f32 %v1238, %v583
        %1244 = vadd.xlane.f32.xlu0 %v1243
        %v1245 = vpop.xlane.xlu0 %1244
        %v1246 = vmul.f32 %v1245, 0.03125
        %v1247 = vsub.f32 %v1243, %v1246
        %v1248 = vmul.f32 %v1247, %v1247
        %v1249 = vmul.f32 %v1248, %v613
        %1250 = vadd.xlane.f32.xlu0 %v1249
        %v1251 = vpop.xlane.xlu0 %1250
        %v1252 = vmul.f32 %v1251, 0.03125
        %v1253 = vadd.f32 %v1252, 1e-05
        %v1254 = vrsqrt.pop %v1253
        %v1255 = vmul.f32 %v1247, %v1254
        %v1256 = vld [vmem:[%s10 + $0x6] sm:$0x1]
        %v1258 = vlaneseq
        %v1259 = vshrl.u32 %v1258, 7
        %v1260 = vsub.s32 0, %v1259
        %v1261 = vrot.slane %v1256, %v1260
        %v1263 = vmul.f32 %v1255, %v1261
        %v1264 = vld [vmem:[%s10 + $0x7] sm:$0x1]
        %v1266 = vlaneseq
        %v1267 = vshrl.u32 %v1266, 7
        %v1268 = vsub.s32 0, %v1267
        %v1269 = vrot.slane %v1264, %v1268
        %v1271 = vadd.f32 %v1263, %v1269
        %v1272 = vpack.c.bf16 %v1271, %v1271
        %v1273 = vld [vmem:[#allocation16 + $0x10] sm:$0xf]
        %v1274 = vld [vmem:[#allocation16 + $0x60] sm:$0xf]
        %v1275 = vld [vmem:[#allocation16 + $0xb0] sm:$0xf]
        %v1276 = vld [vmem:[#allocation16 + $0x100] sm:$0xf]
        %v1277 = vld [vmem:[#allocation16 + $0x150] sm:$0xf]
        %v1278 = vld [vmem:[#allocation16 + $0x1a0] sm:$0xf]
        %v1279 = vld [vmem:[#allocation16 + $0x1f0] sm:$0xf]
        %v1280 = vld [vmem:[#allocation16 + $0x240] sm:$0xf]
        %v1281 = vld [vmem:[#allocation16 + $0x290] sm:$0xf]
        %v1282 = vld [vmem:[#allocation16 + $0x2e0] sm:$0xf]
        %v1283 = vld [vmem:[#allocation16 + $0x330] sm:$0xf]
        %v1284 = vld [vmem:[#allocation16 + $0x380] sm:$0xf]
        %v1285 = vld [vmem:[#allocation16 + $0x3d0] sm:$0xf]
        %v1286 = vld [vmem:[#allocation16 + $0x420] sm:$0xf]
        %v1287 = vld [vmem:[#allocation16 + $0x470] sm:$0xf]
        %v1288 = vld [vmem:[#allocation16 + $0x4c0] sm:$0xf]
        %v1289 = vld [vmem:[%s10 + $0x8] sm:$0x1]
        %v1291 = vlaneseq
        %v1292 = vshrl.u32 %v1291, 7
        %v1293 = vsub.s32 0, %v1292
        %v1294 = vrot.slane %v1289, %v1293
        %v1312 = vunpack.c.l.b16 %v1273
        %v1313 = vunpack.c.l.b16 %v1274
        %v1314 = vunpack.c.l.b16 %v1275
        %v1315 = vunpack.c.l.b16 %v1276
        %v1316 = vunpack.c.l.b16 %v1277
        %v1317 = vunpack.c.l.b16 %v1278
        %v1318 = vunpack.c.l.b16 %v1279
        %v1319 = vunpack.c.l.b16 %v1280
        %v1320 = vunpack.c.l.b16 %v1281
        %v1321 = vunpack.c.l.b16 %v1282
        %v1322 = vunpack.c.l.b16 %v1283
        %v1323 = vunpack.c.l.b16 %v1284
        %v1324 = vunpack.c.l.b16 %v1285
        %v1325 = vunpack.c.l.b16 %v1286
        %v1326 = vunpack.c.l.b16 %v1287
        %v1327 = vunpack.c.l.b16 %v1288
        %v1328 = vpack.c.b16 %v1313, %v1312
        %v1329 = vpack.c.b16 %v1315, %v1314
        %v1330 = vpack.c.b16 %v1317, %v1316
        %v1331 = vpack.c.b16 %v1319, %v1318
        %v1332 = vpack.c.b16 %v1321, %v1320
        %v1333 = vpack.c.b16 %v1323, %v1322
        %v1334 = vpack.c.b16 %v1325, %v1324
        %v1335 = vpack.c.b16 %v1327, %v1326
        %1344 = vmatprep.subr.bf16.mxu0 0
        %1345 = vmatpush1.bf16.msra.mxu0 %v1328
        %1346 = vmatprep.subr.bf16.mxu0 0
        %1347 = vmatpush1.bf16.msra.mxu0 %v1329
        %1348 = vmatprep.subr.bf16.mxu0 0
        %1349 = vmatpush1.bf16.msra.mxu0 %v1330
        %1350 = vmatprep.subr.bf16.mxu0 0
        %1351 = vmatpush1.bf16.msra.mxu0 %v1331
        %1352 = vmatprep.subr.bf16.mxu0 0
        %1353 = vmatpush1.bf16.msra.mxu0 %v1332
        %1354 = vmatprep.subr.bf16.mxu0 0
        %1355 = vmatpush1.bf16.msra.mxu0 %v1333
        %1356 = vmatprep.subr.bf16.mxu0 0
        %1357 = vmatpush1.bf16.msra.mxu0 %v1334
        %1358 = vmatprep.subr.bf16.mxu0 0
        %1359 = vmatpush1.bf16.msra.mxu0 %v1335
        %1360 = vmatprep.subr.bf16.mxu0 0
        %1361 = vmatpush1.bf16.msra.mxu0 0
        %1362 = vmatprep.subr.bf16.mxu0 0
        %1363 = vmatpush1.bf16.msra.mxu0 0
        %1364 = vmatprep.subr.bf16.mxu0 0
        %1365 = vmatpush1.bf16.msra.mxu0 0
        %1366 = vmatprep.subr.bf16.mxu0 0
        %1367 = vmatpush1.bf16.msra.mxu0 0
        %1368 = vmatprep.subr.bf16.mxu0 0
        %1369 = vmatpush1.bf16.msra.mxu0 0
        %1370 = vmatprep.subr.bf16.mxu0 0
        %1371 = vmatpush1.bf16.msra.mxu0 0
        %1372 = vmatprep.subr.bf16.mxu0 0
        %1373 = vmatpush1.bf16.msra.mxu0 0
        %1374 = vmatprep.subr.bf16.mxu0 0
        %1375 = vmatpush1.bf16.msra.mxu0 0
        %1376 = vmatprep.mubr.bf16.mxu0 0
        %1377 = vmatmul.mubr.bf16.gmra.mrb[0].mxu0 %v1272
        %v1378 = vpop.f32.mrb[0].mxu0
        %v1379 = vadd.f32 %v1294, %v1378
        %v1380 = vpop.f32.mrb[0].mxu0
        %v1381 = vpop.f32.mrb[0].mxu0
        %v1382 = vpop.f32.mrb[0].mxu0
        %1383 = vdwg.mxu0
        %v1384 = vmul.f32 %v1379, 0.5
        %v1385 = vmul.f32 %v1379, 0.70710677
        %v1386 = verf.f32.pop %v1385
        %v1387 = vadd.f32 %v1386, 1.0
        %v1388 = vmul.f32 %v1384, %v1387
        %v1389 = vpack.c.bf16 %v1388, %v1388
        %v1390 = vld [vmem:[#allocation16 + $0x14] sm:$0xf]
        %v1391 = vld [vmem:[#allocation16 + $0x64] sm:$0xf]
        %v1392 = vld [vmem:[#allocation16 + $0xb4] sm:$0xf]
        %v1393 = vld [vmem:[#allocation16 + $0x104] sm:$0xf]
        %v1394 = vld [vmem:[#allocation16 + $0x154] sm:$0xf]
        %v1395 = vld [vmem:[#allocation16 + $0x1a4] sm:$0xf]
        %v1396 = vld [vmem:[#allocation16 + $0x1f4] sm:$0xf]
        %v1397 = vld [vmem:[#allocation16 + $0x244] sm:$0xf]
        %v1398 = vld [vmem:[#allocation16 + $0x294] sm:$0xf]
        %v1399 = vld [vmem:[#allocation16 + $0x2e4] sm:$0xf]
        %v1400 = vld [vmem:[#allocation16 + $0x334] sm:$0xf]
        %v1401 = vld [vmem:[#allocation16 + $0x384] sm:$0xf]
        %v1402 = vld [vmem:[#allocation16 + $0x3d4] sm:$0xf]
        %v1403 = vld [vmem:[#allocation16 + $0x424] sm:$0xf]
        %v1404 = vld [vmem:[#allocation16 + $0x474] sm:$0xf]
        %v1405 = vld [vmem:[#allocation16 + $0x4c4] sm:$0xf]
        %v1406 = vld [vmem:[%s10 + $0x9] sm:$0x1]
        %v1408 = vlaneseq
        %v1409 = vshrl.u32 %v1408, 7
        %v1410 = vsub.s32 0, %v1409
        %v1411 = vrot.slane %v1406, %v1410
        %v1429 = vunpack.c.l.b16 %v1390
        %v1430 = vunpack.c.l.b16 %v1391
        %v1431 = vunpack.c.l.b16 %v1392
        %v1432 = vunpack.c.l.b16 %v1393
        %v1433 = vunpack.c.l.b16 %v1394
        %v1434 = vunpack.c.l.b16 %v1395
        %v1435 = vunpack.c.l.b16 %v1396
        %v1436 = vunpack.c.l.b16 %v1397
        %v1437 = vunpack.c.l.b16 %v1398
        %v1438 = vunpack.c.l.b16 %v1399
        %v1439 = vunpack.c.l.b16 %v1400
        %v1440 = vunpack.c.l.b16 %v1401
        %v1441 = vunpack.c.l.b16 %v1402
        %v1442 = vunpack.c.l.b16 %v1403
        %v1443 = vunpack.c.l.b16 %v1404
        %v1444 = vunpack.c.l.b16 %v1405
        %v1445 = vpack.c.b16 %v1430, %v1429
        %v1446 = vpack.c.b16 %v1432, %v1431
        %v1447 = vpack.c.b16 %v1434, %v1433
        %v1448 = vpack.c.b16 %v1436, %v1435
        %v1449 = vpack.c.b16 %v1438, %v1437
        %v1450 = vpack.c.b16 %v1440, %v1439
        %v1451 = vpack.c.b16 %v1442, %v1441
        %v1452 = vpack.c.b16 %v1444, %v1443
        %1461 = vmatprep.subr.bf16.mxu0 0
        %1462 = vmatpush1.bf16.msra.mxu0 %v1445
        %1463 = vmatprep.subr.bf16.mxu0 0
        %1464 = vmatpush1.bf16.msra.mxu0 %v1446
        %1465 = vmatprep.subr.bf16.mxu0 0
        %1466 = vmatpush1.bf16.msra.mxu0 %v1447
        %1467 = vmatprep.subr.bf16.mxu0 0
        %1468 = vmatpush1.bf16.msra.mxu0 %v1448
        %1469 = vmatprep.subr.bf16.mxu0 0
        %1470 = vmatpush1.bf16.msra.mxu0 %v1449
        %1471 = vmatprep.subr.bf16.mxu0 0
        %1472 = vmatpush1.bf16.msra.mxu0 %v1450
        %1473 = vmatprep.subr.bf16.mxu0 0
        %1474 = vmatpush1.bf16.msra.mxu0 %v1451
        %1475 = vmatprep.subr.bf16.mxu0 0
        %1476 = vmatpush1.bf16.msra.mxu0 %v1452
        %1477 = vmatprep.subr.bf16.mxu0 0
        %1478 = vmatpush1.bf16.msra.mxu0 0
        %1479 = vmatprep.subr.bf16.mxu0 0
        %1480 = vmatpush1.bf16.msra.mxu0 0
        %1481 = vmatprep.subr.bf16.mxu0 0
        %1482 = vmatpush1.bf16.msra.mxu0 0
        %1483 = vmatprep.subr.bf16.mxu0 0
        %1484 = vmatpush1.bf16.msra.mxu0 0
        %1485 = vmatprep.subr.bf16.mxu0 0
        %1486 = vmatpush1.bf16.msra.mxu0 0
        %1487 = vmatprep.subr.bf16.mxu0 0
        %1488 = vmatpush1.bf16.msra.mxu0 0
        %1489 = vmatprep.subr.bf16.mxu0 0
        %1490 = vmatpush1.bf16.msra.mxu0 0
        %1491 = vmatprep.subr.bf16.mxu0 0
        %1492 = vmatpush1.bf16.msra.mxu0 0
        %1493 = vmatprep.mubr.bf16.mxu0 0
        %1494 = vmatmul.mubr.bf16.gmra.mrb[0].mxu0 %v1389
        %v1495 = vpop.f32.mrb[0].mxu0
        %v1496 = vadd.f32 %v1411, %v1495
        %v1497 = vpop.f32.mrb[0].mxu0
        %v1498 = vpop.f32.mrb[0].mxu0
        %v1499 = vpop.f32.mrb[0].mxu0
        %1500 = vdwg.mxu0
        %v1501 = vadd.f32 %v1496, %v1243
        %1502 = vadd.xlane.f32.xlu0 %v1501
        %v1503 = vpop.xlane.xlu0 %1502
        %v1504 = vmul.f32 %v1503, 0.03125
        %v1505 = vsub.f32 %v1501, %v1504
        %v1506 = vmul.f32 %v1505, %v1505
        %v1507 = vmul.f32 %v1506, %v613
        %1508 = vadd.xlane.f32.xlu0 %v1507
        %v1509 = vpop.xlane.xlu0 %1508
        %v1510 = vmul.f32 %v1509, 0.03125
        %v1511 = vadd.f32 %v1510, 1e-05
        %v1512 = vrsqrt.pop %v1511
        %v1513 = vmul.f32 %v1505, %v1512
        %v1514 = vld [vmem:[%s10 + $0xa] sm:$0x1]
        %v1516 = vlaneseq
        %v1517 = vshrl.u32 %v1516, 7
        %v1518 = vsub.s32 0, %v1517
        %v1519 = vrot.slane %v1514, %v1518
        %v1521 = vmul.f32 %v1513, %v1519
        %v1522 = vld [vmem:[%s10 + $0xb] sm:$0x1]
        %v1524 = vlaneseq
        %v1525 = vshrl.u32 %v1524, 7
        %v1526 = vsub.s32 0, %v1525
        %v1527 = vrot.slane %v1522, %v1526
        %v1529 = vadd.f32 %v1521, %v1527
        %v1530 = vpack.c.bf16 %v1529, %v1529
        %v1531 = vld [vmem:[#allocation16 + $0x18] sm:$0xff]
        %v1532 = vld [vmem:[#allocation16 + $0x20] sm:$0xf]
        %v1533 = vld [vmem:[#allocation16 + $0x68] sm:$0xff]
        %v1534 = vld [vmem:[#allocation16 + $0x70] sm:$0xf]
        %v1535 = vld [vmem:[#allocation16 + $0xb8] sm:$0xff]
        %v1536 = vld [vmem:[#allocation16 + $0xc0] sm:$0xf]
        %v1537 = vld [vmem:[#allocation16 + $0x108] sm:$0xff]
        %v1538 = vld [vmem:[#allocation16 + $0x110] sm:$0xf]
        %v1539 = vld [vmem:[#allocation16 + $0x158] sm:$0xff]
        %v1540 = vld [vmem:[#allocation16 + $0x160] sm:$0xf]
        %v1541 = vld [vmem:[#allocation16 + $0x1a8] sm:$0xff]
        %v1542 = vld [vmem:[#allocation16 + $0x1b0] sm:$0xf]
        %v1543 = vld [vmem:[#allocation16 + $0x1f8] sm:$0xff]
        %v1544 = vld [vmem:[#allocation16 + $0x200] sm:$0xf]
        %v1545 = vld [vmem:[#allocation16 + $0x248] sm:$0xff]
        %v1546 = vld [vmem:[#allocation16 + $0x250] sm:$0xf]
        %v1547 = vld [vmem:[#allocation16 + $0x298] sm:$0xff]
        %v1548 = vld [vmem:[#allocation16 + $0x2a0] sm:$0xf]
        %v1549 = vld [vmem:[#allocation16 + $0x2e8] sm:$0xff]
        %v1550 = vld [vmem:[#allocation16 + $0x2f0] sm:$0xf]
        %v1551 = vld [vmem:[#allocation16 + $0x338] sm:$0xff]
        %v1552 = vld [vmem:[#allocation16 + $0x340] sm:$0xf]
        %v1553 = vld [vmem:[#allocation16 + $0x388] sm:$0xff]
        %v1554 = vld [vmem:[#allocation16 + $0x390] sm:$0xf]
        %v1555 = vld [vmem:[#allocation16 + $0x3d8] sm:$0xff]
        %v1556 = vld [vmem:[#allocation16 + $0x3e0] sm:$0xf]
        %v1557 = vld [vmem:[#allocation16 + $0x428] sm:$0xff]
        %v1558 = vld [vmem:[#allocation16 + $0x430] sm:$0xf]
        %v1559 = vld [vmem:[#allocation16 + $0x478] sm:$0xff]
        %v1560 = vld [vmem:[#allocation16 + $0x480] sm:$0xf]
        %v1561 = vld [vmem:[#allocation16 + $0x4c8] sm:$0xff]
        %v1562 = vld [vmem:[#allocation16 + $0x4d0] sm:$0xf]
        %v1563 = vld [vmem:[%s10 + $0xc] sm:$0x7]
        %v1565 = vlaneseq
        %v1566 = vshrl.u32 %v1565, 7
        %v1567 = vsub.s32 0, %v1566
        %v1568 = vrot.slane %v1563, %v1567
        %v1569 = vlaneseq
        %v1570 = vshrl.u32 %v1569, 7
        %v1571 = vsub.s32 1, %v1570
        %v1572 = vrot.slane %v1563, %v1571
        %v1573 = vlaneseq
        %v1574 = vshrl.u32 %v1573, 7
        %v1575 = vsub.s32 2, %v1574
        %v1576 = vrot.slane %v1563, %v1575
        %v1612 = vunpack.c.l.b16 %v1531
        %v1613 = vunpack.c.h.b16 %v1531
        %v1614 = vunpack.c.l.b16 %v1532
        %v1615 = vunpack.c.l.b16 %v1533
        %v1616 = vunpack.c.h.b16 %v1533
        %v1617 = vunpack.c.l.b16 %v1534
        %v1618 = vunpack.c.l.b16 %v1535
        %v1619 = vunpack.c.h.b16 %v1535
        %v1620 = vunpack.c.l.b16 %v1536
        %v1621 = vunpack.c.l.b16 %v1537
        %v1622 = vunpack.c.h.b16 %v1537
        %v1623 = vunpack.c.l.b16 %v1538
        %v1624 = vunpack.c.l.b16 %v1539
        %v1625 = vunpack.c.h.b16 %v1539
        %v1626 = vunpack.c.l.b16 %v1540
        %v1627 = vunpack.c.l.b16 %v1541
        %v1628 = vunpack.c.h.b16 %v1541
        %v1629 = vunpack.c.l.b16 %v1542
        %v1630 = vunpack.c.l.b16 %v1543
        %v1631 = vunpack.c.h.b16 %v1543
        %v1632 = vunpack.c.l.b16 %v1544
        %v1633 = vunpack.c.l.b16 %v1545
        %v1634 = vunpack.c.h.b16 %v1545
        %v1635 = vunpack.c.l.b16 %v1546
        %v1636 = vunpack.c.l.b16 %v1547
        %v1637 = vunpack.c.h.b16 %v1547
        %v1638 = vunpack.c.l.b16 %v1548
        %v1639 = vunpack.c.l.b16 %v1549
        %v1640 = vunpack.c.h.b16 %v1549
        %v1641 = vunpack.c.l.b16 %v1550
        %v1642 = vunpack.c.l.b16 %v1551
        %v1643 = vunpack.c.h.b16 %v1551
        %v1644 = vunpack.c.l.b16 %v1552
        %v1645 = vunpack.c.l.b16 %v1553
        %v1646 = vunpack.c.h.b16 %v1553
        %v1647 = vunpack.c.l.b16 %v1554
        %v1648 = vunpack.c.l.b16 %v1555
        %v1649 = vunpack.c.h.b16 %v1555
        %v1650 = vunpack.c.l.b16 %v1556
        %v1651 = vunpack.c.l.b16 %v1557
        %v1652 = vunpack.c.h.b16 %v1557
        %v1653 = vunpack.c.l.b16 %v1558
        %v1654 = vunpack.c.l.b16 %v1559
        %v1655 = vunpack.c.h.b16 %v1559
        %v1656 = vunpack.c.l.b16 %v1560
        %v1657 = vunpack.c.l.b16 %v1561
        %v1658 = vunpack.c.h.b16 %v1561
        %v1659 = vunpack.c.l.b16 %v1562
        %v1660 = vpack.c.b16 %v1615, %v1612
        %v1661 = vpack.c.b16 %v1616, %v1613
        %v1662 = vpack.c.b16 %v1617, %v1614
        %v1663 = vpack.c.b16 %v1621, %v1618
        %v1664 = vpack.c.b16 %v1622, %v1619
        %v1665 = vpack.c.b16 %v1623, %v1620
        %v1666 = vpack.c.b16 %v1627, %v1624
        %v1667 = vpack.c.b16 %v1628, %v1625
        %v1668 = vpack.c.b16 %v1629, %v1626
        %v1669 = vpack.c.b16 %v1633, %v1630
        %v1670 = vpack.c.b16 %v1634, %v1631
        %v1671 = vpack.c.b16 %v1635, %v1632
        %v1672 = vpack.c.b16 %v1639, %v1636
        %v1673 = vpack.c.b16 %v1640, %v1637
        %v1674 = vpack.c.b16 %v1641, %v1638
        %v1675 = vpack.c.b16 %v1645, %v1642
        %v1676 = vpack.c.b16 %v1646, %v1643
        %v1677 = vpack.c.b16 %v1647, %v1644
        %v1678 = vpack.c.b16 %v1651, %v1648
        %v1679 = vpack.c.b16 %v1652, %v1649
        %v1680 = vpack.c.b16 %v1653, %v1650
        %v1681 = vpack.c.b16 %v1657, %v1654
        %v1682 = vpack.c.b16 %v1658, %v1655
        %v1683 = vpack.c.b16 %v1659, %v1656
        %1708 = vmatprep.subr.bf16.mxu0 %v1661
        %1709 = vmatpush1.bf16.msra.mxu0 %v1660
        %1710 = vmatprep.subr.bf16.mxu0 %v1664
        %1711 = vmatpush1.bf16.msra.mxu0 %v1663
        %1712 = vmatprep.subr.bf16.mxu0 %v1667
        %1713 = vmatpush1.bf16.msra.mxu0 %v1666
        %1714 = vmatprep.subr.bf16.mxu0 %v1670
        %1715 = vmatpush1.bf16.msra.mxu0 %v1669
        %1716 = vmatprep.subr.bf16.mxu0 %v1673
        %1717 = vmatpush1.bf16.msra.mxu0 %v1672
        %1718 = vmatprep.subr.bf16.mxu0 %v1676
        %1719 = vmatpush1.bf16.msra.mxu0 %v1675
        %1720 = vmatprep.subr.bf16.mxu0 %v1679
        %1721 = vmatpush1.bf16.msra.mxu0 %v1678
        %1722 = vmatprep.subr.bf16.mxu0 %v1682
        %1723 = vmatpush1.bf16.msra.mxu0 %v1681
        %1724 = vmatprep.subr.bf16.mxu0 0
        %1725 = vmatpush1.bf16.msra.mxu0 0
        %1726 = vmatprep.subr.bf16.mxu0 0
        %1727 = vmatpush1.bf16.msra.mxu0 0
        %1728 = vmatprep.subr.bf16.mxu0 0
        %1729 = vmatpush1.bf16.msra.mxu0 0
        %1730 = vmatprep.subr.bf16.mxu0 0
        %1731 = vmatpush1.bf16.msra.mxu0 0
        %1732 = vmatprep.subr.bf16.mxu0 0
        %1733 = vmatpush1.bf16.msra.mxu0 0
        %1734 = vmatprep.subr.bf16.mxu0 0
        %1735 = vmatpush1.bf16.msra.mxu0 0
        %1736 = vmatprep.subr.bf16.mxu0 0
        %1737 = vmatpush1.bf16.msra.mxu0 0
        %1738 = vmatprep.subr.bf16.mxu0 0
        %1739 = vmatpush1.bf16.msra.mxu0 0
        %1740 = vmatprep.mubr.bf16.mxu0 0
        %1741 = vmatmul.mubr.bf16.gmra.mrb[0].mxu0 %v1530
        %v1742 = vpop.f32.mrb[0].mxu0
        %v1743 = vadd.f32 %v1568, %v1742
        %v1744 = vpop.f32.mrb[0].mxu0
        %v1745 = vadd.f32 %v1572, %v1744
        %v1746 = vpop.f32.mrb[0].mxu0
        %v1747 = vpop.f32.mrb[0].mxu0
        %1748 = vdwg.mxu0
        %1749 = vmatprep.subr.bf16.mxu0 0
        %1750 = vmatpush1.bf16.msra.mxu0 %v1662
        %1751 = vmatprep.subr.bf16.mxu0 0
        %1752 = vmatpush1.bf16.msra.mxu0 %v1665
        %1753 = vmatprep.subr.bf16.mxu0 0
        %1754 = vmatpush1.bf16.msra.mxu0 %v1668
        %1755 = vmatprep.subr.bf16.mxu0 0
        %1756 = vmatpush1.bf16.msra.mxu0 %v1671
        %1757 = vmatprep.subr.bf16.mxu0 0
        %1758 = vmatpush1.bf16.msra.mxu0 %v1674
        %1759 = vmatprep.subr.bf16.mxu0 0
        %1760 = vmatpush1.bf16.msra.mxu0 %v1677
        %1761 = vmatprep.subr.bf16.mxu0 0
        %1762 = vmatpush1.bf16.msra.mxu0 %v1680
        %1763 = vmatprep.subr.bf16.mxu0 0
        %1764 = vmatpush1.bf16.msra.mxu0 %v1683
        %1765 = vmatprep.subr.bf16.mxu0 0
        %1766 = vmatpush1.bf16.msra.mxu0 0
        %1767 = vmatprep.subr.bf16.mxu0 0
        %1768 = vmatpush1.bf16.msra.mxu0 0
        %1769 = vmatprep.subr.bf16.mxu0 0
        %1770 = vmatpush1.bf16.msra.mxu0 0
        %1771 = vmatprep.subr.bf16.mxu0 0
        %1772 = vmatpush1.bf16.msra.mxu0 0
        %1773 = vmatprep.subr.bf16.mxu0 0
        %1774 = vmatpush1.bf16.msra.mxu0 0
        %1775 = vmatprep.subr.bf16.mxu0 0
        %1776 = vmatpush1.bf16.msra.mxu0 0
        %1777 = vmatprep.subr.bf16.mxu0 0
        %1778 = vmatpush1.bf16.msra.mxu0 0
        %1779 = vmatprep.subr.bf16.mxu0 0
        %1780 = vmatpush1.bf16.msra.mxu0 0
        %1781 = vmatprep.mubr.bf16.mxu0 0
        %1782 = vmatmul.mubr.bf16.gmra.mrb[0].mxu0 %v1530
        %v1783 = vpop.f32.mrb[0].mxu0
        %v1784 = vadd.f32 %v1576, %v1783
        %v1785 = vpop.f32.mrb[0].mxu0
        %v1786 = vpop.f32.mrb[0].mxu0
        %v1787 = vpop.f32.mrb[0].mxu0
        %1788 = vdwg.mxu0
        %v1789 = vmul.f32 %v1745, %v588
        %v1790 = vmul.f32 %v1745, %v589
        %v1791 = vmul.f32 %v1745, %v590
        %v1792 = vmul.f32 %v1745, %v591
        %v1793 = vmul.f32 %v1784, %v588
        %v1794 = vmul.f32 %v1784, %v589
        %v1795 = vmul.f32 %v1784, %v590
        %v1796 = vmul.f32 %v1784, %v591
        %v1797 = vmul.f32 %v1743, 0.35355338
        %1798 = vmatprep.subr.mxu0 0.0
        %1799 = vmatpush1.xpose.msra.mxu0 %v1789
        %1800 = vmatprep.subr.mxu0 0.0
        %1801 = vmatpush1.xpose.msra.mxu0 %v1790
        %1802 = vmatprep.subr.mxu0 0.0
        %1803 = vmatpush1.xpose.msra.mxu0 %v1791
        %1804 = vmatprep.subr.mxu0 0.0
        %1805 = vmatpush1.xpose.msra.mxu0 %v1792
        %1806 = vmatprep.subr.mxu0 0.0
        %1807 = vmatpush1.xpose.msra.mxu0 0.0
        %1808 = vmatprep.subr.mxu0 0.0
        %1809 = vmatpush1.xpose.msra.mxu0 0.0
        %1810 = vmatprep.subr.mxu0 0.0
        %1811 = vmatpush1.xpose.msra.mxu0 0.0
        %1812 = vmatprep.subr.mxu0 0.0
        %1813 = vmatpush1.xpose.msra.mxu0 0.0
        %1814 = vmatprep.subr.mxu0 0.0
        %1815 = vmatpush1.xpose.msra.mxu0 0.0
        %1816 = vmatprep.subr.mxu0 0.0
        %1817 = vmatpush1.xpose.msra.mxu0 0.0
        %1818 = vmatprep.subr.mxu0 0.0
        %1819 = vmatpush1.xpose.msra.mxu0 0.0
        %1820 = vmatprep.subr.mxu0 0.0
        %1821 = vmatpush1.xpose.msra.mxu0 0.0
        %1822 = vmatprep.subr.mxu0 0.0
        %1823 = vmatpush1.xpose.msra.mxu0 0.0
        %1824 = vmatprep.subr.mxu0 0.0
        %1825 = vmatpush1.xpose.msra.mxu0 0.0
        %1826 = vmatprep.subr.mxu0 0.0
        %1827 = vmatpush1.xpose.msra.mxu0 0.0
        %1828 = vmatprep.subr.mxu0 0.0
        %1829 = vmatpush1.xpose.msra.mxu0 0.0
        %1830 = vmatprep.subr.mxu0 0.0
        %1831 = vmatpush1.xpose.msra.mxu0 0.0
        %1832 = vmatprep.subr.mxu0 0.0
        %1833 = vmatpush1.xpose.msra.mxu0 0.0
        %1834 = vmatprep.subr.mxu0 0.0
        %1835 = vmatpush1.xpose.msra.mxu0 0.0
        %1836 = vmatprep.subr.mxu0 0.0
        %1837 = vmatpush1.xpose.msra.mxu0 0.0
        %1838 = vmatprep.subr.mxu0 0.0
        %1839 = vmatpush1.xpose.msra.mxu0 0.0
        %1840 = vmatprep.subr.mxu0 0.0
        %1841 = vmatpush1.xpose.msra.mxu0 0.0
        %1842 = vmatprep.subr.mxu0 0.0
        %1843 = vmatpush1.xpose.msra.mxu0 0.0
        %1844 = vmatprep.subr.mxu0 0.0
        %1845 = vmatpush1.xpose.msra.mxu0 0.0
        %1846 = vmatprep.subr.mxu0 0.0
        %1847 = vmatpush1.xpose.msra.mxu0 0.0
        %1848 = vmatprep.subr.mxu0 0.0
        %1849 = vmatpush1.xpose.msra.mxu0 0.0
        %1850 = vmatprep.subr.mxu0 0.0
        %1851 = vmatpush1.xpose.msra.mxu0 0.0
        %1852 = vmatprep.subr.mxu0 0.0
        %1853 = vmatpush1.xpose.msra.mxu0 0.0
        %1854 = vmatprep.subr.mxu0 0.0
        %1855 = vmatpush1.xpose.msra.mxu0 0.0
        %1856 = vmatprep.subr.mxu0 0.0
        %1857 = vmatpush1.xpose.msra.mxu0 0.0
        %1858 = vmatprep.subr.mxu0 0.0
        %1859 = vmatpush1.xpose.msra.mxu0 0.0
        %1860 = vmatprep.subr.mxu0 0.0
        %1861 = vmatpush1.xpose.msra.mxu0 0.0
        %1862 = vmatprep.mubr.f32.mxu0 0.0
        %1863 = vmatmul.mubr.f32.gmra.mrb[0].mxu0 %v1797
        %v1864 = vpop.f32.mrb[0].mxu0
        %v1865 = vadd.f32 %v585, %v1864
        %v1866 = vpop.f32.mrb[0].mxu0
        %1867 = vdwg.mxu0
        %v1868 = vsel %vm976, %v1865, -inf
        %1869 = vmax.xlane.f32.xlu0 %v1868
        %v1870 = vpop.xlane.xlu0 %1869
        %v1871 = vsub.f32 %v1865, %v1870
        %v1872 = vmul.f32 %v1871, 1.442695
        %v1873 = vpow.pop %v1872
        %v1875 = vsel %vm976, %v1873, 0
        %1877 = vmatprep.subr.mxu0 0.0
        %1878 = vmatpush1.msra.mxu0 %v596
        %1879 = vmatprep.subr.mxu0 0.0
        %1880 = vmatpush1.msra.mxu0 %v597
        %1881 = vmatprep.subr.mxu0 0.0
        %1882 = vmatpush1.msra.mxu0 %v598
        %1883 = vmatprep.subr.mxu0 0.0
        %1884 = vmatpush1.msra.mxu0 %v599
        %1885 = vmatprep.subr.mxu0 0.0
        %1886 = vmatpush1.msra.mxu0 0.0
        %1887 = vmatprep.subr.mxu0 0.0
        %1888 = vmatpush1.msra.mxu0 0.0
        %1889 = vmatprep.subr.mxu0 0.0
        %1890 = vmatpush1.msra.mxu0 0.0
        %1891 = vmatprep.subr.mxu0 0.0
        %1892 = vmatpush1.msra.mxu0 0.0
        %1893 = vmatprep.subr.mxu0 0.0
        %1894 = vmatpush1.msra.mxu0 0.0
        %1895 = vmatprep.subr.mxu0 0.0
        %1896 = vmatpush1.msra.mxu0 0.0
        %1897 = vmatprep.subr.mxu0 0.0
        %1898 = vmatpush1.msra.mxu0 0.0
        %1899 = vmatprep.subr.mxu0 0.0
        %1900 = vmatpush1.msra.mxu0 0.0
        %1901 = vmatprep.subr.mxu0 0.0
        %1902 = vmatpush1.msra.mxu0 0.0
        %1903 = vmatprep.subr.mxu0 0.0
        %1904 = vmatpush1.msra.mxu0 0.0
        %1905 = vmatprep.subr.mxu0 0.0
        %1906 = vmatpush1.msra.mxu0 0.0
        %1907 = vmatprep.subr.mxu0 0.0
        %1908 = vmatpush1.msra.mxu0 0.0
        %1909 = vmatprep.subr.mxu0 0.0
        %1910 = vmatpush1.msra.mxu0 0.0
        %1911 = vmatprep.subr.mxu0 0.0
        %1912 = vmatpush1.msra.mxu0 0.0
        %1913 = vmatprep.subr.mxu0 0.0
        %1914 = vmatpush1.msra.mxu0 0.0
        %1915 = vmatprep.subr.mxu0 0.0
        %1916 = vmatpush1.msra.mxu0 0.0
        %1917 = vmatprep.subr.mxu0 0.0
        %1918 = vmatpush1.msra.mxu0 0.0
        %1919 = vmatprep.subr.mxu0 0.0
        %1920 = vmatpush1.msra.mxu0 0.0
        %1921 = vmatprep.subr.mxu0 0.0
        %1922 = vmatpush1.msra.mxu0 0.0
        %1923 = vmatprep.subr.mxu0 0.0
        %1924 = vmatpush1.msra.mxu0 0.0
        %1925 = vmatprep.subr.mxu0 0.0
        %1926 = vmatpush1.msra.mxu0 0.0
        %1927 = vmatprep.subr.mxu0 0.0
        %1928 = vmatpush1.msra.mxu0 0.0
        %1929 = vmatprep.subr.mxu0 0.0
        %1930 = vmatpush1.msra.mxu0 0.0
        %1931 = vmatprep.subr.mxu0 0.0
        %1932 = vmatpush1.msra.mxu0 0.0
        %1933 = vmatprep.subr.mxu0 0.0
        %1934 = vmatpush1.msra.mxu0 0.0
        %1935 = vmatprep.subr.mxu0 0.0
        %1936 = vmatpush1.msra.mxu0 0.0
        %1937 = vmatprep.subr.mxu0 0.0
        %1938 = vmatpush1.msra.mxu0 0.0
        %1939 = vmatprep.subr.mxu0 0.0
        %1940 = vmatpush1.msra.mxu0 0.0
        %1941 = vmatprep.mubr.f32.mxu0 0.0
        %1942 = vmatmul.mubr.f32.gmra.mrb[0].mxu0 %v1875
        %v1943 = vpop.f32.mrb[0].mxu0
        %v1944 = vadd.f32 0.0, %v1943
        %v1945 = vpop.f32.mrb[0].mxu0
        %1946 = vdwg.mxu0
        %v1947 = vrcp.pop %v1944
        %v1948 = vmul.f32 %v1873, %v1947
        %v1950 = vsel %vm976, %v1948, 0
        %1952 = vmatprep.subr.mxu0 0.0
        %1953 = vmatpush1.msra.mxu0 %v1793
        %1954 = vmatprep.subr.mxu0 0.0
        %1955 = vmatpush1.msra.mxu0 %v1794
        %1956 = vmatprep.subr.mxu0 0.0
        %1957 = vmatpush1.msra.mxu0 %v1795
        %1958 = vmatprep.subr.mxu0 0.0
        %1959 = vmatpush1.msra.mxu0 %v1796
        %1960 = vmatprep.subr.mxu0 0.0
        %1961 = vmatpush1.msra.mxu0 0.0
        %1962 = vmatprep.subr.mxu0 0.0
        %1963 = vmatpush1.msra.mxu0 0.0
        %1964 = vmatprep.subr.mxu0 0.0
        %1965 = vmatpush1.msra.mxu0 0.0
        %1966 = vmatprep.subr.mxu0 0.0
        %1967 = vmatpush1.msra.mxu0 0.0
        %1968 = vmatprep.subr.mxu0 0.0
        %1969 = vmatpush1.msra.mxu0 0.0
        %1970 = vmatprep.subr.mxu0 0.0
        %1971 = vmatpush1.msra.mxu0 0.0
        %1972 = vmatprep.subr.mxu0 0.0
        %1973 = vmatpush1.msra.mxu0 0.0
        %1974 = vmatprep.subr.mxu0 0.0
        %1975 = vmatpush1.msra.mxu0 0.0
        %1976 = vmatprep.subr.mxu0 0.0
        %1977 = vmatpush1.msra.mxu0 0.0
        %1978 = vmatprep.subr.mxu0 0.0
        %1979 = vmatpush1.msra.mxu0 0.0
        %1980 = vmatprep.subr.mxu0 0.0
        %1981 = vmatpush1.msra.mxu0 0.0
        %1982 = vmatprep.subr.mxu0 0.0
        %1983 = vmatpush1.msra.mxu0 0.0
        %1984 = vmatprep.subr.mxu0 0.0
        %1985 = vmatpush1.msra.mxu0 0.0
        %1986 = vmatprep.subr.mxu0 0.0
        %1987 = vmatpush1.msra.mxu0 0.0
        %1988 = vmatprep.subr.mxu0 0.0
        %1989 = vmatpush1.msra.mxu0 0.0
        %1990 = vmatprep.subr.mxu0 0.0
        %1991 = vmatpush1.msra.mxu0 0.0
        %1992 = vmatprep.subr.mxu0 0.0
        %1993 = vmatpush1.msra.mxu0 0.0
        %1994 = vmatprep.subr.mxu0 0.0
        %1995 = vmatpush1.msra.mxu0 0.0
        %1996 = vmatprep.subr.mxu0 0.0
        %1997 = vmatpush1.msra.mxu0 0.0
        %1998 = vmatprep.subr.mxu0 0.0
        %1999 = vmatpush1.msra.mxu0 0.0
        %2000 = vmatprep.subr.mxu0 0.0
        %2001 = vmatpush1.msra.mxu0 0.0
        %2002 = vmatprep.subr.mxu0 0.0
        %2003 = vmatpush1.msra.mxu0 0.0
        %2004 = vmatprep.subr.mxu0 0.0
        %2005 = vmatpush1.msra.mxu0 0.0
        %2006 = vmatprep.subr.mxu0 0.0
        %2007 = vmatpush1.msra.mxu0 0.0
        %2008 = vmatprep.subr.mxu0 0.0
        %2009 = vmatpush1.msra.mxu0 0.0
        %2010 = vmatprep.subr.mxu0 0.0
        %2011 = vmatpush1.msra.mxu0 0.0
        %2012 = vmatprep.subr.mxu0 0.0
        %2013 = vmatpush1.msra.mxu0 0.0
        %2014 = vmatprep.subr.mxu0 0.0
        %2015 = vmatpush1.msra.mxu0 0.0
        %2016 = vmatprep.mubr.f32.mxu0 0.0
        %2017 = vmatmul.mubr.f32.gmra.mrb[0].mxu0 %v1950
        %v2018 = vpop.f32.mrb[0].mxu0
        %v2019 = vadd.f32 0.0, %v2018
        %v2020 = vpop.f32.mrb[0].mxu0
        %2021 = vdwg.mxu0
        %v2022 = vpack.c.bf16 %v2019, %v2019
        %v2023 = vld [vmem:[#allocation16 + $0x24] sm:$0xf]
        %v2024 = vld [vmem:[#allocation16 + $0x74] sm:$0xf]
        %v2025 = vld [vmem:[#allocation16 + $0xc4] sm:$0xf]
        %v2026 = vld [vmem:[#allocation16 + $0x114] sm:$0xf]
        %v2027 = vld [vmem:[#allocation16 + $0x164] sm:$0xf]
        %v2028 = vld [vmem:[#allocation16 + $0x1b4] sm:$0xf]
        %v2029 = vld [vmem:[#allocation16 + $0x204] sm:$0xf]
        %v2030 = vld [vmem:[#allocation16 + $0x254] sm:$0xf]
        %v2031 = vld [vmem:[#allocation16 + $0x2a4] sm:$0xf]
        %v2032 = vld [vmem:[#allocation16 + $0x2f4] sm:$0xf]
        %v2033 = vld [vmem:[#allocation16 + $0x344] sm:$0xf]
        %v2034 = vld [vmem:[#allocation16 + $0x394] sm:$0xf]
        %v2035 = vld [vmem:[#allocation16 + $0x3e4] sm:$0xf]
        %v2036 = vld [vmem:[#allocation16 + $0x434] sm:$0xf]
        %v2037 = vld [vmem:[#allocation16 + $0x484] sm:$0xf]
        %v2038 = vld [vmem:[#allocation16 + $0x4d4] sm:$0xf]
        %v2039 = vld [vmem:[%s10 + $0xf] sm:$0x1]
        %v2041 = vlaneseq
        %v2042 = vshrl.u32 %v2041, 7
        %v2043 = vsub.s32 0, %v2042
        %v2044 = vrot.slane %v2039, %v2043
        %v2062 = vunpack.c.l.b16 %v2023
        %v2063 = vunpack.c.l.b16 %v2024
        %v2064 = vunpack.c.l.b16 %v2025
        %v2065 = vunpack.c.l.b16 %v2026
        %v2066 = vunpack.c.l.b16 %v2027
        %v2067 = vunpack.c.l.b16 %v2028
        %v2068 = vunpack.c.l.b16 %v2029
        %v2069 = vunpack.c.l.b16 %v2030
        %v2070 = vunpack.c.l.b16 %v2031
        %v2071 = vunpack.c.l.b16 %v2032
        %v2072 = vunpack.c.l.b16 %v2033
        %v2073 = vunpack.c.l.b16 %v2034
        %v2074 = vunpack.c.l.b16 %v2035
        %v2075 = vunpack.c.l.b16 %v2036
        %v2076 = vunpack.c.l.b16 %v2037
        %v2077 = vunpack.c.l.b16 %v2038
        %v2078 = vpack.c.b16 %v2063, %v2062
        %v2079 = vpack.c.b16 %v2065, %v2064
        %v2080 = vpack.c.b16 %v2067, %v2066
        %v2081 = vpack.c.b16 %v2069, %v2068
        %v2082 = vpack.c.b16 %v2071, %v2070
        %v2083 = vpack.c.b16 %v2073, %v2072
        %v2084 = vpack.c.b16 %v2075, %v2074
        %v2085 = vpack.c.b16 %v2077, %v2076
        %2094 = vmatprep.subr.bf16.mxu0 0
        %2095 = vmatpush1.bf16.msra.mxu0 %v2078
        %2096 = vmatprep.subr.bf16.mxu0 0
        %2097 = vmatpush1.bf16.msra.mxu0 %v2079
        %2098 = vmatprep.subr.bf16.mxu0 0
        %2099 = vmatpush1.bf16.msra.mxu0 %v2080
        %2100 = vmatprep.subr.bf16.mxu0 0
        %2101 = vmatpush1.bf16.msra.mxu0 %v2081
        %2102 = vmatprep.subr.bf16.mxu0 0
        %2103 = vmatpush1.bf16.msra.mxu0 %v2082
        %2104 = vmatprep.subr.bf16.mxu0 0
        %2105 = vmatpush1.bf16.msra.mxu0 %v2083
        %2106 = vmatprep.subr.bf16.mxu0 0
        %2107 = vmatpush1.bf16.msra.mxu0 %v2084
        %2108 = vmatprep.subr.bf16.mxu0 0
        %2109 = vmatpush1.bf16.msra.mxu0 %v2085
        %2110 = vmatprep.subr.bf16.mxu0 0
        %2111 = vmatpush1.bf16.msra.mxu0 0
        %2112 = vmatprep.subr.bf16.mxu0 0
        %2113 = vmatpush1.bf16.msra.mxu0 0
        %2114 = vmatprep.subr.bf16.mxu0 0
        %2115 = vmatpush1.bf16.msra.mxu0 0
        %2116 = vmatprep.subr.bf16.mxu0 0
        %2117 = vmatpush1.bf16.msra.mxu0 0
        %2118 = vmatprep.subr.bf16.mxu0 0
        %2119 = vmatpush1.bf16.msra.mxu0 0
        %2120 = vmatprep.subr.bf16.mxu0 0
        %2121 = vmatpush1.bf16.msra.mxu0 0
        %2122 = vmatprep.subr.bf16.mxu0 0
        %2123 = vmatpush1.bf16.msra.mxu0 0
        %2124 = vmatprep.subr.bf16.mxu0 0
        %2125 = vmatpush1.bf16.msra.mxu0 0
        %2126 = vmatprep.mubr.bf16.mxu0 0
        %2127 = vmatmul.mubr.bf16.gmra.mrb[0].mxu0 %v2022
        %v2128 = vpop.f32.mrb[0].mxu0
        %v2129 = vadd.f32 %v2044, %v2128
        %v2130 = vpop.f32.mrb[0].mxu0
        %v2131 = vpop.f32.mrb[0].mxu0
        %v2132 = vpop.f32.mrb[0].mxu0
        %2133 = vdwg.mxu0
        %v2134 = vadd.f32 %v2129, %v1501
        %2135 = vadd.xlane.f32.xlu0 %v2134
        %v2136 = vpop.xlane.xlu0 %2135
        %v2137 = vmul.f32 %v2136, 0.03125
        %v2138 = vsub.f32 %v2134, %v2137
        %v2139 = vmul.f32 %v2138, %v2138
        %v2140 = vmul.f32 %v2139, %v613
        %2141 = vadd.xlane.f32.xlu0 %v2140
        %v2142 = vpop.xlane.xlu0 %2141
        %v2143 = vmul.f32 %v2142, 0.03125
        %v2144 = vadd.f32 %v2143, 1e-05
        %v2145 = vrsqrt.pop %v2144
        %v2146 = vmul.f32 %v2138, %v2145
        %v2147 = vld [vmem:[%s10 + $0x10] sm:$0x1]
        %v2149 = vlaneseq
        %v2150 = vshrl.u32 %v2149, 7
        %v2151 = vsub.s32 0, %v2150
        %v2152 = vrot.slane %v2147, %v2151
        %v2154 = vmul.f32 %v2146, %v2152
        %v2155 = vld [vmem:[%s10 + $0x11] sm:$0x1]
        %v2157 = vlaneseq
        %v2158 = vshrl.u32 %v2157, 7
        %v2159 = vsub.s32 0, %v2158
        %v2160 = vrot.slane %v2155, %v2159
        %v2162 = vadd.f32 %v2154, %v2160
        %v2163 = vpack.c.bf16 %v2162, %v2162
        %v2164 = vld [vmem:[#allocation16 + $0x28] sm:$0xf]
        %v2165 = vld [vmem:[#allocation16 + $0x78] sm:$0xf]
        %v2166 = vld [vmem:[#allocation16 + $0xc8] sm:$0xf]
        %v2167 = vld [vmem:[#allocation16 + $0x118] sm:$0xf]
        %v2168 = vld [vmem:[#allocation16 + $0x168] sm:$0xf]
        %v2169 = vld [vmem:[#allocation16 + $0x1b8] sm:$0xf]
        %v2170 = vld [vmem:[#allocation16 + $0x208] sm:$0xf]
        %v2171 = vld [vmem:[#allocation16 + $0x258] sm:$0xf]
        %v2172 = vld [vmem:[#allocation16 + $0x2a8] sm:$0xf]
        %v2173 = vld [vmem:[#allocation16 + $0x2f8] sm:$0xf]
        %v2174 = vld [vmem:[#allocation16 + $0x348] sm:$0xf]
        %v2175 = vld [vmem:[#allocation16 + $0x398] sm:$0xf]
        %v2176 = vld [vmem:[#allocation16 + $0x3e8] sm:$0xf]
        %v2177 = vld [vmem:[#allocation16 + $0x438] sm:$0xf]
        %v2178 = vld [vmem:[#allocation16 + $0x488] sm:$0xf]
        %v2179 = vld [vmem:[#allocation16 + $0x4d8] sm:$0xf]
        %v2180 = vld [vmem:[%s10 + $0x12] sm:$0x1]
        %v2182 = vlaneseq
        %v2183 = vshrl.u32 %v2182, 7
        %v2184 = vsub.s32 0, %v2183
        %v2185 = vrot.slane %v2180, %v2184
        %v2203 = vunpack.c.l.b16 %v2164
        %v2204 = vunpack.c.l.b16 %v2165
        %v2205 = vunpack.c.l.b16 %v2166
        %v2206 = vunpack.c.l.b16 %v2167
        %v2207 = vunpack.c.l.b16 %v2168
        %v2208 = vunpack.c.l.b16 %v2169
        %v2209 = vunpack.c.l.b16 %v2170
        %v2210 = vunpack.c.l.b16 %v2171
        %v2211 = vunpack.c.l.b16 %v2172
        %v2212 = vunpack.c.l.b16 %v2173
        %v2213 = vunpack.c.l.b16 %v2174
        %v2214 = vunpack.c.l.b16 %v2175
        %v2215 = vunpack.c.l.b16 %v2176
        %v2216 = vunpack.c.l.b16 %v2177
        %v2217 = vunpack.c.l.b16 %v2178
        %v2218 = vunpack.c.l.b16 %v2179
        %v2219 = vpack.c.b16 %v2204, %v2203
        %v2220 = vpack.c.b16 %v2206, %v2205
        %v2221 = vpack.c.b16 %v2208, %v2207
        %v2222 = vpack.c.b16 %v2210, %v2209
        %v2223 = vpack.c.b16 %v2212, %v2211
        %v2224 = vpack.c.b16 %v2214, %v2213
        %v2225 = vpack.c.b16 %v2216, %v2215
        %v2226 = vpack.c.b16 %v2218, %v2217
        %2235 = vmatprep.subr.bf16.mxu0 0
        %2236 = vmatpush1.bf16.msra.mxu0 %v2219
        %2237 = vmatprep.subr.bf16.mxu0 0
        %2238 = vmatpush1.bf16.msra.mxu0 %v2220
        %2239 = vmatprep.subr.bf16.mxu0 0
        %2240 = vmatpush1.bf16.msra.mxu0 %v2221
        %2241 = vmatprep.subr.bf16.mxu0 0
        %2242 = vmatpush1.bf16.msra.mxu0 %v2222
        %2243 = vmatprep.subr.bf16.mxu0 0
        %2244 = vmatpush1.bf16.msra.mxu0 %v2223
        %2245 = vmatprep.subr.bf16.mxu0 0
        %2246 = vmatpush1.bf16.msra.mxu0 %v2224
        %2247 = vmatprep.subr.bf16.mxu0 0
        %2248 = vmatpush1.bf16.msra.mxu0 %v2225
        %2249 = vmatprep.subr.bf16.mxu0 0
        %2250 = vmatpush1.bf16.msra.mxu0 %v2226
        %2251 = vmatprep.subr.bf16.mxu0 0
        %2252 = vmatpush1.bf16.msra.mxu0 0
        %2253 = vmatprep.subr.bf16.mxu0 0
        %2254 = vmatpush1.bf16.msra.mxu0 0
        %2255 = vmatprep.subr.bf16.mxu0 0
        %2256 = vmatpush1.bf16.msra.mxu0 0
        %2257 = vmatprep.subr.bf16.mxu0 0
        %2258 = vmatpush1.bf16.msra.mxu0 0
        %2259 = vmatprep.subr.bf16.mxu0 0
        %2260 = vmatpush1.bf16.msra.mxu0 0
        %2261 = vmatprep.subr.bf16.mxu0 0
        %2262 = vmatpush1.bf16.msra.mxu0 0
        %2263 = vmatprep.subr.bf16.mxu0 0
        %2264 = vmatpush1.bf16.msra.mxu0 0
        %2265 = vmatprep.subr.bf16.mxu0 0
        %2266 = vmatpush1.bf16.msra.mxu0 0
        %2267 = vmatprep.mubr.bf16.mxu0 0
        %2268 = vmatmul.mubr.bf16.gmra.mrb[0].mxu0 %v2163
        %v2269 = vpop.f32.mrb[0].mxu0
        %v2270 = vadd.f32 %v2185, %v2269
        %v2271 = vpop.f32.mrb[0].mxu0
        %v2272 = vpop.f32.mrb[0].mxu0
        %v2273 = vpop.f32.mrb[0].mxu0
        %2274 = vdwg.mxu0
        %v2275 = vmul.f32 %v2270, 0.5
        %v2276 = vmul.f32 %v2270, 0.70710677
        %v2277 = verf.f32.pop %v2276
        %v2278 = vadd.f32 %v2277, 1.0
        %v2279 = vmul.f32 %v2275, %v2278
        %v2280 = vpack.c.bf16 %v2279, %v2279
        %v2281 = vld [vmem:[#allocation16 + $0x2c] sm:$0xf]
        %v2282 = vld [vmem:[#allocation16 + $0x7c] sm:$0xf]
        %v2283 = vld [vmem:[#allocation16 + $0xcc] sm:$0xf]
        %v2284 = vld [vmem:[#allocation16 + $0x11c] sm:$0xf]
        %v2285 = vld [vmem:[#allocation16 + $0x16c] sm:$0xf]
        %v2286 = vld [vmem:[#allocation16 + $0x1bc] sm:$0xf]
        %v2287 = vld [vmem:[#allocation16 + $0x20c] sm:$0xf]
        %v2288 = vld [vmem:[#allocation16 + $0x25c] sm:$0xf]
        %v2289 = vld [vmem:[#allocation16 + $0x2ac] sm:$0xf]
        %v2290 = vld [vmem:[#allocation16 + $0x2fc] sm:$0xf]
        %v2291 = vld [vmem:[#allocation16 + $0x34c] sm:$0xf]
        %v2292 = vld [vmem:[#allocation16 + $0x39c] sm:$0xf]
        %v2293 = vld [vmem:[#allocation16 + $0x3ec] sm:$0xf]
        %v2294 = vld [vmem:[#allocation16 + $0x43c] sm:$0xf]
        %v2295 = vld [vmem:[#allocation16 + $0x48c] sm:$0xf]
        %v2296 = vld [vmem:[#allocation16 + $0x4dc] sm:$0xf]
        %v2297 = vld [vmem:[%s10 + $0x13] sm:$0x1]
        %v2299 = vlaneseq
        %v2300 = vshrl.u32 %v2299, 7
        %v2301 = vsub.s32 0, %v2300
        %v2302 = vrot.slane %v2297, %v2301
        %v2320 = vunpack.c.l.b16 %v2281
        %v2321 = vunpack.c.l.b16 %v2282
        %v2322 = vunpack.c.l.b16 %v2283
        %v2323 = vunpack.c.l.b16 %v2284
        %v2324 = vunpack.c.l.b16 %v2285
        %v2325 = vunpack.c.l.b16 %v2286
        %v2326 = vunpack.c.l.b16 %v2287
        %v2327 = vunpack.c.l.b16 %v2288
        %v2328 = vunpack.c.l.b16 %v2289
        %v2329 = vunpack.c.l.b16 %v2290
        %v2330 = vunpack.c.l.b16 %v2291
        %v2331 = vunpack.c.l.b16 %v2292
        %v2332 = vunpack.c.l.b16 %v2293
        %v2333 = vunpack.c.l.b16 %v2294
        %v2334 = vunpack.c.l.b16 %v2295
        %v2335 = vunpack.c.l.b16 %v2296
        %v2336 = vpack.c.b16 %v2321, %v2320
        %v2337 = vpack.c.b16 %v2323, %v2322
        %v2338 = vpack.c.b16 %v2325, %v2324
        %v2339 = vpack.c.b16 %v2327, %v2326
        %v2340 = vpack.c.b16 %v2329, %v2328
        %v2341 = vpack.c.b16 %v2331, %v2330
        %v2342 = vpack.c.b16 %v2333, %v2332
        %v2343 = vpack.c.b16 %v2335, %v2334
        %2352 = vmatprep.subr.bf16.mxu0 0
        %2353 = vmatpush1.bf16.msra.mxu0 %v2336
        %2354 = vmatprep.subr.bf16.mxu0 0
        %2355 = vmatpush1.bf16.msra.mxu0 %v2337
        %2356 = vmatprep.subr.bf16.mxu0 0
        %2357 = vmatpush1.bf16.msra.mxu0 %v2338
        %2358 = vmatprep.subr.bf16.mxu0 0
        %2359 = vmatpush1.bf16.msra.mxu0 %v2339
        %2360 = vmatprep.subr.bf16.mxu0 0
        %2361 = vmatpush1.bf16.msra.mxu0 %v2340
        %2362 = vmatprep.subr.bf16.mxu0 0
        %2363 = vmatpush1.bf16.msra.mxu0 %v2341
        %2364 = vmatprep.subr.bf16.mxu0 0
        %2365 = vmatpush1.bf16.msra.mxu0 %v2342
        %2366 = vmatprep.subr.bf16.mxu0 0
        %2367 = vmatpush1.bf16.msra.mxu0 %v2343
        %2368 = vmatprep.subr.bf16.mxu0 0
        %2369 = vmatpush1.bf16.msra.mxu0 0
        %2370 = vmatprep.subr.bf16.mxu0 0
        %2371 = vmatpush1.bf16.msra.mxu0 0
        %2372 = vmatprep.subr.bf16.mxu0 0
        %2373 = vmatpush1.bf16.msra.mxu0 0
        %2374 = vmatprep.subr.bf16.mxu0 0
        %2375 = vmatpush1.bf16.msra.mxu0 0
        %2376 = vmatprep.subr.bf16.mxu0 0
        %2377 = vmatpush1.bf16.msra.mxu0 0
        %2378 = vmatprep.subr.bf16.mxu0 0
        %2379 = vmatpush1.bf16.msra.mxu0 0
        %2380 = vmatprep.subr.bf16.mxu0 0
        %2381 = vmatpush1.bf16.msra.mxu0 0
        %2382 = vmatprep.subr.bf16.mxu0 0
        %2383 = vmatpush1.bf16.msra.mxu0 0
        %2384 = vmatprep.mubr.bf16.mxu0 0
        %2385 = vmatmul.mubr.bf16.gmra.mrb[0].mxu0 %v2280
        %v2386 = vpop.f32.mrb[0].mxu0
        %v2387 = vadd.f32 %v2302, %v2386
        %v2388 = vpop.f32.mrb[0].mxu0
        %v2389 = vpop.f32.mrb[0].mxu0
        %v2390 = vpop.f32.mrb[0].mxu0
        %2391 = vdwg.mxu0
        %v2392 = vadd.f32 %v2387, %v2134
        %2393 = vadd.xlane.f32.xlu0 %v2392
        %v2394 = vpop.xlane.xlu0 %2393
        %v2395 = vmul.f32 %v2394, 0.03125
        %v2396 = vsub.f32 %v2392, %v2395
        %v2397 = vmul.f32 %v2396, %v2396
        %v2398 = vmul.f32 %v2397, %v613
        %2399 = vadd.xlane.f32.xlu0 %v2398
        %v2400 = vpop.xlane.xlu0 %2399
        %v2401 = vmul.f32 %v2400, 0.03125
        %v2402 = vadd.f32 %v2401, 1e-05
        %v2403 = vrsqrt.pop %v2402
        %v2404 = vmul.f32 %v2396, %v2403
        %v2405 = vld [vmem:[%s10 + $0x14] sm:$0x1]
        %v2407 = vlaneseq
        %v2408 = vshrl.u32 %v2407, 7
        %v2409 = vsub.s32 0, %v2408
        %v2410 = vrot.slane %v2405, %v2409
        %v2412 = vmul.f32 %v2404, %v2410
        %v2413 = vld [vmem:[%s10 + $0x15] sm:$0x1]
        %v2415 = vlaneseq
        %v2416 = vshrl.u32 %v2415, 7
        %v2417 = vsub.s32 0, %v2416
        %v2418 = vrot.slane %v2413, %v2417
        %v2420 = vadd.f32 %v2412, %v2418
        %v2421 = vpack.c.bf16 %v2420, %v2420
        %v2422 = vld [vmem:[#allocation16 + $0x30] sm:$0xf]
        %v2423 = vld [vmem:[#allocation16 + $0x80] sm:$0xf]
        %v2424 = vld [vmem:[#allocation16 + $0xd0] sm:$0xf]
        %v2425 = vld [vmem:[#allocation16 + $0x120] sm:$0xf]
        %v2426 = vld [vmem:[#allocation16 + $0x170] sm:$0xf]
        %v2427 = vld [vmem:[#allocation16 + $0x1c0] sm:$0xf]
        %v2428 = vld [vmem:[#allocation16 + $0x210] sm:$0xf]
        %v2429 = vld [vmem:[#allocation16 + $0x260] sm:$0xf]
        %v2430 = vld [vmem:[#allocation16 + $0x2b0] sm:$0xf]
        %v2431 = vld [vmem:[#allocation16 + $0x300] sm:$0xf]
        %v2432 = vld [vmem:[#allocation16 + $0x350] sm:$0xf]
        %v2433 = vld [vmem:[#allocation16 + $0x3a0] sm:$0xf]
        %v2434 = vld [vmem:[#allocation16 + $0x3f0] sm:$0xf]
        %v2435 = vld [vmem:[#allocation16 + $0x440] sm:$0xf]
        %v2436 = vld [vmem:[#allocation16 + $0x490] sm:$0xf]
        %v2437 = vld [vmem:[#allocation16 + $0x4e0] sm:$0xf]
        %v2438 = vld [vmem:[%s10 + $0x16] sm:$0x1]
        %v2440 = vlaneseq
        %v2441 = vshrl.u32 %v2440, 7
        %v2442 = vsub.s32 0, %v2441
        %v2443 = vrot.slane %v2438, %v2442
        %v2461 = vunpack.c.l.b16 %v2422
        %v2462 = vunpack.c.l.b16 %v2423
        %v2463 = vunpack.c.l.b16 %v2424
        %v2464 = vunpack.c.l.b16 %v2425
        %v2465 = vunpack.c.l.b16 %v2426
        %v2466 = vunpack.c.l.b16 %v2427
        %v2467 = vunpack.c.l.b16 %v2428
        %v2468 = vunpack.c.l.b16 %v2429
        %v2469 = vunpack.c.l.b16 %v2430
        %v2470 = vunpack.c.l.b16 %v2431
        %v2471 = vunpack.c.l.b16 %v2432
        %v2472 = vunpack.c.l.b16 %v2433
        %v2473 = vunpack.c.l.b16 %v2434
        %v2474 = vunpack.c.l.b16 %v2435
        %v2475 = vunpack.c.l.b16 %v2436
        %v2476 = vunpack.c.l.b16 %v2437
        %v2477 = vpack.c.b16 %v2462, %v2461
        %v2478 = vpack.c.b16 %v2464, %v2463
        %v2479 = vpack.c.b16 %v2466, %v2465
        %v2480 = vpack.c.b16 %v2468, %v2467
        %v2481 = vpack.c.b16 %v2470, %v2469
        %v2482 = vpack.c.b16 %v2472, %v2471
        %v2483 = vpack.c.b16 %v2474, %v2473
        %v2484 = vpack.c.b16 %v2476, %v2475
        %2493 = vmatprep.subr.bf16.mxu0 0
        %2494 = vmatpush1.bf16.msra.mxu0 %v2477
        %2495 = vmatprep.subr.bf16.mxu0 0
        %2496 = vmatpush1.bf16.msra.mxu0 %v2478
        %2497 = vmatprep.subr.bf16.mxu0 0
        %2498 = vmatpush1.bf16.msra.mxu0 %v2479
        %2499 = vmatprep.subr.bf16.mxu0 0
        %2500 = vmatpush1.bf16.msra.mxu0 %v2480
        %2501 = vmatprep.subr.bf16.mxu0 0
        %2502 = vmatpush1.bf16.msra.mxu0 %v2481
        %2503 = vmatprep.subr.bf16.mxu0 0
        %2504 = vmatpush1.bf16.msra.mxu0 %v2482
        %2505 = vmatprep.subr.bf16.mxu0 0
        %2506 = vmatpush1.bf16.msra.mxu0 %v2483
        %2507 = vmatprep.subr.bf16.mxu0 0
        %2508 = vmatpush1.bf16.msra.mxu0 %v2484
        %2509 = vmatprep.subr.bf16.mxu0 0
        %2510 = vmatpush1.bf16.msra.mxu0 0
        %2511 = vmatprep.subr.bf16.mxu0 0
        %2512 = vmatpush1.bf16.msra.mxu0 0
        %2513 = vmatprep.subr.bf16.mxu0 0
        %2514 = vmatpush1.bf16.msra.mxu0 0
        %2515 = vmatprep.subr.bf16.mxu0 0
        %2516 = vmatpush1.bf16.msra.mxu0 0
        %2517 = vmatprep.subr.bf16.mxu0 0
        %2518 = vmatpush1.bf16.msra.mxu0 0
        %2519 = vmatprep.subr.bf16.mxu0 0
        %2520 = vmatpush1.bf16.msra.mxu0 0
        %2521 = vmatprep.subr.bf16.mxu0 0
        %2522 = vmatpush1.bf16.msra.mxu0 0
        %2523 = vmatprep.subr.bf16.mxu0 0
        %2524 = vmatpush1.bf16.msra.mxu0 0
        %2525 = vmatprep.mubr.bf16.mxu0 0
        %2526 = vmatmul.mubr.bf16.gmra.mrb[0].mxu0 %v2421
        %v2527 = vpop.f32.mrb[0].mxu0
        %v2528 = vadd.f32 %v2443, %v2527
        %v2529 = vpop.f32.mrb[0].mxu0
        %v2530 = vpop.f32.mrb[0].mxu0
        %v2531 = vpop.f32.mrb[0].mxu0
        %2532 = vdwg.mxu0
        %v2533 = vpack.c.bf16 %v584, %v584
        %v2534 = vld [vmem:[#allocation16 + $0x34] sm:$0xff]
        %v2535 = vld [vmem:[#allocation16 + $0x84] sm:$0xff]
        %v2536 = vld [vmem:[#allocation16 + $0xd4] sm:$0xff]
        %v2537 = vld [vmem:[#allocation16 + $0x124] sm:$0xff]
        %v2538 = vld [vmem:[#allocation16 + $0x174] sm:$0xff]
        %v2539 = vld [vmem:[#allocation16 + $0x1c4] sm:$0xff]
        %v2540 = vld [vmem:[#allocation16 + $0x214] sm:$0xff]
        %v2541 = vld [vmem:[#allocation16 + $0x264] sm:$0xff]
        %v2542 = vld [vmem:[#allocation16 + $0x2b4] sm:$0xff]
        %v2543 = vld [vmem:[#allocation16 + $0x304] sm:$0xff]
        %v2544 = vld [vmem:[#allocation16 + $0x354] sm:$0xff]
        %v2545 = vld [vmem:[#allocation16 + $0x3a4] sm:$0xff]
        %v2546 = vld [vmem:[#allocation16 + $0x3f4] sm:$0xff]
        %v2547 = vld [vmem:[#allocation16 + $0x444] sm:$0xff]
        %v2548 = vld [vmem:[#allocation16 + $0x494] sm:$0xff]
        %v2549 = vld [vmem:[#allocation16 + $0x4e4] sm:$0xff]
        %v2550 = vld [vmem:[%s10 + $0x17] sm:$0x3]
        %v2552 = vlaneseq
        %v2553 = vshrl.u32 %v2552, 7
        %v2554 = vsub.s32 0, %v2553
        %v2555 = vrot.slane %v2550, %v2554
        %v2556 = vlaneseq
        %v2557 = vshrl.u32 %v2556, 7
        %v2558 = vsub.s32 1, %v2557
        %v2559 = vrot.slane %v2550, %v2558
        %v2578 = vunpack.c.l.b16 %v2534
        %v2579 = vunpack.c.h.b16 %v2534
        %v2580 = vunpack.c.l.b16 %v2535
        %v2581 = vunpack.c.h.b16 %v2535
        %v2582 = vunpack.c.l.b16 %v2536
        %v2583 = vunpack.c.h.b16 %v2536
        %v2584 = vunpack.c.l.b16 %v2537
        %v2585 = vunpack.c.h.b16 %v2537
        %v2586 = vunpack.c.l.b16 %v2538
        %v2587 = vunpack.c.h.b16 %v2538
        %v2588 = vunpack.c.l.b16 %v2539
        %v2589 = vunpack.c.h.b16 %v2539
        %v2590 = vunpack.c.l.b16 %v2540
        %v2591 = vunpack.c.h.b16 %v2540
        %v2592 = vunpack.c.l.b16 %v2541
        %v2593 = vunpack.c.h.b16 %v2541
        %v2594 = vunpack.c.l.b16 %v2542
        %v2595 = vunpack.c.h.b16 %v2542
        %v2596 = vunpack.c.l.b16 %v2543
        %v2597 = vunpack.c.h.b16 %v2543
        %v2598 = vunpack.c.l.b16 %v2544
        %v2599 = vunpack.c.h.b16 %v2544
        %v2600 = vunpack.c.l.b16 %v2545
        %v2601 = vunpack.c.h.b16 %v2545
        %v2602 = vunpack.c.l.b16 %v2546
        %v2603 = vunpack.c.h.b16 %v2546
        %v2604 = vunpack.c.l.b16 %v2547
        %v2605 = vunpack.c.h.b16 %v2547
        %v2606 = vunpack.c.l.b16 %v2548
        %v2607 = vunpack.c.h.b16 %v2548
        %v2608 = vunpack.c.l.b16 %v2549
        %v2609 = vunpack.c.h.b16 %v2549
        %v2610 = vpack.c.b16 %v2580, %v2578
        %v2611 = vpack.c.b16 %v2581, %v2579
        %v2612 = vpack.c.b16 %v2584, %v2582
        %v2613 = vpack.c.b16 %v2585, %v2583
        %v2614 = vpack.c.b16 %v2588, %v2586
        %v2615 = vpack.c.b16 %v2589, %v2587
        %v2616 = vpack.c.b16 %v2592, %v2590
        %v2617 = vpack.c.b16 %v2593, %v2591
        %v2618 = vpack.c.b16 %v2596, %v2594
        %v2619 = vpack.c.b16 %v2597, %v2595
        %v2620 = vpack.c.b16 %v2600, %v2598
        %v2621 = vpack.c.b16 %v2601, %v2599
        %v2622 = vpack.c.b16 %v2604, %v2602
        %v2623 = vpack.c.b16 %v2605, %v2603
        %v2624 = vpack.c.b16 %v2608, %v2606
        %v2625 = vpack.c.b16 %v2609, %v2607
        %2642 = vmatprep.subr.bf16.mxu0 %v2611
        %2643 = vmatpush1.bf16.msra.mxu0 %v2610
        %2644 = vmatprep.subr.bf16.mxu0 %v2613
        %2645 = vmatpush1.bf16.msra.mxu0 %v2612
        %2646 = vmatprep.subr.bf16.mxu0 %v2615
        %2647 = vmatpush1.bf16.msra.mxu0 %v2614
        %2648 = vmatprep.subr.bf16.mxu0 %v2617
        %2649 = vmatpush1.bf16.msra.mxu0 %v2616
        %2650 = vmatprep.subr.bf16.mxu0 %v2619
        %2651 = vmatpush1.bf16.msra.mxu0 %v2618
        %2652 = vmatprep.subr.bf16.mxu0 %v2621
        %2653 = vmatpush1.bf16.msra.mxu0 %v2620
        %2654 = vmatprep.subr.bf16.mxu0 %v2623
        %2655 = vmatpush1.bf16.msra.mxu0 %v2622
        %2656 = vmatprep.subr.bf16.mxu0 %v2625
        %2657 = vmatpush1.bf16.msra.mxu0 %v2624
        %2658 = vmatprep.subr.bf16.mxu0 0
        %2659 = vmatpush1.bf16.msra.mxu0 0
        %2660 = vmatprep.subr.bf16.mxu0 0
        %2661 = vmatpush1.bf16.msra.mxu0 0
        %2662 = vmatprep.subr.bf16.mxu0 0
        %2663 = vmatpush1.bf16.msra.mxu0 0
        %2664 = vmatprep.subr.bf16.mxu0 0
        %2665 = vmatpush1.bf16.msra.mxu0 0
        %2666 = vmatprep.subr.bf16.mxu0 0
        %2667 = vmatpush1.bf16.msra.mxu0 0
        %2668 = vmatprep.subr.bf16.mxu0 0
        %2669 = vmatpush1.bf16.msra.mxu0 0
        %2670 = vmatprep.subr.bf16.mxu0 0
        %2671 = vmatpush1.bf16.msra.mxu0 0
        %2672 = vmatprep.subr.bf16.mxu0 0
        %2673 = vmatpush1.bf16.msra.mxu0 0
        %2674 = vmatprep.mubr.bf16.mxu0 0
        %2675 = vmatmul.mubr.bf16.gmra.mrb[0].mxu0 %v2533
        %v2676 = vpop.f32.mrb[0].mxu0
        %v2677 = vadd.f32 %v2555, %v2676
        %v2678 = vpop.f32.mrb[0].mxu0
        %v2679 = vadd.f32 %v2559, %v2678
        %v2680 = vpop.f32.mrb[0].mxu0
        %v2681 = vpop.f32.mrb[0].mxu0
        %2682 = vdwg.mxu0
        %v2683 = vmul.f32 %v2677, %v592
        %v2684 = vmul.f32 %v2677, %v593
        %v2685 = vmul.f32 %v2677, %v594
        %v2686 = vmul.f32 %v2677, %v595
        %v2687 = vmul.f32 %v2679, %v592
        %v2688 = vmul.f32 %v2679, %v593
        %v2689 = vmul.f32 %v2679, %v594
        %v2690 = vmul.f32 %v2679, %v595
        %v2691 = vmul.f32 %v2528, 0.35355338
        %2692 = vmatprep.subr.mxu0 0.0
        %2693 = vmatpush1.xpose.msra.mxu0 %v2683
        %2694 = vmatprep.subr.mxu0 0.0
        %2695 = vmatpush1.xpose.msra.mxu0 %v2684
        %2696 = vmatprep.subr.mxu0 0.0
        %2697 = vmatpush1.xpose.msra.mxu0 %v2685
        %2698 = vmatprep.subr.mxu0 0.0
        %2699 = vmatpush1.xpose.msra.mxu0 %v2686
        %2700 = vmatprep.subr.mxu0 0.0
        %2701 = vmatpush1.xpose.msra.mxu0 0.0
        %2702 = vmatprep.subr.mxu0 0.0
        %2703 = vmatpush1.xpose.msra.mxu0 0.0
        %2704 = vmatprep.subr.mxu0 0.0
        %2705 = vmatpush1.xpose.msra.mxu0 0.0
        %2706 = vmatprep.subr.mxu0 0.0
        %2707 = vmatpush1.xpose.msra.mxu0 0.0
        %2708 = vmatprep.subr.mxu0 0.0
        %2709 = vmatpush1.xpose.msra.mxu0 0.0
        %2710 = vmatprep.subr.mxu0 0.0
        %2711 = vmatpush1.xpose.msra.mxu0 0.0
        %2712 = vmatprep.subr.mxu0 0.0
        %2713 = vmatpush1.xpose.msra.mxu0 0.0
        %2714 = vmatprep.subr.mxu0 0.0
        %2715 = vmatpush1.xpose.msra.mxu0 0.0
        %2716 = vmatprep.subr.mxu0 0.0
        %2717 = vmatpush1.xpose.msra.mxu0 0.0
        %2718 = vmatprep.subr.mxu0 0.0
        %2719 = vmatpush1.xpose.msra.mxu0 0.0
        %2720 = vmatprep.subr.mxu0 0.0
        %2721 = vmatpush1.xpose.msra.mxu0 0.0
        %2722 = vmatprep.subr.mxu0 0.0
        %2723 = vmatpush1.xpose.msra.mxu0 0.0
        %2724 = vmatprep.subr.mxu0 0.0
        %2725 = vmatpush1.xpose.msra.mxu0 0.0
        %2726 = vmatprep.subr.mxu0 0.0
        %2727 = vmatpush1.xpose.msra.mxu0 0.0
        %2728 = vmatprep.subr.mxu0 0.0
        %2729 = vmatpush1.xpose.msra.mxu0 0.0
        %2730 = vmatprep.subr.mxu0 0.0
        %2731 = vmatpush1.xpose.msra.mxu0 0.0
        %2732 = vmatprep.subr.mxu0 0.0
        %2733 = vmatpush1.xpose.msra.mxu0 0.0
        %2734 = vmatprep.subr.mxu0 0.0
        %2735 = vmatpush1.xpose.msra.mxu0 0.0
        %2736 = vmatprep.subr.mxu0 0.0
        %2737 = vmatpush1.xpose.msra.mxu0 0.0
        %2738 = vmatprep.subr.mxu0 0.0
        %2739 = vmatpush1.xpose.msra.mxu0 0.0
        %2740 = vmatprep.subr.mxu0 0.0
        %2741 = vmatpush1.xpose.msra.mxu0 0.0
        %2742 = vmatprep.subr.mxu0 0.0
        %2743 = vmatpush1.xpose.msra.mxu0 0.0
        %2744 = vmatprep.subr.mxu0 0.0
        %2745 = vmatpush1.xpose.msra.mxu0 0.0
        %2746 = vmatprep.subr.mxu0 0.0
        %2747 = vmatpush1.xpose.msra.mxu0 0.0
        %2748 = vmatprep.subr.mxu0 0.0
        %2749 = vmatpush1.xpose.msra.mxu0 0.0
        %2750 = vmatprep.subr.mxu0 0.0
        %2751 = vmatpush1.xpose.msra.mxu0 0.0
        %2752 = vmatprep.subr.mxu0 0.0
        %2753 = vmatpush1.xpose.msra.mxu0 0.0
        %2754 = vmatprep.subr.mxu0 0.0
        %2755 = vmatpush1.xpose.msra.mxu0 0.0
        %2756 = vmatprep.mubr.f32.mxu0 0.0
        %2757 = vmatmul.mubr.f32.gmra.mrb[0].mxu0 %v2691
        %v2758 = vpop.f32.mrb[0].mxu0
        %v2759 = vadd.f32 %v586, %v2758
        %v2760 = vpop.f32.mrb[0].mxu0
        %2761 = vdwg.mxu0
        %v2762 = vsel %vm976, %v2759, -inf
        %2763 = vmax.xlane.f32.xlu0 %v2762
        %v2764 = vpop.xlane.xlu0 %2763
        %v2765 = vsub.f32 %v2759, %v2764
        %v2766 = vmul.f32 %v2765, 1.442695
        %v2767 = vpow.pop %v2766
        %v2769 = vsel %vm976, %v2767, 0
        %2771 = vmatprep.subr.mxu0 0.0
        %2772 = vmatpush1.msra.mxu0 %v600
        %2773 = vmatprep.subr.mxu0 0.0
        %2774 = vmatpush1.msra.mxu0 %v601
        %2775 = vmatprep.subr.mxu0 0.0
        %2776 = vmatpush1.msra.mxu0 %v602
        %2777 = vmatprep.subr.mxu0 0.0
        %2778 = vmatpush1.msra.mxu0 %v603
        %2779 = vmatprep.subr.mxu0 0.0
        %2780 = vmatpush1.msra.mxu0 0.0
        %2781 = vmatprep.subr.mxu0 0.0
        %2782 = vmatpush1.msra.mxu0 0.0
        %2783 = vmatprep.subr.mxu0 0.0
        %2784 = vmatpush1.msra.mxu0 0.0
        %2785 = vmatprep.subr.mxu0 0.0
        %2786 = vmatpush1.msra.mxu0 0.0
        %2787 = vmatprep.subr.mxu0 0.0
        %2788 = vmatpush1.msra.mxu0 0.0
        %2789 = vmatprep.subr.mxu0 0.0
        %2790 = vmatpush1.msra.mxu0 0.0
        %2791 = vmatprep.subr.mxu0 0.0
        %2792 = vmatpush1.msra.mxu0 0.0
        %2793 = vmatprep.subr.mxu0 0.0
        %2794 = vmatpush1.msra.mxu0 0.0
        %2795 = vmatprep.subr.mxu0 0.0
        %2796 = vmatpush1.msra.mxu0 0.0
        %2797 = vmatprep.subr.mxu0 0.0
        %2798 = vmatpush1.msra.mxu0 0.0
        %2799 = vmatprep.subr.mxu0 0.0
        %2800 = vmatpush1.msra.mxu0 0.0
        %2801 = vmatprep.subr.mxu0 0.0
        %2802 = vmatpush1.msra.mxu0 0.0
        %2803 = vmatprep.subr.mxu0 0.0
        %2804 = vmatpush1.msra.mxu0 0.0
        %2805 = vmatprep.subr.mxu0 0.0
        %2806 = vmatpush1.msra.mxu0 0.0
        %2807 = vmatprep.subr.mxu0 0.0
        %2808 = vmatpush1.msra.mxu0 0.0
        %2809 = vmatprep.subr.mxu0 0.0
        %2810 = vmatpush1.msra.mxu0 0.0
        %2811 = vmatprep.subr.mxu0 0.0
        %2812 = vmatpush1.msra.mxu0 0.0
        %2813 = vmatprep.subr.mxu0 0.0
        %2814 = vmatpush1.msra.mxu0 0.0
        %2815 = vmatprep.subr.mxu0 0.0
        %2816 = vmatpush1.msra.mxu0 0.0
        %2817 = vmatprep.subr.mxu0 0.0
        %2818 = vmatpush1.msra.mxu0 0.0
        %2819 = vmatprep.subr.mxu0 0.0
        %2820 = vmatpush1.msra.mxu0 0.0
        %2821 = vmatprep.subr.mxu0 0.0
        %2822 = vmatpush1.msra.mxu0 0.0
        %2823 = vmatprep.subr.mxu0 0.0
        %2824 = vmatpush1.msra.mxu0 0.0
        %2825 = vmatprep.subr.mxu0 0.0
        %2826 = vmatpush1.msra.mxu0 0.0
        %2827 = vmatprep.subr.mxu0 0.0
        %2828 = vmatpush1.msra.mxu0 0.0
        %2829 = vmatprep.subr.mxu0 0.0
        %2830 = vmatpush1.msra.mxu0 0.0
        %2831 = vmatprep.subr.mxu0 0.0
        %2832 = vmatpush1.msra.mxu0 0.0
        %2833 = vmatprep.subr.mxu0 0.0
        %2834 = vmatpush1.msra.mxu0 0.0
        %2835 = vmatprep.mubr.f32.mxu0 0.0
        %2836 = vmatmul.mubr.f32.gmra.mrb[0].mxu0 %v2769
        %v2837 = vpop.f32.mrb[0].mxu0
        %v2838 = vadd.f32 0.0, %v2837
        %v2839 = vpop.f32.mrb[0].mxu0
        %2840 = vdwg.mxu0
        %v2841 = vrcp.pop %v2838
        %v2842 = vmul.f32 %v2767, %v2841
        %v2844 = vsel %vm976, %v2842, 0
        %2846 = vmatprep.subr.mxu0 0.0
        %2847 = vmatpush1.msra.mxu0 %v2687
        %2848 = vmatprep.subr.mxu0 0.0
        %2849 = vmatpush1.msra.mxu0 %v2688
        %2850 = vmatprep.subr.mxu0 0.0
        %2851 = vmatpush1.msra.mxu0 %v2689
        %2852 = vmatprep.subr.mxu0 0.0
        %2853 = vmatpush1.msra.mxu0 %v2690
        %2854 = vmatprep.subr.mxu0 0.0
        %2855 = vmatpush1.msra.mxu0 0.0
        %2856 = vmatprep.subr.mxu0 0.0
        %2857 = vmatpush1.msra.mxu0 0.0
        %2858 = vmatprep.subr.mxu0 0.0
        %2859 = vmatpush1.msra.mxu0 0.0
        %2860 = vmatprep.subr.mxu0 0.0
        %2861 = vmatpush1.msra.mxu0 0.0
        %2862 = vmatprep.subr.mxu0 0.0
        %2863 = vmatpush1.msra.mxu0 0.0
        %2864 = vmatprep.subr.mxu0 0.0
        %2865 = vmatpush1.msra.mxu0 0.0
        %2866 = vmatprep.subr.mxu0 0.0
        %2867 = vmatpush1.msra.mxu0 0.0
        %2868 = vmatprep.subr.mxu0 0.0
        %2869 = vmatpush1.msra.mxu0 0.0
        %2870 = vmatprep.subr.mxu0 0.0
        %2871 = vmatpush1.msra.mxu0 0.0
        %2872 = vmatprep.subr.mxu0 0.0
        %2873 = vmatpush1.msra.mxu0 0.0
        %2874 = vmatprep.subr.mxu0 0.0
        %2875 = vmatpush1.msra.mxu0 0.0
        %2876 = vmatprep.subr.mxu0 0.0
        %2877 = vmatpush1.msra.mxu0 0.0
        %2878 = vmatprep.subr.mxu0 0.0
        %2879 = vmatpush1.msra.mxu0 0.0
        %2880 = vmatprep.subr.mxu0 0.0
        %2881 = vmatpush1.msra.mxu0 0.0
        %2882 = vmatprep.subr.mxu0 0.0
        %2883 = vmatpush1.msra.mxu0 0.0
        %2884 = vmatprep.subr.mxu0 0.0
        %2885 = vmatpush1.msra.mxu0 0.0
        %2886 = vmatprep.subr.mxu0 0.0
        %2887 = vmatpush1.msra.mxu0 0.0
        %2888 = vmatprep.subr.mxu0 0.0
        %2889 = vmatpush1.msra.mxu0 0.0
        %2890 = vmatprep.subr.mxu0 0.0
        %2891 = vmatpush1.msra.mxu0 0.0
        %2892 = vmatprep.subr.mxu0 0.0
        %2893 = vmatpush1.msra.mxu0 0.0
        %2894 = vmatprep.subr.mxu0 0.0
        %2895 = vmatpush1.msra.mxu0 0.0
        %2896 = vmatprep.subr.mxu0 0.0
        %2897 = vmatpush1.msra.mxu0 0.0
        %2898 = vmatprep.subr.mxu0 0.0
        %2899 = vmatpush1.msra.mxu0 0.0
        %2900 = vmatprep.subr.mxu0 0.0
        %2901 = vmatpush1.msra.mxu0 0.0
        %2902 = vmatprep.subr.mxu0 0.0
        %2903 = vmatpush1.msra.mxu0 0.0
        %2904 = vmatprep.subr.mxu0 0.0
        %2905 = vmatpush1.msra.mxu0 0.0
        %2906 = vmatprep.subr.mxu0 0.0
        %2907 = vmatpush1.msra.mxu0 0.0
        %2908 = vmatprep.subr.mxu0 0.0
        %2909 = vmatpush1.msra.mxu0 0.0
        %2910 = vmatprep.mubr.f32.mxu0 0.0
        %2911 = vmatmul.mubr.f32.gmra.mrb[0].mxu0 %v2844
        %v2912 = vpop.f32.mrb[0].mxu0
        %v2913 = vadd.f32 0.0, %v2912
        %v2914 = vpop.f32.mrb[0].mxu0
        %2915 = vdwg.mxu0
        %v2916 = vpack.c.bf16 %v2913, %v2913
        %v2917 = vld [vmem:[#allocation16 + $0x3c] sm:$0xf]
        %v2918 = vld [vmem:[#allocation16 + $0x8c] sm:$0xf]
        %v2919 = vld [vmem:[#allocation16 + $0xdc] sm:$0xf]
        %v2920 = vld [vmem:[#allocation16 + $0x12c] sm:$0xf]
        %v2921 = vld [vmem:[#allocation16 + $0x17c] sm:$0xf]
        %v2922 = vld [vmem:[#allocation16 + $0x1cc] sm:$0xf]
        %v2923 = vld [vmem:[#allocation16 + $0x21c] sm:$0xf]
        %v2924 = vld [vmem:[#allocation16 + $0x26c] sm:$0xf]
        %v2925 = vld [vmem:[#allocation16 + $0x2bc] sm:$0xf]
        %v2926 = vld [vmem:[#allocation16 + $0x30c] sm:$0xf]
        %v2927 = vld [vmem:[#allocation16 + $0x35c] sm:$0xf]
        %v2928 = vld [vmem:[#allocation16 + $0x3ac] sm:$0xf]
        %v2929 = vld [vmem:[#allocation16 + $0x3fc] sm:$0xf]
        %v2930 = vld [vmem:[#allocation16 + $0x44c] sm:$0xf]
        %v2931 = vld [vmem:[#allocation16 + $0x49c] sm:$0xf]
        %v2932 = vld [vmem:[#allocation16 + $0x4ec] sm:$0xf]
        %v2933 = vld [vmem:[%s10 + $0x19] sm:$0x1]
        %v2935 = vlaneseq
        %v2936 = vshrl.u32 %v2935, 7
        %v2937 = vsub.s32 0, %v2936
        %v2938 = vrot.slane %v2933, %v2937
        %v2956 = vunpack.c.l.b16 %v2917
        %v2957 = vunpack.c.l.b16 %v2918
        %v2958 = vunpack.c.l.b16 %v2919
        %v2959 = vunpack.c.l.b16 %v2920
        %v2960 = vunpack.c.l.b16 %v2921
        %v2961 = vunpack.c.l.b16 %v2922
        %v2962 = vunpack.c.l.b16 %v2923
        %v2963 = vunpack.c.l.b16 %v2924
        %v2964 = vunpack.c.l.b16 %v2925
        %v2965 = vunpack.c.l.b16 %v2926
        %v2966 = vunpack.c.l.b16 %v2927
        %v2967 = vunpack.c.l.b16 %v2928
        %v2968 = vunpack.c.l.b16 %v2929
        %v2969 = vunpack.c.l.b16 %v2930
        %v2970 = vunpack.c.l.b16 %v2931
        %v2971 = vunpack.c.l.b16 %v2932
        %v2972 = vpack.c.b16 %v2957, %v2956
        %v2973 = vpack.c.b16 %v2959, %v2958
        %v2974 = vpack.c.b16 %v2961, %v2960
        %v2975 = vpack.c.b16 %v2963, %v2962
        %v2976 = vpack.c.b16 %v2965, %v2964
        %v2977 = vpack.c.b16 %v2967, %v2966
        %v2978 = vpack.c.b16 %v2969, %v2968
        %v2979 = vpack.c.b16 %v2971, %v2970
        %2988 = vmatprep.subr.bf16.mxu0 0
        %2989 = vmatpush1.bf16.msra.mxu0 %v2972
        %2990 = vmatprep.subr.bf16.mxu0 0
        %2991 = vmatpush1.bf16.msra.mxu0 %v2973
        %2992 = vmatprep.subr.bf16.mxu0 0
        %2993 = vmatpush1.bf16.msra.mxu0 %v2974
        %2994 = vmatprep.subr.bf16.mxu0 0
        %2995 = vmatpush1.bf16.msra.mxu0 %v2975
        %2996 = vmatprep.subr.bf16.mxu0 0
        %2997 = vmatpush1.bf16.msra.mxu0 %v2976
        %2998 = vmatprep.subr.bf16.mxu0 0
        %2999 = vmatpush1.bf16.msra.mxu0 %v2977
        %3000 = vmatprep.subr.bf16.mxu0 0
        %3001 = vmatpush1.bf16.msra.mxu0 %v2978
        %3002 = vmatprep.subr.bf16.mxu0 0
        %3003 = vmatpush1.bf16.msra.mxu0 %v2979
        %3004 = vmatprep.subr.bf16.mxu0 0
        %3005 = vmatpush1.bf16.msra.mxu0 0
        %3006 = vmatprep.subr.bf16.mxu0 0
        %3007 = vmatpush1.bf16.msra.mxu0 0
        %3008 = vmatprep.subr.bf16.mxu0 0
        %3009 = vmatpush1.bf16.msra.mxu0 0
        %3010 = vmatprep.subr.bf16.mxu0 0
        %3011 = vmatpush1.bf16.msra.mxu0 0
        %3012 = vmatprep.subr.bf16.mxu0 0
        %3013 = vmatpush1.bf16.msra.mxu0 0
        %3014 = vmatprep.subr.bf16.mxu0 0
        %3015 = vmatpush1.bf16.msra.mxu0 0
        %3016 = vmatprep.subr.bf16.mxu0 0
        %3017 = vmatpush1.bf16.msra.mxu0 0
        %3018 = vmatprep.subr.bf16.mxu0 0
        %3019 = vmatpush1.bf16.msra.mxu0 0
        %3020 = vmatprep.mubr.bf16.mxu0 0
        %3021 = vmatmul.mubr.bf16.gmra.mrb[0].mxu0 %v2916
        %v3022 = vpop.f32.mrb[0].mxu0
        %v3023 = vadd.f32 %v2938, %v3022
        %v3024 = vpop.f32.mrb[0].mxu0
        %v3025 = vpop.f32.mrb[0].mxu0
        %v3026 = vpop.f32.mrb[0].mxu0
        %3027 = vdwg.mxu0
        %v3028 = vadd.f32 %v3023, %v2392
        %3029 = vadd.xlane.f32.xlu0 %v3028
        %v3030 = vpop.xlane.xlu0 %3029
        %v3031 = vmul.f32 %v3030, 0.03125
        %v3032 = vsub.f32 %v3028, %v3031
        %v3033 = vmul.f32 %v3032, %v3032
        %v3034 = vmul.f32 %v3033, %v613
        %3035 = vadd.xlane.f32.xlu0 %v3034
        %v3036 = vpop.xlane.xlu0 %3035
        %v3037 = vmul.f32 %v3036, 0.03125
        %v3038 = vadd.f32 %v3037, 1e-05
        %v3039 = vrsqrt.pop %v3038
        %v3040 = vmul.f32 %v3032, %v3039
        %v3041 = vld [vmem:[%s10 + $0x1a] sm:$0x1]
        %v3043 = vlaneseq
        %v3044 = vshrl.u32 %v3043, 7
        %v3045 = vsub.s32 0, %v3044
        %v3046 = vrot.slane %v3041, %v3045
        %v3048 = vmul.f32 %v3040, %v3046
        %v3049 = vld [vmem:[%s10 + $0x1b] sm:$0x1]
        %v3051 = vlaneseq
        %v3052 = vshrl.u32 %v3051, 7
        %v3053 = vsub.s32 0, %v3052
        %v3054 = vrot.slane %v3049, %v3053
        %v3056 = vadd.f32 %v3048, %v3054
        %v3057 = vpack.c.bf16 %v3056, %v3056
        %v3058 = vld [vmem:[#allocation16 + $0x40] sm:$0xf]
        %v3059 = vld [vmem:[#allocation16 + $0x90] sm:$0xf]
        %v3060 = vld [vmem:[#allocation16 + $0xe0] sm:$0xf]
        %v3061 = vld [vmem:[#allocation16 + $0x130] sm:$0xf]
        %v3062 = vld [vmem:[#allocation16 + $0x180] sm:$0xf]
        %v3063 = vld [vmem:[#allocation16 + $0x1d0] sm:$0xf]
        %v3064 = vld [vmem:[#allocation16 + $0x220] sm:$0xf]
        %v3065 = vld [vmem:[#allocation16 + $0x270] sm:$0xf]
        %v3066 = vld [vmem:[#allocation16 + $0x2c0] sm:$0xf]
        %v3067 = vld [vmem:[#allocation16 + $0x310] sm:$0xf]
        %v3068 = vld [vmem:[#allocation16 + $0x360] sm:$0xf]
        %v3069 = vld [vmem:[#allocation16 + $0x3b0] sm:$0xf]
        %v3070 = vld [vmem:[#allocation16 + $0x400] sm:$0xf]
        %v3071 = vld [vmem:[#allocation16 + $0x450] sm:$0xf]
        %v3072 = vld [vmem:[#allocation16 + $0x4a0] sm:$0xf]
        %v3073 = vld [vmem:[#allocation16 + $0x4f0] sm:$0xf]
        %v3074 = vld [vmem:[%s10 + $0x1c] sm:$0x1]
        %v3076 = vlaneseq
        %v3077 = vshrl.u32 %v3076, 7
        %v3078 = vsub.s32 0, %v3077
        %v3079 = vrot.slane %v3074, %v3078
        %v3097 = vunpack.c.l.b16 %v3058
        %v3098 = vunpack.c.l.b16 %v3059
        %v3099 = vunpack.c.l.b16 %v3060
        %v3100 = vunpack.c.l.b16 %v3061
        %v3101 = vunpack.c.l.b16 %v3062
        %v3102 = vunpack.c.l.b16 %v3063
        %v3103 = vunpack.c.l.b16 %v3064
        %v3104 = vunpack.c.l.b16 %v3065
        %v3105 = vunpack.c.l.b16 %v3066
        %v3106 = vunpack.c.l.b16 %v3067
        %v3107 = vunpack.c.l.b16 %v3068
        %v3108 = vunpack.c.l.b16 %v3069
        %v3109 = vunpack.c.l.b16 %v3070
        %v3110 = vunpack.c.l.b16 %v3071
        %v3111 = vunpack.c.l.b16 %v3072
        %v3112 = vunpack.c.l.b16 %v3073
        %v3113 = vpack.c.b16 %v3098, %v3097
        %v3114 = vpack.c.b16 %v3100, %v3099
        %v3115 = vpack.c.b16 %v3102, %v3101
        %v3116 = vpack.c.b16 %v3104, %v3103
        %v3117 = vpack.c.b16 %v3106, %v3105
        %v3118 = vpack.c.b16 %v3108, %v3107
        %v3119 = vpack.c.b16 %v3110, %v3109
        %v3120 = vpack.c.b16 %v3112, %v3111
        %3129 = vmatprep.subr.bf16.mxu0 0
        %3130 = vmatpush1.bf16.msra.mxu0 %v3113
        %3131 = vmatprep.subr.bf16.mxu0 0
        %3132 = vmatpush1.bf16.msra.mxu0 %v3114
        %3133 = vmatprep.subr.bf16.mxu0 0
        %3134 = vmatpush1.bf16.msra.mxu0 %v3115
        %3135 = vmatprep.subr.bf16.mxu0 0
        %3136 = vmatpush1.bf16.msra.mxu0 %v3116
        %3137 = vmatprep.subr.bf16.mxu0 0
        %3138 = vmatpush1.bf16.msra.mxu0 %v3117
        %3139 = vmatprep.subr.bf16.mxu0 0
        %3140 = vmatpush1.bf16.msra.mxu0 %v3118
        %3141 = vmatprep.subr.bf16.mxu0 0
        %3142 = vmatpush1.bf16.msra.mxu0 %v3119
        %3143 = vmatprep.subr.bf16.mxu0 0
        %3144 = vmatpush1.bf16.msra.mxu0 %v3120
        %3145 = vmatprep.subr.bf16.mxu0 0
        %3146 = vmatpush1.bf16.msra.mxu0 0
        %3147 = vmatprep.subr.bf16.mxu0 0
        %3148 = vmatpush1.bf16.msra.mxu0 0
        %3149 = vmatprep.subr.bf16.mxu0 0
        %3150 = vmatpush1.bf16.msra.mxu0 0
        %3151 = vmatprep.subr.bf16.mxu0 0
        %3152 = vmatpush1.bf16.msra.mxu0 0
        %3153 = vmatprep.subr.bf16.mxu0 0
        %3154 = vmatpush1.bf16.msra.mxu0 0
        %3155 = vmatprep.subr.bf16.mxu0 0
        %3156 = vmatpush1.bf16.msra.mxu0 0
        %3157 = vmatprep.subr.bf16.mxu0 0
        %3158 = vmatpush1.bf16.msra.mxu0 0
        %3159 = vmatprep.subr.bf16.mxu0 0
        %3160 = vmatpush1.bf16.msra.mxu0 0
        %3161 = vmatprep.mubr.bf16.mxu0 0
        %3162 = vmatmul.mubr.bf16.gmra.mrb[0].mxu0 %v3057
        %v3163 = vpop.f32.mrb[0].mxu0
        %v3164 = vadd.f32 %v3079, %v3163
        %v3165 = vpop.f32.mrb[0].mxu0
        %v3166 = vpop.f32.mrb[0].mxu0
        %v3167 = vpop.f32.mrb[0].mxu0
        %3168 = vdwg.mxu0
        %v3169 = vmul.f32 %v3164, 0.5
        %v3170 = vmul.f32 %v3164, 0.70710677
        %v3171 = verf.f32.pop %v3170
        %v3172 = vadd.f32 %v3171, 1.0
        %v3173 = vmul.f32 %v3169, %v3172
        %v3174 = vpack.c.bf16 %v3173, %v3173
        %v3175 = vld [vmem:[#allocation16 + $0x44] sm:$0xf]
        %v3176 = vld [vmem:[#allocation16 + $0x94] sm:$0xf]
        %v3177 = vld [vmem:[#allocation16 + $0xe4] sm:$0xf]
        %v3178 = vld [vmem:[#allocation16 + $0x134] sm:$0xf]
        %v3179 = vld [vmem:[#allocation16 + $0x184] sm:$0xf]
        %v3180 = vld [vmem:[#allocation16 + $0x1d4] sm:$0xf]
        %v3181 = vld [vmem:[#allocation16 + $0x224] sm:$0xf]
        %v3182 = vld [vmem:[#allocation16 + $0x274] sm:$0xf]
        %v3183 = vld [vmem:[#allocation16 + $0x2c4] sm:$0xf]
        %v3184 = vld [vmem:[#allocation16 + $0x314] sm:$0xf]
        %v3185 = vld [vmem:[#allocation16 + $0x364] sm:$0xf]
        %v3186 = vld [vmem:[#allocation16 + $0x3b4] sm:$0xf]
        %v3187 = vld [vmem:[#allocation16 + $0x404] sm:$0xf]
        %v3188 = vld [vmem:[#allocation16 + $0x454] sm:$0xf]
        %v3189 = vld [vmem:[#allocation16 + $0x4a4] sm:$0xf]
        %v3190 = vld [vmem:[#allocation16 + $0x4f4] sm:$0xf]
        %v3191 = vld [vmem:[%s10 + $0x1d] sm:$0x1]
        %v3193 = vlaneseq
        %v3194 = vshrl.u32 %v3193, 7
        %v3195 = vsub.s32 0, %v3194
        %v3196 = vrot.slane %v3191, %v3195
        %v3214 = vunpack.c.l.b16 %v3175
        %v3215 = vunpack.c.l.b16 %v3176
        %v3216 = vunpack.c.l.b16 %v3177
        %v3217 = vunpack.c.l.b16 %v3178
        %v3218 = vunpack.c.l.b16 %v3179
        %v3219 = vunpack.c.l.b16 %v3180
        %v3220 = vunpack.c.l.b16 %v3181
        %v3221 = vunpack.c.l.b16 %v3182
        %v3222 = vunpack.c.l.b16 %v3183
        %v3223 = vunpack.c.l.b16 %v3184
        %v3224 = vunpack.c.l.b16 %v3185
        %v3225 = vunpack.c.l.b16 %v3186
        %v3226 = vunpack.c.l.b16 %v3187
        %v3227 = vunpack.c.l.b16 %v3188
        %v3228 = vunpack.c.l.b16 %v3189
        %v3229 = vunpack.c.l.b16 %v3190
        %v3230 = vpack.c.b16 %v3215, %v3214
        %v3231 = vpack.c.b16 %v3217, %v3216
        %v3232 = vpack.c.b16 %v3219, %v3218
        %v3233 = vpack.c.b16 %v3221, %v3220
        %v3234 = vpack.c.b16 %v3223, %v3222
        %v3235 = vpack.c.b16 %v3225, %v3224
        %v3236 = vpack.c.b16 %v3227, %v3226
        %v3237 = vpack.c.b16 %v3229, %v3228
        %3246 = vmatprep.subr.bf16.mxu0 0
        %3247 = vmatpush1.bf16.msra.mxu0 %v3230
        %3248 = vmatprep.subr.bf16.mxu0 0
        %3249 = vmatpush1.bf16.msra.mxu0 %v3231
        %3250 = vmatprep.subr.bf16.mxu0 0
        %3251 = vmatpush1.bf16.msra.mxu0 %v3232
        %3252 = vmatprep.subr.bf16.mxu0 0
        %3253 = vmatpush1.bf16.msra.mxu0 %v3233
        %3254 = vmatprep.subr.bf16.mxu0 0
        %3255 = vmatpush1.bf16.msra.mxu0 %v3234
        %3256 = vmatprep.subr.bf16.mxu0 0
        %3257 = vmatpush1.bf16.msra.mxu0 %v3235
        %3258 = vmatprep.subr.bf16.mxu0 0
        %3259 = vmatpush1.bf16.msra.mxu0 %v3236
        %3260 = vmatprep.subr.bf16.mxu0 0
        %3261 = vmatpush1.bf16.msra.mxu0 %v3237
        %3262 = vmatprep.subr.bf16.mxu0 0
        %3263 = vmatpush1.bf16.msra.mxu0 0
        %3264 = vmatprep.subr.bf16.mxu0 0
        %3265 = vmatpush1.bf16.msra.mxu0 0
        %3266 = vmatprep.subr.bf16.mxu0 0
        %3267 = vmatpush1.bf16.msra.mxu0 0
        %3268 = vmatprep.subr.bf16.mxu0 0
        %3269 = vmatpush1.bf16.msra.mxu0 0
        %3270 = vmatprep.subr.bf16.mxu0 0
        %3271 = vmatpush1.bf16.msra.mxu0 0
        %3272 = vmatprep.subr.bf16.mxu0 0
        %3273 = vmatpush1.bf16.msra.mxu0 0
        %3274 = vmatprep.subr.bf16.mxu0 0
        %3275 = vmatpush1.bf16.msra.mxu0 0
        %3276 = vmatprep.subr.bf16.mxu0 0
        %3277 = vmatpush1.bf16.msra.mxu0 0
        %3278 = vmatprep.mubr.bf16.mxu0 0
        %3279 = vmatmul.mubr.bf16.gmra.mrb[0].mxu0 %v3174
        %v3280 = vpop.f32.mrb[0].mxu0
        %v3281 = vadd.f32 %v3196, %v3280
        %v3282 = vpop.f32.mrb[0].mxu0
        %v3283 = vpop.f32.mrb[0].mxu0
        %v3284 = vpop.f32.mrb[0].mxu0
        %3285 = vdwg.mxu0
        %v3286 = vadd.f32 %v3281, %v3028
        %v3287 = vadd.f32 %v3286, %v2392
        %3288 = vadd.xlane.f32.xlu0 %v3287
        %v3289 = vpop.xlane.xlu0 %3288
        %v3290 = vmul.f32 %v3289, 0.03125
        %v3291 = vsub.f32 %v3287, %v3290
        %v3292 = vmul.f32 %v3291, %v3291
        %v3293 = vmul.f32 %v3292, %v613
        %3294 = vadd.xlane.f32.xlu0 %v3293
        %v3295 = vpop.xlane.xlu0 %3294
        %v3296 = vmul.f32 %v3295, 0.03125
        %v3297 = vadd.f32 %v3296, 1e-05
        %v3298 = vrsqrt.pop %v3297
        %v3299 = vmul.f32 %v3291, %v3298
        %v3300 = vld [vmem:[%s10 + $0x1e] sm:$0x1]
        %v3302 = vlaneseq
        %v3303 = vshrl.u32 %v3302, 7
        %v3304 = vsub.s32 0, %v3303
        %v3305 = vrot.slane %v3300, %v3304
        %v3307 = vmul.f32 %v3299, %v3305
        %v3308 = vld [vmem:[%s10 + $0x1f] sm:$0x1]
        %v3310 = vlaneseq
        %v3311 = vshrl.u32 %v3310, 7
        %v3312 = vsub.s32 0, %v3311
        %v3313 = vrot.slane %v3308, %v3312
        %v3315 = vadd.f32 %v3307, %v3313
        %v3316 = vpack.c.bf16 %v3315, %v3315
        %v3317 = vld [vmem:[#allocation16 + $0x48] sm:$0xf]
        %v3318 = vld [vmem:[#allocation16 + $0x98] sm:$0xf]
        %v3319 = vld [vmem:[#allocation16 + $0xe8] sm:$0xf]
        %v3320 = vld [vmem:[#allocation16 + $0x138] sm:$0xf]
        %v3321 = vld [vmem:[#allocation16 + $0x188] sm:$0xf]
        %v3322 = vld [vmem:[#allocation16 + $0x1d8] sm:$0xf]
        %v3323 = vld [vmem:[#allocation16 + $0x228] sm:$0xf]
        %v3324 = vld [vmem:[#allocation16 + $0x278] sm:$0xf]
        %v3325 = vld [vmem:[#allocation16 + $0x2c8] sm:$0xf]
        %v3326 = vld [vmem:[#allocation16 + $0x318] sm:$0xf]
        %v3327 = vld [vmem:[#allocation16 + $0x368] sm:$0xf]
        %v3328 = vld [vmem:[#allocation16 + $0x3b8] sm:$0xf]
        %v3329 = vld [vmem:[#allocation16 + $0x408] sm:$0xf]
        %v3330 = vld [vmem:[#allocation16 + $0x458] sm:$0xf]
        %v3331 = vld [vmem:[#allocation16 + $0x4a8] sm:$0xf]
        %v3332 = vld [vmem:[#allocation16 + $0x4f8] sm:$0xf]
        %v3333 = vld [vmem:[%s10 + $0x20] sm:$0x1]
        %v3335 = vlaneseq
        %v3336 = vshrl.u32 %v3335, 7
        %v3337 = vsub.s32 0, %v3336
        %v3338 = vrot.slane %v3333, %v3337
        %v3356 = vunpack.c.l.b16 %v3317
        %v3357 = vunpack.c.l.b16 %v3318
        %v3358 = vunpack.c.l.b16 %v3319
        %v3359 = vunpack.c.l.b16 %v3320
        %v3360 = vunpack.c.l.b16 %v3321
        %v3361 = vunpack.c.l.b16 %v3322
        %v3362 = vunpack.c.l.b16 %v3323
        %v3363 = vunpack.c.l.b16 %v3324
        %v3364 = vunpack.c.l.b16 %v3325
        %v3365 = vunpack.c.l.b16 %v3326
        %v3366 = vunpack.c.l.b16 %v3327
        %v3367 = vunpack.c.l.b16 %v3328
        %v3368 = vunpack.c.l.b16 %v3329
        %v3369 = vunpack.c.l.b16 %v3330
        %v3370 = vunpack.c.l.b16 %v3331
        %v3371 = vunpack.c.l.b16 %v3332
        %v3372 = vpack.c.b16 %v3357, %v3356
        %v3373 = vpack.c.b16 %v3359, %v3358
        %v3374 = vpack.c.b16 %v3361, %v3360
        %v3375 = vpack.c.b16 %v3363, %v3362
        %v3376 = vpack.c.b16 %v3365, %v3364
        %v3377 = vpack.c.b16 %v3367, %v3366
        %v3378 = vpack.c.b16 %v3369, %v3368
        %v3379 = vpack.c.b16 %v3371, %v3370
        %3388 = vmatprep.subr.bf16.mxu0 0
        %3389 = vmatpush1.bf16.msra.mxu0 %v3372
        %3390 = vmatprep.subr.bf16.mxu0 0
        %3391 = vmatpush1.bf16.msra.mxu0 %v3373
        %3392 = vmatprep.subr.bf16.mxu0 0
        %3393 = vmatpush1.bf16.msra.mxu0 %v3374
        %3394 = vmatprep.subr.bf16.mxu0 0
        %3395 = vmatpush1.bf16.msra.mxu0 %v3375
        %3396 = vmatprep.subr.bf16.mxu0 0
        %3397 = vmatpush1.bf16.msra.mxu0 %v3376
        %3398 = vmatprep.subr.bf16.mxu0 0
        %3399 = vmatpush1.bf16.msra.mxu0 %v3377
        %3400 = vmatprep.subr.bf16.mxu0 0
        %3401 = vmatpush1.bf16.msra.mxu0 %v3378
        %3402 = vmatprep.subr.bf16.mxu0 0
        %3403 = vmatpush1.bf16.msra.mxu0 %v3379
        %3404 = vmatprep.subr.bf16.mxu0 0
        %3405 = vmatpush1.bf16.msra.mxu0 0
        %3406 = vmatprep.subr.bf16.mxu0 0
        %3407 = vmatpush1.bf16.msra.mxu0 0
        %3408 = vmatprep.subr.bf16.mxu0 0
        %3409 = vmatpush1.bf16.msra.mxu0 0
        %3410 = vmatprep.subr.bf16.mxu0 0
        %3411 = vmatpush1.bf16.msra.mxu0 0
        %3412 = vmatprep.subr.bf16.mxu0 0
        %3413 = vmatpush1.bf16.msra.mxu0 0
        %3414 = vmatprep.subr.bf16.mxu0 0
        %3415 = vmatpush1.bf16.msra.mxu0 0
        %3416 = vmatprep.subr.bf16.mxu0 0
        %3417 = vmatpush1.bf16.msra.mxu0 0
        %3418 = vmatprep.subr.bf16.mxu0 0
        %3419 = vmatpush1.bf16.msra.mxu0 0
        %3420 = vmatprep.mubr.bf16.mxu0 0
        %3421 = vmatmul.mubr.bf16.gmra.mrb[0].mxu0 %v3316
        %v3422 = vpop.f32.mrb[0].mxu0
        %v3423 = vadd.f32 %v3338, %v3422
        %v3424 = vpop.f32.mrb[0].mxu0
        %v3425 = vpop.f32.mrb[0].mxu0
        %v3426 = vpop.f32.mrb[0].mxu0
        %3427 = vdwg.mxu0
        %v3428 = vmul.f32 %v3423, 0.5
        %v3429 = vmul.f32 %v3423, 0.70710677
        %v3430 = verf.f32.pop %v3429
        %v3431 = vadd.f32 %v3430, 1.0
        %v3432 = vmul.f32 %v3428, %v3431
        %3433 = vadd.xlane.f32.xlu0 %v3432
        %v3434 = vpop.xlane.xlu0 %3433
        %v3435 = vmul.f32 %v3434, 0.03125
        %v3436 = vsub.f32 %v3432, %v3435
        %v3437 = vmul.f32 %v3436, %v3436
        %v3438 = vmul.f32 %v3437, %v613
        %3439 = vadd.xlane.f32.xlu0 %v3438
        %v3440 = vpop.xlane.xlu0 %3439
        %v3441 = vmul.f32 %v3440, 0.03125
        %v3442 = vadd.f32 %v3441, 1e-05
        %v3443 = vrsqrt.pop %v3442
        %v3444 = vmul.f32 %v3436, %v3443
        %v3445 = vld [vmem:[%s10 + $0x21] sm:$0x1]
        %v3447 = vlaneseq
        %v3448 = vshrl.u32 %v3447, 7
        %v3449 = vsub.s32 0, %v3448
        %v3450 = vrot.slane %v3445, %v3449
        %v3452 = vmul.f32 %v3444, %v3450
        %v3453 = vld [vmem:[%s10 + $0x22] sm:$0x1]
        %v3455 = vlaneseq
        %v3456 = vshrl.u32 %v3455, 7
        %v3457 = vsub.s32 0, %v3456
        %v3458 = vrot.slane %v3453, %v3457
        %v3460 = vadd.f32 %v3452, %v3458
        %v3461 = vpack.c.bf16 %v3460, %v3460
        %v3462 = vld [vmem:[#allocation16 + $0x4c] sm:$0xf]
        %v3463 = vld [vmem:[#allocation16 + $0x9c] sm:$0xf]
        %v3464 = vld [vmem:[#allocation16 + $0xec] sm:$0xf]
        %v3465 = vld [vmem:[#allocation16 + $0x13c] sm:$0xf]
        %v3466 = vld [vmem:[#allocation16 + $0x18c] sm:$0xf]
        %v3467 = vld [vmem:[#allocation16 + $0x1dc] sm:$0xf]
        %v3468 = vld [vmem:[#allocation16 + $0x22c] sm:$0xf]
        %v3469 = vld [vmem:[#allocation16 + $0x27c] sm:$0xf]
        %v3470 = vld [vmem:[#allocation16 + $0x2cc] sm:$0xf]
        %v3471 = vld [vmem:[#allocation16 + $0x31c] sm:$0xf]
        %v3472 = vld [vmem:[#allocation16 + $0x36c] sm:$0xf]
        %v3473 = vld [vmem:[#allocation16 + $0x3bc] sm:$0xf]
        %v3474 = vld [vmem:[#allocation16 + $0x40c] sm:$0xf]
        %v3475 = vld [vmem:[#allocation16 + $0x45c] sm:$0xf]
        %v3476 = vld [vmem:[#allocation16 + $0x4ac] sm:$0xf]
        %v3477 = vld [vmem:[#allocation16 + $0x4fc] sm:$0xf]
        %v3478 = vld [vmem:[%s10 + $0x23] sm:$0x1]
        %v3480 = vlaneseq
        %v3481 = vshrl.u32 %v3480, 7
        %v3482 = vsub.s32 0, %v3481
        %v3483 = vrot.slane %v3478, %v3482
        %v3501 = vunpack.c.l.b16 %v3462
        %v3502 = vunpack.c.l.b16 %v3463
        %v3503 = vunpack.c.l.b16 %v3464
        %v3504 = vunpack.c.l.b16 %v3465
        %v3505 = vunpack.c.l.b16 %v3466
        %v3506 = vunpack.c.l.b16 %v3467
        %v3507 = vunpack.c.l.b16 %v3468
        %v3508 = vunpack.c.l.b16 %v3469
        %v3509 = vunpack.c.l.b16 %v3470
        %v3510 = vunpack.c.l.b16 %v3471
        %v3511 = vunpack.c.l.b16 %v3472
        %v3512 = vunpack.c.l.b16 %v3473
        %v3513 = vunpack.c.l.b16 %v3474
        %v3514 = vunpack.c.l.b16 %v3475
        %v3515 = vunpack.c.l.b16 %v3476
        %v3516 = vunpack.c.l.b16 %v3477
        %v3517 = vpack.c.b16 %v3502, %v3501
        %v3518 = vpack.c.b16 %v3504, %v3503
        %v3519 = vpack.c.b16 %v3506, %v3505
        %v3520 = vpack.c.b16 %v3508, %v3507
        %v3521 = vpack.c.b16 %v3510, %v3509
        %v3522 = vpack.c.b16 %v3512, %v3511
        %v3523 = vpack.c.b16 %v3514, %v3513
        %v3524 = vpack.c.b16 %v3516, %v3515
        %3533 = vmatprep.subr.bf16.mxu0 0
        %3534 = vmatpush1.bf16.msra.mxu0 %v3517
        %3535 = vmatprep.subr.bf16.mxu0 0
        %3536 = vmatpush1.bf16.msra.mxu0 %v3518
        %3537 = vmatprep.subr.bf16.mxu0 0
        %3538 = vmatpush1.bf16.msra.mxu0 %v3519
        %3539 = vmatprep.subr.bf16.mxu0 0
        %3540 = vmatpush1.bf16.msra.mxu0 %v3520
        %3541 = vmatprep.subr.bf16.mxu0 0
        %3542 = vmatpush1.bf16.msra.mxu0 %v3521
        %3543 = vmatprep.subr.bf16.mxu0 0
        %3544 = vmatpush1.bf16.msra.mxu0 %v3522
        %3545 = vmatprep.subr.bf16.mxu0 0
        %3546 = vmatpush1.bf16.msra.mxu0 %v3523
        %3547 = vmatprep.subr.bf16.mxu0 0
        %3548 = vmatpush1.bf16.msra.mxu0 %v3524
        %3549 = vmatprep.subr.bf16.mxu0 0
        %3550 = vmatpush1.bf16.msra.mxu0 0
        %3551 = vmatprep.subr.bf16.mxu0 0
        %3552 = vmatpush1.bf16.msra.mxu0 0
        %3553 = vmatprep.subr.bf16.mxu0 0
        %3554 = vmatpush1.bf16.msra.mxu0 0
        %3555 = vmatprep.subr.bf16.mxu0 0
        %3556 = vmatpush1.bf16.msra.mxu0 0
        %3557 = vmatprep.subr.bf16.mxu0 0
        %3558 = vmatpush1.bf16.msra.mxu0 0
        %3559 = vmatprep.subr.bf16.mxu0 0
        %3560 = vmatpush1.bf16.msra.mxu0 0
        %3561 = vmatprep.subr.bf16.mxu0 0
        %3562 = vmatpush1.bf16.msra.mxu0 0
        %3563 = vmatprep.subr.bf16.mxu0 0
        %3564 = vmatpush1.bf16.msra.mxu0 0
        %3565 = vmatprep.mubr.bf16.mxu0 0
        %3566 = vmatmul.mubr.bf16.gmra.mrb[0].mxu0 %v3461
        %v3567 = vpop.f32.mrb[0].mxu0
        %v3568 = vadd.f32 %v3483, %v3567
        %v3569 = vpop.f32.mrb[0].mxu0
        %v3570 = vpop.f32.mrb[0].mxu0
        %v3571 = vpop.f32.mrb[0].mxu0
        %3572 = vdwg.mxu0
        %v3573 = vpack.c.bf16 %v3568, %v3568
        %3574 = vst [vmem:[%s581] sm:$0xf] %v3573
        %s3575 = sand.u32 %s295, 1
        %s3576 = scalar_lea.sflag [#allocation4], %s3575
        %s3577 = sand.u32 %s295, 1
        %s3578 = smul.addr %s3577, 4
        %s3579 = scalar_lea.vmem [#allocation17], %s3578
        // Predicated region
        $region101: #{tpu_custom_call.1} parent=63 // pred_check
          %p3580 = pneg %p305
        $region102: #{tpu_custom_call.1} parent=63 // pred_check_branch
          %3582 = sbr.rel (%p3580) target = $region104
        $region103: #{tpu_custom_call.1} parent=63 // pred_region
          %s3584 = ssub.s32 64, 64
          %3585 = vsyncadd %s3576, %s3584
          %s3586 = smul.addr %s36, 64
          %s3587 = scalar_lea.hbm %s11, %s3586
          %s3589 = sshll.u32 %s3579, 4
          %s3590 = int_to_ptr.vmem [resolvable:$true] %s3589
          %3592 = dma.vmem_to_hbm [thread:$0]  %s3590, 64, %s3587, %s3576
        $region104: #{tpu_custom_call.1} parent=63 // pred_fallthru
          _
      $region64: #{tpu_custom_call.1} parent=5 // pred_fallthru
        _
      %p3593 = scmp.le.s32.totalorder 2, %s31
      // Predicated region
      $region105: #{tpu_custom_call.1} parent=5 // pred_check
        %p3594 = pneg %p3593
      $region106: #{tpu_custom_call.1} parent=5 // pred_check_branch
        %3596 = sbr.rel (%p3594) target = $region108
      $region107: #{tpu_custom_call.1} parent=5 // pred_region
        %s3597 = ssub.s32 %s31, 2
        // Predicated region
        $region109: #{tpu_custom_call.1} parent=107 // pred_check
          %p3598 = pneg %p311
        $region110: #{tpu_custom_call.1} parent=107 // pred_check_branch
          %3600 = sbr.rel (%p3598) target = $region112
        $region111: #{tpu_custom_call.1} parent=107 // pred_region
          %s3601 = sand.u32 %s296, 1
          %s3602 = scalar_lea.sflag [#allocation4], %s3601
          %s3603 = sand.u32 %s296, 1
          %s3604 = smul.addr %s3603, 4
          %s3605 = scalar_lea.vmem [#allocation17], %s3604
          %3606 = dma.done %s3602, 64
        $region112: #{tpu_custom_call.1} parent=107 // pred_fallthru
          _
      $region108: #{tpu_custom_call.1} parent=5 // pred_fallthru
        _
    $region6: #{tpu_custom_call.1} parent=1 // loop_footer
      %s35 = sadd.s32 1, %s31
    $region7: #{tpu_custom_call.1} parent=1 // loop_footer_branch
      %30 = sbr.rel target = $region3
    $region8: #{tpu_custom_call.1} parent=1 // loop_exit
      _
    %3607 = vsyncpa [#allocation3], 1
    %s3608 = scalar_lea.sflag [#allocation3], 1
    %3609 = vsyncpa %s3608, 1
    %3610 = vsyncpa [#allocation6], 1
    %s3611 = scalar_lea.sflag [#allocation6], 1
    %3612 = vsyncpa %s3611, 1
    %3613 = vsyncpa [#allocation9], 1
    %s3614 = scalar_lea.sflag [#allocation9], 1
    %3615 = vsyncpa %s3614, 1
    %3616 = vsyncpa [#allocation12], 1
    %3617 = vsyncpa [#allocation15], 1
    %3618 = vsyncpa [#allocation4], 1
    %s3619 = scalar_lea.sflag [#allocation4], 1
    %3620 = vsyncpa %s3619, 1

</llo_original>
